<compile_context>
chip_gen: v7x
topology: tpu7x:2x2x1
jax: 0.10.0
libtpu: 0.0.40
codegen_flags: <defaults>
</compile_context>

<pallas_src>
import jax
import jax.numpy as jnp
from jax.experimental import pallas as pl
from jax.experimental.pallas import tpu as pltpu

_LP = 8  # sublane-aligned column offset of the stage-1 activation interior


def _double_conv_kernel(x_ref, w1_ref, b1_ref, w2_ref, b2_ref, o_ref, mid_ref):
    # x_ref  : (TH+4, W+2, Cin)        bf16  haloed, zero-padded input row tile
    # w1_ref : (9*Cin, Cmid_p)         bf16  conv1 weights (BN1 folded), tap-packed
    # b1_ref : (1, Cmid_p)             f32   conv1 bias (BN1 folded)
    # w2_ref : (9*Cmid_p, Cout_p)      bf16  conv2 weights (BN2 folded), tap-packed
    # b2_ref : (1, Cout_p)             f32   conv2 bias (BN2 folded)
    # o_ref  : (TH, W, Cout_p)         output row tile
    # mid_ref: (TH+2, _LP+W+1, Cmid_p) bf16  scratch: stage-1 activation
    #          (1 halo row each side); cols [_LP, _LP+W) = interior,
    #          cols _LP-1 and _LP+W are the zero-padding columns conv2 reads.
    TH, W, _ = o_ref.shape
    Cin = x_ref.shape[-1]
    Cmid_p = mid_ref.shape[-1]
    HM = TH + 2  # stage-1 rows incl. 1-row halo each side

    rt = pl.program_id(1)
    h_total = TH * pl.num_programs(1)

    # ---- stage 1: conv3x3 (+folded BN) + ReLU as a single tap-packed matmul ----
    taps1 = [x_ref[ky:ky + HM, kx:kx + W, :] for ky in range(3) for kx in range(3)]
    patch1 = jnp.concatenate(taps1, axis=-1).reshape(HM * W, 9 * Cin)
    y1 = jnp.dot(patch1, w1_ref[...], preferred_element_type=jnp.float32)
    y1 = jnp.maximum(y1 + b1_ref[...], 0.0).reshape(HM, W, Cmid_p)

    # Zero the halo rows that fall outside the image: this IS conv2's zero pad.
    row = jax.lax.broadcasted_iota(jnp.int32, (HM, W, Cmid_p), 0)
    g = rt * TH + row - 1
    y1 = jnp.where((g >= 0) & (g < h_total), y1, 0.0)

    # Intermediate activation never leaves VMEM. Only the two zero-padding
    # columns are cleared; the big interior store starts at a multiple-of-8
    # sublane offset so it lowers to unmasked stores.
    zcol = jnp.zeros((HM, 1, Cmid_p), mid_ref.dtype)
    mid_ref[:, _LP - 1:_LP, :] = zcol
    mid_ref[:, _LP + W:_LP + W + 1, :] = zcol
    mid_ref[:, _LP:_LP + W, :] = y1.astype(mid_ref.dtype)

    # ---- stage 2: conv3x3 (+folded BN) + ReLU ----------------------------------
    taps2 = [mid_ref[ky:ky + TH, _LP - 1 + kx:_LP - 1 + kx + W, :]
             for ky in range(3) for kx in range(3)]
    patch2 = jnp.concatenate(taps2, axis=-1).reshape(TH * W, 9 * Cmid_p)
    y2 = jnp.dot(patch2, w2_ref[...], preferred_element_type=jnp.float32)
    y2 = jnp.maximum(y2 + b2_ref[...], 0.0)
    o_ref[...] = y2.reshape(o_ref.shape).astype(o_ref.dtype)


def _fold_bn(w, b, gamma, beta, mean, var, eps=1e-5):
    # Fold inference-mode BatchNorm into conv weight/bias.
    scale = gamma / jnp.sqrt(var + eps)
    return w * scale[:, None, None, None], (b - mean) * scale + beta


def _pack_weight(w, cin_pad, cout_pad):
    # OIHW (Cout, Cin, 3, 3) -> (9*cin_pad, cout_pad); K ordered (ky, kx, cin),
    # matching the in-kernel tap concatenation order.
    cout, cin = w.shape[0], w.shape[1]
    w = jnp.transpose(w, (2, 3, 1, 0))  # (3, 3, Cin, Cout)
    w = jnp.pad(w, ((0, 0), (0, 0), (0, cin_pad - cin), (0, cout_pad - cout)))
    return w.reshape(9 * cin_pad, cout_pad)


def _round_up(x, m):
    return (x + m - 1) // m * m


def _vmem_limit_bytes():
    try:
        cap = pltpu.get_tpu_info().vmem_capacity_bytes
    except Exception:
        cap = 64 * 1024 * 1024
    # <= half of physical VMEM, capped at 64 MiB: 32 MiB on v7x, 64 MiB on v5e/v6e.
    return int(min(cap // 2, 64 * 1024 * 1024))


def double_conv_forward(x, params, eps=1e-5):
    """x: (N, Cin, H, W) float32 -> (N, Cout, H, W); matches doubleConv.forward
    with eval-mode (running-stats) BatchNorm."""
    N, Cin, H, W = x.shape

    w1, b1 = _fold_bn(params["w1"], params["b1"], params["g1"], params["be1"],
                      params["m1"], params["v1"], eps)
    w2, b2 = _fold_bn(params["w2"], params["b2"], params["g2"], params["be2"],
                      params["m2"], params["v2"], eps)
    Cmid, Cout = w1.shape[0], w2.shape[0]
    Cmid_p, Cout_p = _round_up(Cmid, 128), _round_up(Cout, 128)

    w1k = _pack_weight(w1, Cin, Cmid_p).astype(jnp.bfloat16)      # (9*Cin, Cmid_p)
    w2k = _pack_weight(w2, Cmid_p, Cout_p).astype(jnp.bfloat16)   # (9*Cmid_p, Cout_p)
    b1k = jnp.pad(b1, (0, Cmid_p - Cmid)).reshape(1, Cmid_p).astype(jnp.float32)
    b2k = jnp.pad(b2, (0, Cout_p - Cout)).reshape(1, Cout_p).astype(jnp.float32)

    # Row-tile height: bounds VMEM independent of resolution while giving the
    # pipeline several steps per image.
    TH = 8 if H % 8 == 0 else H
    n_tiles = H // TH

    # NCHW -> NHWC (channels on lanes), zero-pad by the 2-row / 1-col halo the
    # two stacked 3x3 convs need, cast to bf16, and materialize the overlapping
    # row tiles so plain BlockSpec pipelining handles the halo (no manual DMA).
    x_nhwc = jnp.transpose(x, (0, 2, 3, 1))
    x_pad = jnp.pad(x_nhwc, ((0, 0), (2, 2), (1, 1), (0, 0))).astype(jnp.bfloat16)
    row_idx = jnp.arange(n_tiles)[:, None] * TH + jnp.arange(TH + 4)[None, :]
    x_tiles = x_pad[:, row_idx]                  # (N, n_tiles, TH+4, W+2, Cin)

    out_shape = jax.ShapeDtypeStruct((N, n_tiles, TH, W, Cout_p), x.dtype)
    grid = (N, n_tiles)

    def build(single_buffer_weights):
        def wspec(shape):
            idx = lambda n, rt: (0,) * len(shape)
            if single_buffer_weights:
                # Constant index_map => operand stays resident; skip double-buffer.
                return pl.BlockSpec(shape, idx, pipeline_mode=pl.Buffered(1))
            return pl.BlockSpec(shape, idx)

        in_specs = [
            pl.BlockSpec((None, None, TH + 4, W + 2, Cin),
                         lambda n, rt: (n, rt, 0, 0, 0)),
            wspec((9 * Cin, Cmid_p)),
            wspec((1, Cmid_p)),
            wspec((9 * Cmid_p, Cout_p)),
            wspec((1, Cout_p)),
        ]
        out_specs = pl.BlockSpec((None, None, TH, W, Cout_p),
                                 lambda n, rt: (n, rt, 0, 0, 0))
        return pl.pallas_call(
            _double_conv_kernel,
            out_shape=out_shape,
            grid_spec=pltpu.PrefetchScalarGridSpec(
                num_scalar_prefetch=0,
                grid=grid,
                in_specs=in_specs,
                out_specs=out_specs,
                scratch_shapes=[
                    pltpu.VMEM((TH + 2, _LP + W + 1, Cmid_p), jnp.bfloat16)],
            ),
            compiler_params=pltpu.CompilerParams(
                dimension_semantics=("parallel", "parallel"),
                vmem_limit_bytes=_vmem_limit_bytes(),
            ),
        )

    try:
        out = build(True)(x_tiles, w1k, b1k, w2k, b2k)
    except Exception:  # pl.Buffered(1) not supported by this Pallas build
        out = build(False)(x_tiles, w1k, b1k, w2k, b2k)

    out = out.reshape(N, H, W, Cout_p)[..., :Cout]    # drop channel padding
    return jnp.transpose(out, (0, 3, 1, 2))           # NHWC -> NCHW


def _ref_double_conv(x, params, eps=1e-5):
    # Pure-JAX reference (eval-mode BN), NCHW.
    def conv(x, w, b):
        y = jax.lax.conv_general_dilated(
            x, w, window_strides=(1, 1), padding=((1, 1), (1, 1)),
            dimension_numbers=("NCHW", "OIHW", "NCHW"))
        return y + b[None, :, None, None]

    def bn(x, g, be, m, v):
        s = g / jnp.sqrt(v + eps)
        return (x - m[None, :, None, None]) * s[None, :, None, None] + be[None, :, None, None]

    y = jax.nn.relu(bn(conv(x, params["w1"], params["b1"]),
                       params["g1"], params["be1"], params["m1"], params["v1"]))
    y = jax.nn.relu(bn(conv(y, params["w2"], params["b2"]),
                       params["g2"], params["be2"], params["m2"], params["v2"]))
    return y


if __name__ == "__main__":
    key = jax.random.PRNGKey(0)
    N, Cin, Cout, H, W = 2, 4, 8, 16, 16
    ks = jax.random.split(key, 13)

    params = {
        "w1": jax.random.normal(ks[0], (Cout, Cin, 3, 3), jnp.float32) / jnp.sqrt(Cin * 9.0),
        "b1": 0.1 * jax.random.normal(ks[1], (Cout,), jnp.float32),
        "g1": 1.0 + 0.1 * jax.random.normal(ks[2], (Cout,), jnp.float32),
        "be1": 0.1 * jax.random.normal(ks[3], (Cout,), jnp.float32),
        "m1": 0.1 * jax.random.normal(ks[4], (Cout,), jnp.float32),
        "v1": 1.0 + 0.5 * jax.random.uniform(ks[5], (Cout,), jnp.float32),
        "w2": jax.random.normal(ks[6], (Cout, Cout, 3, 3), jnp.float32) / jnp.sqrt(Cout * 9.0),
        "b2": 0.1 * jax.random.normal(ks[7], (Cout,), jnp.float32),
        "g2": 1.0 + 0.1 * jax.random.normal(ks[8], (Cout,), jnp.float32),
        "be2": 0.1 * jax.random.normal(ks[9], (Cout,), jnp.float32),
        "m2": 0.1 * jax.random.normal(ks[10], (Cout,), jnp.float32),
        "v2": 1.0 + 0.5 * jax.random.uniform(ks[11], (Cout,), jnp.float32),
    }
    x = jax.random.normal(ks[12], (N, Cin, H, W), dtype=jnp.float32)

    y = double_conv_forward(x, params)
    y = jax.block_until_ready(y)

    ref = _ref_double_conv(x, params)
    assert y.shape == (N, Cout, H, W)
    max_err = float(jnp.max(jnp.abs(y - ref)))
    # bf16 MXU operands with f32 accumulation: tolerance covers the bf16 rounding.
    assert jnp.allclose(y, ref, rtol=5e-2, atol=5e-2), f"mismatch vs reference, max_err={max_err}"

    print("KERNEL_OK")
</pallas_src>

<mosaic_0001>
module attributes {stable_mosaic.version = 11 : i64} {
  func.func @_double_conv_kernel(%arg0: i32, %arg1: i32, %arg2: memref<1x1x12x18x4xbf16, #tpu.memory_space<vmem>>, %arg3: memref<36x128xbf16, #tpu.memory_space<vmem>>, %arg4: memref<1x128xf32, #tpu.memory_space<vmem>>, %arg5: memref<1152x128xbf16, #tpu.memory_space<vmem>>, %arg6: memref<1x128xf32, #tpu.memory_space<vmem>>, %arg7: memref<1x1x8x16x128xf32, #tpu.memory_space<vmem>>, %arg8: memref<10x25x128xbf16, #tpu.memory_space<vmem>>) attributes {dimension_semantics = [#tpu.dimension_semantics<parallel>, #tpu.dimension_semantics<parallel>], iteration_bounds = array<i64: 2, 2>, scalar_prefetch = 0 : i64, scratch_operands = 1 : i64, tpu.core_type = #tpu.core_type<tc>, window_params = [{transform_indices = @transform_0, window_bounds = array<i64: 1, 1, 12, 18, 4>}, {pipeline_mode = #tpu.pipeline_mode<synchronous>, transform_indices = @transform_1, window_bounds = array<i64: 36, 128>}, {pipeline_mode = #tpu.pipeline_mode<synchronous>, transform_indices = @transform_2, window_bounds = array<i64: 1, 128>}, {pipeline_mode = #tpu.pipeline_mode<synchronous>, transform_indices = @transform_3, window_bounds = array<i64: 1152, 128>}, {pipeline_mode = #tpu.pipeline_mode<synchronous>, transform_indices = @transform_4, window_bounds = array<i64: 1, 128>}, {transform_indices = @transform_5, window_bounds = array<i64: 1, 1, 8, 16, 128>}]} {
    %c0 = arith.constant 0 : index
    %c0_0 = arith.constant 0 : index
    %c0_1 = arith.constant 0 : index
    %c0_2 = arith.constant 0 : index
    %c0_3 = arith.constant 0 : index
    %0 = vector.load %arg2[%c0, %c0_0, %c0_1, %c0_2, %c0_3] : memref<1x1x12x18x4xbf16, #tpu.memory_space<vmem>>, vector<1x1x10x16x4xbf16>
    %1 = vector.shape_cast %0 : vector<1x1x10x16x4xbf16> to vector<10x16x4xbf16>
    %c0_4 = arith.constant 0 : index
    %c0_5 = arith.constant 0 : index
    %c0_6 = arith.constant 0 : index
    %c1 = arith.constant 1 : index
    %c0_7 = arith.constant 0 : index
    %2 = vector.load %arg2[%c0_4, %c0_5, %c0_6, %c1, %c0_7] : memref<1x1x12x18x4xbf16, #tpu.memory_space<vmem>>, vector<1x1x10x16x4xbf16>
    %3 = vector.shape_cast %2 : vector<1x1x10x16x4xbf16> to vector<10x16x4xbf16>
    %c0_8 = arith.constant 0 : index
    %c0_9 = arith.constant 0 : index
    %c0_10 = arith.constant 0 : index
    %c2 = arith.constant 2 : index
    %c0_11 = arith.constant 0 : index
    %4 = vector.load %arg2[%c0_8, %c0_9, %c0_10, %c2, %c0_11] : memref<1x1x12x18x4xbf16, #tpu.memory_space<vmem>>, vector<1x1x10x16x4xbf16>
    %5 = vector.shape_cast %4 : vector<1x1x10x16x4xbf16> to vector<10x16x4xbf16>
    %c0_12 = arith.constant 0 : index
    %c0_13 = arith.constant 0 : index
    %c1_14 = arith.constant 1 : index
    %c0_15 = arith.constant 0 : index
    %c0_16 = arith.constant 0 : index
    %6 = vector.load %arg2[%c0_12, %c0_13, %c1_14, %c0_15, %c0_16] : memref<1x1x12x18x4xbf16, #tpu.memory_space<vmem>>, vector<1x1x10x16x4xbf16>
    %7 = vector.shape_cast %6 : vector<1x1x10x16x4xbf16> to vector<10x16x4xbf16>
    %c0_17 = arith.constant 0 : index
    %c0_18 = arith.constant 0 : index
    %c1_19 = arith.constant 1 : index
    %c1_20 = arith.constant 1 : index
    %c0_21 = arith.constant 0 : index
    %8 = vector.load %arg2[%c0_17, %c0_18, %c1_19, %c1_20, %c0_21] : memref<1x1x12x18x4xbf16, #tpu.memory_space<vmem>>, vector<1x1x10x16x4xbf16>
    %9 = vector.shape_cast %8 : vector<1x1x10x16x4xbf16> to vector<10x16x4xbf16>
    %c0_22 = arith.constant 0 : index
    %c0_23 = arith.constant 0 : index
    %c1_24 = arith.constant 1 : index
    %c2_25 = arith.constant 2 : index
    %c0_26 = arith.constant 0 : index
    %10 = vector.load %arg2[%c0_22, %c0_23, %c1_24, %c2_25, %c0_26] : memref<1x1x12x18x4xbf16, #tpu.memory_space<vmem>>, vector<1x1x10x16x4xbf16>
    %11 = vector.shape_cast %10 : vector<1x1x10x16x4xbf16> to vector<10x16x4xbf16>
    %c0_27 = arith.constant 0 : index
    %c0_28 = arith.constant 0 : index
    %c2_29 = arith.constant 2 : index
    %c0_30 = arith.constant 0 : index
    %c0_31 = arith.constant 0 : index
    %12 = vector.load %arg2[%c0_27, %c0_28, %c2_29, %c0_30, %c0_31] : memref<1x1x12x18x4xbf16, #tpu.memory_space<vmem>>, vector<1x1x10x16x4xbf16>
    %13 = vector.shape_cast %12 : vector<1x1x10x16x4xbf16> to vector<10x16x4xbf16>
    %c0_32 = arith.constant 0 : index
    %c0_33 = arith.constant 0 : index
    %c2_34 = arith.constant 2 : index
    %c1_35 = arith.constant 1 : index
    %c0_36 = arith.constant 0 : index
    %14 = vector.load %arg2[%c0_32, %c0_33, %c2_34, %c1_35, %c0_36] : memref<1x1x12x18x4xbf16, #tpu.memory_space<vmem>>, vector<1x1x10x16x4xbf16>
    %15 = vector.shape_cast %14 : vector<1x1x10x16x4xbf16> to vector<10x16x4xbf16>
    %c0_37 = arith.constant 0 : index
    %c0_38 = arith.constant 0 : index
    %c2_39 = arith.constant 2 : index
    %c2_40 = arith.constant 2 : index
    %c0_41 = arith.constant 0 : index
    %16 = vector.load %arg2[%c0_37, %c0_38, %c2_39, %c2_40, %c0_41] : memref<1x1x12x18x4xbf16, #tpu.memory_space<vmem>>, vector<1x1x10x16x4xbf16>
    %17 = vector.shape_cast %16 : vector<1x1x10x16x4xbf16> to vector<10x16x4xbf16>
    %18 = tpu.concatenate %1, %3, %5, %7, %9, %11, %13, %15, %17 in 2 : vector<10x16x4xbf16>, vector<10x16x4xbf16>, vector<10x16x4xbf16>, vector<10x16x4xbf16>, vector<10x16x4xbf16>, vector<10x16x4xbf16>, vector<10x16x4xbf16>, vector<10x16x4xbf16>, vector<10x16x4xbf16> -> vector<10x16x36xbf16>
    %19 = vector.shape_cast %18 : vector<10x16x36xbf16> to vector<160x36xbf16>
    %c0_42 = arith.constant 0 : index
    %c0_43 = arith.constant 0 : index
    %20 = vector.load %arg3[%c0_42, %c0_43] : memref<36x128xbf16, #tpu.memory_space<vmem>>, vector<36x128xbf16>
    %cst = arith.constant dense<0.000000e+00> : vector<160x128xf32>
    %21 = tpu.matmul %19, %20, %cst {dimension_numbers = #tpu.dot_dimension_numbers<[1], [0], [0], [1], [0, 0, 1, 1], [], []>} : vector<160x36xbf16>, vector<36x128xbf16>, vector<160x128xf32> -> vector<160x128xf32>
    %c0_44 = arith.constant 0 : index
    %c0_45 = arith.constant 0 : index
    %22 = vector.load %arg4[%c0_44, %c0_45] : memref<1x128xf32, #tpu.memory_space<vmem>>, vector<1x128xf32>
    %23 = vector.broadcast %22 : vector<1x128xf32> to vector<160x128xf32>
    %24 = arith.addf %21, %23 : vector<160x128xf32>
    %cst_46 = arith.constant 0.000000e+00 : f32
    %25 = vector.broadcast %cst_46 : f32 to vector<160x128xf32>
    %26 = arith.maximumf %24, %25 : vector<160x128xf32>
    %27 = vector.shape_cast %26 : vector<160x128xf32> to vector<10x16x128xf32>
    %28 = tpu.iota {dimensions = array<i32: 0>} : vector<10x16x128xi32>
    %c8_i32 = arith.constant 8 : i32
    %29 = arith.muli %arg1, %c8_i32 : i32
    %30 = vector.broadcast %29 : i32 to vector<10x16x128xi32>
    %31 = arith.addi %30, %28 : vector<10x16x128xi32>
    %c1_i32 = arith.constant 1 : i32
    %32 = vector.broadcast %c1_i32 : i32 to vector<10x16x128xi32>
    %33 = arith.subi %31, %32 : vector<10x16x128xi32>
    %c0_i32 = arith.constant 0 : i32
    %34 = vector.broadcast %c0_i32 : i32 to vector<10x16x128xi32>
    %35 = arith.cmpi sge, %33, %34 : vector<10x16x128xi32>
    %c16_i32 = arith.constant 16 : i32
    %36 = vector.broadcast %c16_i32 : i32 to vector<10x16x128xi32>
    %37 = arith.cmpi slt, %33, %36 : vector<10x16x128xi32>
    %38 = arith.andi %35, %37 : vector<10x16x128xi1>
    %cst_47 = arith.constant 0.000000e+00 : f32
    %39 = vector.broadcast %cst_47 : f32 to vector<10x16x128xf32>
    %40 = arith.select %38, %27, %39 : vector<10x16x128xi1>, vector<10x16x128xf32>
    %cst_48 = arith.constant 0.000000e+00 : bf16
    %41 = vector.broadcast %cst_48 : bf16 to vector<10x1x128xbf16>
    %c0_49 = arith.constant 0 : index
    %c7 = arith.constant 7 : index
    %c0_50 = arith.constant 0 : index
    %42 = vector.load %arg8[%c0_49, %c7, %c0_50] : memref<10x25x128xbf16, #tpu.memory_space<vmem>>, vector<10x1x128xbf16>
    tpu.vector_store %arg8[%c0_49, %c7, %c0_50], %41 {strides = array<i32>} : memref<10x25x128xbf16, #tpu.memory_space<vmem>>, vector<10x1x128xbf16>,
    %c0_51 = arith.constant 0 : index
    %c24 = arith.constant 24 : index
    %c0_52 = arith.constant 0 : index
    %43 = vector.load %arg8[%c0_51, %c24, %c0_52] : memref<10x25x128xbf16, #tpu.memory_space<vmem>>, vector<10x1x128xbf16>
    tpu.vector_store %arg8[%c0_51, %c24, %c0_52], %41 {strides = array<i32>} : memref<10x25x128xbf16, #tpu.memory_space<vmem>>, vector<10x1x128xbf16>,
    %44 = arith.truncf %40 : vector<10x16x128xf32> to vector<10x16x128xbf16>
    %c0_53 = arith.constant 0 : index
    %c8 = arith.constant 8 : index
    %c0_54 = arith.constant 0 : index
    %45 = vector.load %arg8[%c0_53, %c8, %c0_54] : memref<10x25x128xbf16, #tpu.memory_space<vmem>>, vector<10x16x128xbf16>
    tpu.vector_store %arg8[%c0_53, %c8, %c0_54], %44 {strides = array<i32>} : memref<10x25x128xbf16, #tpu.memory_space<vmem>>, vector<10x16x128xbf16>,
    %c0_55 = arith.constant 0 : index
    %c7_56 = arith.constant 7 : index
    %c0_57 = arith.constant 0 : index
    %46 = vector.load %arg8[%c0_55, %c7_56, %c0_57] : memref<10x25x128xbf16, #tpu.memory_space<vmem>>, vector<8x16x128xbf16>
    %c0_58 = arith.constant 0 : index
    %c8_59 = arith.constant 8 : index
    %c0_60 = arith.constant 0 : index
    %47 = vector.load %arg8[%c0_58, %c8_59, %c0_60] : memref<10x25x128xbf16, #tpu.memory_space<vmem>>, vector<8x16x128xbf16>
    %c0_61 = arith.constant 0 : index
    %c9 = arith.constant 9 : index
    %c0_62 = arith.constant 0 : index
    %48 = vector.load %arg8[%c0_61, %c9, %c0_62] : memref<10x25x128xbf16, #tpu.memory_space<vmem>>, vector<8x16x128xbf16>
    %c1_63 = arith.constant 1 : index
    %c7_64 = arith.constant 7 : index
    %c0_65 = arith.constant 0 : index
    %49 = vector.load %arg8[%c1_63, %c7_64, %c0_65] : memref<10x25x128xbf16, #tpu.memory_space<vmem>>, vector<8x16x128xbf16>
    %c1_66 = arith.constant 1 : index
    %c8_67 = arith.constant 8 : index
    %c0_68 = arith.constant 0 : index
    %50 = vector.load %arg8[%c1_66, %c8_67, %c0_68] : memref<10x25x128xbf16, #tpu.memory_space<vmem>>, vector<8x16x128xbf16>
    %c1_69 = arith.constant 1 : index
    %c9_70 = arith.constant 9 : index
    %c0_71 = arith.constant 0 : index
    %51 = vector.load %arg8[%c1_69, %c9_70, %c0_71] : memref<10x25x128xbf16, #tpu.memory_space<vmem>>, vector<8x16x128xbf16>
    %c2_72 = arith.constant 2 : index
    %c7_73 = arith.constant 7 : index
    %c0_74 = arith.constant 0 : index
    %52 = vector.load %arg8[%c2_72, %c7_73, %c0_74] : memref<10x25x128xbf16, #tpu.memory_space<vmem>>, vector<8x16x128xbf16>
    %c2_75 = arith.constant 2 : index
    %c8_76 = arith.constant 8 : index
    %c0_77 = arith.constant 0 : index
    %53 = vector.load %arg8[%c2_75, %c8_76, %c0_77] : memref<10x25x128xbf16, #tpu.memory_space<vmem>>, vector<8x16x128xbf16>
    %c2_78 = arith.constant 2 : index
    %c9_79 = arith.constant 9 : index
    %c0_80 = arith.constant 0 : index
    %54 = vector.load %arg8[%c2_78, %c9_79, %c0_80] : memref<10x25x128xbf16, #tpu.memory_space<vmem>>, vector<8x16x128xbf16>
    %55 = tpu.concatenate %46, %47, %48, %49, %50, %51, %52, %53, %54 in 2 : vector<8x16x128xbf16>, vector<8x16x128xbf16>, vector<8x16x128xbf16>, vector<8x16x128xbf16>, vector<8x16x128xbf16>, vector<8x16x128xbf16>, vector<8x16x128xbf16>, vector<8x16x128xbf16>, vector<8x16x128xbf16> -> vector<8x16x1152xbf16>
    %56 = vector.shape_cast %55 : vector<8x16x1152xbf16> to vector<128x1152xbf16>
    %c0_81 = arith.constant 0 : index
    %c0_82 = arith.constant 0 : index
    %57 = vector.load %arg5[%c0_81, %c0_82] : memref<1152x128xbf16, #tpu.memory_space<vmem>>, vector<1152x128xbf16>
    %cst_83 = arith.constant dense<0.000000e+00> : vector<128x128xf32>
    %58 = tpu.matmul %56, %57, %cst_83 {dimension_numbers = #tpu.dot_dimension_numbers<[1], [0], [0], [1], [0, 0, 1, 1], [], []>} : vector<128x1152xbf16>, vector<1152x128xbf16>, vector<128x128xf32> -> vector<128x128xf32>
    %c0_84 = arith.constant 0 : index
    %c0_85 = arith.constant 0 : index
    %59 = vector.load %arg6[%c0_84, %c0_85] : memref<1x128xf32, #tpu.memory_space<vmem>>, vector<1x128xf32>
    %60 = vector.broadcast %59 : vector<1x128xf32> to vector<128x128xf32>
    %61 = arith.addf %58, %60 : vector<128x128xf32>
    %cst_86 = arith.constant 0.000000e+00 : f32
    %62 = vector.broadcast %cst_86 : f32 to vector<128x128xf32>
    %63 = arith.maximumf %61, %62 : vector<128x128xf32>
    %64 = vector.shape_cast %63 : vector<128x128xf32> to vector<8x16x128xf32>
    %c0_87 = arith.constant 0 : index
    %c0_88 = arith.constant 0 : index
    %c0_89 = arith.constant 0 : index
    %c0_90 = arith.constant 0 : index
    %c0_91 = arith.constant 0 : index
    %65 = vector.load %arg7[%c0_87, %c0_88, %c0_89, %c0_90, %c0_91] : memref<1x1x8x16x128xf32, #tpu.memory_space<vmem>>, vector<1x1x8x16x128xf32>
    %66 = vector.shape_cast %65 : vector<1x1x8x16x128xf32> to vector<8x16x128xf32>
    %67 = vector.shape_cast %64 : vector<8x16x128xf32> to vector<1x1x8x16x128xf32>
    tpu.vector_store %arg7[%c0_87, %c0_88, %c0_89, %c0_90, %c0_91], %67 {strides = array<i32>} : memref<1x1x8x16x128xf32, #tpu.memory_space<vmem>>, vector<1x1x8x16x128xf32>,
    return
  }
  func.func @transform_0(%arg0: i32, %arg1: i32) -> (i32, i32, i32, i32, i32) {
    %c0_i32 = arith.constant 0 : i32
    %c0_i32_0 = arith.constant 0 : i32
    %c0_i32_1 = arith.constant 0 : i32
    %c0_i32_2 = arith.constant 0 : i32
    return %arg0, %arg1, %c0_i32, %c0_i32_0, %c0_i32_1 : i32, i32, i32, i32, i32
  }
  func.func @transform_1(%arg0: i32, %arg1: i32) -> (i32, i32) {
    %c0_i32 = arith.constant 0 : i32
    %c0_i32_0 = arith.constant 0 : i32
    %c0_i32_1 = arith.constant 0 : i32
    return %c0_i32, %c0_i32_0 : i32, i32
  }
  func.func @transform_2(%arg0: i32, %arg1: i32) -> (i32, i32) {
    %c0_i32 = arith.constant 0 : i32
    %c0_i32_0 = arith.constant 0 : i32
    %c0_i32_1 = arith.constant 0 : i32
    return %c0_i32, %c0_i32_0 : i32, i32
  }
  func.func @transform_3(%arg0: i32, %arg1: i32) -> (i32, i32) {
    %c0_i32 = arith.constant 0 : i32
    %c0_i32_0 = arith.constant 0 : i32
    %c0_i32_1 = arith.constant 0 : i32
    return %c0_i32, %c0_i32_0 : i32, i32
  }
  func.func @transform_4(%arg0: i32, %arg1: i32) -> (i32, i32) {
    %c0_i32 = arith.constant 0 : i32
    %c0_i32_0 = arith.constant 0 : i32
    %c0_i32_1 = arith.constant 0 : i32
    return %c0_i32, %c0_i32_0 : i32, i32
  }
  func.func @transform_5(%arg0: i32, %arg1: i32) -> (i32, i32, i32, i32, i32) {
    %c0_i32 = arith.constant 0 : i32
    %c0_i32_0 = arith.constant 0 : i32
    %c0_i32_1 = arith.constant 0 : i32
    %c0_i32_2 = arith.constant 0 : i32
    return %arg0, %arg1, %c0_i32, %c0_i32_0, %c0_i32_1 : i32, i32, i32, i32, i32
  }
}

module attributes {stable_mosaic.version = 11 : i64} {
  func.func @_double_conv_kernel(%arg0: i32, %arg1: i32, %arg2: memref<1x1x12x18x4xbf16, #tpu.memory_space<vmem>>, %arg3: memref<36x128xbf16, #tpu.memory_space<vmem>>, %arg4: memref<1x128xf32, #tpu.memory_space<vmem>>, %arg5: memref<1152x128xbf16, #tpu.memory_space<vmem>>, %arg6: memref<1x128xf32, #tpu.memory_space<vmem>>, %arg7: memref<1x1x8x16x128xf32, #tpu.memory_space<vmem>>, %arg8: memref<10x25x128xbf16, #tpu.memory_space<vmem>>) attributes {dimension_semantics = [#tpu.dimension_semantics<parallel>, #tpu.dimension_semantics<parallel>], iteration_bounds = array<i64: 2, 2>, scalar_prefetch = 0 : i64, scratch_operands = 1 : i64, tpu.core_type = #tpu.core_type<tc>, window_params = [{transform_indices = @transform_0, window_bounds = array<i64: 1, 1, 12, 18, 4>}, {pipeline_mode = #tpu.pipeline_mode<synchronous>, transform_indices = @transform_1, window_bounds = array<i64: 36, 128>}, {pipeline_mode = #tpu.pipeline_mode<synchronous>, transform_indices = @transform_2, window_bounds = array<i64: 1, 128>}, {pipeline_mode = #tpu.pipeline_mode<synchronous>, transform_indices = @transform_3, window_bounds = array<i64: 1152, 128>}, {pipeline_mode = #tpu.pipeline_mode<synchronous>, transform_indices = @transform_4, window_bounds = array<i64: 1, 128>}, {transform_indices = @transform_5, window_bounds = array<i64: 1, 1, 8, 16, 128>}]} {
    %c0 = arith.constant 0 : index
    %c0_0 = arith.constant 0 : index
    %c0_1 = arith.constant 0 : index
    %c0_2 = arith.constant 0 : index
    %c0_3 = arith.constant 0 : index
    %0 = vector.load %arg2[%c0, %c0_0, %c0_1, %c0_2, %c0_3] : memref<1x1x12x18x4xbf16, #tpu.memory_space<vmem>>, vector<1x1x10x16x4xbf16>
    %1 = vector.shape_cast %0 : vector<1x1x10x16x4xbf16> to vector<10x16x4xbf16>
    %c0_4 = arith.constant 0 : index
    %c0_5 = arith.constant 0 : index
    %c0_6 = arith.constant 0 : index
    %c1 = arith.constant 1 : index
    %c0_7 = arith.constant 0 : index
    %2 = vector.load %arg2[%c0_4, %c0_5, %c0_6, %c1, %c0_7] : memref<1x1x12x18x4xbf16, #tpu.memory_space<vmem>>, vector<1x1x10x16x4xbf16>
    %3 = vector.shape_cast %2 : vector<1x1x10x16x4xbf16> to vector<10x16x4xbf16>
    %c0_8 = arith.constant 0 : index
    %c0_9 = arith.constant 0 : index
    %c0_10 = arith.constant 0 : index
    %c2 = arith.constant 2 : index
    %c0_11 = arith.constant 0 : index
    %4 = vector.load %arg2[%c0_8, %c0_9, %c0_10, %c2, %c0_11] : memref<1x1x12x18x4xbf16, #tpu.memory_space<vmem>>, vector<1x1x10x16x4xbf16>
    %5 = vector.shape_cast %4 : vector<1x1x10x16x4xbf16> to vector<10x16x4xbf16>
    %c0_12 = arith.constant 0 : index
    %c0_13 = arith.constant 0 : index
    %c1_14 = arith.constant 1 : index
    %c0_15 = arith.constant 0 : index
    %c0_16 = arith.constant 0 : index
    %6 = vector.load %arg2[%c0_12, %c0_13, %c1_14, %c0_15, %c0_16] : memref<1x1x12x18x4xbf16, #tpu.memory_space<vmem>>, vector<1x1x10x16x4xbf16>
    %7 = vector.shape_cast %6 : vector<1x1x10x16x4xbf16> to vector<10x16x4xbf16>
    %c0_17 = arith.constant 0 : index
    %c0_18 = arith.constant 0 : index
    %c1_19 = arith.constant 1 : index
    %c1_20 = arith.constant 1 : index
    %c0_21 = arith.constant 0 : index
    %8 = vector.load %arg2[%c0_17, %c0_18, %c1_19, %c1_20, %c0_21] : memref<1x1x12x18x4xbf16, #tpu.memory_space<vmem>>, vector<1x1x10x16x4xbf16>
    %9 = vector.shape_cast %8 : vector<1x1x10x16x4xbf16> to vector<10x16x4xbf16>
    %c0_22 = arith.constant 0 : index
    %c0_23 = arith.constant 0 : index
    %c1_24 = arith.constant 1 : index
    %c2_25 = arith.constant 2 : index
    %c0_26 = arith.constant 0 : index
    %10 = vector.load %arg2[%c0_22, %c0_23, %c1_24, %c2_25, %c0_26] : memref<1x1x12x18x4xbf16, #tpu.memory_space<vmem>>, vector<1x1x10x16x4xbf16>
    %11 = vector.shape_cast %10 : vector<1x1x10x16x4xbf16> to vector<10x16x4xbf16>
    %c0_27 = arith.constant 0 : index
    %c0_28 = arith.constant 0 : index
    %c2_29 = arith.constant 2 : index
    %c0_30 = arith.constant 0 : index
    %c0_31 = arith.constant 0 : index
    %12 = vector.load %arg2[%c0_27, %c0_28, %c2_29, %c0_30, %c0_31] : memref<1x1x12x18x4xbf16, #tpu.memory_space<vmem>>, vector<1x1x10x16x4xbf16>
    %13 = vector.shape_cast %12 : vector<1x1x10x16x4xbf16> to vector<10x16x4xbf16>
    %c0_32 = arith.constant 0 : index
    %c0_33 = arith.constant 0 : index
    %c2_34 = arith.constant 2 : index
    %c1_35 = arith.constant 1 : index
    %c0_36 = arith.constant 0 : index
    %14 = vector.load %arg2[%c0_32, %c0_33, %c2_34, %c1_35, %c0_36] : memref<1x1x12x18x4xbf16, #tpu.memory_space<vmem>>, vector<1x1x10x16x4xbf16>
    %15 = vector.shape_cast %14 : vector<1x1x10x16x4xbf16> to vector<10x16x4xbf16>
    %c0_37 = arith.constant 0 : index
    %c0_38 = arith.constant 0 : index
    %c2_39 = arith.constant 2 : index
    %c2_40 = arith.constant 2 : index
    %c0_41 = arith.constant 0 : index
    %16 = vector.load %arg2[%c0_37, %c0_38, %c2_39, %c2_40, %c0_41] : memref<1x1x12x18x4xbf16, #tpu.memory_space<vmem>>, vector<1x1x10x16x4xbf16>
    %17 = vector.shape_cast %16 : vector<1x1x10x16x4xbf16> to vector<10x16x4xbf16>
    %18 = tpu.concatenate %1, %3, %5, %7, %9, %11, %13, %15, %17 in 2 : vector<10x16x4xbf16>, vector<10x16x4xbf16>, vector<10x16x4xbf16>, vector<10x16x4xbf16>, vector<10x16x4xbf16>, vector<10x16x4xbf16>, vector<10x16x4xbf16>, vector<10x16x4xbf16>, vector<10x16x4xbf16> -> vector<10x16x36xbf16>
    %19 = vector.shape_cast %18 : vector<10x16x36xbf16> to vector<160x36xbf16>
    %c0_42 = arith.constant 0 : index
    %c0_43 = arith.constant 0 : index
    %20 = vector.load %arg3[%c0_42, %c0_43] : memref<36x128xbf16, #tpu.memory_space<vmem>>, vector<36x128xbf16>
    %cst = arith.constant dense<0.000000e+00> : vector<160x128xf32>
    %21 = tpu.matmul %19, %20, %cst {dimension_numbers = #tpu.dot_dimension_numbers<[1], [0], [0], [1], [0, 0, 1, 1], [], []>} : vector<160x36xbf16>, vector<36x128xbf16>, vector<160x128xf32> -> vector<160x128xf32>
    %c0_44 = arith.constant 0 : index
    %c0_45 = arith.constant 0 : index
    %22 = vector.load %arg4[%c0_44, %c0_45] : memref<1x128xf32, #tpu.memory_space<vmem>>, vector<1x128xf32>
    %23 = vector.broadcast %22 : vector<1x128xf32> to vector<160x128xf32>
    %24 = arith.addf %21, %23 : vector<160x128xf32>
    %cst_46 = arith.constant 0.000000e+00 : f32
    %25 = vector.broadcast %cst_46 : f32 to vector<160x128xf32>
    %26 = arith.maximumf %24, %25 : vector<160x128xf32>
    %27 = vector.shape_cast %26 : vector<160x128xf32> to vector<10x16x128xf32>
    %28 = tpu.iota {dimensions = array<i32: 0>} : vector<10x16x128xi32>
    %c8_i32 = arith.constant 8 : i32
    %29 = arith.muli %arg1, %c8_i32 : i32
    %30 = vector.broadcast %29 : i32 to vector<10x16x128xi32>
    %31 = arith.addi %30, %28 : vector<10x16x128xi32>
    %c1_i32 = arith.constant 1 : i32
    %32 = vector.broadcast %c1_i32 : i32 to vector<10x16x128xi32>
    %33 = arith.subi %31, %32 : vector<10x16x128xi32>
    %c0_i32 = arith.constant 0 : i32
    %34 = vector.broadcast %c0_i32 : i32 to vector<10x16x128xi32>
    %35 = arith.cmpi sge, %33, %34 : vector<10x16x128xi32>
    %c16_i32 = arith.constant 16 : i32
    %36 = vector.broadcast %c16_i32 : i32 to vector<10x16x128xi32>
    %37 = arith.cmpi slt, %33, %36 : vector<10x16x128xi32>
    %38 = arith.andi %35, %37 : vector<10x16x128xi1>
    %cst_47 = arith.constant 0.000000e+00 : f32
    %39 = vector.broadcast %cst_47 : f32 to vector<10x16x128xf32>
    %40 = arith.select %38, %27, %39 : vector<10x16x128xi1>, vector<10x16x128xf32>
    %cst_48 = arith.constant 0.000000e+00 : bf16
    %41 = vector.broadcast %cst_48 : bf16 to vector<10x1x128xbf16>
    %c0_49 = arith.constant 0 : index
    %c7 = arith.constant 7 : index
    %c0_50 = arith.constant 0 : index
    %42 = vector.load %arg8[%c0_49, %c7, %c0_50] : memref<10x25x128xbf16, #tpu.memory_space<vmem>>, vector<10x1x128xbf16>
    tpu.vector_store %arg8[%c0_49, %c7, %c0_50], %41 {strides = array<i32>} : memref<10x25x128xbf16, #tpu.memory_space<vmem>>, vector<10x1x128xbf16>,
    %c0_51 = arith.constant 0 : index
    %c24 = arith.constant 24 : index
    %c0_52 = arith.constant 0 : index
    %43 = vector.load %arg8[%c0_51, %c24, %c0_52] : memref<10x25x128xbf16, #tpu.memory_space<vmem>>, vector<10x1x128xbf16>
    tpu.vector_store %arg8[%c0_51, %c24, %c0_52], %41 {strides = array<i32>} : memref<10x25x128xbf16, #tpu.memory_space<vmem>>, vector<10x1x128xbf16>,
    %44 = arith.truncf %40 : vector<10x16x128xf32> to vector<10x16x128xbf16>
    %c0_53 = arith.constant 0 : index
    %c8 = arith.constant 8 : index
    %c0_54 = arith.constant 0 : index
    %45 = vector.load %arg8[%c0_53, %c8, %c0_54] : memref<10x25x128xbf16, #tpu.memory_space<vmem>>, vector<10x16x128xbf16>
    tpu.vector_store %arg8[%c0_53, %c8, %c0_54], %44 {strides = array<i32>} : memref<10x25x128xbf16, #tpu.memory_space<vmem>>, vector<10x16x128xbf16>,
    %c0_55 = arith.constant 0 : index
    %c7_56 = arith.constant 7 : index
    %c0_57 = arith.constant 0 : index
    %46 = vector.load %arg8[%c0_55, %c7_56, %c0_57] : memref<10x25x128xbf16, #tpu.memory_space<vmem>>, vector<8x16x128xbf16>
    %c0_58 = arith.constant 0 : index
    %c8_59 = arith.constant 8 : index
    %c0_60 = arith.constant 0 : index
    %47 = vector.load %arg8[%c0_58, %c8_59, %c0_60] : memref<10x25x128xbf16, #tpu.memory_space<vmem>>, vector<8x16x128xbf16>
    %c0_61 = arith.constant 0 : index
    %c9 = arith.constant 9 : index
    %c0_62 = arith.constant 0 : index
    %48 = vector.load %arg8[%c0_61, %c9, %c0_62] : memref<10x25x128xbf16, #tpu.memory_space<vmem>>, vector<8x16x128xbf16>
    %c1_63 = arith.constant 1 : index
    %c7_64 = arith.constant 7 : index
    %c0_65 = arith.constant 0 : index
    %49 = vector.load %arg8[%c1_63, %c7_64, %c0_65] : memref<10x25x128xbf16, #tpu.memory_space<vmem>>, vector<8x16x128xbf16>
    %c1_66 = arith.constant 1 : index
    %c8_67 = arith.constant 8 : index
    %c0_68 = arith.constant 0 : index
    %50 = vector.load %arg8[%c1_66, %c8_67, %c0_68] : memref<10x25x128xbf16, #tpu.memory_space<vmem>>, vector<8x16x128xbf16>
    %c1_69 = arith.constant 1 : index
    %c9_70 = arith.constant 9 : index
    %c0_71 = arith.constant 0 : index
    %51 = vector.load %arg8[%c1_69, %c9_70, %c0_71] : memref<10x25x128xbf16, #tpu.memory_space<vmem>>, vector<8x16x128xbf16>
    %c2_72 = arith.constant 2 : index
    %c7_73 = arith.constant 7 : index
    %c0_74 = arith.constant 0 : index
    %52 = vector.load %arg8[%c2_72, %c7_73, %c0_74] : memref<10x25x128xbf16, #tpu.memory_space<vmem>>, vector<8x16x128xbf16>
    %c2_75 = arith.constant 2 : index
    %c8_76 = arith.constant 8 : index
    %c0_77 = arith.constant 0 : index
    %53 = vector.load %arg8[%c2_75, %c8_76, %c0_77] : memref<10x25x128xbf16, #tpu.memory_space<vmem>>, vector<8x16x128xbf16>
    %c2_78 = arith.constant 2 : index
    %c9_79 = arith.constant 9 : index
    %c0_80 = arith.constant 0 : index
    %54 = vector.load %arg8[%c2_78, %c9_79, %c0_80] : memref<10x25x128xbf16, #tpu.memory_space<vmem>>, vector<8x16x128xbf16>
    %55 = tpu.concatenate %46, %47, %48, %49, %50, %51, %52, %53, %54 in 2 : vector<8x16x128xbf16>, vector<8x16x128xbf16>, vector<8x16x128xbf16>, vector<8x16x128xbf16>, vector<8x16x128xbf16>, vector<8x16x128xbf16>, vector<8x16x128xbf16>, vector<8x16x128xbf16>, vector<8x16x128xbf16> -> vector<8x16x1152xbf16>
    %56 = vector.shape_cast %55 : vector<8x16x1152xbf16> to vector<128x1152xbf16>
    %c0_81 = arith.constant 0 : index
    %c0_82 = arith.constant 0 : index
    %57 = vector.load %arg5[%c0_81, %c0_82] : memref<1152x128xbf16, #tpu.memory_space<vmem>>, vector<1152x128xbf16>
    %cst_83 = arith.constant dense<0.000000e+00> : vector<128x128xf32>
    %58 = tpu.matmul %56, %57, %cst_83 {dimension_numbers = #tpu.dot_dimension_numbers<[1], [0], [0], [1], [0, 0, 1, 1], [], []>} : vector<128x1152xbf16>, vector<1152x128xbf16>, vector<128x128xf32> -> vector<128x128xf32>
    %c0_84 = arith.constant 0 : index
    %c0_85 = arith.constant 0 : index
    %59 = vector.load %arg6[%c0_84, %c0_85] : memref<1x128xf32, #tpu.memory_space<vmem>>, vector<1x128xf32>
    %60 = vector.broadcast %59 : vector<1x128xf32> to vector<128x128xf32>
    %61 = arith.addf %58, %60 : vector<128x128xf32>
    %cst_86 = arith.constant 0.000000e+00 : f32
    %62 = vector.broadcast %cst_86 : f32 to vector<128x128xf32>
    %63 = arith.maximumf %61, %62 : vector<128x128xf32>
    %64 = vector.shape_cast %63 : vector<128x128xf32> to vector<8x16x128xf32>
    %c0_87 = arith.constant 0 : index
    %c0_88 = arith.constant 0 : index
    %c0_89 = arith.constant 0 : index
    %c0_90 = arith.constant 0 : index
    %c0_91 = arith.constant 0 : index
    %65 = vector.load %arg7[%c0_87, %c0_88, %c0_89, %c0_90, %c0_91] : memref<1x1x8x16x128xf32, #tpu.memory_space<vmem>>, vector<1x1x8x16x128xf32>
    %66 = vector.shape_cast %65 : vector<1x1x8x16x128xf32> to vector<8x16x128xf32>
    %67 = vector.shape_cast %64 : vector<8x16x128xf32> to vector<1x1x8x16x128xf32>
    tpu.vector_store %arg7[%c0_87, %c0_88, %c0_89, %c0_90, %c0_91], %67 {strides = array<i32>} : memref<1x1x8x16x128xf32, #tpu.memory_space<vmem>>, vector<1x1x8x16x128xf32>,
    return
  }
  func.func @transform_0(%arg0: i32, %arg1: i32) -> (i32, i32, i32, i32, i32) {
    %c0_i32 = arith.constant 0 : i32
    %c0_i32_0 = arith.constant 0 : i32
    %c0_i32_1 = arith.constant 0 : i32
    %c0_i32_2 = arith.constant 0 : i32
    return %arg0, %arg1, %c0_i32, %c0_i32_0, %c0_i32_1 : i32, i32, i32, i32, i32
  }
  func.func @transform_1(%arg0: i32, %arg1: i32) -> (i32, i32) {
    %c0_i32 = arith.constant 0 : i32
    %c0_i32_0 = arith.constant 0 : i32
    %c0_i32_1 = arith.constant 0 : i32
    return %c0_i32, %c0_i32_0 : i32, i32
  }
  func.func @transform_2(%arg0: i32, %arg1: i32) -> (i32, i32) {
    %c0_i32 = arith.constant 0 : i32
    %c0_i32_0 = arith.constant 0 : i32
    %c0_i32_1 = arith.constant 0 : i32
    return %c0_i32, %c0_i32_0 : i32, i32
  }
  func.func @transform_3(%arg0: i32, %arg1: i32) -> (i32, i32) {
    %c0_i32 = arith.constant 0 : i32
    %c0_i32_0 = arith.constant 0 : i32
    %c0_i32_1 = arith.constant 0 : i32
    return %c0_i32, %c0_i32_0 : i32, i32
  }
  func.func @transform_4(%arg0: i32, %arg1: i32) -> (i32, i32) {
    %c0_i32 = arith.constant 0 : i32
    %c0_i32_0 = arith.constant 0 : i32
    %c0_i32_1 = arith.constant 0 : i32
    return %c0_i32, %c0_i32_0 : i32, i32
  }
  func.func @transform_5(%arg0: i32, %arg1: i32) -> (i32, i32, i32, i32, i32) {
    %c0_i32 = arith.constant 0 : i32
    %c0_i32_0 = arith.constant 0 : i32
    %c0_i32_1 = arith.constant 0 : i32
    %c0_i32_2 = arith.constant 0 : i32
    return %arg0, %arg1, %c0_i32, %c0_i32_0, %c0_i32_1 : i32, i32, i32, i32, i32
  }
}

</mosaic_0001>

<llo_original>
// kernel: tpu_custom_call.1
$region0: #{tpu_custom_call.1}
  #allocation0 [shape = 'u32[]', space=smem, size = 0x4, offset = 0x4, fixed_abs, tag = 'smem constant byte address 0x4 - core index']
  #allocation1 [shape = 'u32[144,128]{1,0:T(1,128)}', space=vmem, size = 0x12000, scoped, tag = 'internal scratch']
  #allocation2 [shape = 'bf16[10,25,128]{2,1,0:T(8,128)(2,1)}', space=vmem, size = 0x14000, scoped, tag = 'scratch operand']
  %s0 = inlined_call_operand.vmem [shape: bf16[2,2,12,18,4], index: 0, kind: input, shape index: {}]
  %s1 = inlined_call_operand.vmem [shape: bf16[36,128], index: 1, kind: input, shape index: {}]
  %s2 = inlined_call_operand.vmem [shape: f32[1,128], index: 2, kind: input, shape index: {}]
  %s3 = inlined_call_operand.vmem [shape: bf16[1152,128], index: 3, kind: input, shape index: {}]
  %s4 = inlined_call_operand.vmem [shape: f32[1,128], index: 4, kind: input, shape index: {}]
  %s5 = inlined_call_operand.hbm [shape: f32[2,2,8,16,128], index: 5, kind: output, shape index: {}]
  %s6 = sld [smem:[#allocation0]]
  $region53: #{tpu_custom_call.1} parent=0
    _
  %s8 = ssub.s32 1, %s6
  %s9 = scalar_select 0, %s8, %s6
  $region1: #{tpu_custom_call.1} parent=0
    #allocation3 [shape = 'u8[131072]{0}', space=vmem, size = 0x20000, scoped, tag = 'output window, operand 0']
    #allocation4 [shape = 's32[2]{0}', space=sflag, size = 0x8, scoped, tag = 'scoped memory for tpu_custom_call.1']
    %10 = vsyncpa [#allocation4], 0
    %s11 = scalar_lea.sflag [#allocation4], 1
    %12 = vsyncpa %s11, 0
    loop: start=0, step=1, limit=6
    $region2: #{tpu_custom_call.1} parent=1 // loop_pre_header
      _
    $region3: #{tpu_custom_call.1} parent=1 // loop_header
      %s14 = sphi 0, %s18
      %p15 = scmp.ge.s32.totalorder %s14, 6
      %s21 = sphi 0, %s33
      %s22 = sphi 0, %s29
      %s23 = sphi 0, %s21
      %s24 = sphi 0, %s22
      %s25 = sphi 0, %s23
      %s26 = sphi 0, %s24
      %s38 = sphi 0, %s40
      %s41 = sphi 0, %s38
      %s42 = sphi 0, %s41
      %s58 = sphi 0, %s42
      %s62 = sphi 0, %s62
      %s64 = sphi 0, %s62
      %s65 = sphi 0, %s64
      %s79 = sphi 0, %s65
      %s83 = sphi 0, %s83
      %s85 = sphi 0, %s83
      %s86 = sphi 0, %s85
      %s100 = sphi 0, %s86
      %s104 = sphi 0, %s104
      %s106 = sphi 0, %s104
      %s107 = sphi 0, %s106
      %s121 = sphi 0, %s107
      %s125 = sphi 0, %s125
      %s127 = sphi 0, %s125
      %s128 = sphi 0, %s127
      %s142 = sphi 0, %s128
      %s150 = sphi 0, %s152
      %s153 = sphi 0, %s150
      %s154 = sphi 0, %s153
      %s170 = sphi 0, %s154
    $region4: #{tpu_custom_call.1} parent=1 // loop_header_branch
      %17 = sbr.rel (%p15) target = $region8
    $region5: #{tpu_custom_call.1} parent=1 // loop_body
      %s19 = ssub.s32 %s14, 1
      %s20 = ssub.s32 %s14, 2
      %s27 = sadd.s32 1, %s22
      %p28 = scmp.ge.s32.totalorder %s27, 2
      %s29 = scalar_select %p28, 0, %s27
      %s30 = sadd.s32 1, %s21
      %s31 = scalar_select %p28, %s30, %s21
      %p32 = scmp.ge.s32.totalorder %s31, 2
      %s33 = scalar_select %p32, 0, %s31
      %s34 = ssub.s32 %s21, %s33
      %s35 = ssub.s32 %s22, %s29
      %s36 = sor.u32 %s34, %s35
      %p37 = scmp.eq.s32.totalorder %s36, 0
      %s39 = sadd.s32 %s38, 1
      %s40 = scalar_select %p37, %s38, %s39
      %p43 = pneg %p37
      %p44 = scmp.eq.s32.totalorder %s14, 3
      %p45 = por %p43, %p44
      %p46 = scmp.ne.s32.totalorder %s38, %s41
      %p47 = scmp.eq.s32.totalorder %s14, 0
      %p48 = por %p46, %p47
      %p49 = scmp.ne.s32.totalorder %s38, %s41
      %p50 = scmp.eq.s32.totalorder %s19, 3
      %p51 = por %p49, %p50
      %p52 = scmp.ne.s32.totalorder %s41, %s42
      %p53 = scmp.eq.s32.totalorder %s19, 0
      %p54 = por %p52, %p53
      %p55 = scmp.ne.s32.totalorder %s41, %s42
      %p56 = scmp.eq.s32.totalorder %s20, 3
      %p57 = por %p55, %p56
      %p59 = scmp.ne.s32.totalorder %s42, %s58
      %p60 = scmp.eq.s32.totalorder %s20, 0
      %p61 = por %p59, %p60
      %s63 = sadd.s32 %s62, 1
      %p66 = scmp.eq.s32.totalorder %s14, 3
      %p67 = scmp.ne.s32.totalorder %s62, %s64
      %p68 = scmp.eq.s32.totalorder %s14, 0
      %p69 = por %p67, %p68
      %p70 = scmp.ne.s32.totalorder %s62, %s64
      %p71 = scmp.eq.s32.totalorder %s19, 3
      %p72 = por %p70, %p71
      %p73 = scmp.ne.s32.totalorder %s64, %s65
      %p74 = scmp.eq.s32.totalorder %s19, 0
      %p75 = por %p73, %p74
      %p76 = scmp.ne.s32.totalorder %s64, %s65
      %p77 = scmp.eq.s32.totalorder %s20, 3
      %p78 = por %p76, %p77
      %p80 = scmp.ne.s32.totalorder %s65, %s79
      %p81 = scmp.eq.s32.totalorder %s20, 0
      %p82 = por %p80, %p81
      %s84 = sadd.s32 %s83, 1
      %p87 = scmp.eq.s32.totalorder %s14, 3
      %p88 = scmp.ne.s32.totalorder %s83, %s85
      %p89 = scmp.eq.s32.totalorder %s14, 0
      %p90 = por %p88, %p89
      %p91 = scmp.ne.s32.totalorder %s83, %s85
      %p92 = scmp.eq.s32.totalorder %s19, 3
      %p93 = por %p91, %p92
      %p94 = scmp.ne.s32.totalorder %s85, %s86
      %p95 = scmp.eq.s32.totalorder %s19, 0
      %p96 = por %p94, %p95
      %p97 = scmp.ne.s32.totalorder %s85, %s86
      %p98 = scmp.eq.s32.totalorder %s20, 3
      %p99 = por %p97, %p98
      %p101 = scmp.ne.s32.totalorder %s86, %s100
      %p102 = scmp.eq.s32.totalorder %s20, 0
      %p103 = por %p101, %p102
      %s105 = sadd.s32 %s104, 1
      %p108 = scmp.eq.s32.totalorder %s14, 3
      %p109 = scmp.ne.s32.totalorder %s104, %s106
      %p110 = scmp.eq.s32.totalorder %s14, 0
      %p111 = por %p109, %p110
      %p112 = scmp.ne.s32.totalorder %s104, %s106
      %p113 = scmp.eq.s32.totalorder %s19, 3
      %p114 = por %p112, %p113
      %p115 = scmp.ne.s32.totalorder %s106, %s107
      %p116 = scmp.eq.s32.totalorder %s19, 0
      %p117 = por %p115, %p116
      %p118 = scmp.ne.s32.totalorder %s106, %s107
      %p119 = scmp.eq.s32.totalorder %s20, 3
      %p120 = por %p118, %p119
      %p122 = scmp.ne.s32.totalorder %s107, %s121
      %p123 = scmp.eq.s32.totalorder %s20, 0
      %p124 = por %p122, %p123
      %s126 = sadd.s32 %s125, 1
      %p129 = scmp.eq.s32.totalorder %s14, 3
      %p130 = scmp.ne.s32.totalorder %s125, %s127
      %p131 = scmp.eq.s32.totalorder %s14, 0
      %p132 = por %p130, %p131
      %p133 = scmp.ne.s32.totalorder %s125, %s127
      %p134 = scmp.eq.s32.totalorder %s19, 3
      %p135 = por %p133, %p134
      %p136 = scmp.ne.s32.totalorder %s127, %s128
      %p137 = scmp.eq.s32.totalorder %s19, 0
      %p138 = por %p136, %p137
      %p139 = scmp.ne.s32.totalorder %s127, %s128
      %p140 = scmp.eq.s32.totalorder %s20, 3
      %p141 = por %p139, %p140
      %p143 = scmp.ne.s32.totalorder %s128, %s142
      %p144 = scmp.eq.s32.totalorder %s20, 0
      %p145 = por %p143, %p144
      %s146 = ssub.s32 %s21, %s33
      %s147 = ssub.s32 %s22, %s29
      %s148 = sor.u32 %s146, %s147
      %p149 = scmp.eq.s32.totalorder %s148, 0
      %s151 = sadd.s32 %s150, 1
      %s152 = scalar_select %p149, %s150, %s151
      %p155 = pneg %p149
      %p156 = scmp.eq.s32.totalorder %s14, 3
      %p157 = por %p155, %p156
      %p158 = scmp.ne.s32.totalorder %s150, %s153
      %p159 = scmp.eq.s32.totalorder %s14, 0
      %p160 = por %p158, %p159
      %p161 = scmp.ne.s32.totalorder %s150, %s153
      %p162 = scmp.eq.s32.totalorder %s19, 3
      %p163 = por %p161, %p162
      %p164 = scmp.ne.s32.totalorder %s153, %s154
      %p165 = scmp.eq.s32.totalorder %s19, 0
      %p166 = por %p164, %p165
      %p167 = scmp.ne.s32.totalorder %s153, %s154
      %p168 = scmp.eq.s32.totalorder %s20, 3
      %p169 = por %p167, %p168
      %p171 = scmp.ne.s32.totalorder %s154, %s170
      %p172 = scmp.eq.s32.totalorder %s20, 0
      %p173 = por %p171, %p172
      %p174 = scmp.le.s32.totalorder 1, %s14
      %p175 = scmp.lt.s32.totalorder %s14, 5
      %p176 = pnand %p174, %p175
      %p177 = pneg %p176
      // Predicated region
      $region9: #{tpu_custom_call.1} parent=5 // pred_check
        _
      $region10: #{tpu_custom_call.1} parent=5 // pred_check_branch
        %179 = sbr.rel (%p176) target = $region12
      $region11: #{tpu_custom_call.1} parent=5 // pred_region
        %s180 = ssub.s32 %s14, 1
        // Predicated region
        $region13: #{tpu_custom_call.1} parent=11 // pred_check
          %p181 = pneg %p75
        $region14: #{tpu_custom_call.1} parent=11 // pred_check_branch
          %183 = sbr.rel (%p181) target = $region16
        $region15: #{tpu_custom_call.1} parent=11 // pred_region
          _
        $region16: #{tpu_custom_call.1} parent=11 // pred_fallthru
          _
        // Predicated region
        $region17: #{tpu_custom_call.1} parent=11 // pred_check
          %p184 = pneg %p96
        $region18: #{tpu_custom_call.1} parent=11 // pred_check_branch
          %186 = sbr.rel (%p184) target = $region20
        $region19: #{tpu_custom_call.1} parent=11 // pred_region
          _
        $region20: #{tpu_custom_call.1} parent=11 // pred_fallthru
          _
        // Predicated region
        $region21: #{tpu_custom_call.1} parent=11 // pred_check
          %p187 = pneg %p117
        $region22: #{tpu_custom_call.1} parent=11 // pred_check_branch
          %189 = sbr.rel (%p187) target = $region24
        $region23: #{tpu_custom_call.1} parent=11 // pred_region
          _
        $region24: #{tpu_custom_call.1} parent=11 // pred_fallthru
          _
        // Predicated region
        $region25: #{tpu_custom_call.1} parent=11 // pred_check
          %p190 = pneg %p138
        $region26: #{tpu_custom_call.1} parent=11 // pred_check_branch
          %192 = sbr.rel (%p190) target = $region28
        $region27: #{tpu_custom_call.1} parent=11 // pred_region
          _
        $region28: #{tpu_custom_call.1} parent=11 // pred_fallthru
          _
      $region12: #{tpu_custom_call.1} parent=5 // pred_fallthru
        _
      %p193 = scmp.lt.s32.totalorder %s14, 4
      // Predicated region
      $region29: #{tpu_custom_call.1} parent=5 // pred_check
        %p194 = pneg %p193
      $region30: #{tpu_custom_call.1} parent=5 // pred_check_branch
        %196 = sbr.rel (%p194) target = $region32
      $region31: #{tpu_custom_call.1} parent=5 // pred_region
        // Predicated region
        $region33: #{tpu_custom_call.1} parent=31 // pred_check
          %p197 = pneg %p48
        $region34: #{tpu_custom_call.1} parent=31 // pred_check_branch
          %199 = sbr.rel (%p197) target = $region36
        $region35: #{tpu_custom_call.1} parent=31 // pred_region
          %p200 = scmp.lt.s32.totalorder %s21, 1
          %s201 = scalar_select %p200, %s21, 1
          %p202 = scmp.lt.s32.totalorder %s22, 1
          %s203 = scalar_select %p202, %s22, 1
          %s204 = smul.addr %s203, 36
          %s205 = smul.addr %s201, 72
          %s206 = sadd.s32 %s204, %s205
          %s207 = smul.addr %s206, 4
          %s208 = scalar_lea.vmem %s0, %s207
        $region36: #{tpu_custom_call.1} parent=31 // pred_fallthru
          _
      $region32: #{tpu_custom_call.1} parent=5 // pred_fallthru
        _
      %p209 = scmp.le.s32.totalorder 1, %s14
      %p210 = scmp.lt.s32.totalorder %s14, 5
      %p211 = pnand %p209, %p210
      %p212 = pneg %p211
      // Predicated region
      $region37: #{tpu_custom_call.1} parent=5 // pred_check
        _
      $region38: #{tpu_custom_call.1} parent=5 // pred_check_branch
        %214 = sbr.rel (%p211) target = $region40
      $region39: #{tpu_custom_call.1} parent=5 // pred_region
        %s215 = ssub.s32 %s14, 1
        %p216 = scmp.lt.s32.totalorder %s23, 1
        %s217 = scalar_select %p216, %s23, 1
        %p218 = scmp.lt.s32.totalorder %s24, 1
        %s219 = scalar_select %p218, %s24, 1
        %s220 = smul.addr %s219, 36
        %s221 = smul.addr %s217, 72
        %s222 = sadd.s32 %s220, %s221
        %s223 = smul.addr %s222, 4
        %s224 = scalar_lea.vmem %s0, %s223
        %p225 = pneg %p54
        %p226 = pneg %p51
        %p227 = pneg %p75
        %p228 = pneg %p72
        %p229 = pneg %p96
        %p230 = pneg %p93
        %p231 = pneg %p117
        %p232 = pneg %p114
        %p233 = pneg %p138
        %p234 = pneg %p135
        %p235 = pneg %p166
        %p236 = pneg %p163
        %s237 = sand.u32 %s153, 1
        %s238 = scalar_lea.sflag [#allocation4], %s237
        %s239 = sand.u32 %s153, 1
        %s240 = smul.addr %s239, 128
        %s241 = scalar_lea.vmem [#allocation3], %s240
        %p242 = scmp.lt.s32.totalorder %s23, 1
        %s243 = scalar_select %p242, %s23, 1
        %p244 = scmp.lt.s32.totalorder %s24, 1
        %s245 = scalar_select %p244, %s24, 1
        %s246 = smul.addr %s245, 36
        %s247 = smul.addr %s243, 72
        %s248 = sadd.s32 %s246, %s247
        %s249 = smul.addr %s248, 4
        %s250 = scalar_lea.vmem %s0, %s249
        %v252 = vld [vmem:[%s250] sm:$0xf]
        %v253 = vld [vmem:[%s250 + $0x4] sm:$0xf]
        %v254 = vld [vmem:[%s250 + $0xc] sm:$0xf]
        %v255 = vld [vmem:[%s250 + $0x10] sm:$0xf]
        %v256 = vld [vmem:[%s250 + $0x18] sm:$0xf]
        %v257 = vld [vmem:[%s250 + $0x1c] sm:$0xf]
        %v258 = vld [vmem:[%s250 + $0x24] sm:$0xf]
        %v259 = vld [vmem:[%s250 + $0x28] sm:$0xf]
        %v260 = vld [vmem:[%s250 + $0x30] sm:$0xf]
        %v261 = vld [vmem:[%s250 + $0x34] sm:$0xf]
        %v262 = vld [vmem:[%s250 + $0x3c] sm:$0xf]
        %v263 = vld [vmem:[%s250 + $0x40] sm:$0xf]
        %v264 = vld [vmem:[%s250 + $0x48] sm:$0xf]
        %v265 = vld [vmem:[%s250 + $0x4c] sm:$0xf]
        %v266 = vld [vmem:[%s250 + $0x54] sm:$0xf]
        %v267 = vld [vmem:[%s250 + $0x58] sm:$0xf]
        %v268 = vld [vmem:[%s250 + $0x60] sm:$0xf]
        %v269 = vld [vmem:[%s250 + $0x64] sm:$0xf]
        %v270 = vld [vmem:[%s250 + $0x6c] sm:$0xf]
        %v271 = vld [vmem:[%s250 + $0x70] sm:$0xf]
        %v272 = vld [vmem:[%s250 + $0x8] sm:$0x1]
        %v273 = vld [vmem:[%s250 + $0x14] sm:$0x1]
        %v274 = vld [vmem:[%s250 + $0x20] sm:$0x1]
        %v275 = vld [vmem:[%s250 + $0x2c] sm:$0x1]
        %v276 = vld [vmem:[%s250 + $0x38] sm:$0x1]
        %v277 = vld [vmem:[%s250 + $0x44] sm:$0x1]
        %v278 = vld [vmem:[%s250 + $0x50] sm:$0x1]
        %v279 = vld [vmem:[%s250 + $0x5c] sm:$0x1]
        %v280 = vld [vmem:[%s250 + $0x68] sm:$0x1]
        %v281 = vld [vmem:[%s250 + $0x74] sm:$0x1]
        %v282 = vld [vmem:[%s250] sm:$0xe]
        %v283 = vld [vmem:[%s250 + $0xc] sm:$0xe]
        %v284 = vld [vmem:[%s250 + $0x18] sm:$0xe]
        %v285 = vld [vmem:[%s250 + $0x24] sm:$0xe]
        %v286 = vld [vmem:[%s250 + $0x30] sm:$0xe]
        %v287 = vld [vmem:[%s250 + $0x3c] sm:$0xe]
        %v288 = vld [vmem:[%s250 + $0x48] sm:$0xe]
        %v289 = vld [vmem:[%s250 + $0x54] sm:$0xe]
        %v290 = vld [vmem:[%s250 + $0x60] sm:$0xe]
        %v291 = vld [vmem:[%s250 + $0x6c] sm:$0xe]
        %s292 = scalar_lea.vmem %s250, 12
        %v293 = vld [vmem:[%s292] sm:$0xf]
        %v294 = vld [vmem:[%s292 + $0x4] sm:$0xf]
        %v295 = vld [vmem:[%s292 + $0xc] sm:$0xf]
        %v296 = vld [vmem:[%s292 + $0x10] sm:$0xf]
        %v297 = vld [vmem:[%s292 + $0x18] sm:$0xf]
        %v298 = vld [vmem:[%s292 + $0x1c] sm:$0xf]
        %v299 = vld [vmem:[%s292 + $0x24] sm:$0xf]
        %v300 = vld [vmem:[%s292 + $0x28] sm:$0xf]
        %v301 = vld [vmem:[%s292 + $0x30] sm:$0xf]
        %v302 = vld [vmem:[%s292 + $0x34] sm:$0xf]
        %v303 = vld [vmem:[%s292 + $0x3c] sm:$0xf]
        %v304 = vld [vmem:[%s292 + $0x40] sm:$0xf]
        %v305 = vld [vmem:[%s292 + $0x48] sm:$0xf]
        %v306 = vld [vmem:[%s292 + $0x4c] sm:$0xf]
        %v307 = vld [vmem:[%s292 + $0x54] sm:$0xf]
        %v308 = vld [vmem:[%s292 + $0x58] sm:$0xf]
        %v309 = vld [vmem:[%s292 + $0x60] sm:$0xf]
        %v310 = vld [vmem:[%s292 + $0x64] sm:$0xf]
        %v311 = vld [vmem:[%s292 + $0x6c] sm:$0xf]
        %v312 = vld [vmem:[%s292 + $0x70] sm:$0xf]
        %v313 = vld [vmem:[%s292 + $0x8] sm:$0x1]
        %v314 = vld [vmem:[%s292 + $0x14] sm:$0x1]
        %v315 = vld [vmem:[%s292 + $0x20] sm:$0x1]
        %v316 = vld [vmem:[%s292 + $0x2c] sm:$0x1]
        %v317 = vld [vmem:[%s292 + $0x38] sm:$0x1]
        %v318 = vld [vmem:[%s292 + $0x44] sm:$0x1]
        %v319 = vld [vmem:[%s292 + $0x50] sm:$0x1]
        %v320 = vld [vmem:[%s292 + $0x5c] sm:$0x1]
        %v321 = vld [vmem:[%s292 + $0x68] sm:$0x1]
        %v322 = vld [vmem:[%s292 + $0x74] sm:$0x1]
        %v323 = vld [vmem:[%s292] sm:$0xe]
        %v324 = vld [vmem:[%s292 + $0xc] sm:$0xe]
        %v325 = vld [vmem:[%s292 + $0x18] sm:$0xe]
        %v326 = vld [vmem:[%s292 + $0x24] sm:$0xe]
        %v327 = vld [vmem:[%s292 + $0x30] sm:$0xe]
        %v328 = vld [vmem:[%s292 + $0x3c] sm:$0xe]
        %v329 = vld [vmem:[%s292 + $0x48] sm:$0xe]
        %v330 = vld [vmem:[%s292 + $0x54] sm:$0xe]
        %v331 = vld [vmem:[%s292 + $0x60] sm:$0xe]
        %v332 = vld [vmem:[%s292 + $0x6c] sm:$0xe]
        %s333 = scalar_lea.vmem %s250, 24
        %v334 = vld [vmem:[%s333] sm:$0xf]
        %v335 = vld [vmem:[%s333 + $0x4] sm:$0xf]
        %v336 = vld [vmem:[%s333 + $0xc] sm:$0xf]
        %v337 = vld [vmem:[%s333 + $0x10] sm:$0xf]
        %v338 = vld [vmem:[%s333 + $0x18] sm:$0xf]
        %v339 = vld [vmem:[%s333 + $0x1c] sm:$0xf]
        %v340 = vld [vmem:[%s333 + $0x24] sm:$0xf]
        %v341 = vld [vmem:[%s333 + $0x28] sm:$0xf]
        %v342 = vld [vmem:[%s333 + $0x30] sm:$0xf]
        %v343 = vld [vmem:[%s333 + $0x34] sm:$0xf]
        %v344 = vld [vmem:[%s333 + $0x3c] sm:$0xf]
        %v345 = vld [vmem:[%s333 + $0x40] sm:$0xf]
        %v346 = vld [vmem:[%s333 + $0x48] sm:$0xf]
        %v347 = vld [vmem:[%s333 + $0x4c] sm:$0xf]
        %v348 = vld [vmem:[%s333 + $0x54] sm:$0xf]
        %v349 = vld [vmem:[%s333 + $0x58] sm:$0xf]
        %v350 = vld [vmem:[%s333 + $0x60] sm:$0xf]
        %v351 = vld [vmem:[%s333 + $0x64] sm:$0xf]
        %v352 = vld [vmem:[%s333 + $0x6c] sm:$0xf]
        %v353 = vld [vmem:[%s333 + $0x70] sm:$0xf]
        %v354 = vld [vmem:[%s333 + $0x8] sm:$0x1]
        %v355 = vld [vmem:[%s333 + $0x14] sm:$0x1]
        %v356 = vld [vmem:[%s333 + $0x20] sm:$0x1]
        %v357 = vld [vmem:[%s333 + $0x2c] sm:$0x1]
        %v358 = vld [vmem:[%s333 + $0x38] sm:$0x1]
        %v359 = vld [vmem:[%s333 + $0x44] sm:$0x1]
        %v360 = vld [vmem:[%s333 + $0x50] sm:$0x1]
        %v361 = vld [vmem:[%s333 + $0x5c] sm:$0x1]
        %v362 = vld [vmem:[%s333 + $0x68] sm:$0x1]
        %v363 = vld [vmem:[%s333 + $0x74] sm:$0x1]
        %v364 = vld [vmem:[%s333] sm:$0xe]
        %v365 = vld [vmem:[%s333 + $0xc] sm:$0xe]
        %v366 = vld [vmem:[%s333 + $0x18] sm:$0xe]
        %v367 = vld [vmem:[%s333 + $0x24] sm:$0xe]
        %v368 = vld [vmem:[%s333 + $0x30] sm:$0xe]
        %v369 = vld [vmem:[%s333 + $0x3c] sm:$0xe]
        %v370 = vld [vmem:[%s333 + $0x48] sm:$0xe]
        %v371 = vld [vmem:[%s333 + $0x54] sm:$0xe]
        %v372 = vld [vmem:[%s333 + $0x60] sm:$0xe]
        %v373 = vld [vmem:[%s333 + $0x6c] sm:$0xe]
        %v394 = vunpack.c.l.b16 %v252
        %v395 = vunpack.c.l.b16 %v253
        %v396 = vunpack.c.l.b16 %v254
        %v397 = vunpack.c.l.b16 %v255
        %v398 = vunpack.c.l.b16 %v256
        %v399 = vunpack.c.l.b16 %v257
        %v400 = vunpack.c.l.b16 %v258
        %v401 = vunpack.c.l.b16 %v259
        %v402 = vunpack.c.l.b16 %v260
        %v403 = vunpack.c.l.b16 %v261
        %v404 = vunpack.c.l.b16 %v262
        %v405 = vunpack.c.l.b16 %v263
        %v406 = vunpack.c.l.b16 %v264
        %v407 = vunpack.c.l.b16 %v265
        %v408 = vunpack.c.l.b16 %v266
        %v409 = vunpack.c.l.b16 %v267
        %v410 = vunpack.c.l.b16 %v268
        %v411 = vunpack.c.l.b16 %v269
        %v412 = vunpack.c.l.b16 %v270
        %v413 = vunpack.c.l.b16 %v271
        %v414 = vpack.c.b16 %v395, %v394
        %v415 = vpack.c.b16 %v397, %v396
        %v416 = vpack.c.b16 %v399, %v398
        %v417 = vpack.c.b16 %v401, %v400
        %v418 = vpack.c.b16 %v403, %v402
        %v419 = vpack.c.b16 %v405, %v404
        %v420 = vpack.c.b16 %v407, %v406
        %v421 = vpack.c.b16 %v409, %v408
        %v422 = vpack.c.b16 %v411, %v410
        %v423 = vpack.c.b16 %v413, %v412
        %v434 = vunpack.c.l.b16 %v272
        %v435 = vunpack.c.l.b16 %v273
        %v436 = vunpack.c.l.b16 %v274
        %v437 = vunpack.c.l.b16 %v275
        %v438 = vunpack.c.l.b16 %v276
        %v439 = vunpack.c.l.b16 %v277
        %v440 = vunpack.c.l.b16 %v278
        %v441 = vunpack.c.l.b16 %v279
        %v442 = vunpack.c.l.b16 %v280
        %v443 = vunpack.c.l.b16 %v281
        %v444 = vpack.c.b16 %v434, %v434
        %v445 = vpack.c.b16 %v435, %v435
        %v446 = vpack.c.b16 %v436, %v436
        %v447 = vpack.c.b16 %v437, %v437
        %v448 = vpack.c.b16 %v438, %v438
        %v449 = vpack.c.b16 %v439, %v439
        %v450 = vpack.c.b16 %v440, %v440
        %v451 = vpack.c.b16 %v441, %v441
        %v452 = vpack.c.b16 %v442, %v442
        %v453 = vpack.c.b16 %v443, %v443
        %vm454 = vsmask.f32 7424
        %v456 = vshrl.u32 %v414, 16
        %v458 = vshll.u32 %v414, 16
        %v460 = vrot.slane %v458, 1
        %v461 = vor.u32 %v456, %v460
        %v463 = vshll.u32 %v444, 16
        %v465 = vrot.slane %v463, 1
        %v466 = vsel %vm454, %v461, %v465
        %v468 = vshrl.u32 %v415, 16
        %v470 = vshll.u32 %v415, 16
        %v472 = vrot.slane %v470, 1
        %v473 = vor.u32 %v468, %v472
        %v475 = vshll.u32 %v445, 16
        %v477 = vrot.slane %v475, 1
        %v478 = vsel %vm454, %v473, %v477
        %v480 = vshrl.u32 %v416, 16
        %v482 = vshll.u32 %v416, 16
        %v484 = vrot.slane %v482, 1
        %v485 = vor.u32 %v480, %v484
        %v487 = vshll.u32 %v446, 16
        %v489 = vrot.slane %v487, 1
        %v490 = vsel %vm454, %v485, %v489
        %v492 = vshrl.u32 %v417, 16
        %v494 = vshll.u32 %v417, 16
        %v496 = vrot.slane %v494, 1
        %v497 = vor.u32 %v492, %v496
        %v499 = vshll.u32 %v447, 16
        %v501 = vrot.slane %v499, 1
        %v502 = vsel %vm454, %v497, %v501
        %v504 = vshrl.u32 %v418, 16
        %v506 = vshll.u32 %v418, 16
        %v508 = vrot.slane %v506, 1
        %v509 = vor.u32 %v504, %v508
        %v511 = vshll.u32 %v448, 16
        %v513 = vrot.slane %v511, 1
        %v514 = vsel %vm454, %v509, %v513
        %v516 = vshrl.u32 %v419, 16
        %v518 = vshll.u32 %v419, 16
        %v520 = vrot.slane %v518, 1
        %v521 = vor.u32 %v516, %v520
        %v523 = vshll.u32 %v449, 16
        %v525 = vrot.slane %v523, 1
        %v526 = vsel %vm454, %v521, %v525
        %v528 = vshrl.u32 %v420, 16
        %v530 = vshll.u32 %v420, 16
        %v532 = vrot.slane %v530, 1
        %v533 = vor.u32 %v528, %v532
        %v535 = vshll.u32 %v450, 16
        %v537 = vrot.slane %v535, 1
        %v538 = vsel %vm454, %v533, %v537
        %v540 = vshrl.u32 %v421, 16
        %v542 = vshll.u32 %v421, 16
        %v544 = vrot.slane %v542, 1
        %v545 = vor.u32 %v540, %v544
        %v547 = vshll.u32 %v451, 16
        %v549 = vrot.slane %v547, 1
        %v550 = vsel %vm454, %v545, %v549
        %v552 = vshrl.u32 %v422, 16
        %v554 = vshll.u32 %v422, 16
        %v556 = vrot.slane %v554, 1
        %v557 = vor.u32 %v552, %v556
        %v559 = vshll.u32 %v452, 16
        %v561 = vrot.slane %v559, 1
        %v562 = vsel %vm454, %v557, %v561
        %v564 = vshrl.u32 %v423, 16
        %v566 = vshll.u32 %v423, 16
        %v568 = vrot.slane %v566, 1
        %v569 = vor.u32 %v564, %v568
        %v571 = vshll.u32 %v453, 16
        %v573 = vrot.slane %v571, 1
        %v574 = vsel %vm454, %v569, %v573
        %575 = vrot.lane.b32.xlu0 %v466, 4
        %v576 = vpop.permute.xlu0 %575
        %577 = vrot.lane.b32.xlu0 %v478, 4
        %v578 = vpop.permute.xlu0 %577
        %579 = vrot.lane.b32.xlu0 %v490, 4
        %v580 = vpop.permute.xlu0 %579
        %581 = vrot.lane.b32.xlu0 %v502, 4
        %v582 = vpop.permute.xlu0 %581
        %583 = vrot.lane.b32.xlu0 %v514, 4
        %v584 = vpop.permute.xlu0 %583
        %585 = vrot.lane.b32.xlu0 %v526, 4
        %v586 = vpop.permute.xlu0 %585
        %587 = vrot.lane.b32.xlu0 %v538, 4
        %v588 = vpop.permute.xlu0 %587
        %589 = vrot.lane.b32.xlu0 %v550, 4
        %v590 = vpop.permute.xlu0 %589
        %591 = vrot.lane.b32.xlu0 %v562, 4
        %v592 = vpop.permute.xlu0 %591
        %593 = vrot.lane.b32.xlu0 %v574, 4
        %v594 = vpop.permute.xlu0 %593
        %v605 = vunpack.c.l.b16 %v282
        %v606 = vunpack.c.l.b16 %v283
        %v607 = vunpack.c.l.b16 %v284
        %v608 = vunpack.c.l.b16 %v285
        %v609 = vunpack.c.l.b16 %v286
        %v610 = vunpack.c.l.b16 %v287
        %v611 = vunpack.c.l.b16 %v288
        %v612 = vunpack.c.l.b16 %v289
        %v613 = vunpack.c.l.b16 %v290
        %v614 = vunpack.c.l.b16 %v291
        %v615 = vpack.c.b16 %v395, %v605
        %v616 = vpack.c.b16 %v397, %v606
        %v617 = vpack.c.b16 %v399, %v607
        %v618 = vpack.c.b16 %v401, %v608
        %v619 = vpack.c.b16 %v403, %v609
        %v620 = vpack.c.b16 %v405, %v610
        %v621 = vpack.c.b16 %v407, %v611
        %v622 = vpack.c.b16 %v409, %v612
        %v623 = vpack.c.b16 %v411, %v613
        %v624 = vpack.c.b16 %v413, %v614
        %vm625 = vcmask 1046528
        %v626 = vrot.slane %v615, 1
        %v627 = vrot.slane %v444, 1
        %v628 = vsel %vm625, %v626, %v627
        %v629 = vrot.slane %v616, 1
        %v630 = vrot.slane %v445, 1
        %v631 = vsel %vm625, %v629, %v630
        %v632 = vrot.slane %v617, 1
        %v633 = vrot.slane %v446, 1
        %v634 = vsel %vm625, %v632, %v633
        %v635 = vrot.slane %v618, 1
        %v636 = vrot.slane %v447, 1
        %v637 = vsel %vm625, %v635, %v636
        %v638 = vrot.slane %v619, 1
        %v639 = vrot.slane %v448, 1
        %v640 = vsel %vm625, %v638, %v639
        %v641 = vrot.slane %v620, 1
        %v642 = vrot.slane %v449, 1
        %v643 = vsel %vm625, %v641, %v642
        %v644 = vrot.slane %v621, 1
        %v645 = vrot.slane %v450, 1
        %v646 = vsel %vm625, %v644, %v645
        %v647 = vrot.slane %v622, 1
        %v648 = vrot.slane %v451, 1
        %v649 = vsel %vm625, %v647, %v648
        %v650 = vrot.slane %v623, 1
        %v651 = vrot.slane %v452, 1
        %v652 = vsel %vm625, %v650, %v651
        %v653 = vrot.slane %v624, 1
        %v654 = vrot.slane %v453, 1
        %v655 = vsel %vm625, %v653, %v654
        %656 = vrot.lane.b32.xlu0 %v628, 8
        %v657 = vpop.permute.xlu0 %656
        %658 = vrot.lane.b32.xlu0 %v631, 8
        %v659 = vpop.permute.xlu0 %658
        %660 = vrot.lane.b32.xlu0 %v634, 8
        %v661 = vpop.permute.xlu0 %660
        %662 = vrot.lane.b32.xlu0 %v637, 8
        %v663 = vpop.permute.xlu0 %662
        %664 = vrot.lane.b32.xlu0 %v640, 8
        %v665 = vpop.permute.xlu0 %664
        %666 = vrot.lane.b32.xlu0 %v643, 8
        %v667 = vpop.permute.xlu0 %666
        %668 = vrot.lane.b32.xlu0 %v646, 8
        %v669 = vpop.permute.xlu0 %668
        %670 = vrot.lane.b32.xlu0 %v649, 8
        %v671 = vpop.permute.xlu0 %670
        %672 = vrot.lane.b32.xlu0 %v652, 8
        %v673 = vpop.permute.xlu0 %672
        %674 = vrot.lane.b32.xlu0 %v655, 8
        %v675 = vpop.permute.xlu0 %674
        %v696 = vunpack.c.l.b16 %v293
        %v697 = vunpack.c.l.b16 %v294
        %v698 = vunpack.c.l.b16 %v295
        %v699 = vunpack.c.l.b16 %v296
        %v700 = vunpack.c.l.b16 %v297
        %v701 = vunpack.c.l.b16 %v298
        %v702 = vunpack.c.l.b16 %v299
        %v703 = vunpack.c.l.b16 %v300
        %v704 = vunpack.c.l.b16 %v301
        %v705 = vunpack.c.l.b16 %v302
        %v706 = vunpack.c.l.b16 %v303
        %v707 = vunpack.c.l.b16 %v304
        %v708 = vunpack.c.l.b16 %v305
        %v709 = vunpack.c.l.b16 %v306
        %v710 = vunpack.c.l.b16 %v307
        %v711 = vunpack.c.l.b16 %v308
        %v712 = vunpack.c.l.b16 %v309
        %v713 = vunpack.c.l.b16 %v310
        %v714 = vunpack.c.l.b16 %v311
        %v715 = vunpack.c.l.b16 %v312
        %v716 = vpack.c.b16 %v697, %v696
        %v717 = vpack.c.b16 %v699, %v698
        %v718 = vpack.c.b16 %v701, %v700
        %v719 = vpack.c.b16 %v703, %v702
        %v720 = vpack.c.b16 %v705, %v704
        %v721 = vpack.c.b16 %v707, %v706
        %v722 = vpack.c.b16 %v709, %v708
        %v723 = vpack.c.b16 %v711, %v710
        %v724 = vpack.c.b16 %v713, %v712
        %v725 = vpack.c.b16 %v715, %v714
        %726 = vrot.lane.b32.xlu0 %v716, 12
        %v727 = vpop.permute.xlu0 %726
        %728 = vrot.lane.b32.xlu0 %v717, 12
        %v729 = vpop.permute.xlu0 %728
        %730 = vrot.lane.b32.xlu0 %v718, 12
        %v731 = vpop.permute.xlu0 %730
        %732 = vrot.lane.b32.xlu0 %v719, 12
        %v733 = vpop.permute.xlu0 %732
        %734 = vrot.lane.b32.xlu0 %v720, 12
        %v735 = vpop.permute.xlu0 %734
        %736 = vrot.lane.b32.xlu0 %v721, 12
        %v737 = vpop.permute.xlu0 %736
        %738 = vrot.lane.b32.xlu0 %v722, 12
        %v739 = vpop.permute.xlu0 %738
        %740 = vrot.lane.b32.xlu0 %v723, 12
        %v741 = vpop.permute.xlu0 %740
        %742 = vrot.lane.b32.xlu0 %v724, 12
        %v743 = vpop.permute.xlu0 %742
        %744 = vrot.lane.b32.xlu0 %v725, 12
        %v745 = vpop.permute.xlu0 %744
        %v756 = vunpack.c.l.b16 %v313
        %v757 = vunpack.c.l.b16 %v314
        %v758 = vunpack.c.l.b16 %v315
        %v759 = vunpack.c.l.b16 %v316
        %v760 = vunpack.c.l.b16 %v317
        %v761 = vunpack.c.l.b16 %v318
        %v762 = vunpack.c.l.b16 %v319
        %v763 = vunpack.c.l.b16 %v320
        %v764 = vunpack.c.l.b16 %v321
        %v765 = vunpack.c.l.b16 %v322
        %v766 = vpack.c.b16 %v756, %v756
        %v767 = vpack.c.b16 %v757, %v757
        %v768 = vpack.c.b16 %v758, %v758
        %v769 = vpack.c.b16 %v759, %v759
        %v770 = vpack.c.b16 %v760, %v760
        %v771 = vpack.c.b16 %v761, %v761
        %v772 = vpack.c.b16 %v762, %v762
        %v773 = vpack.c.b16 %v763, %v763
        %v774 = vpack.c.b16 %v764, %v764
        %v775 = vpack.c.b16 %v765, %v765
        %v777 = vshrl.u32 %v716, 16
        %v779 = vshll.u32 %v716, 16
        %v781 = vrot.slane %v779, 1
        %v782 = vor.u32 %v777, %v781
        %v784 = vshll.u32 %v766, 16
        %v786 = vrot.slane %v784, 1
        %v787 = vsel %vm454, %v782, %v786
        %v789 = vshrl.u32 %v717, 16
        %v791 = vshll.u32 %v717, 16
        %v793 = vrot.slane %v791, 1
        %v794 = vor.u32 %v789, %v793
        %v796 = vshll.u32 %v767, 16
        %v798 = vrot.slane %v796, 1
        %v799 = vsel %vm454, %v794, %v798
        %v801 = vshrl.u32 %v718, 16
        %v803 = vshll.u32 %v718, 16
        %v805 = vrot.slane %v803, 1
        %v806 = vor.u32 %v801, %v805
        %v808 = vshll.u32 %v768, 16
        %v810 = vrot.slane %v808, 1
        %v811 = vsel %vm454, %v806, %v810
        %v813 = vshrl.u32 %v719, 16
        %v815 = vshll.u32 %v719, 16
        %v817 = vrot.slane %v815, 1
        %v818 = vor.u32 %v813, %v817
        %v820 = vshll.u32 %v769, 16
        %v822 = vrot.slane %v820, 1
        %v823 = vsel %vm454, %v818, %v822
        %v825 = vshrl.u32 %v720, 16
        %v827 = vshll.u32 %v720, 16
        %v829 = vrot.slane %v827, 1
        %v830 = vor.u32 %v825, %v829
        %v832 = vshll.u32 %v770, 16
        %v834 = vrot.slane %v832, 1
        %v835 = vsel %vm454, %v830, %v834
        %v837 = vshrl.u32 %v721, 16
        %v839 = vshll.u32 %v721, 16
        %v841 = vrot.slane %v839, 1
        %v842 = vor.u32 %v837, %v841
        %v844 = vshll.u32 %v771, 16
        %v846 = vrot.slane %v844, 1
        %v847 = vsel %vm454, %v842, %v846
        %v849 = vshrl.u32 %v722, 16
        %v851 = vshll.u32 %v722, 16
        %v853 = vrot.slane %v851, 1
        %v854 = vor.u32 %v849, %v853
        %v856 = vshll.u32 %v772, 16
        %v858 = vrot.slane %v856, 1
        %v859 = vsel %vm454, %v854, %v858
        %v861 = vshrl.u32 %v723, 16
        %v863 = vshll.u32 %v723, 16
        %v865 = vrot.slane %v863, 1
        %v866 = vor.u32 %v861, %v865
        %v868 = vshll.u32 %v773, 16
        %v870 = vrot.slane %v868, 1
        %v871 = vsel %vm454, %v866, %v870
        %v873 = vshrl.u32 %v724, 16
        %v875 = vshll.u32 %v724, 16
        %v877 = vrot.slane %v875, 1
        %v878 = vor.u32 %v873, %v877
        %v880 = vshll.u32 %v774, 16
        %v882 = vrot.slane %v880, 1
        %v883 = vsel %vm454, %v878, %v882
        %v885 = vshrl.u32 %v725, 16
        %v887 = vshll.u32 %v725, 16
        %v889 = vrot.slane %v887, 1
        %v890 = vor.u32 %v885, %v889
        %v892 = vshll.u32 %v775, 16
        %v894 = vrot.slane %v892, 1
        %v895 = vsel %vm454, %v890, %v894
        %896 = vrot.lane.b32.xlu0 %v787, 16
        %v897 = vpop.permute.xlu0 %896
        %898 = vrot.lane.b32.xlu0 %v799, 16
        %v899 = vpop.permute.xlu0 %898
        %900 = vrot.lane.b32.xlu0 %v811, 16
        %v901 = vpop.permute.xlu0 %900
        %902 = vrot.lane.b32.xlu0 %v823, 16
        %v903 = vpop.permute.xlu0 %902
        %904 = vrot.lane.b32.xlu0 %v835, 16
        %v905 = vpop.permute.xlu0 %904
        %906 = vrot.lane.b32.xlu0 %v847, 16
        %v907 = vpop.permute.xlu0 %906
        %908 = vrot.lane.b32.xlu0 %v859, 16
        %v909 = vpop.permute.xlu0 %908
        %910 = vrot.lane.b32.xlu0 %v871, 16
        %v911 = vpop.permute.xlu0 %910
        %912 = vrot.lane.b32.xlu0 %v883, 16
        %v913 = vpop.permute.xlu0 %912
        %914 = vrot.lane.b32.xlu0 %v895, 16
        %v915 = vpop.permute.xlu0 %914
        %v926 = vunpack.c.l.b16 %v323
        %v927 = vunpack.c.l.b16 %v324
        %v928 = vunpack.c.l.b16 %v325
        %v929 = vunpack.c.l.b16 %v326
        %v930 = vunpack.c.l.b16 %v327
        %v931 = vunpack.c.l.b16 %v328
        %v932 = vunpack.c.l.b16 %v329
        %v933 = vunpack.c.l.b16 %v330
        %v934 = vunpack.c.l.b16 %v331
        %v935 = vunpack.c.l.b16 %v332
        %v936 = vpack.c.b16 %v697, %v926
        %v937 = vpack.c.b16 %v699, %v927
        %v938 = vpack.c.b16 %v701, %v928
        %v939 = vpack.c.b16 %v703, %v929
        %v940 = vpack.c.b16 %v705, %v930
        %v941 = vpack.c.b16 %v707, %v931
        %v942 = vpack.c.b16 %v709, %v932
        %v943 = vpack.c.b16 %v711, %v933
        %v944 = vpack.c.b16 %v713, %v934
        %v945 = vpack.c.b16 %v715, %v935
        %v946 = vrot.slane %v936, 1
        %v947 = vrot.slane %v766, 1
        %v948 = vsel %vm625, %v946, %v947
        %v949 = vrot.slane %v937, 1
        %v950 = vrot.slane %v767, 1
        %v951 = vsel %vm625, %v949, %v950
        %v952 = vrot.slane %v938, 1
        %v953 = vrot.slane %v768, 1
        %v954 = vsel %vm625, %v952, %v953
        %v955 = vrot.slane %v939, 1
        %v956 = vrot.slane %v769, 1
        %v957 = vsel %vm625, %v955, %v956
        %v958 = vrot.slane %v940, 1
        %v959 = vrot.slane %v770, 1
        %v960 = vsel %vm625, %v958, %v959
        %v961 = vrot.slane %v941, 1
        %v962 = vrot.slane %v771, 1
        %v963 = vsel %vm625, %v961, %v962
        %v964 = vrot.slane %v942, 1
        %v965 = vrot.slane %v772, 1
        %v966 = vsel %vm625, %v964, %v965
        %v967 = vrot.slane %v943, 1
        %v968 = vrot.slane %v773, 1
        %v969 = vsel %vm625, %v967, %v968
        %v970 = vrot.slane %v944, 1
        %v971 = vrot.slane %v774, 1
        %v972 = vsel %vm625, %v970, %v971
        %v973 = vrot.slane %v945, 1
        %v974 = vrot.slane %v775, 1
        %v975 = vsel %vm625, %v973, %v974
        %976 = vrot.lane.b32.xlu0 %v948, 20
        %v977 = vpop.permute.xlu0 %976
        %978 = vrot.lane.b32.xlu0 %v951, 20
        %v979 = vpop.permute.xlu0 %978
        %980 = vrot.lane.b32.xlu0 %v954, 20
        %v981 = vpop.permute.xlu0 %980
        %982 = vrot.lane.b32.xlu0 %v957, 20
        %v983 = vpop.permute.xlu0 %982
        %984 = vrot.lane.b32.xlu0 %v960, 20
        %v985 = vpop.permute.xlu0 %984
        %986 = vrot.lane.b32.xlu0 %v963, 20
        %v987 = vpop.permute.xlu0 %986
        %988 = vrot.lane.b32.xlu0 %v966, 20
        %v989 = vpop.permute.xlu0 %988
        %990 = vrot.lane.b32.xlu0 %v969, 20
        %v991 = vpop.permute.xlu0 %990
        %992 = vrot.lane.b32.xlu0 %v972, 20
        %v993 = vpop.permute.xlu0 %992
        %994 = vrot.lane.b32.xlu0 %v975, 20
        %v995 = vpop.permute.xlu0 %994
        %v1016 = vunpack.c.l.b16 %v334
        %v1017 = vunpack.c.l.b16 %v335
        %v1018 = vunpack.c.l.b16 %v336
        %v1019 = vunpack.c.l.b16 %v337
        %v1020 = vunpack.c.l.b16 %v338
        %v1021 = vunpack.c.l.b16 %v339
        %v1022 = vunpack.c.l.b16 %v340
        %v1023 = vunpack.c.l.b16 %v341
        %v1024 = vunpack.c.l.b16 %v342
        %v1025 = vunpack.c.l.b16 %v343
        %v1026 = vunpack.c.l.b16 %v344
        %v1027 = vunpack.c.l.b16 %v345
        %v1028 = vunpack.c.l.b16 %v346
        %v1029 = vunpack.c.l.b16 %v347
        %v1030 = vunpack.c.l.b16 %v348
        %v1031 = vunpack.c.l.b16 %v349
        %v1032 = vunpack.c.l.b16 %v350
        %v1033 = vunpack.c.l.b16 %v351
        %v1034 = vunpack.c.l.b16 %v352
        %v1035 = vunpack.c.l.b16 %v353
        %v1036 = vpack.c.b16 %v1017, %v1016
        %v1037 = vpack.c.b16 %v1019, %v1018
        %v1038 = vpack.c.b16 %v1021, %v1020
        %v1039 = vpack.c.b16 %v1023, %v1022
        %v1040 = vpack.c.b16 %v1025, %v1024
        %v1041 = vpack.c.b16 %v1027, %v1026
        %v1042 = vpack.c.b16 %v1029, %v1028
        %v1043 = vpack.c.b16 %v1031, %v1030
        %v1044 = vpack.c.b16 %v1033, %v1032
        %v1045 = vpack.c.b16 %v1035, %v1034
        %1046 = vrot.lane.b32.xlu0 %v1036, 24
        %v1047 = vpop.permute.xlu0 %1046
        %1048 = vrot.lane.b32.xlu0 %v1037, 24
        %v1049 = vpop.permute.xlu0 %1048
        %1050 = vrot.lane.b32.xlu0 %v1038, 24
        %v1051 = vpop.permute.xlu0 %1050
        %1052 = vrot.lane.b32.xlu0 %v1039, 24
        %v1053 = vpop.permute.xlu0 %1052
        %1054 = vrot.lane.b32.xlu0 %v1040, 24
        %v1055 = vpop.permute.xlu0 %1054
        %1056 = vrot.lane.b32.xlu0 %v1041, 24
        %v1057 = vpop.permute.xlu0 %1056
        %1058 = vrot.lane.b32.xlu0 %v1042, 24
        %v1059 = vpop.permute.xlu0 %1058
        %1060 = vrot.lane.b32.xlu0 %v1043, 24
        %v1061 = vpop.permute.xlu0 %1060
        %1062 = vrot.lane.b32.xlu0 %v1044, 24
        %v1063 = vpop.permute.xlu0 %1062
        %1064 = vrot.lane.b32.xlu0 %v1045, 24
        %v1065 = vpop.permute.xlu0 %1064
        %v1076 = vunpack.c.l.b16 %v354
        %v1077 = vunpack.c.l.b16 %v355
        %v1078 = vunpack.c.l.b16 %v356
        %v1079 = vunpack.c.l.b16 %v357
        %v1080 = vunpack.c.l.b16 %v358
        %v1081 = vunpack.c.l.b16 %v359
        %v1082 = vunpack.c.l.b16 %v360
        %v1083 = vunpack.c.l.b16 %v361
        %v1084 = vunpack.c.l.b16 %v362
        %v1085 = vunpack.c.l.b16 %v363
        %v1086 = vpack.c.b16 %v1076, %v1076
        %v1087 = vpack.c.b16 %v1077, %v1077
        %v1088 = vpack.c.b16 %v1078, %v1078
        %v1089 = vpack.c.b16 %v1079, %v1079
        %v1090 = vpack.c.b16 %v1080, %v1080
        %v1091 = vpack.c.b16 %v1081, %v1081
        %v1092 = vpack.c.b16 %v1082, %v1082
        %v1093 = vpack.c.b16 %v1083, %v1083
        %v1094 = vpack.c.b16 %v1084, %v1084
        %v1095 = vpack.c.b16 %v1085, %v1085
        %v1097 = vshrl.u32 %v1036, 16
        %v1099 = vshll.u32 %v1036, 16
        %v1101 = vrot.slane %v1099, 1
        %v1102 = vor.u32 %v1097, %v1101
        %v1104 = vshll.u32 %v1086, 16
        %v1106 = vrot.slane %v1104, 1
        %v1107 = vsel %vm454, %v1102, %v1106
        %v1109 = vshrl.u32 %v1037, 16
        %v1111 = vshll.u32 %v1037, 16
        %v1113 = vrot.slane %v1111, 1
        %v1114 = vor.u32 %v1109, %v1113
        %v1116 = vshll.u32 %v1087, 16
        %v1118 = vrot.slane %v1116, 1
        %v1119 = vsel %vm454, %v1114, %v1118
        %v1121 = vshrl.u32 %v1038, 16
        %v1123 = vshll.u32 %v1038, 16
        %v1125 = vrot.slane %v1123, 1
        %v1126 = vor.u32 %v1121, %v1125
        %v1128 = vshll.u32 %v1088, 16
        %v1130 = vrot.slane %v1128, 1
        %v1131 = vsel %vm454, %v1126, %v1130
        %v1133 = vshrl.u32 %v1039, 16
        %v1135 = vshll.u32 %v1039, 16
        %v1137 = vrot.slane %v1135, 1
        %v1138 = vor.u32 %v1133, %v1137
        %v1140 = vshll.u32 %v1089, 16
        %v1142 = vrot.slane %v1140, 1
        %v1143 = vsel %vm454, %v1138, %v1142
        %v1145 = vshrl.u32 %v1040, 16
        %v1147 = vshll.u32 %v1040, 16
        %v1149 = vrot.slane %v1147, 1
        %v1150 = vor.u32 %v1145, %v1149
        %v1152 = vshll.u32 %v1090, 16
        %v1154 = vrot.slane %v1152, 1
        %v1155 = vsel %vm454, %v1150, %v1154
        %v1157 = vshrl.u32 %v1041, 16
        %v1159 = vshll.u32 %v1041, 16
        %v1161 = vrot.slane %v1159, 1
        %v1162 = vor.u32 %v1157, %v1161
        %v1164 = vshll.u32 %v1091, 16
        %v1166 = vrot.slane %v1164, 1
        %v1167 = vsel %vm454, %v1162, %v1166
        %v1169 = vshrl.u32 %v1042, 16
        %v1171 = vshll.u32 %v1042, 16
        %v1173 = vrot.slane %v1171, 1
        %v1174 = vor.u32 %v1169, %v1173
        %v1176 = vshll.u32 %v1092, 16
        %v1178 = vrot.slane %v1176, 1
        %v1179 = vsel %vm454, %v1174, %v1178
        %v1181 = vshrl.u32 %v1043, 16
        %v1183 = vshll.u32 %v1043, 16
        %v1185 = vrot.slane %v1183, 1
        %v1186 = vor.u32 %v1181, %v1185
        %v1188 = vshll.u32 %v1093, 16
        %v1190 = vrot.slane %v1188, 1
        %v1191 = vsel %vm454, %v1186, %v1190
        %v1193 = vshrl.u32 %v1044, 16
        %v1195 = vshll.u32 %v1044, 16
        %v1197 = vrot.slane %v1195, 1
        %v1198 = vor.u32 %v1193, %v1197
        %v1200 = vshll.u32 %v1094, 16
        %v1202 = vrot.slane %v1200, 1
        %v1203 = vsel %vm454, %v1198, %v1202
        %v1205 = vshrl.u32 %v1045, 16
        %v1207 = vshll.u32 %v1045, 16
        %v1209 = vrot.slane %v1207, 1
        %v1210 = vor.u32 %v1205, %v1209
        %v1212 = vshll.u32 %v1095, 16
        %v1214 = vrot.slane %v1212, 1
        %v1215 = vsel %vm454, %v1210, %v1214
        %1216 = vrot.lane.b32.xlu0 %v1107, 28
        %v1217 = vpop.permute.xlu0 %1216
        %1218 = vrot.lane.b32.xlu0 %v1119, 28
        %v1219 = vpop.permute.xlu0 %1218
        %1220 = vrot.lane.b32.xlu0 %v1131, 28
        %v1221 = vpop.permute.xlu0 %1220
        %1222 = vrot.lane.b32.xlu0 %v1143, 28
        %v1223 = vpop.permute.xlu0 %1222
        %1224 = vrot.lane.b32.xlu0 %v1155, 28
        %v1225 = vpop.permute.xlu0 %1224
        %1226 = vrot.lane.b32.xlu0 %v1167, 28
        %v1227 = vpop.permute.xlu0 %1226
        %1228 = vrot.lane.b32.xlu0 %v1179, 28
        %v1229 = vpop.permute.xlu0 %1228
        %1230 = vrot.lane.b32.xlu0 %v1191, 28
        %v1231 = vpop.permute.xlu0 %1230
        %1232 = vrot.lane.b32.xlu0 %v1203, 28
        %v1233 = vpop.permute.xlu0 %1232
        %1234 = vrot.lane.b32.xlu0 %v1215, 28
        %v1235 = vpop.permute.xlu0 %1234
        %v1246 = vunpack.c.l.b16 %v364
        %v1247 = vunpack.c.l.b16 %v365
        %v1248 = vunpack.c.l.b16 %v366
        %v1249 = vunpack.c.l.b16 %v367
        %v1250 = vunpack.c.l.b16 %v368
        %v1251 = vunpack.c.l.b16 %v369
        %v1252 = vunpack.c.l.b16 %v370
        %v1253 = vunpack.c.l.b16 %v371
        %v1254 = vunpack.c.l.b16 %v372
        %v1255 = vunpack.c.l.b16 %v373
        %v1256 = vpack.c.b16 %v1017, %v1246
        %v1257 = vpack.c.b16 %v1019, %v1247
        %v1258 = vpack.c.b16 %v1021, %v1248
        %v1259 = vpack.c.b16 %v1023, %v1249
        %v1260 = vpack.c.b16 %v1025, %v1250
        %v1261 = vpack.c.b16 %v1027, %v1251
        %v1262 = vpack.c.b16 %v1029, %v1252
        %v1263 = vpack.c.b16 %v1031, %v1253
        %v1264 = vpack.c.b16 %v1033, %v1254
        %v1265 = vpack.c.b16 %v1035, %v1255
        %v1266 = vrot.slane %v1256, 1
        %v1267 = vrot.slane %v1086, 1
        %v1268 = vsel %vm625, %v1266, %v1267
        %v1269 = vrot.slane %v1257, 1
        %v1270 = vrot.slane %v1087, 1
        %v1271 = vsel %vm625, %v1269, %v1270
        %v1272 = vrot.slane %v1258, 1
        %v1273 = vrot.slane %v1088, 1
        %v1274 = vsel %vm625, %v1272, %v1273
        %v1275 = vrot.slane %v1259, 1
        %v1276 = vrot.slane %v1089, 1
        %v1277 = vsel %vm625, %v1275, %v1276
        %v1278 = vrot.slane %v1260, 1
        %v1279 = vrot.slane %v1090, 1
        %v1280 = vsel %vm625, %v1278, %v1279
        %v1281 = vrot.slane %v1261, 1
        %v1282 = vrot.slane %v1091, 1
        %v1283 = vsel %vm625, %v1281, %v1282
        %v1284 = vrot.slane %v1262, 1
        %v1285 = vrot.slane %v1092, 1
        %v1286 = vsel %vm625, %v1284, %v1285
        %v1287 = vrot.slane %v1263, 1
        %v1288 = vrot.slane %v1093, 1
        %v1289 = vsel %vm625, %v1287, %v1288
        %v1290 = vrot.slane %v1264, 1
        %v1291 = vrot.slane %v1094, 1
        %v1292 = vsel %vm625, %v1290, %v1291
        %v1293 = vrot.slane %v1265, 1
        %v1294 = vrot.slane %v1095, 1
        %v1295 = vsel %vm625, %v1293, %v1294
        %1296 = vrot.lane.b32.xlu0 %v1268, 32
        %v1297 = vpop.permute.xlu0 %1296
        %1298 = vrot.lane.b32.xlu0 %v1271, 32
        %v1299 = vpop.permute.xlu0 %1298
        %1300 = vrot.lane.b32.xlu0 %v1274, 32
        %v1301 = vpop.permute.xlu0 %1300
        %1302 = vrot.lane.b32.xlu0 %v1277, 32
        %v1303 = vpop.permute.xlu0 %1302
        %1304 = vrot.lane.b32.xlu0 %v1280, 32
        %v1305 = vpop.permute.xlu0 %1304
        %1306 = vrot.lane.b32.xlu0 %v1283, 32
        %v1307 = vpop.permute.xlu0 %1306
        %1308 = vrot.lane.b32.xlu0 %v1286, 32
        %v1309 = vpop.permute.xlu0 %1308
        %1310 = vrot.lane.b32.xlu0 %v1289, 32
        %v1311 = vpop.permute.xlu0 %1310
        %1312 = vrot.lane.b32.xlu0 %v1292, 32
        %v1313 = vpop.permute.xlu0 %1312
        %1314 = vrot.lane.b32.xlu0 %v1295, 32
        %v1315 = vpop.permute.xlu0 %1314
        %vm1316 = vcmask 31744
        %v1318 = vsel %vm1316, %v414, %v576
        %v1320 = vsel %vm1316, %v415, %v578
        %v1322 = vsel %vm1316, %v416, %v580
        %v1324 = vsel %vm1316, %v417, %v582
        %v1326 = vsel %vm1316, %v418, %v584
        %v1328 = vsel %vm1316, %v419, %v586
        %v1330 = vsel %vm1316, %v420, %v588
        %v1332 = vsel %vm1316, %v421, %v590
        %v1334 = vsel %vm1316, %v422, %v592
        %v1336 = vsel %vm1316, %v423, %v594
        %vm1337 = vcmask 64512
        %v1339 = vsel %vm1337, %v1318, %v657
        %v1341 = vsel %vm1337, %v1320, %v659
        %v1343 = vsel %vm1337, %v1322, %v661
        %v1345 = vsel %vm1337, %v1324, %v663
        %v1347 = vsel %vm1337, %v1326, %v665
        %v1349 = vsel %vm1337, %v1328, %v667
        %v1351 = vsel %vm1337, %v1330, %v669
        %v1353 = vsel %vm1337, %v1332, %v671
        %v1355 = vsel %vm1337, %v1334, %v673
        %v1357 = vsel %vm1337, %v1336, %v675
        %vm1358 = vcmask 97280
        %v1360 = vsel %vm1358, %v1339, %v727
        %v1362 = vsel %vm1358, %v1341, %v729
        %v1364 = vsel %vm1358, %v1343, %v731
        %v1366 = vsel %vm1358, %v1345, %v733
        %v1368 = vsel %vm1358, %v1347, %v735
        %v1370 = vsel %vm1358, %v1349, %v737
        %v1372 = vsel %vm1358, %v1351, %v739
        %v1374 = vsel %vm1358, %v1353, %v741
        %v1376 = vsel %vm1358, %v1355, %v743
        %v1378 = vsel %vm1358, %v1357, %v745
        %vm1379 = vcmask 130048
        %v1381 = vsel %vm1379, %v1360, %v897
        %v1383 = vsel %vm1379, %v1362, %v899
        %v1385 = vsel %vm1379, %v1364, %v901
        %v1387 = vsel %vm1379, %v1366, %v903
        %v1389 = vsel %vm1379, %v1368, %v905
        %v1391 = vsel %vm1379, %v1370, %v907
        %v1393 = vsel %vm1379, %v1372, %v909
        %v1395 = vsel %vm1379, %v1374, %v911
        %v1397 = vsel %vm1379, %v1376, %v913
        %v1399 = vsel %vm1379, %v1378, %v915
        %vm1400 = vcmask 162816
        %v1402 = vsel %vm1400, %v1381, %v977
        %v1404 = vsel %vm1400, %v1383, %v979
        %v1406 = vsel %vm1400, %v1385, %v981
        %v1408 = vsel %vm1400, %v1387, %v983
        %v1410 = vsel %vm1400, %v1389, %v985
        %v1412 = vsel %vm1400, %v1391, %v987
        %v1414 = vsel %vm1400, %v1393, %v989
        %v1416 = vsel %vm1400, %v1395, %v991
        %v1418 = vsel %vm1400, %v1397, %v993
        %v1420 = vsel %vm1400, %v1399, %v995
        %vm1421 = vcmask 195584
        %v1423 = vsel %vm1421, %v1402, %v1047
        %v1425 = vsel %vm1421, %v1404, %v1049
        %v1427 = vsel %vm1421, %v1406, %v1051
        %v1429 = vsel %vm1421, %v1408, %v1053
        %v1431 = vsel %vm1421, %v1410, %v1055
        %v1433 = vsel %vm1421, %v1412, %v1057
        %v1435 = vsel %vm1421, %v1414, %v1059
        %v1437 = vsel %vm1421, %v1416, %v1061
        %v1439 = vsel %vm1421, %v1418, %v1063
        %v1441 = vsel %vm1421, %v1420, %v1065
        %vm1442 = vcmask 228352
        %v1444 = vsel %vm1442, %v1423, %v1217
        %v1446 = vsel %vm1442, %v1425, %v1219
        %v1448 = vsel %vm1442, %v1427, %v1221
        %v1450 = vsel %vm1442, %v1429, %v1223
        %v1452 = vsel %vm1442, %v1431, %v1225
        %v1454 = vsel %vm1442, %v1433, %v1227
        %v1456 = vsel %vm1442, %v1435, %v1229
        %v1458 = vsel %vm1442, %v1437, %v1231
        %v1460 = vsel %vm1442, %v1439, %v1233
        %v1462 = vsel %vm1442, %v1441, %v1235
        %vm1463 = vcmask 261120
        %v1465 = vsel %vm1463, %v1444, %v1297
        %v1467 = vsel %vm1463, %v1446, %v1299
        %v1469 = vsel %vm1463, %v1448, %v1301
        %v1471 = vsel %vm1463, %v1450, %v1303
        %v1473 = vsel %vm1463, %v1452, %v1305
        %v1475 = vsel %vm1463, %v1454, %v1307
        %v1477 = vsel %vm1463, %v1456, %v1309
        %v1479 = vsel %vm1463, %v1458, %v1311
        %v1481 = vsel %vm1463, %v1460, %v1313
        %v1483 = vsel %vm1463, %v1462, %v1315
        %v1484 = vld [vmem:[%s1] sm:$0xf]
        %v1485 = vld [vmem:[%s1 + $0x4] sm:$0xf]
        %v1486 = vld [vmem:[%s1 + $0x8] sm:$0xf]
        %v1487 = vld [vmem:[%s1 + $0xc] sm:$0xf]
        %v1488 = vld [vmem:[%s1 + $0x10] sm:$0x3]
        %v1489 = vld [vmem:[%s2] sm:$0x1]
        %v1491 = vlaneseq
        %v1492 = vshrl.u32 %v1491, 7
        %v1493 = vsub.s32 0, %v1492
        %v1494 = vrot.slane %v1489, %v1493
        %v1501 = vunpack.c.l.b16 %v1484
        %v1502 = vunpack.c.l.b16 %v1485
        %v1503 = vunpack.c.l.b16 %v1486
        %v1504 = vunpack.c.l.b16 %v1487
        %v1505 = vunpack.c.l.b16 %v1488
        %v1506 = vpack.c.b16 %v1502, %v1501
        %v1507 = vpack.c.b16 %v1504, %v1503
        %v1508 = vpack.c.b16 %v1505, %v1505
        %vm1511 = vcmask 293888
        %v1512 = vsel %vm1511, %v1465, 0
        %v1514 = vsel %vm1511, %v1467, 0
        %v1516 = vsel %vm1511, %v1469, 0
        %v1518 = vsel %vm1511, %v1471, 0
        %v1520 = vsel %vm1511, %v1473, 0
        %v1522 = vsel %vm1511, %v1475, 0
        %v1524 = vsel %vm1511, %v1477, 0
        %v1526 = vsel %vm1511, %v1479, 0
        %v1528 = vsel %vm1511, %v1481, 0
        %v1530 = vsel %vm1511, %v1483, 0
        %vm1532 = vcmask 1041408
        %v1534 = vsel %vm1532, %v1508, 0
        %1536 = vmatprep.subr.bf16.mxu0 0
        %1537 = vmatpush1.bf16.msra.mxu0 %v1506
        %1538 = vmatprep.subr.bf16.mxu0 0
        %1539 = vmatpush1.bf16.msra.mxu0 %v1507
        %1540 = vmatprep.subr.bf16.mxu0 0
        %1541 = vmatpush1.bf16.msra.mxu0 %v1534
        %1542 = vmatprep.subr.bf16.mxu0 0
        %1543 = vmatpush1.bf16.msra.mxu0 0
        %1544 = vmatprep.subr.bf16.mxu0 0
        %1545 = vmatpush1.bf16.msra.mxu0 0
        %1546 = vmatprep.subr.bf16.mxu0 0
        %1547 = vmatpush1.bf16.msra.mxu0 0
        %1548 = vmatprep.subr.bf16.mxu0 0
        %1549 = vmatpush1.bf16.msra.mxu0 0
        %1550 = vmatprep.subr.bf16.mxu0 0
        %1551 = vmatpush1.bf16.msra.mxu0 0
        %1552 = vmatprep.subr.bf16.mxu0 0
        %1553 = vmatpush1.bf16.msra.mxu0 0
        %1554 = vmatprep.subr.bf16.mxu0 0
        %1555 = vmatpush1.bf16.msra.mxu0 0
        %1556 = vmatprep.subr.bf16.mxu0 0
        %1557 = vmatpush1.bf16.msra.mxu0 0
        %1558 = vmatprep.subr.bf16.mxu0 0
        %1559 = vmatpush1.bf16.msra.mxu0 0
        %1560 = vmatprep.subr.bf16.mxu0 0
        %1561 = vmatpush1.bf16.msra.mxu0 0
        %1562 = vmatprep.subr.bf16.mxu0 0
        %1563 = vmatpush1.bf16.msra.mxu0 0
        %1564 = vmatprep.subr.bf16.mxu0 0
        %1565 = vmatpush1.bf16.msra.mxu0 0
        %1566 = vmatprep.subr.bf16.mxu0 0
        %1567 = vmatpush1.bf16.msra.mxu0 0
        %1568 = vmatprep.mubr.bf16.mxu0 0
        %1569 = vmatmul.mubr.bf16.gmra.mrb[0].mxu0 %v1512
        %v1570 = vpop.f32.mrb[0].mxu0
        %v1571 = vadd.f32 %v1494, %v1570
        %v1572 = vpop.f32.mrb[0].mxu0
        %v1573 = vpop.f32.mrb[0].mxu0
        %v1574 = vadd.f32 %v1494, %v1573
        %v1575 = vpop.f32.mrb[0].mxu0
        %1576 = vmatprep.mubr.bf16.mxu0 0
        %1577 = vmatmul.mubr.bf16.gmra.mrb[0].mxu0 %v1514
        %v1578 = vpop.f32.mrb[0].mxu0
        %v1579 = vadd.f32 %v1494, %v1578
        %v1580 = vpop.f32.mrb[0].mxu0
        %v1581 = vpop.f32.mrb[0].mxu0
        %v1582 = vadd.f32 %v1494, %v1581
        %v1583 = vpop.f32.mrb[0].mxu0
        %1584 = vmatprep.mubr.bf16.mxu0 0
        %1585 = vmatmul.mubr.bf16.gmra.mrb[0].mxu0 %v1516
        %v1586 = vpop.f32.mrb[0].mxu0
        %v1587 = vadd.f32 %v1494, %v1586
        %v1588 = vpop.f32.mrb[0].mxu0
        %v1589 = vpop.f32.mrb[0].mxu0
        %v1590 = vadd.f32 %v1494, %v1589
        %v1591 = vpop.f32.mrb[0].mxu0
        %1592 = vmatprep.mubr.bf16.mxu0 0
        %1593 = vmatmul.mubr.bf16.gmra.mrb[0].mxu0 %v1518
        %v1594 = vpop.f32.mrb[0].mxu0
        %v1595 = vadd.f32 %v1494, %v1594
        %v1596 = vpop.f32.mrb[0].mxu0
        %v1597 = vpop.f32.mrb[0].mxu0
        %v1598 = vadd.f32 %v1494, %v1597
        %v1599 = vpop.f32.mrb[0].mxu0
        %1600 = vmatprep.mubr.bf16.mxu0 0
        %1601 = vmatmul.mubr.bf16.gmra.mrb[0].mxu0 %v1520
        %v1602 = vpop.f32.mrb[0].mxu0
        %v1603 = vadd.f32 %v1494, %v1602
        %v1604 = vpop.f32.mrb[0].mxu0
        %v1605 = vpop.f32.mrb[0].mxu0
        %v1606 = vadd.f32 %v1494, %v1605
        %v1607 = vpop.f32.mrb[0].mxu0
        %1608 = vmatprep.mubr.bf16.mxu0 0
        %1609 = vmatmul.mubr.bf16.gmra.mrb[0].mxu0 %v1522
        %v1610 = vpop.f32.mrb[0].mxu0
        %v1611 = vadd.f32 %v1494, %v1610
        %v1612 = vpop.f32.mrb[0].mxu0
        %v1613 = vpop.f32.mrb[0].mxu0
        %v1614 = vadd.f32 %v1494, %v1613
        %v1615 = vpop.f32.mrb[0].mxu0
        %1616 = vmatprep.mubr.bf16.mxu0 0
        %1617 = vmatmul.mubr.bf16.gmra.mrb[0].mxu0 %v1524
        %v1618 = vpop.f32.mrb[0].mxu0
        %v1619 = vadd.f32 %v1494, %v1618
        %v1620 = vpop.f32.mrb[0].mxu0
        %v1621 = vpop.f32.mrb[0].mxu0
        %v1622 = vadd.f32 %v1494, %v1621
        %v1623 = vpop.f32.mrb[0].mxu0
        %1624 = vmatprep.mubr.bf16.mxu0 0
        %1625 = vmatmul.mubr.bf16.gmra.mrb[0].mxu0 %v1526
        %v1626 = vpop.f32.mrb[0].mxu0
        %v1627 = vadd.f32 %v1494, %v1626
        %v1628 = vpop.f32.mrb[0].mxu0
        %v1629 = vpop.f32.mrb[0].mxu0
        %v1630 = vadd.f32 %v1494, %v1629
        %v1631 = vpop.f32.mrb[0].mxu0
        %1632 = vmatprep.mubr.bf16.mxu0 0
        %1633 = vmatmul.mubr.bf16.gmra.mrb[0].mxu0 %v1528
        %v1634 = vpop.f32.mrb[0].mxu0
        %v1635 = vadd.f32 %v1494, %v1634
        %v1636 = vpop.f32.mrb[0].mxu0
        %v1637 = vpop.f32.mrb[0].mxu0
        %v1638 = vadd.f32 %v1494, %v1637
        %v1639 = vpop.f32.mrb[0].mxu0
        %1640 = vmatprep.mubr.bf16.mxu0 0
        %1641 = vmatmul.mubr.bf16.gmra.mrb[0].mxu0 %v1530
        %v1642 = vpop.f32.mrb[0].mxu0
        %v1643 = vadd.f32 %v1494, %v1642
        %v1644 = vpop.f32.mrb[0].mxu0
        %v1645 = vpop.f32.mrb[0].mxu0
        %v1646 = vadd.f32 %v1494, %v1645
        %v1647 = vpop.f32.mrb[0].mxu0
        %1648 = vdwg.mxu0
        %v1649 = vmax.f32 %v1571, 0.0
        %v1650 = vmax.f32 %v1574, 0.0
        %v1651 = vmax.f32 %v1579, 0.0
        %v1652 = vmax.f32 %v1582, 0.0
        %v1653 = vmax.f32 %v1587, 0.0
        %v1654 = vmax.f32 %v1590, 0.0
        %v1655 = vmax.f32 %v1595, 0.0
        %v1656 = vmax.f32 %v1598, 0.0
        %v1657 = vmax.f32 %v1603, 0.0
        %v1658 = vmax.f32 %v1606, 0.0
        %v1659 = vmax.f32 %v1611, 0.0
        %v1660 = vmax.f32 %v1614, 0.0
        %v1661 = vmax.f32 %v1619, 0.0
        %v1662 = vmax.f32 %v1622, 0.0
        %v1663 = vmax.f32 %v1627, 0.0
        %v1664 = vmax.f32 %v1630, 0.0
        %v1665 = vmax.f32 %v1635, 0.0
        %v1666 = vmax.f32 %v1638, 0.0
        %v1667 = vmax.f32 %v1643, 0.0
        %v1668 = vmax.f32 %v1646, 0.0
        %s1669 = smul.u32 %s24, 8
        %v1670 = vstv %s1669
        %v1671 = vadd.s32 %v1670, 2
        %v1672 = vadd.s32 %v1670, 3
        %v1673 = vadd.s32 %v1670, 4
        %v1674 = vadd.s32 %v1670, 5
        %v1675 = vadd.s32 %v1670, 6
        %v1676 = vadd.s32 %v1670, 7
        %v1677 = vadd.s32 %v1670, 8
        %v1678 = vadd.s32 %v1670, 9
        %v1679 = vsub.s32 %v1670, 1
        %v1680 = vsub.s32 %v1671, 1
        %v1681 = vsub.s32 %v1672, 1
        %v1682 = vsub.s32 %v1673, 1
        %v1683 = vsub.s32 %v1674, 1
        %v1684 = vsub.s32 %v1675, 1
        %v1685 = vsub.s32 %v1676, 1
        %v1686 = vsub.s32 %v1677, 1
        %v1687 = vsub.s32 %v1678, 1
        %vm1688 = vcmp.ge.s32.totalorder %v1679, 0
        %vm1689 = vcmp.ge.s32.totalorder %v1670, 0
        %vm1690 = vcmp.ge.s32.totalorder %v1680, 0
        %vm1691 = vcmp.ge.s32.totalorder %v1681, 0
        %vm1692 = vcmp.ge.s32.totalorder %v1682, 0
        %vm1693 = vcmp.ge.s32.totalorder %v1683, 0
        %vm1694 = vcmp.ge.s32.totalorder %v1684, 0
        %vm1695 = vcmp.ge.s32.totalorder %v1685, 0
        %vm1696 = vcmp.ge.s32.totalorder %v1686, 0
        %vm1697 = vcmp.ge.s32.totalorder %v1687, 0
        %vm1698 = vcmp.lt.s32.totalorder %v1679, 16
        %vm1699 = vcmp.lt.s32.totalorder %v1670, 16
        %vm1700 = vcmp.lt.s32.totalorder %v1680, 16
        %vm1701 = vcmp.lt.s32.totalorder %v1681, 16
        %vm1702 = vcmp.lt.s32.totalorder %v1682, 16
        %vm1703 = vcmp.lt.s32.totalorder %v1683, 16
        %vm1704 = vcmp.lt.s32.totalorder %v1684, 16
        %vm1705 = vcmp.lt.s32.totalorder %v1685, 16
        %vm1706 = vcmp.lt.s32.totalorder %v1686, 16
        %vm1707 = vcmp.lt.s32.totalorder %v1687, 16
        %vm1708 = vmand %vm1688, %vm1698
        %vm1709 = vmand %vm1689, %vm1699
        %vm1710 = vmand %vm1690, %vm1700
        %vm1711 = vmand %vm1691, %vm1701
        %vm1712 = vmand %vm1692, %vm1702
        %vm1713 = vmand %vm1693, %vm1703
        %vm1714 = vmand %vm1694, %vm1704
        %vm1715 = vmand %vm1695, %vm1705
        %vm1716 = vmand %vm1696, %vm1706
        %vm1717 = vmand %vm1697, %vm1707
        %v1718 = vsel %vm1708, %v1649, 0.0
        %v1719 = vsel %vm1708, %v1650, 0.0
        %v1720 = vsel %vm1709, %v1651, 0.0
        %v1721 = vsel %vm1709, %v1652, 0.0
        %v1722 = vsel %vm1710, %v1653, 0.0
        %v1723 = vsel %vm1710, %v1654, 0.0
        %v1724 = vsel %vm1711, %v1655, 0.0
        %v1725 = vsel %vm1711, %v1656, 0.0
        %v1726 = vsel %vm1712, %v1657, 0.0
        %v1727 = vsel %vm1712, %v1658, 0.0
        %v1728 = vsel %vm1713, %v1659, 0.0
        %v1729 = vsel %vm1713, %v1660, 0.0
        %v1730 = vsel %vm1714, %v1661, 0.0
        %v1731 = vsel %vm1714, %v1662, 0.0
        %v1732 = vsel %vm1715, %v1663, 0.0
        %v1733 = vsel %vm1715, %v1664, 0.0
        %v1734 = vsel %vm1716, %v1665, 0.0
        %v1735 = vsel %vm1716, %v1666, 0.0
        %v1736 = vsel %vm1717, %v1667, 0.0
        %v1737 = vsel %vm1717, %v1668, 0.0
        %vm1738 = vcmask 1043459
        %vm1739 = vsmask.f32 7950
        %vm1740 = vmand %vm1738, %vm1739
        %v1741 = vld [vmem:[#allocation2] sm:$0x8]
        %v1742 = vsel %vm1740, 0, %v1741
        %1743 = vst [vmem:[#allocation2] sm:$0x8] %v1742
        %v1744 = vld [vmem:[#allocation2 + $0x10] sm:$0x8]
        %v1745 = vsel %vm1740, 0, %v1744
        %1746 = vst [vmem:[#allocation2 + $0x10] sm:$0x8] %v1745
        %v1747 = vld [vmem:[#allocation2 + $0x20] sm:$0x8]
        %v1748 = vsel %vm1740, 0, %v1747
        %1749 = vst [vmem:[#allocation2 + $0x20] sm:$0x8] %v1748
        %v1750 = vld [vmem:[#allocation2 + $0x30] sm:$0x8]
        %v1751 = vsel %vm1740, 0, %v1750
        %1752 = vst [vmem:[#allocation2 + $0x30] sm:$0x8] %v1751
        %v1753 = vld [vmem:[#allocation2 + $0x40] sm:$0x8]
        %v1754 = vsel %vm1740, 0, %v1753
        %1755 = vst [vmem:[#allocation2 + $0x40] sm:$0x8] %v1754
        %v1756 = vld [vmem:[#allocation2 + $0x50] sm:$0x8]
        %v1757 = vsel %vm1740, 0, %v1756
        %1758 = vst [vmem:[#allocation2 + $0x50] sm:$0x8] %v1757
        %v1759 = vld [vmem:[#allocation2 + $0x60] sm:$0x8]
        %v1760 = vsel %vm1740, 0, %v1759
        %1761 = vst [vmem:[#allocation2 + $0x60] sm:$0x8] %v1760
        %v1762 = vld [vmem:[#allocation2 + $0x70] sm:$0x8]
        %v1763 = vsel %vm1740, 0, %v1762
        %1764 = vst [vmem:[#allocation2 + $0x70] sm:$0x8] %v1763
        %v1765 = vld [vmem:[#allocation2 + $0x80] sm:$0x8]
        %v1766 = vsel %vm1740, 0, %v1765
        %1767 = vst [vmem:[#allocation2 + $0x80] sm:$0x8] %v1766
        %v1768 = vld [vmem:[#allocation2 + $0x90] sm:$0x8]
        %v1769 = vsel %vm1740, 0, %v1768
        %1770 = vst [vmem:[#allocation2 + $0x90] sm:$0x8] %v1769
        %vm1771 = vcmask 1040384
        %vm1772 = vsmask.f32 256
        %vm1773 = vmand %vm1771, %vm1772
        %v1774 = vld [vmem:[#allocation2 + $0xc] sm:$0x1]
        %v1775 = vsel %vm1773, 0, %v1774
        %1776 = vst [vmem:[#allocation2 + $0xc] sm:$0x1] %v1775
        %v1777 = vld [vmem:[#allocation2 + $0x1c] sm:$0x1]
        %v1778 = vsel %vm1773, 0, %v1777
        %1779 = vst [vmem:[#allocation2 + $0x1c] sm:$0x1] %v1778
        %v1780 = vld [vmem:[#allocation2 + $0x2c] sm:$0x1]
        %v1781 = vsel %vm1773, 0, %v1780
        %1782 = vst [vmem:[#allocation2 + $0x2c] sm:$0x1] %v1781
        %v1783 = vld [vmem:[#allocation2 + $0x3c] sm:$0x1]
        %v1784 = vsel %vm1773, 0, %v1783
        %1785 = vst [vmem:[#allocation2 + $0x3c] sm:$0x1] %v1784
        %v1786 = vld [vmem:[#allocation2 + $0x4c] sm:$0x1]
        %v1787 = vsel %vm1773, 0, %v1786
        %1788 = vst [vmem:[#allocation2 + $0x4c] sm:$0x1] %v1787
        %v1789 = vld [vmem:[#allocation2 + $0x5c] sm:$0x1]
        %v1790 = vsel %vm1773, 0, %v1789
        %1791 = vst [vmem:[#allocation2 + $0x5c] sm:$0x1] %v1790
        %v1792 = vld [vmem:[#allocation2 + $0x6c] sm:$0x1]
        %v1793 = vsel %vm1773, 0, %v1792
        %1794 = vst [vmem:[#allocation2 + $0x6c] sm:$0x1] %v1793
        %v1795 = vld [vmem:[#allocation2 + $0x7c] sm:$0x1]
        %v1796 = vsel %vm1773, 0, %v1795
        %1797 = vst [vmem:[#allocation2 + $0x7c] sm:$0x1] %v1796
        %v1798 = vld [vmem:[#allocation2 + $0x8c] sm:$0x1]
        %v1799 = vsel %vm1773, 0, %v1798
        %1800 = vst [vmem:[#allocation2 + $0x8c] sm:$0x1] %v1799
        %v1801 = vld [vmem:[#allocation2 + $0x9c] sm:$0x1]
        %v1802 = vsel %vm1773, 0, %v1801
        %1803 = vst [vmem:[#allocation2 + $0x9c] sm:$0x1] %v1802
        %v1804 = vpack.c.bf16 %v1719, %v1718
        %v1805 = vpack.c.bf16 %v1721, %v1720
        %v1806 = vpack.c.bf16 %v1723, %v1722
        %v1807 = vpack.c.bf16 %v1725, %v1724
        %v1808 = vpack.c.bf16 %v1727, %v1726
        %v1809 = vpack.c.bf16 %v1729, %v1728
        %v1810 = vpack.c.bf16 %v1731, %v1730
        %v1811 = vpack.c.bf16 %v1733, %v1732
        %v1812 = vpack.c.bf16 %v1735, %v1734
        %v1813 = vpack.c.bf16 %v1737, %v1736
        %v1824 = vunpack.c.l.b16 %v1804
        %v1825 = vunpack.c.h.b16 %v1804
        %v1826 = vunpack.c.l.b16 %v1805
        %v1827 = vunpack.c.h.b16 %v1805
        %v1828 = vunpack.c.l.b16 %v1806
        %v1829 = vunpack.c.h.b16 %v1806
        %v1830 = vunpack.c.l.b16 %v1807
        %v1831 = vunpack.c.h.b16 %v1807
        %v1832 = vunpack.c.l.b16 %v1808
        %v1833 = vunpack.c.h.b16 %v1808
        %v1834 = vunpack.c.l.b16 %v1809
        %v1835 = vunpack.c.h.b16 %v1809
        %v1836 = vunpack.c.l.b16 %v1810
        %v1837 = vunpack.c.h.b16 %v1810
        %v1838 = vunpack.c.l.b16 %v1811
        %v1839 = vunpack.c.h.b16 %v1811
        %v1840 = vunpack.c.l.b16 %v1812
        %v1841 = vunpack.c.h.b16 %v1812
        %v1842 = vunpack.c.l.b16 %v1813
        %v1843 = vunpack.c.h.b16 %v1813
        %v1844 = vpack.c.b16 %v1824, %v1824
        %v1845 = vpack.c.b16 %v1825, %v1825
        %v1846 = vpack.c.b16 %v1826, %v1826
        %v1847 = vpack.c.b16 %v1827, %v1827
        %v1848 = vpack.c.b16 %v1828, %v1828
        %v1849 = vpack.c.b16 %v1829, %v1829
        %v1850 = vpack.c.b16 %v1830, %v1830
        %v1851 = vpack.c.b16 %v1831, %v1831
        %v1852 = vpack.c.b16 %v1832, %v1832
        %v1853 = vpack.c.b16 %v1833, %v1833
        %v1854 = vpack.c.b16 %v1834, %v1834
        %v1855 = vpack.c.b16 %v1835, %v1835
        %v1856 = vpack.c.b16 %v1836, %v1836
        %v1857 = vpack.c.b16 %v1837, %v1837
        %v1858 = vpack.c.b16 %v1838, %v1838
        %v1859 = vpack.c.b16 %v1839, %v1839
        %v1860 = vpack.c.b16 %v1840, %v1840
        %v1861 = vpack.c.b16 %v1841, %v1841
        %v1862 = vpack.c.b16 %v1842, %v1842
        %v1863 = vpack.c.b16 %v1843, %v1843
        %1884 = vst [vmem:[#allocation2 + $0x4] sm:$0xf] %v1844
        %1885 = vst [vmem:[#allocation2 + $0x8] sm:$0xf] %v1845
        %1886 = vst [vmem:[#allocation2 + $0x14] sm:$0xf] %v1846
        %1887 = vst [vmem:[#allocation2 + $0x18] sm:$0xf] %v1847
        %1888 = vst [vmem:[#allocation2 + $0x24] sm:$0xf] %v1848
        %1889 = vst [vmem:[#allocation2 + $0x28] sm:$0xf] %v1849
        %1890 = vst [vmem:[#allocation2 + $0x34] sm:$0xf] %v1850
        %1891 = vst [vmem:[#allocation2 + $0x38] sm:$0xf] %v1851
        %1892 = vst [vmem:[#allocation2 + $0x44] sm:$0xf] %v1852
        %1893 = vst [vmem:[#allocation2 + $0x48] sm:$0xf] %v1853
        %1894 = vst [vmem:[#allocation2 + $0x54] sm:$0xf] %v1854
        %1895 = vst [vmem:[#allocation2 + $0x58] sm:$0xf] %v1855
        %1896 = vst [vmem:[#allocation2 + $0x64] sm:$0xf] %v1856
        %1897 = vst [vmem:[#allocation2 + $0x68] sm:$0xf] %v1857
        %1898 = vst [vmem:[#allocation2 + $0x74] sm:$0xf] %v1858
        %1899 = vst [vmem:[#allocation2 + $0x78] sm:$0xf] %v1859
        %1900 = vst [vmem:[#allocation2 + $0x84] sm:$0xf] %v1860
        %1901 = vst [vmem:[#allocation2 + $0x88] sm:$0xf] %v1861
        %1902 = vst [vmem:[#allocation2 + $0x94] sm:$0xf] %v1862
        %1903 = vst [vmem:[#allocation2 + $0x98] sm:$0xf] %v1863
        %v1904 = vld [vmem:[#allocation2] sm:$0x8]
        %v1905 = vld [vmem:[#allocation2 + $0x4] sm:$0xf]
        %v1906 = vld [vmem:[#allocation2 + $0x8] sm:$0xf]
        %v1907 = vld [vmem:[#allocation2 + $0x10] sm:$0x8]
        %v1908 = vld [vmem:[#allocation2 + $0x14] sm:$0xf]
        %v1909 = vld [vmem:[#allocation2 + $0x18] sm:$0xf]
        %v1910 = vld [vmem:[#allocation2 + $0x20] sm:$0x8]
        %v1911 = vld [vmem:[#allocation2 + $0x24] sm:$0xf]
        %v1912 = vld [vmem:[#allocation2 + $0x28] sm:$0xf]
        %v1913 = vld [vmem:[#allocation2 + $0x30] sm:$0x8]
        %v1914 = vld [vmem:[#allocation2 + $0x34] sm:$0xf]
        %v1915 = vld [vmem:[#allocation2 + $0x38] sm:$0xf]
        %v1916 = vld [vmem:[#allocation2 + $0x40] sm:$0x8]
        %v1917 = vld [vmem:[#allocation2 + $0x44] sm:$0xf]
        %v1918 = vld [vmem:[#allocation2 + $0x48] sm:$0xf]
        %v1919 = vld [vmem:[#allocation2 + $0x50] sm:$0x8]
        %v1920 = vld [vmem:[#allocation2 + $0x54] sm:$0xf]
        %v1921 = vld [vmem:[#allocation2 + $0x58] sm:$0xf]
        %v1922 = vld [vmem:[#allocation2 + $0x60] sm:$0x8]
        %v1923 = vld [vmem:[#allocation2 + $0x64] sm:$0xf]
        %v1924 = vld [vmem:[#allocation2 + $0x68] sm:$0xf]
        %v1925 = vld [vmem:[#allocation2 + $0x70] sm:$0x8]
        %v1926 = vld [vmem:[#allocation2 + $0x74] sm:$0xf]
        %v1927 = vld [vmem:[#allocation2 + $0x78] sm:$0xf]
        %v1928 = vld [vmem:[#allocation2 + $0xc] sm:$0x1]
        %v1929 = vld [vmem:[#allocation2 + $0x1c] sm:$0x1]
        %v1930 = vld [vmem:[#allocation2 + $0x2c] sm:$0x1]
        %v1931 = vld [vmem:[#allocation2 + $0x3c] sm:$0x1]
        %v1932 = vld [vmem:[#allocation2 + $0x4c] sm:$0x1]
        %v1933 = vld [vmem:[#allocation2 + $0x5c] sm:$0x1]
        %v1934 = vld [vmem:[#allocation2 + $0x6c] sm:$0x1]
        %v1935 = vld [vmem:[#allocation2 + $0x7c] sm:$0x1]
        %s1936 = scalar_lea.vmem [#allocation2], 16
        %v1937 = vld [vmem:[%s1936] sm:$0x8]
        %v1938 = vld [vmem:[%s1936 + $0x4] sm:$0xf]
        %v1939 = vld [vmem:[%s1936 + $0x8] sm:$0xf]
        %v1940 = vld [vmem:[%s1936 + $0x10] sm:$0x8]
        %v1941 = vld [vmem:[%s1936 + $0x14] sm:$0xf]
        %v1942 = vld [vmem:[%s1936 + $0x18] sm:$0xf]
        %v1943 = vld [vmem:[%s1936 + $0x20] sm:$0x8]
        %v1944 = vld [vmem:[%s1936 + $0x24] sm:$0xf]
        %v1945 = vld [vmem:[%s1936 + $0x28] sm:$0xf]
        %v1946 = vld [vmem:[%s1936 + $0x30] sm:$0x8]
        %v1947 = vld [vmem:[%s1936 + $0x34] sm:$0xf]
        %v1948 = vld [vmem:[%s1936 + $0x38] sm:$0xf]
        %v1949 = vld [vmem:[%s1936 + $0x40] sm:$0x8]
        %v1950 = vld [vmem:[%s1936 + $0x44] sm:$0xf]
        %v1951 = vld [vmem:[%s1936 + $0x48] sm:$0xf]
        %v1952 = vld [vmem:[%s1936 + $0x50] sm:$0x8]
        %v1953 = vld [vmem:[%s1936 + $0x54] sm:$0xf]
        %v1954 = vld [vmem:[%s1936 + $0x58] sm:$0xf]
        %v1955 = vld [vmem:[%s1936 + $0x60] sm:$0x8]
        %v1956 = vld [vmem:[%s1936 + $0x64] sm:$0xf]
        %v1957 = vld [vmem:[%s1936 + $0x68] sm:$0xf]
        %v1958 = vld [vmem:[%s1936 + $0x70] sm:$0x8]
        %v1959 = vld [vmem:[%s1936 + $0x74] sm:$0xf]
        %v1960 = vld [vmem:[%s1936 + $0x78] sm:$0xf]
        %v1961 = vld [vmem:[%s1936 + $0xc] sm:$0x1]
        %v1962 = vld [vmem:[%s1936 + $0x1c] sm:$0x1]
        %v1963 = vld [vmem:[%s1936 + $0x2c] sm:$0x1]
        %v1964 = vld [vmem:[%s1936 + $0x3c] sm:$0x1]
        %v1965 = vld [vmem:[%s1936 + $0x4c] sm:$0x1]
        %v1966 = vld [vmem:[%s1936 + $0x5c] sm:$0x1]
        %v1967 = vld [vmem:[%s1936 + $0x6c] sm:$0x1]
        %v1968 = vld [vmem:[%s1936 + $0x7c] sm:$0x1]
        %s1969 = scalar_lea.vmem [#allocation2], 32
        %v1970 = vld [vmem:[%s1969] sm:$0x8]
        %v1971 = vld [vmem:[%s1969 + $0x4] sm:$0xf]
        %v1972 = vld [vmem:[%s1969 + $0x8] sm:$0xf]
        %v1973 = vld [vmem:[%s1969 + $0x10] sm:$0x8]
        %v1974 = vld [vmem:[%s1969 + $0x14] sm:$0xf]
        %v1975 = vld [vmem:[%s1969 + $0x18] sm:$0xf]
        %v1976 = vld [vmem:[%s1969 + $0x20] sm:$0x8]
        %v1977 = vld [vmem:[%s1969 + $0x24] sm:$0xf]
        %v1978 = vld [vmem:[%s1969 + $0x28] sm:$0xf]
        %v1979 = vld [vmem:[%s1969 + $0x30] sm:$0x8]
        %v1980 = vld [vmem:[%s1969 + $0x34] sm:$0xf]
        %v1981 = vld [vmem:[%s1969 + $0x38] sm:$0xf]
        %v1982 = vld [vmem:[%s1969 + $0x40] sm:$0x8]
        %v1983 = vld [vmem:[%s1969 + $0x44] sm:$0xf]
        %v1984 = vld [vmem:[%s1969 + $0x48] sm:$0xf]
        %v1985 = vld [vmem:[%s1969 + $0x50] sm:$0x8]
        %v1986 = vld [vmem:[%s1969 + $0x54] sm:$0xf]
        %v1987 = vld [vmem:[%s1969 + $0x58] sm:$0xf]
        %v1988 = vld [vmem:[%s1969 + $0x60] sm:$0x8]
        %v1989 = vld [vmem:[%s1969 + $0x64] sm:$0xf]
        %v1990 = vld [vmem:[%s1969 + $0x68] sm:$0xf]
        %v1991 = vld [vmem:[%s1969 + $0x70] sm:$0x8]
        %v1992 = vld [vmem:[%s1969 + $0x74] sm:$0xf]
        %v1993 = vld [vmem:[%s1969 + $0x78] sm:$0xf]
        %v1994 = vld [vmem:[%s1969 + $0xc] sm:$0x1]
        %v1995 = vld [vmem:[%s1969 + $0x1c] sm:$0x1]
        %v1996 = vld [vmem:[%s1969 + $0x2c] sm:$0x1]
        %v1997 = vld [vmem:[%s1969 + $0x3c] sm:$0x1]
        %v1998 = vld [vmem:[%s1969 + $0x4c] sm:$0x1]
        %v1999 = vld [vmem:[%s1969 + $0x5c] sm:$0x1]
        %v2000 = vld [vmem:[%s1969 + $0x6c] sm:$0x1]
        %v2001 = vld [vmem:[%s1969 + $0x7c] sm:$0x1]
        %v2026 = vunpack.c.l.b16 %v1904
        %v2027 = vunpack.c.l.b16 %v1905
        %v2028 = vunpack.c.l.b16 %v1906
        %v2029 = vunpack.c.l.b16 %v1907
        %v2030 = vunpack.c.l.b16 %v1908
        %v2031 = vunpack.c.l.b16 %v1909
        %v2032 = vunpack.c.l.b16 %v1910
        %v2033 = vunpack.c.l.b16 %v1911
        %v2034 = vunpack.c.l.b16 %v1912
        %v2035 = vunpack.c.l.b16 %v1913
        %v2036 = vunpack.c.l.b16 %v1914
        %v2037 = vunpack.c.l.b16 %v1915
        %v2038 = vunpack.c.l.b16 %v1916
        %v2039 = vunpack.c.l.b16 %v1917
        %v2040 = vunpack.c.l.b16 %v1918
        %v2041 = vunpack.c.l.b16 %v1919
        %v2042 = vunpack.c.l.b16 %v1920
        %v2043 = vunpack.c.l.b16 %v1921
        %v2044 = vunpack.c.l.b16 %v1922
        %v2045 = vunpack.c.l.b16 %v1923
        %v2046 = vunpack.c.l.b16 %v1924
        %v2047 = vunpack.c.l.b16 %v1925
        %v2048 = vunpack.c.l.b16 %v1926
        %v2049 = vunpack.c.l.b16 %v1927
        %v2050 = vpack.c.b16 %v2027, %v2026
        %v2051 = vpack.c.b16 %v2028, %v2028
        %v2052 = vpack.c.b16 %v2030, %v2029
        %v2053 = vpack.c.b16 %v2031, %v2031
        %v2054 = vpack.c.b16 %v2033, %v2032
        %v2055 = vpack.c.b16 %v2034, %v2034
        %v2056 = vpack.c.b16 %v2036, %v2035
        %v2057 = vpack.c.b16 %v2037, %v2037
        %v2058 = vpack.c.b16 %v2039, %v2038
        %v2059 = vpack.c.b16 %v2040, %v2040
        %v2060 = vpack.c.b16 %v2042, %v2041
        %v2061 = vpack.c.b16 %v2043, %v2043
        %v2062 = vpack.c.b16 %v2045, %v2044
        %v2063 = vpack.c.b16 %v2046, %v2046
        %v2064 = vpack.c.b16 %v2048, %v2047
        %v2065 = vpack.c.b16 %v2049, %v2049
        %v2066 = vpack.c.b16 %v2028, %v2027
        %v2067 = vpack.c.b16 %v2031, %v2030
        %v2068 = vpack.c.b16 %v2034, %v2033
        %v2069 = vpack.c.b16 %v2037, %v2036
        %v2070 = vpack.c.b16 %v2040, %v2039
        %v2071 = vpack.c.b16 %v2043, %v2042
        %v2072 = vpack.c.b16 %v2046, %v2045
        %v2073 = vpack.c.b16 %v2049, %v2048
        %v2075 = vshrl.u32 %v2066, 16
        %v2077 = vrot.slane %v2075, 4
        %v2078 = vshll.u32 %v2066, 16
        %v2080 = vrot.slane %v2078, 5
        %v2081 = vor.u32 %v2077, %v2080
        %v2083 = vshrl.u32 %v2067, 16
        %v2085 = vrot.slane %v2083, 4
        %v2086 = vshll.u32 %v2067, 16
        %v2088 = vrot.slane %v2086, 5
        %v2089 = vor.u32 %v2085, %v2088
        %v2091 = vshrl.u32 %v2068, 16
        %v2093 = vrot.slane %v2091, 4
        %v2094 = vshll.u32 %v2068, 16
        %v2096 = vrot.slane %v2094, 5
        %v2097 = vor.u32 %v2093, %v2096
        %v2099 = vshrl.u32 %v2069, 16
        %v2101 = vrot.slane %v2099, 4
        %v2102 = vshll.u32 %v2069, 16
        %v2104 = vrot.slane %v2102, 5
        %v2105 = vor.u32 %v2101, %v2104
        %v2107 = vshrl.u32 %v2070, 16
        %v2109 = vrot.slane %v2107, 4
        %v2110 = vshll.u32 %v2070, 16
        %v2112 = vrot.slane %v2110, 5
        %v2113 = vor.u32 %v2109, %v2112
        %v2115 = vshrl.u32 %v2071, 16
        %v2117 = vrot.slane %v2115, 4
        %v2118 = vshll.u32 %v2071, 16
        %v2120 = vrot.slane %v2118, 5
        %v2121 = vor.u32 %v2117, %v2120
        %v2123 = vshrl.u32 %v2072, 16
        %v2125 = vrot.slane %v2123, 4
        %v2126 = vshll.u32 %v2072, 16
        %v2128 = vrot.slane %v2126, 5
        %v2129 = vor.u32 %v2125, %v2128
        %v2131 = vshrl.u32 %v2073, 16
        %v2133 = vrot.slane %v2131, 4
        %v2134 = vshll.u32 %v2073, 16
        %v2136 = vrot.slane %v2134, 5
        %v2137 = vor.u32 %v2133, %v2136
        %v2146 = vunpack.c.l.b16 %v1928
        %v2147 = vunpack.c.l.b16 %v1929
        %v2148 = vunpack.c.l.b16 %v1930
        %v2149 = vunpack.c.l.b16 %v1931
        %v2150 = vunpack.c.l.b16 %v1932
        %v2151 = vunpack.c.l.b16 %v1933
        %v2152 = vunpack.c.l.b16 %v1934
        %v2153 = vunpack.c.l.b16 %v1935
        %v2154 = vpack.c.b16 %v2146, %v2146
        %v2155 = vpack.c.b16 %v2147, %v2147
        %v2156 = vpack.c.b16 %v2148, %v2148
        %v2157 = vpack.c.b16 %v2149, %v2149
        %v2158 = vpack.c.b16 %v2150, %v2150
        %v2159 = vpack.c.b16 %v2151, %v2151
        %v2160 = vpack.c.b16 %v2152, %v2152
        %v2161 = vpack.c.b16 %v2153, %v2153
        %vm2162 = vcmask 1042432
        %v2163 = vrot.slane %v2066, 5
        %v2164 = vrot.slane %v2154, 5
        %v2165 = vsel %vm2162, %v2163, %v2164
        %v2166 = vrot.slane %v2067, 5
        %v2167 = vrot.slane %v2155, 5
        %v2168 = vsel %vm2162, %v2166, %v2167
        %v2169 = vrot.slane %v2068, 5
        %v2170 = vrot.slane %v2156, 5
        %v2171 = vsel %vm2162, %v2169, %v2170
        %v2172 = vrot.slane %v2069, 5
        %v2173 = vrot.slane %v2157, 5
        %v2174 = vsel %vm2162, %v2172, %v2173
        %v2175 = vrot.slane %v2070, 5
        %v2176 = vrot.slane %v2158, 5
        %v2177 = vsel %vm2162, %v2175, %v2176
        %v2178 = vrot.slane %v2071, 5
        %v2179 = vrot.slane %v2159, 5
        %v2180 = vsel %vm2162, %v2178, %v2179
        %v2181 = vrot.slane %v2072, 5
        %v2182 = vrot.slane %v2160, 5
        %v2183 = vsel %vm2162, %v2181, %v2182
        %v2184 = vrot.slane %v2073, 5
        %v2185 = vrot.slane %v2161, 5
        %v2186 = vsel %vm2162, %v2184, %v2185
        %v2211 = vunpack.c.l.b16 %v1937
        %v2212 = vunpack.c.l.b16 %v1938
        %v2213 = vunpack.c.l.b16 %v1939
        %v2214 = vunpack.c.l.b16 %v1940
        %v2215 = vunpack.c.l.b16 %v1941
        %v2216 = vunpack.c.l.b16 %v1942
        %v2217 = vunpack.c.l.b16 %v1943
        %v2218 = vunpack.c.l.b16 %v1944
        %v2219 = vunpack.c.l.b16 %v1945
        %v2220 = vunpack.c.l.b16 %v1946
        %v2221 = vunpack.c.l.b16 %v1947
        %v2222 = vunpack.c.l.b16 %v1948
        %v2223 = vunpack.c.l.b16 %v1949
        %v2224 = vunpack.c.l.b16 %v1950
        %v2225 = vunpack.c.l.b16 %v1951
        %v2226 = vunpack.c.l.b16 %v1952
        %v2227 = vunpack.c.l.b16 %v1953
        %v2228 = vunpack.c.l.b16 %v1954
        %v2229 = vunpack.c.l.b16 %v1955
        %v2230 = vunpack.c.l.b16 %v1956
        %v2231 = vunpack.c.l.b16 %v1957
        %v2232 = vunpack.c.l.b16 %v1958
        %v2233 = vunpack.c.l.b16 %v1959
        %v2234 = vunpack.c.l.b16 %v1960
        %v2235 = vpack.c.b16 %v2212, %v2211
        %v2236 = vpack.c.b16 %v2213, %v2213
        %v2237 = vpack.c.b16 %v2215, %v2214
        %v2238 = vpack.c.b16 %v2216, %v2216
        %v2239 = vpack.c.b16 %v2218, %v2217
        %v2240 = vpack.c.b16 %v2219, %v2219
        %v2241 = vpack.c.b16 %v2221, %v2220
        %v2242 = vpack.c.b16 %v2222, %v2222
        %v2243 = vpack.c.b16 %v2224, %v2223
        %v2244 = vpack.c.b16 %v2225, %v2225
        %v2245 = vpack.c.b16 %v2227, %v2226
        %v2246 = vpack.c.b16 %v2228, %v2228
        %v2247 = vpack.c.b16 %v2230, %v2229
        %v2248 = vpack.c.b16 %v2231, %v2231
        %v2249 = vpack.c.b16 %v2233, %v2232
        %v2250 = vpack.c.b16 %v2234, %v2234
        %v2251 = vpack.c.b16 %v2213, %v2212
        %v2252 = vpack.c.b16 %v2216, %v2215
        %v2253 = vpack.c.b16 %v2219, %v2218
        %v2254 = vpack.c.b16 %v2222, %v2221
        %v2255 = vpack.c.b16 %v2225, %v2224
        %v2256 = vpack.c.b16 %v2228, %v2227
        %v2257 = vpack.c.b16 %v2231, %v2230
        %v2258 = vpack.c.b16 %v2234, %v2233
        %v2260 = vshrl.u32 %v2251, 16
        %v2262 = vrot.slane %v2260, 4
        %v2263 = vshll.u32 %v2251, 16
        %v2265 = vrot.slane %v2263, 5
        %v2266 = vor.u32 %v2262, %v2265
        %v2268 = vshrl.u32 %v2252, 16
        %v2270 = vrot.slane %v2268, 4
        %v2271 = vshll.u32 %v2252, 16
        %v2273 = vrot.slane %v2271, 5
        %v2274 = vor.u32 %v2270, %v2273
        %v2276 = vshrl.u32 %v2253, 16
        %v2278 = vrot.slane %v2276, 4
        %v2279 = vshll.u32 %v2253, 16
        %v2281 = vrot.slane %v2279, 5
        %v2282 = vor.u32 %v2278, %v2281
        %v2284 = vshrl.u32 %v2254, 16
        %v2286 = vrot.slane %v2284, 4
        %v2287 = vshll.u32 %v2254, 16
        %v2289 = vrot.slane %v2287, 5
        %v2290 = vor.u32 %v2286, %v2289
        %v2292 = vshrl.u32 %v2255, 16
        %v2294 = vrot.slane %v2292, 4
        %v2295 = vshll.u32 %v2255, 16
        %v2297 = vrot.slane %v2295, 5
        %v2298 = vor.u32 %v2294, %v2297
        %v2300 = vshrl.u32 %v2256, 16
        %v2302 = vrot.slane %v2300, 4
        %v2303 = vshll.u32 %v2256, 16
        %v2305 = vrot.slane %v2303, 5
        %v2306 = vor.u32 %v2302, %v2305
        %v2308 = vshrl.u32 %v2257, 16
        %v2310 = vrot.slane %v2308, 4
        %v2311 = vshll.u32 %v2257, 16
        %v2313 = vrot.slane %v2311, 5
        %v2314 = vor.u32 %v2310, %v2313
        %v2316 = vshrl.u32 %v2258, 16
        %v2318 = vrot.slane %v2316, 4
        %v2319 = vshll.u32 %v2258, 16
        %v2321 = vrot.slane %v2319, 5
        %v2322 = vor.u32 %v2318, %v2321
        %v2331 = vunpack.c.l.b16 %v1961
        %v2332 = vunpack.c.l.b16 %v1962
        %v2333 = vunpack.c.l.b16 %v1963
        %v2334 = vunpack.c.l.b16 %v1964
        %v2335 = vunpack.c.l.b16 %v1965
        %v2336 = vunpack.c.l.b16 %v1966
        %v2337 = vunpack.c.l.b16 %v1967
        %v2338 = vunpack.c.l.b16 %v1968
        %v2339 = vpack.c.b16 %v2331, %v2331
        %v2340 = vpack.c.b16 %v2332, %v2332
        %v2341 = vpack.c.b16 %v2333, %v2333
        %v2342 = vpack.c.b16 %v2334, %v2334
        %v2343 = vpack.c.b16 %v2335, %v2335
        %v2344 = vpack.c.b16 %v2336, %v2336
        %v2345 = vpack.c.b16 %v2337, %v2337
        %v2346 = vpack.c.b16 %v2338, %v2338
        %v2347 = vrot.slane %v2251, 5
        %v2348 = vrot.slane %v2339, 5
        %v2349 = vsel %vm2162, %v2347, %v2348
        %v2350 = vrot.slane %v2252, 5
        %v2351 = vrot.slane %v2340, 5
        %v2352 = vsel %vm2162, %v2350, %v2351
        %v2353 = vrot.slane %v2253, 5
        %v2354 = vrot.slane %v2341, 5
        %v2355 = vsel %vm2162, %v2353, %v2354
        %v2356 = vrot.slane %v2254, 5
        %v2357 = vrot.slane %v2342, 5
        %v2358 = vsel %vm2162, %v2356, %v2357
        %v2359 = vrot.slane %v2255, 5
        %v2360 = vrot.slane %v2343, 5
        %v2361 = vsel %vm2162, %v2359, %v2360
        %v2362 = vrot.slane %v2256, 5
        %v2363 = vrot.slane %v2344, 5
        %v2364 = vsel %vm2162, %v2362, %v2363
        %v2365 = vrot.slane %v2257, 5
        %v2366 = vrot.slane %v2345, 5
        %v2367 = vsel %vm2162, %v2365, %v2366
        %v2368 = vrot.slane %v2258, 5
        %v2369 = vrot.slane %v2346, 5
        %v2370 = vsel %vm2162, %v2368, %v2369
        %v2395 = vunpack.c.l.b16 %v1970
        %v2396 = vunpack.c.l.b16 %v1971
        %v2397 = vunpack.c.l.b16 %v1972
        %v2398 = vunpack.c.l.b16 %v1973
        %v2399 = vunpack.c.l.b16 %v1974
        %v2400 = vunpack.c.l.b16 %v1975
        %v2401 = vunpack.c.l.b16 %v1976
        %v2402 = vunpack.c.l.b16 %v1977
        %v2403 = vunpack.c.l.b16 %v1978
        %v2404 = vunpack.c.l.b16 %v1979
        %v2405 = vunpack.c.l.b16 %v1980
        %v2406 = vunpack.c.l.b16 %v1981
        %v2407 = vunpack.c.l.b16 %v1982
        %v2408 = vunpack.c.l.b16 %v1983
        %v2409 = vunpack.c.l.b16 %v1984
        %v2410 = vunpack.c.l.b16 %v1985
        %v2411 = vunpack.c.l.b16 %v1986
        %v2412 = vunpack.c.l.b16 %v1987
        %v2413 = vunpack.c.l.b16 %v1988
        %v2414 = vunpack.c.l.b16 %v1989
        %v2415 = vunpack.c.l.b16 %v1990
        %v2416 = vunpack.c.l.b16 %v1991
        %v2417 = vunpack.c.l.b16 %v1992
        %v2418 = vunpack.c.l.b16 %v1993
        %v2419 = vpack.c.b16 %v2396, %v2395
        %v2420 = vpack.c.b16 %v2397, %v2397
        %v2421 = vpack.c.b16 %v2399, %v2398
        %v2422 = vpack.c.b16 %v2400, %v2400
        %v2423 = vpack.c.b16 %v2402, %v2401
        %v2424 = vpack.c.b16 %v2403, %v2403
        %v2425 = vpack.c.b16 %v2405, %v2404
        %v2426 = vpack.c.b16 %v2406, %v2406
        %v2427 = vpack.c.b16 %v2408, %v2407
        %v2428 = vpack.c.b16 %v2409, %v2409
        %v2429 = vpack.c.b16 %v2411, %v2410
        %v2430 = vpack.c.b16 %v2412, %v2412
        %v2431 = vpack.c.b16 %v2414, %v2413
        %v2432 = vpack.c.b16 %v2415, %v2415
        %v2433 = vpack.c.b16 %v2417, %v2416
        %v2434 = vpack.c.b16 %v2418, %v2418
        %v2435 = vpack.c.b16 %v2397, %v2396
        %v2436 = vpack.c.b16 %v2400, %v2399
        %v2437 = vpack.c.b16 %v2403, %v2402
        %v2438 = vpack.c.b16 %v2406, %v2405
        %v2439 = vpack.c.b16 %v2409, %v2408
        %v2440 = vpack.c.b16 %v2412, %v2411
        %v2441 = vpack.c.b16 %v2415, %v2414
        %v2442 = vpack.c.b16 %v2418, %v2417
        %v2444 = vshrl.u32 %v2435, 16
        %v2446 = vrot.slane %v2444, 4
        %v2447 = vshll.u32 %v2435, 16
        %v2449 = vrot.slane %v2447, 5
        %v2450 = vor.u32 %v2446, %v2449
        %v2452 = vshrl.u32 %v2436, 16
        %v2454 = vrot.slane %v2452, 4
        %v2455 = vshll.u32 %v2436, 16
        %v2457 = vrot.slane %v2455, 5
        %v2458 = vor.u32 %v2454, %v2457
        %v2460 = vshrl.u32 %v2437, 16
        %v2462 = vrot.slane %v2460, 4
        %v2463 = vshll.u32 %v2437, 16
        %v2465 = vrot.slane %v2463, 5
        %v2466 = vor.u32 %v2462, %v2465
        %v2468 = vshrl.u32 %v2438, 16
        %v2470 = vrot.slane %v2468, 4
        %v2471 = vshll.u32 %v2438, 16
        %v2473 = vrot.slane %v2471, 5
        %v2474 = vor.u32 %v2470, %v2473
        %v2476 = vshrl.u32 %v2439, 16
        %v2478 = vrot.slane %v2476, 4
        %v2479 = vshll.u32 %v2439, 16
        %v2481 = vrot.slane %v2479, 5
        %v2482 = vor.u32 %v2478, %v2481
        %v2484 = vshrl.u32 %v2440, 16
        %v2486 = vrot.slane %v2484, 4
        %v2487 = vshll.u32 %v2440, 16
        %v2489 = vrot.slane %v2487, 5
        %v2490 = vor.u32 %v2486, %v2489
        %v2492 = vshrl.u32 %v2441, 16
        %v2494 = vrot.slane %v2492, 4
        %v2495 = vshll.u32 %v2441, 16
        %v2497 = vrot.slane %v2495, 5
        %v2498 = vor.u32 %v2494, %v2497
        %v2500 = vshrl.u32 %v2442, 16
        %v2502 = vrot.slane %v2500, 4
        %v2503 = vshll.u32 %v2442, 16
        %v2505 = vrot.slane %v2503, 5
        %v2506 = vor.u32 %v2502, %v2505
        %v2515 = vunpack.c.l.b16 %v1994
        %v2516 = vunpack.c.l.b16 %v1995
        %v2517 = vunpack.c.l.b16 %v1996
        %v2518 = vunpack.c.l.b16 %v1997
        %v2519 = vunpack.c.l.b16 %v1998
        %v2520 = vunpack.c.l.b16 %v1999
        %v2521 = vunpack.c.l.b16 %v2000
        %v2522 = vunpack.c.l.b16 %v2001
        %v2523 = vpack.c.b16 %v2515, %v2515
        %v2524 = vpack.c.b16 %v2516, %v2516
        %v2525 = vpack.c.b16 %v2517, %v2517
        %v2526 = vpack.c.b16 %v2518, %v2518
        %v2527 = vpack.c.b16 %v2519, %v2519
        %v2528 = vpack.c.b16 %v2520, %v2520
        %v2529 = vpack.c.b16 %v2521, %v2521
        %v2530 = vpack.c.b16 %v2522, %v2522
        %v2531 = vrot.slane %v2435, 5
        %v2532 = vrot.slane %v2523, 5
        %v2533 = vsel %vm2162, %v2531, %v2532
        %v2534 = vrot.slane %v2436, 5
        %v2535 = vrot.slane %v2524, 5
        %v2536 = vsel %vm2162, %v2534, %v2535
        %v2537 = vrot.slane %v2437, 5
        %v2538 = vrot.slane %v2525, 5
        %v2539 = vsel %vm2162, %v2537, %v2538
        %v2540 = vrot.slane %v2438, 5
        %v2541 = vrot.slane %v2526, 5
        %v2542 = vsel %vm2162, %v2540, %v2541
        %v2543 = vrot.slane %v2439, 5
        %v2544 = vrot.slane %v2527, 5
        %v2545 = vsel %vm2162, %v2543, %v2544
        %v2546 = vrot.slane %v2440, 5
        %v2547 = vrot.slane %v2528, 5
        %v2548 = vsel %vm2162, %v2546, %v2547
        %v2549 = vrot.slane %v2441, 5
        %v2550 = vrot.slane %v2529, 5
        %v2551 = vsel %vm2162, %v2549, %v2550
        %v2552 = vrot.slane %v2442, 5
        %v2553 = vrot.slane %v2530, 5
        %v2554 = vsel %vm2162, %v2552, %v2553
        %vm2555 = vsmask.f32 4352
        %v2557 = vshrl.u32 %v2050, 16
        %v2559 = vrot.slane %v2557, 3
        %v2560 = vshll.u32 %v2050, 16
        %v2562 = vrot.slane %v2560, 4
        %v2563 = vor.u32 %v2559, %v2562
        %v2565 = vshrl.u32 %v2051, 16
        %v2567 = vrot.slane %v2565, 3
        %v2568 = vshll.u32 %v2051, 16
        %v2570 = vrot.slane %v2568, 4
        %v2571 = vor.u32 %v2567, %v2570
        %v2572 = vsel %vm2555, %v2563, %v2571
        %v2574 = vshrl.u32 %v2081, 16
        %v2576 = vrot.slane %v2574, 3
        %v2577 = vshll.u32 %v2081, 16
        %v2579 = vrot.slane %v2577, 4
        %v2580 = vor.u32 %v2576, %v2579
        %v2581 = vsel %vm2555, %v2580, %v2580
        %v2583 = vshrl.u32 %v2163, 16
        %v2585 = vrot.slane %v2583, 3
        %v2586 = vshll.u32 %v2163, 16
        %v2588 = vrot.slane %v2586, 4
        %v2589 = vor.u32 %v2585, %v2588
        %v2591 = vshrl.u32 %v2165, 16
        %v2593 = vrot.slane %v2591, 3
        %v2594 = vshll.u32 %v2165, 16
        %v2596 = vrot.slane %v2594, 4
        %v2597 = vor.u32 %v2593, %v2596
        %v2598 = vsel %vm2555, %v2589, %v2597
        %v2600 = vshrl.u32 %v2235, 16
        %v2602 = vrot.slane %v2600, 3
        %v2603 = vshll.u32 %v2235, 16
        %v2605 = vrot.slane %v2603, 4
        %v2606 = vor.u32 %v2602, %v2605
        %v2608 = vshrl.u32 %v2236, 16
        %v2610 = vrot.slane %v2608, 3
        %v2611 = vshll.u32 %v2236, 16
        %v2613 = vrot.slane %v2611, 4
        %v2614 = vor.u32 %v2610, %v2613
        %v2615 = vsel %vm2555, %v2606, %v2614
        %v2617 = vshrl.u32 %v2266, 16
        %v2619 = vrot.slane %v2617, 3
        %v2620 = vshll.u32 %v2266, 16
        %v2622 = vrot.slane %v2620, 4
        %v2623 = vor.u32 %v2619, %v2622
        %v2624 = vsel %vm2555, %v2623, %v2623
        %v2626 = vshrl.u32 %v2347, 16
        %v2628 = vrot.slane %v2626, 3
        %v2629 = vshll.u32 %v2347, 16
        %v2631 = vrot.slane %v2629, 4
        %v2632 = vor.u32 %v2628, %v2631
        %v2634 = vshrl.u32 %v2349, 16
        %v2636 = vrot.slane %v2634, 3
        %v2637 = vshll.u32 %v2349, 16
        %v2639 = vrot.slane %v2637, 4
        %v2640 = vor.u32 %v2636, %v2639
        %v2641 = vsel %vm2555, %v2632, %v2640
        %v2643 = vshrl.u32 %v2419, 16
        %v2645 = vrot.slane %v2643, 3
        %v2646 = vshll.u32 %v2419, 16
        %v2648 = vrot.slane %v2646, 4
        %v2649 = vor.u32 %v2645, %v2648
        %v2651 = vshrl.u32 %v2420, 16
        %v2653 = vrot.slane %v2651, 3
        %v2654 = vshll.u32 %v2420, 16
        %v2656 = vrot.slane %v2654, 4
        %v2657 = vor.u32 %v2653, %v2656
        %v2658 = vsel %vm2555, %v2649, %v2657
        %v2660 = vshrl.u32 %v2450, 16
        %v2662 = vrot.slane %v2660, 3
        %v2663 = vshll.u32 %v2450, 16
        %v2665 = vrot.slane %v2663, 4
        %v2666 = vor.u32 %v2662, %v2665
        %v2667 = vsel %vm2555, %v2666, %v2666
        %v2669 = vshrl.u32 %v2531, 16
        %v2671 = vrot.slane %v2669, 3
        %v2672 = vshll.u32 %v2531, 16
        %v2674 = vrot.slane %v2672, 4
        %v2675 = vor.u32 %v2671, %v2674
        %v2677 = vshrl.u32 %v2533, 16
        %v2679 = vrot.slane %v2677, 3
        %v2680 = vshll.u32 %v2533, 16
        %v2682 = vrot.slane %v2680, 4
        %v2683 = vor.u32 %v2679, %v2682
        %v2684 = vsel %vm2555, %v2675, %v2683
        %v2686 = vshrl.u32 %v2052, 16
        %v2688 = vrot.slane %v2686, 3
        %v2689 = vshll.u32 %v2052, 16
        %v2691 = vrot.slane %v2689, 4
        %v2692 = vor.u32 %v2688, %v2691
        %v2694 = vshrl.u32 %v2053, 16
        %v2696 = vrot.slane %v2694, 3
        %v2697 = vshll.u32 %v2053, 16
        %v2699 = vrot.slane %v2697, 4
        %v2700 = vor.u32 %v2696, %v2699
        %v2701 = vsel %vm2555, %v2692, %v2700
        %v2703 = vshrl.u32 %v2089, 16
        %v2705 = vrot.slane %v2703, 3
        %v2706 = vshll.u32 %v2089, 16
        %v2708 = vrot.slane %v2706, 4
        %v2709 = vor.u32 %v2705, %v2708
        %v2710 = vsel %vm2555, %v2709, %v2709
        %v2712 = vshrl.u32 %v2166, 16
        %v2714 = vrot.slane %v2712, 3
        %v2715 = vshll.u32 %v2166, 16
        %v2717 = vrot.slane %v2715, 4
        %v2718 = vor.u32 %v2714, %v2717
        %v2720 = vshrl.u32 %v2168, 16
        %v2722 = vrot.slane %v2720, 3
        %v2723 = vshll.u32 %v2168, 16
        %v2725 = vrot.slane %v2723, 4
        %v2726 = vor.u32 %v2722, %v2725
        %v2727 = vsel %vm2555, %v2718, %v2726
        %v2729 = vshrl.u32 %v2237, 16
        %v2731 = vrot.slane %v2729, 3
        %v2732 = vshll.u32 %v2237, 16
        %v2734 = vrot.slane %v2732, 4
        %v2735 = vor.u32 %v2731, %v2734
        %v2737 = vshrl.u32 %v2238, 16
        %v2739 = vrot.slane %v2737, 3
        %v2740 = vshll.u32 %v2238, 16
        %v2742 = vrot.slane %v2740, 4
        %v2743 = vor.u32 %v2739, %v2742
        %v2744 = vsel %vm2555, %v2735, %v2743
        %v2746 = vshrl.u32 %v2274, 16
        %v2748 = vrot.slane %v2746, 3
        %v2749 = vshll.u32 %v2274, 16
        %v2751 = vrot.slane %v2749, 4
        %v2752 = vor.u32 %v2748, %v2751
        %v2753 = vsel %vm2555, %v2752, %v2752
        %v2755 = vshrl.u32 %v2350, 16
        %v2757 = vrot.slane %v2755, 3
        %v2758 = vshll.u32 %v2350, 16
        %v2760 = vrot.slane %v2758, 4
        %v2761 = vor.u32 %v2757, %v2760
        %v2763 = vshrl.u32 %v2352, 16
        %v2765 = vrot.slane %v2763, 3
        %v2766 = vshll.u32 %v2352, 16
        %v2768 = vrot.slane %v2766, 4
        %v2769 = vor.u32 %v2765, %v2768
        %v2770 = vsel %vm2555, %v2761, %v2769
        %v2772 = vshrl.u32 %v2421, 16
        %v2774 = vrot.slane %v2772, 3
        %v2775 = vshll.u32 %v2421, 16
        %v2777 = vrot.slane %v2775, 4
        %v2778 = vor.u32 %v2774, %v2777
        %v2780 = vshrl.u32 %v2422, 16
        %v2782 = vrot.slane %v2780, 3
        %v2783 = vshll.u32 %v2422, 16
        %v2785 = vrot.slane %v2783, 4
        %v2786 = vor.u32 %v2782, %v2785
        %v2787 = vsel %vm2555, %v2778, %v2786
        %v2789 = vshrl.u32 %v2458, 16
        %v2791 = vrot.slane %v2789, 3
        %v2792 = vshll.u32 %v2458, 16
        %v2794 = vrot.slane %v2792, 4
        %v2795 = vor.u32 %v2791, %v2794
        %v2796 = vsel %vm2555, %v2795, %v2795
        %v2798 = vshrl.u32 %v2534, 16
        %v2800 = vrot.slane %v2798, 3
        %v2801 = vshll.u32 %v2534, 16
        %v2803 = vrot.slane %v2801, 4
        %v2804 = vor.u32 %v2800, %v2803
        %v2806 = vshrl.u32 %v2536, 16
        %v2808 = vrot.slane %v2806, 3
        %v2809 = vshll.u32 %v2536, 16
        %v2811 = vrot.slane %v2809, 4
        %v2812 = vor.u32 %v2808, %v2811
        %v2813 = vsel %vm2555, %v2804, %v2812
        %v2815 = vshrl.u32 %v2054, 16
        %v2817 = vrot.slane %v2815, 3
        %v2818 = vshll.u32 %v2054, 16
        %v2820 = vrot.slane %v2818, 4
        %v2821 = vor.u32 %v2817, %v2820
        %v2823 = vshrl.u32 %v2055, 16
        %v2825 = vrot.slane %v2823, 3
        %v2826 = vshll.u32 %v2055, 16
        %v2828 = vrot.slane %v2826, 4
        %v2829 = vor.u32 %v2825, %v2828
        %v2830 = vsel %vm2555, %v2821, %v2829
        %v2832 = vshrl.u32 %v2097, 16
        %v2834 = vrot.slane %v2832, 3
        %v2835 = vshll.u32 %v2097, 16
        %v2837 = vrot.slane %v2835, 4
        %v2838 = vor.u32 %v2834, %v2837
        %v2839 = vsel %vm2555, %v2838, %v2838
        %v2841 = vshrl.u32 %v2169, 16
        %v2843 = vrot.slane %v2841, 3
        %v2844 = vshll.u32 %v2169, 16
        %v2846 = vrot.slane %v2844, 4
        %v2847 = vor.u32 %v2843, %v2846
        %v2849 = vshrl.u32 %v2171, 16
        %v2851 = vrot.slane %v2849, 3
        %v2852 = vshll.u32 %v2171, 16
        %v2854 = vrot.slane %v2852, 4
        %v2855 = vor.u32 %v2851, %v2854
        %v2856 = vsel %vm2555, %v2847, %v2855
        %v2858 = vshrl.u32 %v2239, 16
        %v2860 = vrot.slane %v2858, 3
        %v2861 = vshll.u32 %v2239, 16
        %v2863 = vrot.slane %v2861, 4
        %v2864 = vor.u32 %v2860, %v2863
        %v2866 = vshrl.u32 %v2240, 16
        %v2868 = vrot.slane %v2866, 3
        %v2869 = vshll.u32 %v2240, 16
        %v2871 = vrot.slane %v2869, 4
        %v2872 = vor.u32 %v2868, %v2871
        %v2873 = vsel %vm2555, %v2864, %v2872
        %v2875 = vshrl.u32 %v2282, 16
        %v2877 = vrot.slane %v2875, 3
        %v2878 = vshll.u32 %v2282, 16
        %v2880 = vrot.slane %v2878, 4
        %v2881 = vor.u32 %v2877, %v2880
        %v2882 = vsel %vm2555, %v2881, %v2881
        %v2884 = vshrl.u32 %v2353, 16
        %v2886 = vrot.slane %v2884, 3
        %v2887 = vshll.u32 %v2353, 16
        %v2889 = vrot.slane %v2887, 4
        %v2890 = vor.u32 %v2886, %v2889
        %v2892 = vshrl.u32 %v2355, 16
        %v2894 = vrot.slane %v2892, 3
        %v2895 = vshll.u32 %v2355, 16
        %v2897 = vrot.slane %v2895, 4
        %v2898 = vor.u32 %v2894, %v2897
        %v2899 = vsel %vm2555, %v2890, %v2898
        %v2901 = vshrl.u32 %v2423, 16
        %v2903 = vrot.slane %v2901, 3
        %v2904 = vshll.u32 %v2423, 16
        %v2906 = vrot.slane %v2904, 4
        %v2907 = vor.u32 %v2903, %v2906
        %v2909 = vshrl.u32 %v2424, 16
        %v2911 = vrot.slane %v2909, 3
        %v2912 = vshll.u32 %v2424, 16
        %v2914 = vrot.slane %v2912, 4
        %v2915 = vor.u32 %v2911, %v2914
        %v2916 = vsel %vm2555, %v2907, %v2915
        %v2918 = vshrl.u32 %v2466, 16
        %v2920 = vrot.slane %v2918, 3
        %v2921 = vshll.u32 %v2466, 16
        %v2923 = vrot.slane %v2921, 4
        %v2924 = vor.u32 %v2920, %v2923
        %v2925 = vsel %vm2555, %v2924, %v2924
        %v2927 = vshrl.u32 %v2537, 16
        %v2929 = vrot.slane %v2927, 3
        %v2930 = vshll.u32 %v2537, 16
        %v2932 = vrot.slane %v2930, 4
        %v2933 = vor.u32 %v2929, %v2932
        %v2935 = vshrl.u32 %v2539, 16
        %v2937 = vrot.slane %v2935, 3
        %v2938 = vshll.u32 %v2539, 16
        %v2940 = vrot.slane %v2938, 4
        %v2941 = vor.u32 %v2937, %v2940
        %v2942 = vsel %vm2555, %v2933, %v2941
        %v2944 = vshrl.u32 %v2056, 16
        %v2946 = vrot.slane %v2944, 3
        %v2947 = vshll.u32 %v2056, 16
        %v2949 = vrot.slane %v2947, 4
        %v2950 = vor.u32 %v2946, %v2949
        %v2952 = vshrl.u32 %v2057, 16
        %v2954 = vrot.slane %v2952, 3
        %v2955 = vshll.u32 %v2057, 16
        %v2957 = vrot.slane %v2955, 4
        %v2958 = vor.u32 %v2954, %v2957
        %v2959 = vsel %vm2555, %v2950, %v2958
        %v2961 = vshrl.u32 %v2105, 16
        %v2963 = vrot.slane %v2961, 3
        %v2964 = vshll.u32 %v2105, 16
        %v2966 = vrot.slane %v2964, 4
        %v2967 = vor.u32 %v2963, %v2966
        %v2968 = vsel %vm2555, %v2967, %v2967
        %v2970 = vshrl.u32 %v2172, 16
        %v2972 = vrot.slane %v2970, 3
        %v2973 = vshll.u32 %v2172, 16
        %v2975 = vrot.slane %v2973, 4
        %v2976 = vor.u32 %v2972, %v2975
        %v2978 = vshrl.u32 %v2174, 16
        %v2980 = vrot.slane %v2978, 3
        %v2981 = vshll.u32 %v2174, 16
        %v2983 = vrot.slane %v2981, 4
        %v2984 = vor.u32 %v2980, %v2983
        %v2985 = vsel %vm2555, %v2976, %v2984
        %v2987 = vshrl.u32 %v2241, 16
        %v2989 = vrot.slane %v2987, 3
        %v2990 = vshll.u32 %v2241, 16
        %v2992 = vrot.slane %v2990, 4
        %v2993 = vor.u32 %v2989, %v2992
        %v2995 = vshrl.u32 %v2242, 16
        %v2997 = vrot.slane %v2995, 3
        %v2998 = vshll.u32 %v2242, 16
        %v3000 = vrot.slane %v2998, 4
        %v3001 = vor.u32 %v2997, %v3000
        %v3002 = vsel %vm2555, %v2993, %v3001
        %v3004 = vshrl.u32 %v2290, 16
        %v3006 = vrot.slane %v3004, 3
        %v3007 = vshll.u32 %v2290, 16
        %v3009 = vrot.slane %v3007, 4
        %v3010 = vor.u32 %v3006, %v3009
        %v3011 = vsel %vm2555, %v3010, %v3010
        %v3013 = vshrl.u32 %v2356, 16
        %v3015 = vrot.slane %v3013, 3
        %v3016 = vshll.u32 %v2356, 16
        %v3018 = vrot.slane %v3016, 4
        %v3019 = vor.u32 %v3015, %v3018
        %v3021 = vshrl.u32 %v2358, 16
        %v3023 = vrot.slane %v3021, 3
        %v3024 = vshll.u32 %v2358, 16
        %v3026 = vrot.slane %v3024, 4
        %v3027 = vor.u32 %v3023, %v3026
        %v3028 = vsel %vm2555, %v3019, %v3027
        %v3030 = vshrl.u32 %v2425, 16
        %v3032 = vrot.slane %v3030, 3
        %v3033 = vshll.u32 %v2425, 16
        %v3035 = vrot.slane %v3033, 4
        %v3036 = vor.u32 %v3032, %v3035
        %v3038 = vshrl.u32 %v2426, 16
        %v3040 = vrot.slane %v3038, 3
        %v3041 = vshll.u32 %v2426, 16
        %v3043 = vrot.slane %v3041, 4
        %v3044 = vor.u32 %v3040, %v3043
        %v3045 = vsel %vm2555, %v3036, %v3044
        %v3047 = vshrl.u32 %v2474, 16
        %v3049 = vrot.slane %v3047, 3
        %v3050 = vshll.u32 %v2474, 16
        %v3052 = vrot.slane %v3050, 4
        %v3053 = vor.u32 %v3049, %v3052
        %v3054 = vsel %vm2555, %v3053, %v3053
        %v3056 = vshrl.u32 %v2540, 16
        %v3058 = vrot.slane %v3056, 3
        %v3059 = vshll.u32 %v2540, 16
        %v3061 = vrot.slane %v3059, 4
        %v3062 = vor.u32 %v3058, %v3061
        %v3064 = vshrl.u32 %v2542, 16
        %v3066 = vrot.slane %v3064, 3
        %v3067 = vshll.u32 %v2542, 16
        %v3069 = vrot.slane %v3067, 4
        %v3070 = vor.u32 %v3066, %v3069
        %v3071 = vsel %vm2555, %v3062, %v3070
        %v3073 = vshrl.u32 %v2058, 16
        %v3075 = vrot.slane %v3073, 3
        %v3076 = vshll.u32 %v2058, 16
        %v3078 = vrot.slane %v3076, 4
        %v3079 = vor.u32 %v3075, %v3078
        %v3081 = vshrl.u32 %v2059, 16
        %v3083 = vrot.slane %v3081, 3
        %v3084 = vshll.u32 %v2059, 16
        %v3086 = vrot.slane %v3084, 4
        %v3087 = vor.u32 %v3083, %v3086
        %v3088 = vsel %vm2555, %v3079, %v3087
        %v3090 = vshrl.u32 %v2113, 16
        %v3092 = vrot.slane %v3090, 3
        %v3093 = vshll.u32 %v2113, 16
        %v3095 = vrot.slane %v3093, 4
        %v3096 = vor.u32 %v3092, %v3095
        %v3097 = vsel %vm2555, %v3096, %v3096
        %v3099 = vshrl.u32 %v2175, 16
        %v3101 = vrot.slane %v3099, 3
        %v3102 = vshll.u32 %v2175, 16
        %v3104 = vrot.slane %v3102, 4
        %v3105 = vor.u32 %v3101, %v3104
        %v3107 = vshrl.u32 %v2177, 16
        %v3109 = vrot.slane %v3107, 3
        %v3110 = vshll.u32 %v2177, 16
        %v3112 = vrot.slane %v3110, 4
        %v3113 = vor.u32 %v3109, %v3112
        %v3114 = vsel %vm2555, %v3105, %v3113
        %v3116 = vshrl.u32 %v2243, 16
        %v3118 = vrot.slane %v3116, 3
        %v3119 = vshll.u32 %v2243, 16
        %v3121 = vrot.slane %v3119, 4
        %v3122 = vor.u32 %v3118, %v3121
        %v3124 = vshrl.u32 %v2244, 16
        %v3126 = vrot.slane %v3124, 3
        %v3127 = vshll.u32 %v2244, 16
        %v3129 = vrot.slane %v3127, 4
        %v3130 = vor.u32 %v3126, %v3129
        %v3131 = vsel %vm2555, %v3122, %v3130
        %v3133 = vshrl.u32 %v2298, 16
        %v3135 = vrot.slane %v3133, 3
        %v3136 = vshll.u32 %v2298, 16
        %v3138 = vrot.slane %v3136, 4
        %v3139 = vor.u32 %v3135, %v3138
        %v3140 = vsel %vm2555, %v3139, %v3139
        %v3142 = vshrl.u32 %v2359, 16
        %v3144 = vrot.slane %v3142, 3
        %v3145 = vshll.u32 %v2359, 16
        %v3147 = vrot.slane %v3145, 4
        %v3148 = vor.u32 %v3144, %v3147
        %v3150 = vshrl.u32 %v2361, 16
        %v3152 = vrot.slane %v3150, 3
        %v3153 = vshll.u32 %v2361, 16
        %v3155 = vrot.slane %v3153, 4
        %v3156 = vor.u32 %v3152, %v3155
        %v3157 = vsel %vm2555, %v3148, %v3156
        %v3159 = vshrl.u32 %v2427, 16
        %v3161 = vrot.slane %v3159, 3
        %v3162 = vshll.u32 %v2427, 16
        %v3164 = vrot.slane %v3162, 4
        %v3165 = vor.u32 %v3161, %v3164
        %v3167 = vshrl.u32 %v2428, 16
        %v3169 = vrot.slane %v3167, 3
        %v3170 = vshll.u32 %v2428, 16
        %v3172 = vrot.slane %v3170, 4
        %v3173 = vor.u32 %v3169, %v3172
        %v3174 = vsel %vm2555, %v3165, %v3173
        %v3176 = vshrl.u32 %v2482, 16
        %v3178 = vrot.slane %v3176, 3
        %v3179 = vshll.u32 %v2482, 16
        %v3181 = vrot.slane %v3179, 4
        %v3182 = vor.u32 %v3178, %v3181
        %v3183 = vsel %vm2555, %v3182, %v3182
        %v3185 = vshrl.u32 %v2543, 16
        %v3187 = vrot.slane %v3185, 3
        %v3188 = vshll.u32 %v2543, 16
        %v3190 = vrot.slane %v3188, 4
        %v3191 = vor.u32 %v3187, %v3190
        %v3193 = vshrl.u32 %v2545, 16
        %v3195 = vrot.slane %v3193, 3
        %v3196 = vshll.u32 %v2545, 16
        %v3198 = vrot.slane %v3196, 4
        %v3199 = vor.u32 %v3195, %v3198
        %v3200 = vsel %vm2555, %v3191, %v3199
        %v3202 = vshrl.u32 %v2060, 16
        %v3204 = vrot.slane %v3202, 3
        %v3205 = vshll.u32 %v2060, 16
        %v3207 = vrot.slane %v3205, 4
        %v3208 = vor.u32 %v3204, %v3207
        %v3210 = vshrl.u32 %v2061, 16
        %v3212 = vrot.slane %v3210, 3
        %v3213 = vshll.u32 %v2061, 16
        %v3215 = vrot.slane %v3213, 4
        %v3216 = vor.u32 %v3212, %v3215
        %v3217 = vsel %vm2555, %v3208, %v3216
        %v3219 = vshrl.u32 %v2121, 16
        %v3221 = vrot.slane %v3219, 3
        %v3222 = vshll.u32 %v2121, 16
        %v3224 = vrot.slane %v3222, 4
        %v3225 = vor.u32 %v3221, %v3224
        %v3226 = vsel %vm2555, %v3225, %v3225
        %v3228 = vshrl.u32 %v2178, 16
        %v3230 = vrot.slane %v3228, 3
        %v3231 = vshll.u32 %v2178, 16
        %v3233 = vrot.slane %v3231, 4
        %v3234 = vor.u32 %v3230, %v3233
        %v3236 = vshrl.u32 %v2180, 16
        %v3238 = vrot.slane %v3236, 3
        %v3239 = vshll.u32 %v2180, 16
        %v3241 = vrot.slane %v3239, 4
        %v3242 = vor.u32 %v3238, %v3241
        %v3243 = vsel %vm2555, %v3234, %v3242
        %v3245 = vshrl.u32 %v2245, 16
        %v3247 = vrot.slane %v3245, 3
        %v3248 = vshll.u32 %v2245, 16
        %v3250 = vrot.slane %v3248, 4
        %v3251 = vor.u32 %v3247, %v3250
        %v3253 = vshrl.u32 %v2246, 16
        %v3255 = vrot.slane %v3253, 3
        %v3256 = vshll.u32 %v2246, 16
        %v3258 = vrot.slane %v3256, 4
        %v3259 = vor.u32 %v3255, %v3258
        %v3260 = vsel %vm2555, %v3251, %v3259
        %v3262 = vshrl.u32 %v2306, 16
        %v3264 = vrot.slane %v3262, 3
        %v3265 = vshll.u32 %v2306, 16
        %v3267 = vrot.slane %v3265, 4
        %v3268 = vor.u32 %v3264, %v3267
        %v3269 = vsel %vm2555, %v3268, %v3268
        %v3271 = vshrl.u32 %v2362, 16
        %v3273 = vrot.slane %v3271, 3
        %v3274 = vshll.u32 %v2362, 16
        %v3276 = vrot.slane %v3274, 4
        %v3277 = vor.u32 %v3273, %v3276
        %v3279 = vshrl.u32 %v2364, 16
        %v3281 = vrot.slane %v3279, 3
        %v3282 = vshll.u32 %v2364, 16
        %v3284 = vrot.slane %v3282, 4
        %v3285 = vor.u32 %v3281, %v3284
        %v3286 = vsel %vm2555, %v3277, %v3285
        %v3288 = vshrl.u32 %v2429, 16
        %v3290 = vrot.slane %v3288, 3
        %v3291 = vshll.u32 %v2429, 16
        %v3293 = vrot.slane %v3291, 4
        %v3294 = vor.u32 %v3290, %v3293
        %v3296 = vshrl.u32 %v2430, 16
        %v3298 = vrot.slane %v3296, 3
        %v3299 = vshll.u32 %v2430, 16
        %v3301 = vrot.slane %v3299, 4
        %v3302 = vor.u32 %v3298, %v3301
        %v3303 = vsel %vm2555, %v3294, %v3302
        %v3305 = vshrl.u32 %v2490, 16
        %v3307 = vrot.slane %v3305, 3
        %v3308 = vshll.u32 %v2490, 16
        %v3310 = vrot.slane %v3308, 4
        %v3311 = vor.u32 %v3307, %v3310
        %v3312 = vsel %vm2555, %v3311, %v3311
        %v3314 = vshrl.u32 %v2546, 16
        %v3316 = vrot.slane %v3314, 3
        %v3317 = vshll.u32 %v2546, 16
        %v3319 = vrot.slane %v3317, 4
        %v3320 = vor.u32 %v3316, %v3319
        %v3322 = vshrl.u32 %v2548, 16
        %v3324 = vrot.slane %v3322, 3
        %v3325 = vshll.u32 %v2548, 16
        %v3327 = vrot.slane %v3325, 4
        %v3328 = vor.u32 %v3324, %v3327
        %v3329 = vsel %vm2555, %v3320, %v3328
        %v3331 = vshrl.u32 %v2062, 16
        %v3333 = vrot.slane %v3331, 3
        %v3334 = vshll.u32 %v2062, 16
        %v3336 = vrot.slane %v3334, 4
        %v3337 = vor.u32 %v3333, %v3336
        %v3339 = vshrl.u32 %v2063, 16
        %v3341 = vrot.slane %v3339, 3
        %v3342 = vshll.u32 %v2063, 16
        %v3344 = vrot.slane %v3342, 4
        %v3345 = vor.u32 %v3341, %v3344
        %v3346 = vsel %vm2555, %v3337, %v3345
        %v3348 = vshrl.u32 %v2129, 16
        %v3350 = vrot.slane %v3348, 3
        %v3351 = vshll.u32 %v2129, 16
        %v3353 = vrot.slane %v3351, 4
        %v3354 = vor.u32 %v3350, %v3353
        %v3355 = vsel %vm2555, %v3354, %v3354
        %v3357 = vshrl.u32 %v2181, 16
        %v3359 = vrot.slane %v3357, 3
        %v3360 = vshll.u32 %v2181, 16
        %v3362 = vrot.slane %v3360, 4
        %v3363 = vor.u32 %v3359, %v3362
        %v3365 = vshrl.u32 %v2183, 16
        %v3367 = vrot.slane %v3365, 3
        %v3368 = vshll.u32 %v2183, 16
        %v3370 = vrot.slane %v3368, 4
        %v3371 = vor.u32 %v3367, %v3370
        %v3372 = vsel %vm2555, %v3363, %v3371
        %v3374 = vshrl.u32 %v2247, 16
        %v3376 = vrot.slane %v3374, 3
        %v3377 = vshll.u32 %v2247, 16
        %v3379 = vrot.slane %v3377, 4
        %v3380 = vor.u32 %v3376, %v3379
        %v3382 = vshrl.u32 %v2248, 16
        %v3384 = vrot.slane %v3382, 3
        %v3385 = vshll.u32 %v2248, 16
        %v3387 = vrot.slane %v3385, 4
        %v3388 = vor.u32 %v3384, %v3387
        %v3389 = vsel %vm2555, %v3380, %v3388
        %v3391 = vshrl.u32 %v2314, 16
        %v3393 = vrot.slane %v3391, 3
        %v3394 = vshll.u32 %v2314, 16
        %v3396 = vrot.slane %v3394, 4
        %v3397 = vor.u32 %v3393, %v3396
        %v3398 = vsel %vm2555, %v3397, %v3397
        %v3400 = vshrl.u32 %v2365, 16
        %v3402 = vrot.slane %v3400, 3
        %v3403 = vshll.u32 %v2365, 16
        %v3405 = vrot.slane %v3403, 4
        %v3406 = vor.u32 %v3402, %v3405
        %v3408 = vshrl.u32 %v2367, 16
        %v3410 = vrot.slane %v3408, 3
        %v3411 = vshll.u32 %v2367, 16
        %v3413 = vrot.slane %v3411, 4
        %v3414 = vor.u32 %v3410, %v3413
        %v3415 = vsel %vm2555, %v3406, %v3414
        %v3417 = vshrl.u32 %v2431, 16
        %v3419 = vrot.slane %v3417, 3
        %v3420 = vshll.u32 %v2431, 16
        %v3422 = vrot.slane %v3420, 4
        %v3423 = vor.u32 %v3419, %v3422
        %v3425 = vshrl.u32 %v2432, 16
        %v3427 = vrot.slane %v3425, 3
        %v3428 = vshll.u32 %v2432, 16
        %v3430 = vrot.slane %v3428, 4
        %v3431 = vor.u32 %v3427, %v3430
        %v3432 = vsel %vm2555, %v3423, %v3431
        %v3434 = vshrl.u32 %v2498, 16
        %v3436 = vrot.slane %v3434, 3
        %v3437 = vshll.u32 %v2498, 16
        %v3439 = vrot.slane %v3437, 4
        %v3440 = vor.u32 %v3436, %v3439
        %v3441 = vsel %vm2555, %v3440, %v3440
        %v3443 = vshrl.u32 %v2549, 16
        %v3445 = vrot.slane %v3443, 3
        %v3446 = vshll.u32 %v2549, 16
        %v3448 = vrot.slane %v3446, 4
        %v3449 = vor.u32 %v3445, %v3448
        %v3451 = vshrl.u32 %v2551, 16
        %v3453 = vrot.slane %v3451, 3
        %v3454 = vshll.u32 %v2551, 16
        %v3456 = vrot.slane %v3454, 4
        %v3457 = vor.u32 %v3453, %v3456
        %v3458 = vsel %vm2555, %v3449, %v3457
        %v3460 = vshrl.u32 %v2064, 16
        %v3462 = vrot.slane %v3460, 3
        %v3463 = vshll.u32 %v2064, 16
        %v3465 = vrot.slane %v3463, 4
        %v3466 = vor.u32 %v3462, %v3465
        %v3468 = vshrl.u32 %v2065, 16
        %v3470 = vrot.slane %v3468, 3
        %v3471 = vshll.u32 %v2065, 16
        %v3473 = vrot.slane %v3471, 4
        %v3474 = vor.u32 %v3470, %v3473
        %v3475 = vsel %vm2555, %v3466, %v3474
        %v3477 = vshrl.u32 %v2137, 16
        %v3479 = vrot.slane %v3477, 3
        %v3480 = vshll.u32 %v2137, 16
        %v3482 = vrot.slane %v3480, 4
        %v3483 = vor.u32 %v3479, %v3482
        %v3484 = vsel %vm2555, %v3483, %v3483
        %v3486 = vshrl.u32 %v2184, 16
        %v3488 = vrot.slane %v3486, 3
        %v3489 = vshll.u32 %v2184, 16
        %v3491 = vrot.slane %v3489, 4
        %v3492 = vor.u32 %v3488, %v3491
        %v3494 = vshrl.u32 %v2186, 16
        %v3496 = vrot.slane %v3494, 3
        %v3497 = vshll.u32 %v2186, 16
        %v3499 = vrot.slane %v3497, 4
        %v3500 = vor.u32 %v3496, %v3499
        %v3501 = vsel %vm2555, %v3492, %v3500
        %v3503 = vshrl.u32 %v2249, 16
        %v3505 = vrot.slane %v3503, 3
        %v3506 = vshll.u32 %v2249, 16
        %v3508 = vrot.slane %v3506, 4
        %v3509 = vor.u32 %v3505, %v3508
        %v3511 = vshrl.u32 %v2250, 16
        %v3513 = vrot.slane %v3511, 3
        %v3514 = vshll.u32 %v2250, 16
        %v3516 = vrot.slane %v3514, 4
        %v3517 = vor.u32 %v3513, %v3516
        %v3518 = vsel %vm2555, %v3509, %v3517
        %v3520 = vshrl.u32 %v2322, 16
        %v3522 = vrot.slane %v3520, 3
        %v3523 = vshll.u32 %v2322, 16
        %v3525 = vrot.slane %v3523, 4
        %v3526 = vor.u32 %v3522, %v3525
        %v3527 = vsel %vm2555, %v3526, %v3526
        %v3529 = vshrl.u32 %v2368, 16
        %v3531 = vrot.slane %v3529, 3
        %v3532 = vshll.u32 %v2368, 16
        %v3534 = vrot.slane %v3532, 4
        %v3535 = vor.u32 %v3531, %v3534
        %v3537 = vshrl.u32 %v2370, 16
        %v3539 = vrot.slane %v3537, 3
        %v3540 = vshll.u32 %v2370, 16
        %v3542 = vrot.slane %v3540, 4
        %v3543 = vor.u32 %v3539, %v3542
        %v3544 = vsel %vm2555, %v3535, %v3543
        %v3546 = vshrl.u32 %v2433, 16
        %v3548 = vrot.slane %v3546, 3
        %v3549 = vshll.u32 %v2433, 16
        %v3551 = vrot.slane %v3549, 4
        %v3552 = vor.u32 %v3548, %v3551
        %v3554 = vshrl.u32 %v2434, 16
        %v3556 = vrot.slane %v3554, 3
        %v3557 = vshll.u32 %v2434, 16
        %v3559 = vrot.slane %v3557, 4
        %v3560 = vor.u32 %v3556, %v3559
        %v3561 = vsel %vm2555, %v3552, %v3560
        %v3563 = vshrl.u32 %v2506, 16
        %v3565 = vrot.slane %v3563, 3
        %v3566 = vshll.u32 %v2506, 16
        %v3568 = vrot.slane %v3566, 4
        %v3569 = vor.u32 %v3565, %v3568
        %v3570 = vsel %vm2555, %v3569, %v3569
        %v3572 = vshrl.u32 %v2552, 16
        %v3574 = vrot.slane %v3572, 3
        %v3575 = vshll.u32 %v2552, 16
        %v3577 = vrot.slane %v3575, 4
        %v3578 = vor.u32 %v3574, %v3577
        %v3580 = vshrl.u32 %v2554, 16
        %v3582 = vrot.slane %v3580, 3
        %v3583 = vshll.u32 %v2554, 16
        %v3585 = vrot.slane %v3583, 4
        %v3586 = vor.u32 %v3582, %v3585
        %v3587 = vsel %vm2555, %v3578, %v3586
        %v3660 = vld [vmem:[%s3] sm:$0xf]
        %v3661 = vld [vmem:[%s3 + $0x4] sm:$0xf]
        %v3662 = vld [vmem:[%s3 + $0x8] sm:$0xf]
        %v3663 = vld [vmem:[%s3 + $0xc] sm:$0xf]
        %v3664 = vld [vmem:[%s3 + $0x10] sm:$0xf]
        %v3665 = vld [vmem:[%s3 + $0x14] sm:$0xf]
        %v3666 = vld [vmem:[%s3 + $0x18] sm:$0xf]
        %v3667 = vld [vmem:[%s3 + $0x1c] sm:$0xf]
        %v3668 = vld [vmem:[%s3 + $0x20] sm:$0xf]
        %v3669 = vld [vmem:[%s3 + $0x24] sm:$0xf]
        %v3670 = vld [vmem:[%s3 + $0x28] sm:$0xf]
        %v3671 = vld [vmem:[%s3 + $0x2c] sm:$0xf]
        %v3672 = vld [vmem:[%s3 + $0x30] sm:$0xf]
        %v3673 = vld [vmem:[%s3 + $0x34] sm:$0xf]
        %v3674 = vld [vmem:[%s3 + $0x38] sm:$0xf]
        %v3675 = vld [vmem:[%s3 + $0x3c] sm:$0xf]
        %v3676 = vld [vmem:[%s3 + $0x40] sm:$0xf]
        %v3677 = vld [vmem:[%s3 + $0x44] sm:$0xf]
        %v3678 = vld [vmem:[%s3 + $0x48] sm:$0xf]
        %v3679 = vld [vmem:[%s3 + $0x4c] sm:$0xf]
        %v3680 = vld [vmem:[%s3 + $0x50] sm:$0xf]
        %v3681 = vld [vmem:[%s3 + $0x54] sm:$0xf]
        %v3682 = vld [vmem:[%s3 + $0x58] sm:$0xf]
        %v3683 = vld [vmem:[%s3 + $0x5c] sm:$0xf]
        %v3684 = vld [vmem:[%s3 + $0x60] sm:$0xf]
        %v3685 = vld [vmem:[%s3 + $0x64] sm:$0xf]
        %v3686 = vld [vmem:[%s3 + $0x68] sm:$0xf]
        %v3687 = vld [vmem:[%s3 + $0x6c] sm:$0xf]
        %v3688 = vld [vmem:[%s3 + $0x70] sm:$0xf]
        %v3689 = vld [vmem:[%s3 + $0x74] sm:$0xf]
        %v3690 = vld [vmem:[%s3 + $0x78] sm:$0xf]
        %v3691 = vld [vmem:[%s3 + $0x7c] sm:$0xf]
        %v3692 = vld [vmem:[%s3 + $0x80] sm:$0xf]
        %v3693 = vld [vmem:[%s3 + $0x84] sm:$0xf]
        %v3694 = vld [vmem:[%s3 + $0x88] sm:$0xf]
        %v3695 = vld [vmem:[%s3 + $0x8c] sm:$0xf]
        %v3696 = vld [vmem:[%s3 + $0x90] sm:$0xf]
        %v3697 = vld [vmem:[%s3 + $0x94] sm:$0xf]
        %v3698 = vld [vmem:[%s3 + $0x98] sm:$0xf]
        %v3699 = vld [vmem:[%s3 + $0x9c] sm:$0xf]
        %v3700 = vld [vmem:[%s3 + $0xa0] sm:$0xf]
        %v3701 = vld [vmem:[%s3 + $0xa4] sm:$0xf]
        %v3702 = vld [vmem:[%s3 + $0xa8] sm:$0xf]
        %v3703 = vld [vmem:[%s3 + $0xac] sm:$0xf]
        %v3704 = vld [vmem:[%s3 + $0xb0] sm:$0xf]
        %v3705 = vld [vmem:[%s3 + $0xb4] sm:$0xf]
        %v3706 = vld [vmem:[%s3 + $0xb8] sm:$0xf]
        %v3707 = vld [vmem:[%s3 + $0xbc] sm:$0xf]
        %v3708 = vld [vmem:[%s3 + $0xc0] sm:$0xf]
        %v3709 = vld [vmem:[%s3 + $0xc4] sm:$0xf]
        %v3710 = vld [vmem:[%s3 + $0xc8] sm:$0xf]
        %v3711 = vld [vmem:[%s3 + $0xcc] sm:$0xf]
        %v3712 = vld [vmem:[%s3 + $0xd0] sm:$0xf]
        %v3713 = vld [vmem:[%s3 + $0xd4] sm:$0xf]
        %v3714 = vld [vmem:[%s3 + $0xd8] sm:$0xf]
        %v3715 = vld [vmem:[%s3 + $0xdc] sm:$0xf]
        %v3716 = vld [vmem:[%s3 + $0xe0] sm:$0xf]
        %v3717 = vld [vmem:[%s3 + $0xe4] sm:$0xf]
        %v3718 = vld [vmem:[%s3 + $0xe8] sm:$0xf]
        %v3719 = vld [vmem:[%s3 + $0xec] sm:$0xf]
        %v3720 = vld [vmem:[%s3 + $0xf0] sm:$0xf]
        %v3721 = vld [vmem:[%s3 + $0xf4] sm:$0xf]
        %v3722 = vld [vmem:[%s3 + $0xf8] sm:$0xf]
        %v3723 = vld [vmem:[%s3 + $0xfc] sm:$0xf]
        %v3724 = vld [vmem:[%s3 + $0x100] sm:$0xf]
        %v3725 = vld [vmem:[%s3 + $0x104] sm:$0xf]
        %v3726 = vld [vmem:[%s3 + $0x108] sm:$0xf]
        %v3727 = vld [vmem:[%s3 + $0x10c] sm:$0xf]
        %v3728 = vld [vmem:[%s3 + $0x110] sm:$0xf]
        %v3729 = vld [vmem:[%s3 + $0x114] sm:$0xf]
        %v3730 = vld [vmem:[%s3 + $0x118] sm:$0xf]
        %v3731 = vld [vmem:[%s3 + $0x11c] sm:$0xf]
        %v3732 = vld [vmem:[%s3 + $0x120] sm:$0xf]
        %v3733 = vld [vmem:[%s3 + $0x124] sm:$0xf]
        %v3734 = vld [vmem:[%s3 + $0x128] sm:$0xf]
        %v3735 = vld [vmem:[%s3 + $0x12c] sm:$0xf]
        %v3736 = vld [vmem:[%s3 + $0x130] sm:$0xf]
        %v3737 = vld [vmem:[%s3 + $0x134] sm:$0xf]
        %v3738 = vld [vmem:[%s3 + $0x138] sm:$0xf]
        %v3739 = vld [vmem:[%s3 + $0x13c] sm:$0xf]
        %v3740 = vld [vmem:[%s3 + $0x140] sm:$0xf]
        %v3741 = vld [vmem:[%s3 + $0x144] sm:$0xf]
        %v3742 = vld [vmem:[%s3 + $0x148] sm:$0xf]
        %v3743 = vld [vmem:[%s3 + $0x14c] sm:$0xf]
        %v3744 = vld [vmem:[%s3 + $0x150] sm:$0xf]
        %v3745 = vld [vmem:[%s3 + $0x154] sm:$0xf]
        %v3746 = vld [vmem:[%s3 + $0x158] sm:$0xf]
        %v3747 = vld [vmem:[%s3 + $0x15c] sm:$0xf]
        %v3748 = vld [vmem:[%s3 + $0x160] sm:$0xf]
        %v3749 = vld [vmem:[%s3 + $0x164] sm:$0xf]
        %v3750 = vld [vmem:[%s3 + $0x168] sm:$0xf]
        %v3751 = vld [vmem:[%s3 + $0x16c] sm:$0xf]
        %v3752 = vld [vmem:[%s3 + $0x170] sm:$0xf]
        %v3753 = vld [vmem:[%s3 + $0x174] sm:$0xf]
        %v3754 = vld [vmem:[%s3 + $0x178] sm:$0xf]
        %v3755 = vld [vmem:[%s3 + $0x17c] sm:$0xf]
        %v3756 = vld [vmem:[%s3 + $0x180] sm:$0xf]
        %v3757 = vld [vmem:[%s3 + $0x184] sm:$0xf]
        %v3758 = vld [vmem:[%s3 + $0x188] sm:$0xf]
        %v3759 = vld [vmem:[%s3 + $0x18c] sm:$0xf]
        %v3760 = vld [vmem:[%s3 + $0x190] sm:$0xf]
        %v3761 = vld [vmem:[%s3 + $0x194] sm:$0xf]
        %v3762 = vld [vmem:[%s3 + $0x198] sm:$0xf]
        %v3763 = vld [vmem:[%s3 + $0x19c] sm:$0xf]
        %v3764 = vld [vmem:[%s3 + $0x1a0] sm:$0xf]
        %v3765 = vld [vmem:[%s3 + $0x1a4] sm:$0xf]
        %v3766 = vld [vmem:[%s3 + $0x1a8] sm:$0xf]
        %v3767 = vld [vmem:[%s3 + $0x1ac] sm:$0xf]
        %v3768 = vld [vmem:[%s3 + $0x1b0] sm:$0xf]
        %v3769 = vld [vmem:[%s3 + $0x1b4] sm:$0xf]
        %v3770 = vld [vmem:[%s3 + $0x1b8] sm:$0xf]
        %v3771 = vld [vmem:[%s3 + $0x1bc] sm:$0xf]
        %v3772 = vld [vmem:[%s3 + $0x1c0] sm:$0xf]
        %v3773 = vld [vmem:[%s3 + $0x1c4] sm:$0xf]
        %v3774 = vld [vmem:[%s3 + $0x1c8] sm:$0xf]
        %v3775 = vld [vmem:[%s3 + $0x1cc] sm:$0xf]
        %v3776 = vld [vmem:[%s3 + $0x1d0] sm:$0xf]
        %v3777 = vld [vmem:[%s3 + $0x1d4] sm:$0xf]
        %v3778 = vld [vmem:[%s3 + $0x1d8] sm:$0xf]
        %v3779 = vld [vmem:[%s3 + $0x1dc] sm:$0xf]
        %v3780 = vld [vmem:[%s3 + $0x1e0] sm:$0xf]
        %v3781 = vld [vmem:[%s3 + $0x1e4] sm:$0xf]
        %v3782 = vld [vmem:[%s3 + $0x1e8] sm:$0xf]
        %v3783 = vld [vmem:[%s3 + $0x1ec] sm:$0xf]
        %v3784 = vld [vmem:[%s3 + $0x1f0] sm:$0xf]
        %v3785 = vld [vmem:[%s3 + $0x1f4] sm:$0xf]
        %v3786 = vld [vmem:[%s3 + $0x1f8] sm:$0xf]
        %v3787 = vld [vmem:[%s3 + $0x1fc] sm:$0xf]
        %v3788 = vld [vmem:[%s3 + $0x200] sm:$0xf]
        %v3789 = vld [vmem:[%s3 + $0x204] sm:$0xf]
        %v3790 = vld [vmem:[%s3 + $0x208] sm:$0xf]
        %v3791 = vld [vmem:[%s3 + $0x20c] sm:$0xf]
        %v3792 = vld [vmem:[%s3 + $0x210] sm:$0xf]
        %v3793 = vld [vmem:[%s3 + $0x214] sm:$0xf]
        %v3794 = vld [vmem:[%s3 + $0x218] sm:$0xf]
        %v3795 = vld [vmem:[%s3 + $0x21c] sm:$0xf]
        %v3796 = vld [vmem:[%s3 + $0x220] sm:$0xf]
        %v3797 = vld [vmem:[%s3 + $0x224] sm:$0xf]
        %v3798 = vld [vmem:[%s3 + $0x228] sm:$0xf]
        %v3799 = vld [vmem:[%s3 + $0x22c] sm:$0xf]
        %v3800 = vld [vmem:[%s3 + $0x230] sm:$0xf]
        %v3801 = vld [vmem:[%s3 + $0x234] sm:$0xf]
        %v3802 = vld [vmem:[%s3 + $0x238] sm:$0xf]
        %v3803 = vld [vmem:[%s3 + $0x23c] sm:$0xf]
        %v3804 = vld [vmem:[%s4] sm:$0x1]
        %v3806 = vlaneseq
        %v3807 = vshrl.u32 %v3806, 7
        %v3808 = vsub.s32 0, %v3807
        %v3809 = vrot.slane %v3804, %v3808
        %v3955 = vunpack.c.l.b16 %v3660
        %v3956 = vunpack.c.l.b16 %v3661
        %v3957 = vunpack.c.l.b16 %v3662
        %v3958 = vunpack.c.l.b16 %v3663
        %v3959 = vunpack.c.l.b16 %v3664
        %v3960 = vunpack.c.l.b16 %v3665
        %v3961 = vunpack.c.l.b16 %v3666
        %v3962 = vunpack.c.l.b16 %v3667
        %v3963 = vunpack.c.l.b16 %v3668
        %v3964 = vunpack.c.l.b16 %v3669
        %v3965 = vunpack.c.l.b16 %v3670
        %v3966 = vunpack.c.l.b16 %v3671
        %v3967 = vunpack.c.l.b16 %v3672
        %v3968 = vunpack.c.l.b16 %v3673
        %v3969 = vunpack.c.l.b16 %v3674
        %v3970 = vunpack.c.l.b16 %v3675
        %v3971 = vunpack.c.l.b16 %v3676
        %v3972 = vunpack.c.l.b16 %v3677
        %v3973 = vunpack.c.l.b16 %v3678
        %v3974 = vunpack.c.l.b16 %v3679
        %v3975 = vunpack.c.l.b16 %v3680
        %v3976 = vunpack.c.l.b16 %v3681
        %v3977 = vunpack.c.l.b16 %v3682
        %v3978 = vunpack.c.l.b16 %v3683
        %v3979 = vunpack.c.l.b16 %v3684
        %v3980 = vunpack.c.l.b16 %v3685
        %v3981 = vunpack.c.l.b16 %v3686
        %v3982 = vunpack.c.l.b16 %v3687
        %v3983 = vunpack.c.l.b16 %v3688
        %v3984 = vunpack.c.l.b16 %v3689
        %v3985 = vunpack.c.l.b16 %v3690
        %v3986 = vunpack.c.l.b16 %v3691
        %v3987 = vunpack.c.l.b16 %v3692
        %v3988 = vunpack.c.l.b16 %v3693
        %v3989 = vunpack.c.l.b16 %v3694
        %v3990 = vunpack.c.l.b16 %v3695
        %v3991 = vunpack.c.l.b16 %v3696
        %v3992 = vunpack.c.l.b16 %v3697
        %v3993 = vunpack.c.l.b16 %v3698
        %v3994 = vunpack.c.l.b16 %v3699
        %v3995 = vunpack.c.l.b16 %v3700
        %v3996 = vunpack.c.l.b16 %v3701
        %v3997 = vunpack.c.l.b16 %v3702
        %v3998 = vunpack.c.l.b16 %v3703
        %v3999 = vunpack.c.l.b16 %v3704
        %v4000 = vunpack.c.l.b16 %v3705
        %v4001 = vunpack.c.l.b16 %v3706
        %v4002 = vunpack.c.l.b16 %v3707
        %v4003 = vunpack.c.l.b16 %v3708
        %v4004 = vunpack.c.l.b16 %v3709
        %v4005 = vunpack.c.l.b16 %v3710
        %v4006 = vunpack.c.l.b16 %v3711
        %v4007 = vunpack.c.l.b16 %v3712
        %v4008 = vunpack.c.l.b16 %v3713
        %v4009 = vunpack.c.l.b16 %v3714
        %v4010 = vunpack.c.l.b16 %v3715
        %v4011 = vunpack.c.l.b16 %v3716
        %v4012 = vunpack.c.l.b16 %v3717
        %v4013 = vunpack.c.l.b16 %v3718
        %v4014 = vunpack.c.l.b16 %v3719
        %v4015 = vunpack.c.l.b16 %v3720
        %v4016 = vunpack.c.l.b16 %v3721
        %v4017 = vunpack.c.l.b16 %v3722
        %v4018 = vunpack.c.l.b16 %v3723
        %v4019 = vunpack.c.l.b16 %v3724
        %v4020 = vunpack.c.l.b16 %v3725
        %v4021 = vunpack.c.l.b16 %v3726
        %v4022 = vunpack.c.l.b16 %v3727
        %v4023 = vunpack.c.l.b16 %v3728
        %v4024 = vunpack.c.l.b16 %v3729
        %v4025 = vunpack.c.l.b16 %v3730
        %v4026 = vunpack.c.l.b16 %v3731
        %v4027 = vunpack.c.l.b16 %v3732
        %v4028 = vunpack.c.l.b16 %v3733
        %v4029 = vunpack.c.l.b16 %v3734
        %v4030 = vunpack.c.l.b16 %v3735
        %v4031 = vunpack.c.l.b16 %v3736
        %v4032 = vunpack.c.l.b16 %v3737
        %v4033 = vunpack.c.l.b16 %v3738
        %v4034 = vunpack.c.l.b16 %v3739
        %v4035 = vunpack.c.l.b16 %v3740
        %v4036 = vunpack.c.l.b16 %v3741
        %v4037 = vunpack.c.l.b16 %v3742
        %v4038 = vunpack.c.l.b16 %v3743
        %v4039 = vunpack.c.l.b16 %v3744
        %v4040 = vunpack.c.l.b16 %v3745
        %v4041 = vunpack.c.l.b16 %v3746
        %v4042 = vunpack.c.l.b16 %v3747
        %v4043 = vunpack.c.l.b16 %v3748
        %v4044 = vunpack.c.l.b16 %v3749
        %v4045 = vunpack.c.l.b16 %v3750
        %v4046 = vunpack.c.l.b16 %v3751
        %v4047 = vunpack.c.l.b16 %v3752
        %v4048 = vunpack.c.l.b16 %v3753
        %v4049 = vunpack.c.l.b16 %v3754
        %v4050 = vunpack.c.l.b16 %v3755
        %v4051 = vunpack.c.l.b16 %v3756
        %v4052 = vunpack.c.l.b16 %v3757
        %v4053 = vunpack.c.l.b16 %v3758
        %v4054 = vunpack.c.l.b16 %v3759
        %v4055 = vunpack.c.l.b16 %v3760
        %v4056 = vunpack.c.l.b16 %v3761
        %v4057 = vunpack.c.l.b16 %v3762
        %v4058 = vunpack.c.l.b16 %v3763
        %v4059 = vunpack.c.l.b16 %v3764
        %v4060 = vunpack.c.l.b16 %v3765
        %v4061 = vunpack.c.l.b16 %v3766
        %v4062 = vunpack.c.l.b16 %v3767
        %v4063 = vunpack.c.l.b16 %v3768
        %v4064 = vunpack.c.l.b16 %v3769
        %v4065 = vunpack.c.l.b16 %v3770
        %v4066 = vunpack.c.l.b16 %v3771
        %v4067 = vunpack.c.l.b16 %v3772
        %v4068 = vunpack.c.l.b16 %v3773
        %v4069 = vunpack.c.l.b16 %v3774
        %v4070 = vunpack.c.l.b16 %v3775
        %v4071 = vunpack.c.l.b16 %v3776
        %v4072 = vunpack.c.l.b16 %v3777
        %v4073 = vunpack.c.l.b16 %v3778
        %v4074 = vunpack.c.l.b16 %v3779
        %v4075 = vunpack.c.l.b16 %v3780
        %v4076 = vunpack.c.l.b16 %v3781
        %v4077 = vunpack.c.l.b16 %v3782
        %v4078 = vunpack.c.l.b16 %v3783
        %v4079 = vunpack.c.l.b16 %v3784
        %v4080 = vunpack.c.l.b16 %v3785
        %v4081 = vunpack.c.l.b16 %v3786
        %v4082 = vunpack.c.l.b16 %v3787
        %v4083 = vunpack.c.l.b16 %v3788
        %v4084 = vunpack.c.l.b16 %v3789
        %v4085 = vunpack.c.l.b16 %v3790
        %v4086 = vunpack.c.l.b16 %v3791
        %v4087 = vunpack.c.l.b16 %v3792
        %v4088 = vunpack.c.l.b16 %v3793
        %v4089 = vunpack.c.l.b16 %v3794
        %v4090 = vunpack.c.l.b16 %v3795
        %v4091 = vunpack.c.l.b16 %v3796
        %v4092 = vunpack.c.l.b16 %v3797
        %v4093 = vunpack.c.l.b16 %v3798
        %v4094 = vunpack.c.l.b16 %v3799
        %v4095 = vunpack.c.l.b16 %v3800
        %v4096 = vunpack.c.l.b16 %v3801
        %v4097 = vunpack.c.l.b16 %v3802
        %v4098 = vunpack.c.l.b16 %v3803
        %v4099 = vpack.c.b16 %v3956, %v3955
        %v4100 = vpack.c.b16 %v3958, %v3957
        %v4101 = vpack.c.b16 %v3960, %v3959
        %v4102 = vpack.c.b16 %v3962, %v3961
        %v4103 = vpack.c.b16 %v3964, %v3963
        %v4104 = vpack.c.b16 %v3966, %v3965
        %v4105 = vpack.c.b16 %v3968, %v3967
        %v4106 = vpack.c.b16 %v3970, %v3969
        %v4107 = vpack.c.b16 %v3972, %v3971
        %v4108 = vpack.c.b16 %v3974, %v3973
        %v4109 = vpack.c.b16 %v3976, %v3975
        %v4110 = vpack.c.b16 %v3978, %v3977
        %v4111 = vpack.c.b16 %v3980, %v3979
        %v4112 = vpack.c.b16 %v3982, %v3981
        %v4113 = vpack.c.b16 %v3984, %v3983
        %v4114 = vpack.c.b16 %v3986, %v3985
        %v4115 = vpack.c.b16 %v3988, %v3987
        %v4116 = vpack.c.b16 %v3990, %v3989
        %v4117 = vpack.c.b16 %v3992, %v3991
        %v4118 = vpack.c.b16 %v3994, %v3993
        %v4119 = vpack.c.b16 %v3996, %v3995
        %v4120 = vpack.c.b16 %v3998, %v3997
        %v4121 = vpack.c.b16 %v4000, %v3999
        %v4122 = vpack.c.b16 %v4002, %v4001
        %v4123 = vpack.c.b16 %v4004, %v4003
        %v4124 = vpack.c.b16 %v4006, %v4005
        %v4125 = vpack.c.b16 %v4008, %v4007
        %v4126 = vpack.c.b16 %v4010, %v4009
        %v4127 = vpack.c.b16 %v4012, %v4011
        %v4128 = vpack.c.b16 %v4014, %v4013
        %v4129 = vpack.c.b16 %v4016, %v4015
        %v4130 = vpack.c.b16 %v4018, %v4017
        %v4131 = vpack.c.b16 %v4020, %v4019
        %v4132 = vpack.c.b16 %v4022, %v4021
        %v4133 = vpack.c.b16 %v4024, %v4023
        %v4134 = vpack.c.b16 %v4026, %v4025
        %v4135 = vpack.c.b16 %v4028, %v4027
        %v4136 = vpack.c.b16 %v4030, %v4029
        %v4137 = vpack.c.b16 %v4032, %v4031
        %v4138 = vpack.c.b16 %v4034, %v4033
        %v4139 = vpack.c.b16 %v4036, %v4035
        %v4140 = vpack.c.b16 %v4038, %v4037
        %v4141 = vpack.c.b16 %v4040, %v4039
        %v4142 = vpack.c.b16 %v4042, %v4041
        %v4143 = vpack.c.b16 %v4044, %v4043
        %v4144 = vpack.c.b16 %v4046, %v4045
        %v4145 = vpack.c.b16 %v4048, %v4047
        %v4146 = vpack.c.b16 %v4050, %v4049
        %v4147 = vpack.c.b16 %v4052, %v4051
        %v4148 = vpack.c.b16 %v4054, %v4053
        %v4149 = vpack.c.b16 %v4056, %v4055
        %v4150 = vpack.c.b16 %v4058, %v4057
        %v4151 = vpack.c.b16 %v4060, %v4059
        %v4152 = vpack.c.b16 %v4062, %v4061
        %v4153 = vpack.c.b16 %v4064, %v4063
        %v4154 = vpack.c.b16 %v4066, %v4065
        %v4155 = vpack.c.b16 %v4068, %v4067
        %v4156 = vpack.c.b16 %v4070, %v4069
        %v4157 = vpack.c.b16 %v4072, %v4071
        %v4158 = vpack.c.b16 %v4074, %v4073
        %v4159 = vpack.c.b16 %v4076, %v4075
        %v4160 = vpack.c.b16 %v4078, %v4077
        %v4161 = vpack.c.b16 %v4080, %v4079
        %v4162 = vpack.c.b16 %v4082, %v4081
        %v4163 = vpack.c.b16 %v4084, %v4083
        %v4164 = vpack.c.b16 %v4086, %v4085
        %v4165 = vpack.c.b16 %v4088, %v4087
        %v4166 = vpack.c.b16 %v4090, %v4089
        %v4167 = vpack.c.b16 %v4092, %v4091
        %v4168 = vpack.c.b16 %v4094, %v4093
        %v4169 = vpack.c.b16 %v4096, %v4095
        %v4170 = vpack.c.b16 %v4098, %v4097
        %4243 = vmatprep.subr.bf16.mxu0 0
        %4244 = vmatpush1.bf16.msra.mxu0 %v4099
        %4245 = vmatprep.subr.bf16.mxu0 0
        %4246 = vmatpush1.bf16.msra.mxu0 %v4100
        %4247 = vmatprep.subr.bf16.mxu0 0
        %4248 = vmatpush1.bf16.msra.mxu0 %v4101
        %4249 = vmatprep.subr.bf16.mxu0 0
        %4250 = vmatpush1.bf16.msra.mxu0 %v4102
        %4251 = vmatprep.subr.bf16.mxu0 0
        %4252 = vmatpush1.bf16.msra.mxu0 %v4103
        %4253 = vmatprep.subr.bf16.mxu0 0
        %4254 = vmatpush1.bf16.msra.mxu0 %v4104
        %4255 = vmatprep.subr.bf16.mxu0 0
        %4256 = vmatpush1.bf16.msra.mxu0 %v4105
        %4257 = vmatprep.subr.bf16.mxu0 0
        %4258 = vmatpush1.bf16.msra.mxu0 %v4106
        %4259 = vmatprep.subr.bf16.mxu0 0
        %4260 = vmatpush1.bf16.msra.mxu0 %v4107
        %4261 = vmatprep.subr.bf16.mxu0 0
        %4262 = vmatpush1.bf16.msra.mxu0 %v4108
        %4263 = vmatprep.subr.bf16.mxu0 0
        %4264 = vmatpush1.bf16.msra.mxu0 %v4109
        %4265 = vmatprep.subr.bf16.mxu0 0
        %4266 = vmatpush1.bf16.msra.mxu0 %v4110
        %4267 = vmatprep.subr.bf16.mxu0 0
        %4268 = vmatpush1.bf16.msra.mxu0 %v4111
        %4269 = vmatprep.subr.bf16.mxu0 0
        %4270 = vmatpush1.bf16.msra.mxu0 %v4112
        %4271 = vmatprep.subr.bf16.mxu0 0
        %4272 = vmatpush1.bf16.msra.mxu0 %v4113
        %4273 = vmatprep.subr.bf16.mxu0 0
        %4274 = vmatpush1.bf16.msra.mxu0 %v4114
        %4275 = vmatprep.mubr.bf16.mxu0 %v2581
        %4276 = vmatmul.mubr.bf16.gmra.mrb[0].mxu0 %v2572
        %v4277 = vpop.f32.mrb[0].mxu0
        %v4278 = vadd.f32 %v3809, %v4277
        %v4279 = vpop.f32.mrb[0].mxu0
        %v4280 = vpop.f32.mrb[0].mxu0
        %v4281 = vadd.f32 %v3809, %v4280
        %v4282 = vpop.f32.mrb[0].mxu0
        %4283 = vmatprep.mubr.bf16.mxu0 %v2710
        %4284 = vmatmul.mubr.bf16.gmra.mrb[0].mxu0 %v2701
        %v4285 = vpop.f32.mrb[0].mxu0
        %v4286 = vadd.f32 %v3809, %v4285
        %v4287 = vpop.f32.mrb[0].mxu0
        %v4288 = vpop.f32.mrb[0].mxu0
        %v4289 = vadd.f32 %v3809, %v4288
        %v4290 = vpop.f32.mrb[0].mxu0
        %4291 = vmatprep.mubr.bf16.mxu0 %v2839
        %4292 = vmatmul.mubr.bf16.gmra.mrb[0].mxu0 %v2830
        %v4293 = vpop.f32.mrb[0].mxu0
        %v4294 = vadd.f32 %v3809, %v4293
        %v4295 = vpop.f32.mrb[0].mxu0
        %v4296 = vpop.f32.mrb[0].mxu0
        %v4297 = vadd.f32 %v3809, %v4296
        %v4298 = vpop.f32.mrb[0].mxu0
        %4299 = vmatprep.mubr.bf16.mxu0 %v2968
        %4300 = vmatmul.mubr.bf16.gmra.mrb[0].mxu0 %v2959
        %v4301 = vpop.f32.mrb[0].mxu0
        %v4302 = vadd.f32 %v3809, %v4301
        %v4303 = vpop.f32.mrb[0].mxu0
        %v4304 = vpop.f32.mrb[0].mxu0
        %v4305 = vadd.f32 %v3809, %v4304
        %v4306 = vpop.f32.mrb[0].mxu0
        %4307 = vmatprep.mubr.bf16.mxu0 %v3097
        %4308 = vmatmul.mubr.bf16.gmra.mrb[0].mxu0 %v3088
        %v4309 = vpop.f32.mrb[0].mxu0
        %v4310 = vadd.f32 %v3809, %v4309
        %v4311 = vpop.f32.mrb[0].mxu0
        %v4312 = vpop.f32.mrb[0].mxu0
        %v4313 = vadd.f32 %v3809, %v4312
        %v4314 = vpop.f32.mrb[0].mxu0
        %4315 = vmatprep.mubr.bf16.mxu0 %v3226
        %4316 = vmatmul.mubr.bf16.gmra.mrb[0].mxu0 %v3217
        %v4317 = vpop.f32.mrb[0].mxu0
        %v4318 = vadd.f32 %v3809, %v4317
        %v4319 = vpop.f32.mrb[0].mxu0
        %v4320 = vpop.f32.mrb[0].mxu0
        %v4321 = vadd.f32 %v3809, %v4320
        %v4322 = vpop.f32.mrb[0].mxu0
        %4323 = vmatprep.mubr.bf16.mxu0 %v3355
        %4324 = vmatmul.mubr.bf16.gmra.mrb[0].mxu0 %v3346
        %v4325 = vpop.f32.mrb[0].mxu0
        %v4326 = vadd.f32 %v3809, %v4325
        %v4327 = vpop.f32.mrb[0].mxu0
        %v4328 = vpop.f32.mrb[0].mxu0
        %v4329 = vadd.f32 %v3809, %v4328
        %v4330 = vpop.f32.mrb[0].mxu0
        %4331 = vmatprep.mubr.bf16.mxu0 %v3484
        %4332 = vmatmul.mubr.bf16.gmra.mrb[0].mxu0 %v3475
        %v4333 = vpop.f32.mrb[0].mxu0
        %v4334 = vadd.f32 %v3809, %v4333
        %v4335 = vpop.f32.mrb[0].mxu0
        %v4336 = vpop.f32.mrb[0].mxu0
        %v4337 = vadd.f32 %v3809, %v4336
        %v4338 = vpop.f32.mrb[0].mxu0
        %4339 = vdwg.mxu0
        %4340 = vmatprep.subr.bf16.mxu0 0
        %4341 = vmatpush1.bf16.msra.mxu0 %v4115
        %4342 = vmatprep.subr.bf16.mxu0 0
        %4343 = vmatpush1.bf16.msra.mxu0 %v4116
        %4344 = vmatprep.subr.bf16.mxu0 0
        %4345 = vmatpush1.bf16.msra.mxu0 %v4117
        %4346 = vmatprep.subr.bf16.mxu0 0
        %4347 = vmatpush1.bf16.msra.mxu0 %v4118
        %4348 = vmatprep.subr.bf16.mxu0 0
        %4349 = vmatpush1.bf16.msra.mxu0 %v4119
        %4350 = vmatprep.subr.bf16.mxu0 0
        %4351 = vmatpush1.bf16.msra.mxu0 %v4120
        %4352 = vmatprep.subr.bf16.mxu0 0
        %4353 = vmatpush1.bf16.msra.mxu0 %v4121
        %4354 = vmatprep.subr.bf16.mxu0 0
        %4355 = vmatpush1.bf16.msra.mxu0 %v4122
        %4356 = vmatprep.subr.bf16.mxu0 0
        %4357 = vmatpush1.bf16.msra.mxu0 %v4123
        %4358 = vmatprep.subr.bf16.mxu0 0
        %4359 = vmatpush1.bf16.msra.mxu0 %v4124
        %4360 = vmatprep.subr.bf16.mxu0 0
        %4361 = vmatpush1.bf16.msra.mxu0 %v4125
        %4362 = vmatprep.subr.bf16.mxu0 0
        %4363 = vmatpush1.bf16.msra.mxu0 %v4126
        %4364 = vmatprep.subr.bf16.mxu0 0
        %4365 = vmatpush1.bf16.msra.mxu0 %v4127
        %4366 = vmatprep.subr.bf16.mxu0 0
        %4367 = vmatpush1.bf16.msra.mxu0 %v4128
        %4368 = vmatprep.subr.bf16.mxu0 0
        %4369 = vmatpush1.bf16.msra.mxu0 %v4129
        %4370 = vmatprep.subr.bf16.mxu0 0
        %4371 = vmatpush1.bf16.msra.mxu0 %v4130
        %4372 = vmatprep.mubr.bf16.mxu0 %v2615
        %4373 = vmatmul.mubr.bf16.gmra.mrb[0].mxu0 %v2598
        %v4374 = vpop.f32.mrb[0].mxu0
        %v4375 = vadd.f32 %v4278, %v4374
        %v4376 = vpop.f32.mrb[0].mxu0
        %v4377 = vpop.f32.mrb[0].mxu0
        %v4378 = vadd.f32 %v4281, %v4377
        %v4379 = vpop.f32.mrb[0].mxu0
        %4380 = vmatprep.mubr.bf16.mxu0 %v2744
        %4381 = vmatmul.mubr.bf16.gmra.mrb[0].mxu0 %v2727
        %v4382 = vpop.f32.mrb[0].mxu0
        %v4383 = vadd.f32 %v4286, %v4382
        %v4384 = vpop.f32.mrb[0].mxu0
        %v4385 = vpop.f32.mrb[0].mxu0
        %v4386 = vadd.f32 %v4289, %v4385
        %v4387 = vpop.f32.mrb[0].mxu0
        %4388 = vmatprep.mubr.bf16.mxu0 %v2873
        %4389 = vmatmul.mubr.bf16.gmra.mrb[0].mxu0 %v2856
        %v4390 = vpop.f32.mrb[0].mxu0
        %v4391 = vadd.f32 %v4294, %v4390
        %v4392 = vpop.f32.mrb[0].mxu0
        %v4393 = vpop.f32.mrb[0].mxu0
        %v4394 = vadd.f32 %v4297, %v4393
        %v4395 = vpop.f32.mrb[0].mxu0
        %4396 = vmatprep.mubr.bf16.mxu0 %v3002
        %4397 = vmatmul.mubr.bf16.gmra.mrb[0].mxu0 %v2985
        %v4398 = vpop.f32.mrb[0].mxu0
        %v4399 = vadd.f32 %v4302, %v4398
        %v4400 = vpop.f32.mrb[0].mxu0
        %v4401 = vpop.f32.mrb[0].mxu0
        %v4402 = vadd.f32 %v4305, %v4401
        %v4403 = vpop.f32.mrb[0].mxu0
        %4404 = vmatprep.mubr.bf16.mxu0 %v3131
        %4405 = vmatmul.mubr.bf16.gmra.mrb[0].mxu0 %v3114
        %v4406 = vpop.f32.mrb[0].mxu0
        %v4407 = vadd.f32 %v4310, %v4406
        %v4408 = vpop.f32.mrb[0].mxu0
        %v4409 = vpop.f32.mrb[0].mxu0
        %v4410 = vadd.f32 %v4313, %v4409
        %v4411 = vpop.f32.mrb[0].mxu0
        %4412 = vmatprep.mubr.bf16.mxu0 %v3260
        %4413 = vmatmul.mubr.bf16.gmra.mrb[0].mxu0 %v3243
        %v4414 = vpop.f32.mrb[0].mxu0
        %v4415 = vadd.f32 %v4318, %v4414
        %v4416 = vpop.f32.mrb[0].mxu0
        %v4417 = vpop.f32.mrb[0].mxu0
        %v4418 = vadd.f32 %v4321, %v4417
        %v4419 = vpop.f32.mrb[0].mxu0
        %4420 = vmatprep.mubr.bf16.mxu0 %v3389
        %4421 = vmatmul.mubr.bf16.gmra.mrb[0].mxu0 %v3372
        %v4422 = vpop.f32.mrb[0].mxu0
        %v4423 = vadd.f32 %v4326, %v4422
        %v4424 = vpop.f32.mrb[0].mxu0
        %v4425 = vpop.f32.mrb[0].mxu0
        %v4426 = vadd.f32 %v4329, %v4425
        %v4427 = vpop.f32.mrb[0].mxu0
        %4428 = vmatprep.mubr.bf16.mxu0 %v3518
        %4429 = vmatmul.mubr.bf16.gmra.mrb[0].mxu0 %v3501
        %v4430 = vpop.f32.mrb[0].mxu0
        %v4431 = vadd.f32 %v4334, %v4430
        %v4432 = vpop.f32.mrb[0].mxu0
        %v4433 = vpop.f32.mrb[0].mxu0
        %v4434 = vadd.f32 %v4337, %v4433
        %v4435 = vpop.f32.mrb[0].mxu0
        %4436 = vdwg.mxu0
        %4437 = vmatprep.subr.bf16.mxu0 0
        %4438 = vmatpush1.bf16.msra.mxu0 %v4131
        %4439 = vmatprep.subr.bf16.mxu0 0
        %4440 = vmatpush1.bf16.msra.mxu0 %v4132
        %4441 = vmatprep.subr.bf16.mxu0 0
        %4442 = vmatpush1.bf16.msra.mxu0 %v4133
        %4443 = vmatprep.subr.bf16.mxu0 0
        %4444 = vmatpush1.bf16.msra.mxu0 %v4134
        %4445 = vmatprep.subr.bf16.mxu0 0
        %4446 = vmatpush1.bf16.msra.mxu0 %v4135
        %4447 = vmatprep.subr.bf16.mxu0 0
        %4448 = vmatpush1.bf16.msra.mxu0 %v4136
        %4449 = vmatprep.subr.bf16.mxu0 0
        %4450 = vmatpush1.bf16.msra.mxu0 %v4137
        %4451 = vmatprep.subr.bf16.mxu0 0
        %4452 = vmatpush1.bf16.msra.mxu0 %v4138
        %4453 = vmatprep.subr.bf16.mxu0 0
        %4454 = vmatpush1.bf16.msra.mxu0 %v4139
        %4455 = vmatprep.subr.bf16.mxu0 0
        %4456 = vmatpush1.bf16.msra.mxu0 %v4140
        %4457 = vmatprep.subr.bf16.mxu0 0
        %4458 = vmatpush1.bf16.msra.mxu0 %v4141
        %4459 = vmatprep.subr.bf16.mxu0 0
        %4460 = vmatpush1.bf16.msra.mxu0 %v4142
        %4461 = vmatprep.subr.bf16.mxu0 0
        %4462 = vmatpush1.bf16.msra.mxu0 %v4143
        %4463 = vmatprep.subr.bf16.mxu0 0
        %4464 = vmatpush1.bf16.msra.mxu0 %v4144
        %4465 = vmatprep.subr.bf16.mxu0 0
        %4466 = vmatpush1.bf16.msra.mxu0 %v4145
        %4467 = vmatprep.subr.bf16.mxu0 0
        %4468 = vmatpush1.bf16.msra.mxu0 %v4146
        %4469 = vmatprep.mubr.bf16.mxu0 %v2641
        %4470 = vmatmul.mubr.bf16.gmra.mrb[0].mxu0 %v2624
        %v4471 = vpop.f32.mrb[0].mxu0
        %v4472 = vadd.f32 %v4375, %v4471
        %v4473 = vpop.f32.mrb[0].mxu0
        %v4474 = vpop.f32.mrb[0].mxu0
        %v4475 = vadd.f32 %v4378, %v4474
        %v4476 = vpop.f32.mrb[0].mxu0
        %4477 = vmatprep.mubr.bf16.mxu0 %v2770
        %4478 = vmatmul.mubr.bf16.gmra.mrb[0].mxu0 %v2753
        %v4479 = vpop.f32.mrb[0].mxu0
        %v4480 = vadd.f32 %v4383, %v4479
        %v4481 = vpop.f32.mrb[0].mxu0
        %v4482 = vpop.f32.mrb[0].mxu0
        %v4483 = vadd.f32 %v4386, %v4482
        %v4484 = vpop.f32.mrb[0].mxu0
        %4485 = vmatprep.mubr.bf16.mxu0 %v2899
        %4486 = vmatmul.mubr.bf16.gmra.mrb[0].mxu0 %v2882
        %v4487 = vpop.f32.mrb[0].mxu0
        %v4488 = vadd.f32 %v4391, %v4487
        %v4489 = vpop.f32.mrb[0].mxu0
        %v4490 = vpop.f32.mrb[0].mxu0
        %v4491 = vadd.f32 %v4394, %v4490
        %v4492 = vpop.f32.mrb[0].mxu0
        %4493 = vmatprep.mubr.bf16.mxu0 %v3028
        %4494 = vmatmul.mubr.bf16.gmra.mrb[0].mxu0 %v3011
        %v4495 = vpop.f32.mrb[0].mxu0
        %v4496 = vadd.f32 %v4399, %v4495
        %v4497 = vpop.f32.mrb[0].mxu0
        %v4498 = vpop.f32.mrb[0].mxu0
        %v4499 = vadd.f32 %v4402, %v4498
        %v4500 = vpop.f32.mrb[0].mxu0
        %4501 = vmatprep.mubr.bf16.mxu0 %v3157
        %4502 = vmatmul.mubr.bf16.gmra.mrb[0].mxu0 %v3140
        %v4503 = vpop.f32.mrb[0].mxu0
        %v4504 = vadd.f32 %v4407, %v4503
        %v4505 = vpop.f32.mrb[0].mxu0
        %v4506 = vpop.f32.mrb[0].mxu0
        %v4507 = vadd.f32 %v4410, %v4506
        %v4508 = vpop.f32.mrb[0].mxu0
        %4509 = vmatprep.mubr.bf16.mxu0 %v3286
        %4510 = vmatmul.mubr.bf16.gmra.mrb[0].mxu0 %v3269
        %v4511 = vpop.f32.mrb[0].mxu0
        %v4512 = vadd.f32 %v4415, %v4511
        %v4513 = vpop.f32.mrb[0].mxu0
        %v4514 = vpop.f32.mrb[0].mxu0
        %v4515 = vadd.f32 %v4418, %v4514
        %v4516 = vpop.f32.mrb[0].mxu0
        %4517 = vmatprep.mubr.bf16.mxu0 %v3415
        %4518 = vmatmul.mubr.bf16.gmra.mrb[0].mxu0 %v3398
        %v4519 = vpop.f32.mrb[0].mxu0
        %v4520 = vadd.f32 %v4423, %v4519
        %v4521 = vpop.f32.mrb[0].mxu0
        %v4522 = vpop.f32.mrb[0].mxu0
        %v4523 = vadd.f32 %v4426, %v4522
        %v4524 = vpop.f32.mrb[0].mxu0
        %4525 = vmatprep.mubr.bf16.mxu0 %v3544
        %4526 = vmatmul.mubr.bf16.gmra.mrb[0].mxu0 %v3527
        %v4527 = vpop.f32.mrb[0].mxu0
        %v4528 = vadd.f32 %v4431, %v4527
        %v4529 = vpop.f32.mrb[0].mxu0
        %v4530 = vpop.f32.mrb[0].mxu0
        %v4531 = vadd.f32 %v4434, %v4530
        %v4532 = vpop.f32.mrb[0].mxu0
        %4533 = vdwg.mxu0
        %4534 = vmatprep.subr.bf16.mxu0 0
        %4535 = vmatpush1.bf16.msra.mxu0 %v4147
        %4536 = vmatprep.subr.bf16.mxu0 0
        %4537 = vmatpush1.bf16.msra.mxu0 %v4148
        %4538 = vmatprep.subr.bf16.mxu0 0
        %4539 = vmatpush1.bf16.msra.mxu0 %v4149
        %4540 = vmatprep.subr.bf16.mxu0 0
        %4541 = vmatpush1.bf16.msra.mxu0 %v4150
        %4542 = vmatprep.subr.bf16.mxu0 0
        %4543 = vmatpush1.bf16.msra.mxu0 %v4151
        %4544 = vmatprep.subr.bf16.mxu0 0
        %4545 = vmatpush1.bf16.msra.mxu0 %v4152
        %4546 = vmatprep.subr.bf16.mxu0 0
        %4547 = vmatpush1.bf16.msra.mxu0 %v4153
        %4548 = vmatprep.subr.bf16.mxu0 0
        %4549 = vmatpush1.bf16.msra.mxu0 %v4154
        %4550 = vmatprep.subr.bf16.mxu0 0
        %4551 = vmatpush1.bf16.msra.mxu0 %v4155
        %4552 = vmatprep.subr.bf16.mxu0 0
        %4553 = vmatpush1.bf16.msra.mxu0 %v4156
        %4554 = vmatprep.subr.bf16.mxu0 0
        %4555 = vmatpush1.bf16.msra.mxu0 %v4157
        %4556 = vmatprep.subr.bf16.mxu0 0
        %4557 = vmatpush1.bf16.msra.mxu0 %v4158
        %4558 = vmatprep.subr.bf16.mxu0 0
        %4559 = vmatpush1.bf16.msra.mxu0 %v4159
        %4560 = vmatprep.subr.bf16.mxu0 0
        %4561 = vmatpush1.bf16.msra.mxu0 %v4160
        %4562 = vmatprep.subr.bf16.mxu0 0
        %4563 = vmatpush1.bf16.msra.mxu0 %v4161
        %4564 = vmatprep.subr.bf16.mxu0 0
        %4565 = vmatpush1.bf16.msra.mxu0 %v4162
        %4566 = vmatprep.mubr.bf16.mxu0 %v2667
        %4567 = vmatmul.mubr.bf16.gmra.mrb[0].mxu0 %v2658
        %v4568 = vpop.f32.mrb[0].mxu0
        %v4569 = vadd.f32 %v4472, %v4568
        %v4570 = vpop.f32.mrb[0].mxu0
        %v4571 = vpop.f32.mrb[0].mxu0
        %v4572 = vadd.f32 %v4475, %v4571
        %v4573 = vpop.f32.mrb[0].mxu0
        %4574 = vmatprep.mubr.bf16.mxu0 %v2796
        %4575 = vmatmul.mubr.bf16.gmra.mrb[0].mxu0 %v2787
        %v4576 = vpop.f32.mrb[0].mxu0
        %v4577 = vadd.f32 %v4480, %v4576
        %v4578 = vpop.f32.mrb[0].mxu0
        %v4579 = vpop.f32.mrb[0].mxu0
        %v4580 = vadd.f32 %v4483, %v4579
        %v4581 = vpop.f32.mrb[0].mxu0
        %4582 = vmatprep.mubr.bf16.mxu0 %v2925
        %4583 = vmatmul.mubr.bf16.gmra.mrb[0].mxu0 %v2916
        %v4584 = vpop.f32.mrb[0].mxu0
        %v4585 = vadd.f32 %v4488, %v4584
        %v4586 = vpop.f32.mrb[0].mxu0
        %v4587 = vpop.f32.mrb[0].mxu0
        %v4588 = vadd.f32 %v4491, %v4587
        %v4589 = vpop.f32.mrb[0].mxu0
        %4590 = vmatprep.mubr.bf16.mxu0 %v3054
        %4591 = vmatmul.mubr.bf16.gmra.mrb[0].mxu0 %v3045
        %v4592 = vpop.f32.mrb[0].mxu0
        %v4593 = vadd.f32 %v4496, %v4592
        %v4594 = vpop.f32.mrb[0].mxu0
        %v4595 = vpop.f32.mrb[0].mxu0
        %v4596 = vadd.f32 %v4499, %v4595
        %v4597 = vpop.f32.mrb[0].mxu0
        %4598 = vmatprep.mubr.bf16.mxu0 %v3183
        %4599 = vmatmul.mubr.bf16.gmra.mrb[0].mxu0 %v3174
        %v4600 = vpop.f32.mrb[0].mxu0
        %v4601 = vadd.f32 %v4504, %v4600
        %v4602 = vpop.f32.mrb[0].mxu0
        %v4603 = vpop.f32.mrb[0].mxu0
        %v4604 = vadd.f32 %v4507, %v4603
        %v4605 = vpop.f32.mrb[0].mxu0
        %4606 = vmatprep.mubr.bf16.mxu0 %v3312
        %4607 = vmatmul.mubr.bf16.gmra.mrb[0].mxu0 %v3303
        %v4608 = vpop.f32.mrb[0].mxu0
        %v4609 = vadd.f32 %v4512, %v4608
        %v4610 = vpop.f32.mrb[0].mxu0
        %v4611 = vpop.f32.mrb[0].mxu0
        %v4612 = vadd.f32 %v4515, %v4611
        %v4613 = vpop.f32.mrb[0].mxu0
        %4614 = vmatprep.mubr.bf16.mxu0 %v3441
        %4615 = vmatmul.mubr.bf16.gmra.mrb[0].mxu0 %v3432
        %v4616 = vpop.f32.mrb[0].mxu0
        %v4617 = vadd.f32 %v4520, %v4616
        %v4618 = vpop.f32.mrb[0].mxu0
        %v4619 = vpop.f32.mrb[0].mxu0
        %v4620 = vadd.f32 %v4523, %v4619
        %v4621 = vpop.f32.mrb[0].mxu0
        %4622 = vmatprep.mubr.bf16.mxu0 %v3570
        %4623 = vmatmul.mubr.bf16.gmra.mrb[0].mxu0 %v3561
        %v4624 = vpop.f32.mrb[0].mxu0
        %v4625 = vadd.f32 %v4528, %v4624
        %v4626 = vpop.f32.mrb[0].mxu0
        %v4627 = vpop.f32.mrb[0].mxu0
        %v4628 = vadd.f32 %v4531, %v4627
        %v4629 = vpop.f32.mrb[0].mxu0
        %4630 = vdwg.mxu0
        %4631 = vmatprep.subr.bf16.mxu0 0
        %4632 = vmatpush1.bf16.msra.mxu0 %v4163
        %4633 = vmatprep.subr.bf16.mxu0 0
        %4634 = vmatpush1.bf16.msra.mxu0 %v4164
        %4635 = vmatprep.subr.bf16.mxu0 0
        %4636 = vmatpush1.bf16.msra.mxu0 %v4165
        %4637 = vmatprep.subr.bf16.mxu0 0
        %4638 = vmatpush1.bf16.msra.mxu0 %v4166
        %4639 = vmatprep.subr.bf16.mxu0 0
        %4640 = vmatpush1.bf16.msra.mxu0 %v4167
        %4641 = vmatprep.subr.bf16.mxu0 0
        %4642 = vmatpush1.bf16.msra.mxu0 %v4168
        %4643 = vmatprep.subr.bf16.mxu0 0
        %4644 = vmatpush1.bf16.msra.mxu0 %v4169
        %4645 = vmatprep.subr.bf16.mxu0 0
        %4646 = vmatpush1.bf16.msra.mxu0 %v4170
        %4647 = vmatprep.subr.bf16.mxu0 0
        %4648 = vmatpush1.bf16.msra.mxu0 0
        %4649 = vmatprep.subr.bf16.mxu0 0
        %4650 = vmatpush1.bf16.msra.mxu0 0
        %4651 = vmatprep.subr.bf16.mxu0 0
        %4652 = vmatpush1.bf16.msra.mxu0 0
        %4653 = vmatprep.subr.bf16.mxu0 0
        %4654 = vmatpush1.bf16.msra.mxu0 0
        %4655 = vmatprep.subr.bf16.mxu0 0
        %4656 = vmatpush1.bf16.msra.mxu0 0
        %4657 = vmatprep.subr.bf16.mxu0 0
        %4658 = vmatpush1.bf16.msra.mxu0 0
        %4659 = vmatprep.subr.bf16.mxu0 0
        %4660 = vmatpush1.bf16.msra.mxu0 0
        %4661 = vmatprep.subr.bf16.mxu0 0
        %4662 = vmatpush1.bf16.msra.mxu0 0
        %4663 = vmatprep.mubr.bf16.mxu0 0
        %4664 = vmatmul.mubr.bf16.gmra.mrb[0].mxu0 %v2684
        %v4665 = vpop.f32.mrb[0].mxu0
        %v4666 = vadd.f32 %v4569, %v4665
        %v4667 = vpop.f32.mrb[0].mxu0
        %v4668 = vpop.f32.mrb[0].mxu0
        %v4669 = vadd.f32 %v4572, %v4668
        %v4670 = vpop.f32.mrb[0].mxu0
        %4671 = vmatprep.mubr.bf16.mxu0 0
        %4672 = vmatmul.mubr.bf16.gmra.mrb[0].mxu0 %v2813
        %v4673 = vpop.f32.mrb[0].mxu0
        %v4674 = vadd.f32 %v4577, %v4673
        %v4675 = vpop.f32.mrb[0].mxu0
        %v4676 = vpop.f32.mrb[0].mxu0
        %v4677 = vadd.f32 %v4580, %v4676
        %v4678 = vpop.f32.mrb[0].mxu0
        %4679 = vmatprep.mubr.bf16.mxu0 0
        %4680 = vmatmul.mubr.bf16.gmra.mrb[0].mxu0 %v2942
        %v4681 = vpop.f32.mrb[0].mxu0
        %v4682 = vadd.f32 %v4585, %v4681
        %v4683 = vpop.f32.mrb[0].mxu0
        %v4684 = vpop.f32.mrb[0].mxu0
        %v4685 = vadd.f32 %v4588, %v4684
        %v4686 = vpop.f32.mrb[0].mxu0
        %4687 = vmatprep.mubr.bf16.mxu0 0
        %4688 = vmatmul.mubr.bf16.gmra.mrb[0].mxu0 %v3071
        %v4689 = vpop.f32.mrb[0].mxu0
        %v4690 = vadd.f32 %v4593, %v4689
        %v4691 = vpop.f32.mrb[0].mxu0
        %v4692 = vpop.f32.mrb[0].mxu0
        %v4693 = vadd.f32 %v4596, %v4692
        %v4694 = vpop.f32.mrb[0].mxu0
        %4695 = vmatprep.mubr.bf16.mxu0 0
        %4696 = vmatmul.mubr.bf16.gmra.mrb[0].mxu0 %v3200
        %v4697 = vpop.f32.mrb[0].mxu0
        %v4698 = vadd.f32 %v4601, %v4697
        %v4699 = vpop.f32.mrb[0].mxu0
        %v4700 = vpop.f32.mrb[0].mxu0
        %v4701 = vadd.f32 %v4604, %v4700
        %v4702 = vpop.f32.mrb[0].mxu0
        %4703 = vmatprep.mubr.bf16.mxu0 0
        %4704 = vmatmul.mubr.bf16.gmra.mrb[0].mxu0 %v3329
        %v4705 = vpop.f32.mrb[0].mxu0
        %v4706 = vadd.f32 %v4609, %v4705
        %v4707 = vpop.f32.mrb[0].mxu0
        %v4708 = vpop.f32.mrb[0].mxu0
        %v4709 = vadd.f32 %v4612, %v4708
        %v4710 = vpop.f32.mrb[0].mxu0
        %4711 = vmatprep.mubr.bf16.mxu0 0
        %4712 = vmatmul.mubr.bf16.gmra.mrb[0].mxu0 %v3458
        %v4713 = vpop.f32.mrb[0].mxu0
        %v4714 = vadd.f32 %v4617, %v4713
        %v4715 = vpop.f32.mrb[0].mxu0
        %v4716 = vpop.f32.mrb[0].mxu0
        %v4717 = vadd.f32 %v4620, %v4716
        %v4718 = vpop.f32.mrb[0].mxu0
        %4719 = vmatprep.mubr.bf16.mxu0 0
        %4720 = vmatmul.mubr.bf16.gmra.mrb[0].mxu0 %v3587
        %v4721 = vpop.f32.mrb[0].mxu0
        %v4722 = vadd.f32 %v4625, %v4721
        %v4723 = vpop.f32.mrb[0].mxu0
        %v4724 = vpop.f32.mrb[0].mxu0
        %v4725 = vadd.f32 %v4628, %v4724
        %v4726 = vpop.f32.mrb[0].mxu0
        %4727 = vdwg.mxu0
        %v4728 = vmax.f32 %v4666, 0.0
        %v4729 = vmax.f32 %v4669, 0.0
        %v4730 = vmax.f32 %v4674, 0.0
        %v4731 = vmax.f32 %v4677, 0.0
        %v4732 = vmax.f32 %v4682, 0.0
        %v4733 = vmax.f32 %v4685, 0.0
        %v4734 = vmax.f32 %v4690, 0.0
        %v4735 = vmax.f32 %v4693, 0.0
        %v4736 = vmax.f32 %v4698, 0.0
        %v4737 = vmax.f32 %v4701, 0.0
        %v4738 = vmax.f32 %v4706, 0.0
        %v4739 = vmax.f32 %v4709, 0.0
        %v4740 = vmax.f32 %v4714, 0.0
        %v4741 = vmax.f32 %v4717, 0.0
        %v4742 = vmax.f32 %v4722, 0.0
        %v4743 = vmax.f32 %v4725, 0.0
        %4744 = vst [vmem:[%s241] sm:$0xff] %v4728
        %4745 = vst [vmem:[%s241 + $0x8] sm:$0xff] %v4729
        %4746 = vst [vmem:[%s241 + $0x10] sm:$0xff] %v4730
        %4747 = vst [vmem:[%s241 + $0x18] sm:$0xff] %v4731
        %4748 = vst [vmem:[%s241 + $0x20] sm:$0xff] %v4732
        %4749 = vst [vmem:[%s241 + $0x28] sm:$0xff] %v4733
        %4750 = vst [vmem:[%s241 + $0x30] sm:$0xff] %v4734
        %4751 = vst [vmem:[%s241 + $0x38] sm:$0xff] %v4735
        %4752 = vst [vmem:[%s241 + $0x40] sm:$0xff] %v4736
        %4753 = vst [vmem:[%s241 + $0x48] sm:$0xff] %v4737
        %4754 = vst [vmem:[%s241 + $0x50] sm:$0xff] %v4738
        %4755 = vst [vmem:[%s241 + $0x58] sm:$0xff] %v4739
        %4756 = vst [vmem:[%s241 + $0x60] sm:$0xff] %v4740
        %4757 = vst [vmem:[%s241 + $0x68] sm:$0xff] %v4741
        %4758 = vst [vmem:[%s241 + $0x70] sm:$0xff] %v4742
        %4759 = vst [vmem:[%s241 + $0x78] sm:$0xff] %v4743
        %s4760 = sand.u32 %s153, 1
        %s4761 = scalar_lea.sflag [#allocation4], %s4760
        %s4762 = sand.u32 %s153, 1
        %s4763 = smul.addr %s4762, 128
        %s4764 = scalar_lea.vmem [#allocation3], %s4763
        // Predicated region
        $region41: #{tpu_custom_call.1} parent=39 // pred_check
          %p4765 = pneg %p163
        $region42: #{tpu_custom_call.1} parent=39 // pred_check_branch
          %4767 = sbr.rel (%p4765) target = $region44
        $region43: #{tpu_custom_call.1} parent=39 // pred_region
          %s4769 = ssub.s32 2048, 2048
          %4770 = vsyncadd %s4761, %s4769
          %s4771 = smul.addr %s24, 16
          %s4772 = smul.addr %s23, 32
          %s4773 = sadd.s32 %s4771, %s4772
          %s4774 = smul.addr %s4773, 128
          %s4775 = scalar_lea.hbm %s5, %s4774
          %s4776 = sshll.u32 %s4764, 4
          %s4777 = int_to_ptr.vmem [resolvable:$true] %s4776
          %4782 = dma.vmem_to_hbm [thread:$0]  %s4777, 2048, %s4775, %s4761, 128, 128, 8
        $region44: #{tpu_custom_call.1} parent=39 // pred_fallthru
          _
      $region40: #{tpu_custom_call.1} parent=5 // pred_fallthru
        _
      %p4783 = scmp.le.s32.totalorder 2, %s14
      // Predicated region
      $region45: #{tpu_custom_call.1} parent=5 // pred_check
        %p4784 = pneg %p4783
      $region46: #{tpu_custom_call.1} parent=5 // pred_check_branch
        %4786 = sbr.rel (%p4784) target = $region48
      $region47: #{tpu_custom_call.1} parent=5 // pred_region
        %s4787 = ssub.s32 %s14, 2
        // Predicated region
        $region49: #{tpu_custom_call.1} parent=47 // pred_check
          %p4788 = pneg %p169
        $region50: #{tpu_custom_call.1} parent=47 // pred_check_branch
          %4790 = sbr.rel (%p4788) target = $region52
        $region51: #{tpu_custom_call.1} parent=47 // pred_region
          %s4791 = sand.u32 %s154, 1
          %s4792 = scalar_lea.sflag [#allocation4], %s4791
          %s4793 = sand.u32 %s154, 1
          %s4794 = smul.addr %s4793, 128
          %s4795 = scalar_lea.vmem [#allocation3], %s4794
          %4796 = dma.done %s4792, 2048
        $region52: #{tpu_custom_call.1} parent=47 // pred_fallthru
          _
      $region48: #{tpu_custom_call.1} parent=5 // pred_fallthru
        _
    $region6: #{tpu_custom_call.1} parent=1 // loop_footer
      %s18 = sadd.s32 1, %s14
    $region7: #{tpu_custom_call.1} parent=1 // loop_footer_branch
      %13 = sbr.rel target = $region3
    $region8: #{tpu_custom_call.1} parent=1 // loop_exit
      _
    %4797 = vsyncpa [#allocation4], 1
    %s4798 = scalar_lea.sflag [#allocation4], 1
    %4799 = vsyncpa %s4798, 1

// kernel: tpu_custom_call.1
$region0: #{tpu_custom_call.1}
  #allocation0 [shape = 'u32[]', space=smem, size = 0x4, offset = 0x4, fixed_abs, tag = 'smem constant byte address 0x4 - core index']
  #allocation1 [shape = 'u32[144,128]{1,0:T(1,128)}', space=vmem, size = 0x12000, scoped, tag = 'internal scratch']
  #allocation2 [shape = 'bf16[10,25,128]{2,1,0:T(8,128)(2,1)}', space=vmem, size = 0x14000, scoped, tag = 'scratch operand']
  %s0 = inlined_call_operand.vmem [shape: bf16[2,2,12,18,4], index: 0, kind: input, shape index: {}]
  %s1 = inlined_call_operand.vmem [shape: bf16[36,128], index: 1, kind: input, shape index: {}]
  %s2 = inlined_call_operand.vmem [shape: f32[1,128], index: 2, kind: input, shape index: {}]
  %s3 = inlined_call_operand.vmem [shape: bf16[1152,128], index: 3, kind: input, shape index: {}]
  %s4 = inlined_call_operand.vmem [shape: f32[1,128], index: 4, kind: input, shape index: {}]
  %s5 = inlined_call_operand.hbm [shape: f32[2,2,8,16,128], index: 5, kind: output, shape index: {}]
  %s6 = sld [smem:[#allocation0]]
  $region53: #{tpu_custom_call.1} parent=0
    _
  %s8 = ssub.s32 1, %s6
  %s9 = scalar_select 0, %s8, %s6
  $region1: #{tpu_custom_call.1} parent=0
    #allocation3 [shape = 'u8[131072]{0}', space=vmem, size = 0x20000, scoped, tag = 'output window, operand 0']
    #allocation4 [shape = 's32[2]{0}', space=sflag, size = 0x8, scoped, tag = 'scoped memory for tpu_custom_call.1']
    %10 = vsyncpa [#allocation4], 0
    %s11 = scalar_lea.sflag [#allocation4], 1
    %12 = vsyncpa %s11, 0
    loop: start=0, step=1, limit=6
    $region2: #{tpu_custom_call.1} parent=1 // loop_pre_header
      _
    $region3: #{tpu_custom_call.1} parent=1 // loop_header
      %s14 = sphi 0, %s18
      %p15 = scmp.ge.s32.totalorder %s14, 6
      %s21 = sphi 0, %s33
      %s22 = sphi 0, %s29
      %s23 = sphi 0, %s21
      %s24 = sphi 0, %s22
      %s25 = sphi 0, %s23
      %s26 = sphi 0, %s24
      %s38 = sphi 0, %s40
      %s41 = sphi 0, %s38
      %s42 = sphi 0, %s41
      %s58 = sphi 0, %s42
      %s62 = sphi 0, %s62
      %s64 = sphi 0, %s62
      %s65 = sphi 0, %s64
      %s79 = sphi 0, %s65
      %s83 = sphi 0, %s83
      %s85 = sphi 0, %s83
      %s86 = sphi 0, %s85
      %s100 = sphi 0, %s86
      %s104 = sphi 0, %s104
      %s106 = sphi 0, %s104
      %s107 = sphi 0, %s106
      %s121 = sphi 0, %s107
      %s125 = sphi 0, %s125
      %s127 = sphi 0, %s125
      %s128 = sphi 0, %s127
      %s142 = sphi 0, %s128
      %s150 = sphi 0, %s152
      %s153 = sphi 0, %s150
      %s154 = sphi 0, %s153
      %s170 = sphi 0, %s154
    $region4: #{tpu_custom_call.1} parent=1 // loop_header_branch
      %17 = sbr.rel (%p15) target = $region8
    $region5: #{tpu_custom_call.1} parent=1 // loop_body
      %s19 = ssub.s32 %s14, 1
      %s20 = ssub.s32 %s14, 2
      %s27 = sadd.s32 1, %s22
      %p28 = scmp.ge.s32.totalorder %s27, 2
      %s29 = scalar_select %p28, 0, %s27
      %s30 = sadd.s32 1, %s21
      %s31 = scalar_select %p28, %s30, %s21
      %p32 = scmp.ge.s32.totalorder %s31, 2
      %s33 = scalar_select %p32, 0, %s31
      %s34 = ssub.s32 %s21, %s33
      %s35 = ssub.s32 %s22, %s29
      %s36 = sor.u32 %s34, %s35
      %p37 = scmp.eq.s32.totalorder %s36, 0
      %s39 = sadd.s32 %s38, 1
      %s40 = scalar_select %p37, %s38, %s39
      %p43 = pneg %p37
      %p44 = scmp.eq.s32.totalorder %s14, 3
      %p45 = por %p43, %p44
      %p46 = scmp.ne.s32.totalorder %s38, %s41
      %p47 = scmp.eq.s32.totalorder %s14, 0
      %p48 = por %p46, %p47
      %p49 = scmp.ne.s32.totalorder %s38, %s41
      %p50 = scmp.eq.s32.totalorder %s19, 3
      %p51 = por %p49, %p50
      %p52 = scmp.ne.s32.totalorder %s41, %s42
      %p53 = scmp.eq.s32.totalorder %s19, 0
      %p54 = por %p52, %p53
      %p55 = scmp.ne.s32.totalorder %s41, %s42
      %p56 = scmp.eq.s32.totalorder %s20, 3
      %p57 = por %p55, %p56
      %p59 = scmp.ne.s32.totalorder %s42, %s58
      %p60 = scmp.eq.s32.totalorder %s20, 0
      %p61 = por %p59, %p60
      %s63 = sadd.s32 %s62, 1
      %p66 = scmp.eq.s32.totalorder %s14, 3
      %p67 = scmp.ne.s32.totalorder %s62, %s64
      %p68 = scmp.eq.s32.totalorder %s14, 0
      %p69 = por %p67, %p68
      %p70 = scmp.ne.s32.totalorder %s62, %s64
      %p71 = scmp.eq.s32.totalorder %s19, 3
      %p72 = por %p70, %p71
      %p73 = scmp.ne.s32.totalorder %s64, %s65
      %p74 = scmp.eq.s32.totalorder %s19, 0
      %p75 = por %p73, %p74
      %p76 = scmp.ne.s32.totalorder %s64, %s65
      %p77 = scmp.eq.s32.totalorder %s20, 3
      %p78 = por %p76, %p77
      %p80 = scmp.ne.s32.totalorder %s65, %s79
      %p81 = scmp.eq.s32.totalorder %s20, 0
      %p82 = por %p80, %p81
      %s84 = sadd.s32 %s83, 1
      %p87 = scmp.eq.s32.totalorder %s14, 3
      %p88 = scmp.ne.s32.totalorder %s83, %s85
      %p89 = scmp.eq.s32.totalorder %s14, 0
      %p90 = por %p88, %p89
      %p91 = scmp.ne.s32.totalorder %s83, %s85
      %p92 = scmp.eq.s32.totalorder %s19, 3
      %p93 = por %p91, %p92
      %p94 = scmp.ne.s32.totalorder %s85, %s86
      %p95 = scmp.eq.s32.totalorder %s19, 0
      %p96 = por %p94, %p95
      %p97 = scmp.ne.s32.totalorder %s85, %s86
      %p98 = scmp.eq.s32.totalorder %s20, 3
      %p99 = por %p97, %p98
      %p101 = scmp.ne.s32.totalorder %s86, %s100
      %p102 = scmp.eq.s32.totalorder %s20, 0
      %p103 = por %p101, %p102
      %s105 = sadd.s32 %s104, 1
      %p108 = scmp.eq.s32.totalorder %s14, 3
      %p109 = scmp.ne.s32.totalorder %s104, %s106
      %p110 = scmp.eq.s32.totalorder %s14, 0
      %p111 = por %p109, %p110
      %p112 = scmp.ne.s32.totalorder %s104, %s106
      %p113 = scmp.eq.s32.totalorder %s19, 3
      %p114 = por %p112, %p113
      %p115 = scmp.ne.s32.totalorder %s106, %s107
      %p116 = scmp.eq.s32.totalorder %s19, 0
      %p117 = por %p115, %p116
      %p118 = scmp.ne.s32.totalorder %s106, %s107
      %p119 = scmp.eq.s32.totalorder %s20, 3
      %p120 = por %p118, %p119
      %p122 = scmp.ne.s32.totalorder %s107, %s121
      %p123 = scmp.eq.s32.totalorder %s20, 0
      %p124 = por %p122, %p123
      %s126 = sadd.s32 %s125, 1
      %p129 = scmp.eq.s32.totalorder %s14, 3
      %p130 = scmp.ne.s32.totalorder %s125, %s127
      %p131 = scmp.eq.s32.totalorder %s14, 0
      %p132 = por %p130, %p131
      %p133 = scmp.ne.s32.totalorder %s125, %s127
      %p134 = scmp.eq.s32.totalorder %s19, 3
      %p135 = por %p133, %p134
      %p136 = scmp.ne.s32.totalorder %s127, %s128
      %p137 = scmp.eq.s32.totalorder %s19, 0
      %p138 = por %p136, %p137
      %p139 = scmp.ne.s32.totalorder %s127, %s128
      %p140 = scmp.eq.s32.totalorder %s20, 3
      %p141 = por %p139, %p140
      %p143 = scmp.ne.s32.totalorder %s128, %s142
      %p144 = scmp.eq.s32.totalorder %s20, 0
      %p145 = por %p143, %p144
      %s146 = ssub.s32 %s21, %s33
      %s147 = ssub.s32 %s22, %s29
      %s148 = sor.u32 %s146, %s147
      %p149 = scmp.eq.s32.totalorder %s148, 0
      %s151 = sadd.s32 %s150, 1
      %s152 = scalar_select %p149, %s150, %s151
      %p155 = pneg %p149
      %p156 = scmp.eq.s32.totalorder %s14, 3
      %p157 = por %p155, %p156
      %p158 = scmp.ne.s32.totalorder %s150, %s153
      %p159 = scmp.eq.s32.totalorder %s14, 0
      %p160 = por %p158, %p159
      %p161 = scmp.ne.s32.totalorder %s150, %s153
      %p162 = scmp.eq.s32.totalorder %s19, 3
      %p163 = por %p161, %p162
      %p164 = scmp.ne.s32.totalorder %s153, %s154
      %p165 = scmp.eq.s32.totalorder %s19, 0
      %p166 = por %p164, %p165
      %p167 = scmp.ne.s32.totalorder %s153, %s154
      %p168 = scmp.eq.s32.totalorder %s20, 3
      %p169 = por %p167, %p168
      %p171 = scmp.ne.s32.totalorder %s154, %s170
      %p172 = scmp.eq.s32.totalorder %s20, 0
      %p173 = por %p171, %p172
      %p174 = scmp.le.s32.totalorder 1, %s14
      %p175 = scmp.lt.s32.totalorder %s14, 5
      %p176 = pnand %p174, %p175
      %p177 = pneg %p176
      // Predicated region
      $region9: #{tpu_custom_call.1} parent=5 // pred_check
        _
      $region10: #{tpu_custom_call.1} parent=5 // pred_check_branch
        %179 = sbr.rel (%p176) target = $region12
      $region11: #{tpu_custom_call.1} parent=5 // pred_region
        %s180 = ssub.s32 %s14, 1
        // Predicated region
        $region13: #{tpu_custom_call.1} parent=11 // pred_check
          %p181 = pneg %p75
        $region14: #{tpu_custom_call.1} parent=11 // pred_check_branch
          %183 = sbr.rel (%p181) target = $region16
        $region15: #{tpu_custom_call.1} parent=11 // pred_region
          _
        $region16: #{tpu_custom_call.1} parent=11 // pred_fallthru
          _
        // Predicated region
        $region17: #{tpu_custom_call.1} parent=11 // pred_check
          %p184 = pneg %p96
        $region18: #{tpu_custom_call.1} parent=11 // pred_check_branch
          %186 = sbr.rel (%p184) target = $region20
        $region19: #{tpu_custom_call.1} parent=11 // pred_region
          _
        $region20: #{tpu_custom_call.1} parent=11 // pred_fallthru
          _
        // Predicated region
        $region21: #{tpu_custom_call.1} parent=11 // pred_check
          %p187 = pneg %p117
        $region22: #{tpu_custom_call.1} parent=11 // pred_check_branch
          %189 = sbr.rel (%p187) target = $region24
        $region23: #{tpu_custom_call.1} parent=11 // pred_region
          _
        $region24: #{tpu_custom_call.1} parent=11 // pred_fallthru
          _
        // Predicated region
        $region25: #{tpu_custom_call.1} parent=11 // pred_check
          %p190 = pneg %p138
        $region26: #{tpu_custom_call.1} parent=11 // pred_check_branch
          %192 = sbr.rel (%p190) target = $region28
        $region27: #{tpu_custom_call.1} parent=11 // pred_region
          _
        $region28: #{tpu_custom_call.1} parent=11 // pred_fallthru
          _
      $region12: #{tpu_custom_call.1} parent=5 // pred_fallthru
        _
      %p193 = scmp.lt.s32.totalorder %s14, 4
      // Predicated region
      $region29: #{tpu_custom_call.1} parent=5 // pred_check
        %p194 = pneg %p193
      $region30: #{tpu_custom_call.1} parent=5 // pred_check_branch
        %196 = sbr.rel (%p194) target = $region32
      $region31: #{tpu_custom_call.1} parent=5 // pred_region
        // Predicated region
        $region33: #{tpu_custom_call.1} parent=31 // pred_check
          %p197 = pneg %p48
        $region34: #{tpu_custom_call.1} parent=31 // pred_check_branch
          %199 = sbr.rel (%p197) target = $region36
        $region35: #{tpu_custom_call.1} parent=31 // pred_region
          %p200 = scmp.lt.s32.totalorder %s21, 1
          %s201 = scalar_select %p200, %s21, 1
          %p202 = scmp.lt.s32.totalorder %s22, 1
          %s203 = scalar_select %p202, %s22, 1
          %s204 = smul.addr %s203, 36
          %s205 = smul.addr %s201, 72
          %s206 = sadd.s32 %s204, %s205
          %s207 = smul.addr %s206, 4
          %s208 = scalar_lea.vmem %s0, %s207
        $region36: #{tpu_custom_call.1} parent=31 // pred_fallthru
          _
      $region32: #{tpu_custom_call.1} parent=5 // pred_fallthru
        _
      %p209 = scmp.le.s32.totalorder 1, %s14
      %p210 = scmp.lt.s32.totalorder %s14, 5
      %p211 = pnand %p209, %p210
      %p212 = pneg %p211
      // Predicated region
      $region37: #{tpu_custom_call.1} parent=5 // pred_check
        _
      $region38: #{tpu_custom_call.1} parent=5 // pred_check_branch
        %214 = sbr.rel (%p211) target = $region40
      $region39: #{tpu_custom_call.1} parent=5 // pred_region
        %s215 = ssub.s32 %s14, 1
        %p216 = scmp.lt.s32.totalorder %s23, 1
        %s217 = scalar_select %p216, %s23, 1
        %p218 = scmp.lt.s32.totalorder %s24, 1
        %s219 = scalar_select %p218, %s24, 1
        %s220 = smul.addr %s219, 36
        %s221 = smul.addr %s217, 72
        %s222 = sadd.s32 %s220, %s221
        %s223 = smul.addr %s222, 4
        %s224 = scalar_lea.vmem %s0, %s223
        %p225 = pneg %p54
        %p226 = pneg %p51
        %p227 = pneg %p75
        %p228 = pneg %p72
        %p229 = pneg %p96
        %p230 = pneg %p93
        %p231 = pneg %p117
        %p232 = pneg %p114
        %p233 = pneg %p138
        %p234 = pneg %p135
        %p235 = pneg %p166
        %p236 = pneg %p163
        %s237 = sand.u32 %s153, 1
        %s238 = scalar_lea.sflag [#allocation4], %s237
        %s239 = sand.u32 %s153, 1
        %s240 = smul.addr %s239, 128
        %s241 = scalar_lea.vmem [#allocation3], %s240
        %p242 = scmp.lt.s32.totalorder %s23, 1
        %s243 = scalar_select %p242, %s23, 1
        %p244 = scmp.lt.s32.totalorder %s24, 1
        %s245 = scalar_select %p244, %s24, 1
        %s246 = smul.addr %s245, 36
        %s247 = smul.addr %s243, 72
        %s248 = sadd.s32 %s246, %s247
        %s249 = smul.addr %s248, 4
        %s250 = scalar_lea.vmem %s0, %s249
        %v252 = vld [vmem:[%s250] sm:$0xf]
        %v253 = vld [vmem:[%s250 + $0x4] sm:$0xf]
        %v254 = vld [vmem:[%s250 + $0xc] sm:$0xf]
        %v255 = vld [vmem:[%s250 + $0x10] sm:$0xf]
        %v256 = vld [vmem:[%s250 + $0x18] sm:$0xf]
        %v257 = vld [vmem:[%s250 + $0x1c] sm:$0xf]
        %v258 = vld [vmem:[%s250 + $0x24] sm:$0xf]
        %v259 = vld [vmem:[%s250 + $0x28] sm:$0xf]
        %v260 = vld [vmem:[%s250 + $0x30] sm:$0xf]
        %v261 = vld [vmem:[%s250 + $0x34] sm:$0xf]
        %v262 = vld [vmem:[%s250 + $0x3c] sm:$0xf]
        %v263 = vld [vmem:[%s250 + $0x40] sm:$0xf]
        %v264 = vld [vmem:[%s250 + $0x48] sm:$0xf]
        %v265 = vld [vmem:[%s250 + $0x4c] sm:$0xf]
        %v266 = vld [vmem:[%s250 + $0x54] sm:$0xf]
        %v267 = vld [vmem:[%s250 + $0x58] sm:$0xf]
        %v268 = vld [vmem:[%s250 + $0x60] sm:$0xf]
        %v269 = vld [vmem:[%s250 + $0x64] sm:$0xf]
        %v270 = vld [vmem:[%s250 + $0x6c] sm:$0xf]
        %v271 = vld [vmem:[%s250 + $0x70] sm:$0xf]
        %v272 = vld [vmem:[%s250 + $0x8] sm:$0x1]
        %v273 = vld [vmem:[%s250 + $0x14] sm:$0x1]
        %v274 = vld [vmem:[%s250 + $0x20] sm:$0x1]
        %v275 = vld [vmem:[%s250 + $0x2c] sm:$0x1]
        %v276 = vld [vmem:[%s250 + $0x38] sm:$0x1]
        %v277 = vld [vmem:[%s250 + $0x44] sm:$0x1]
        %v278 = vld [vmem:[%s250 + $0x50] sm:$0x1]
        %v279 = vld [vmem:[%s250 + $0x5c] sm:$0x1]
        %v280 = vld [vmem:[%s250 + $0x68] sm:$0x1]
        %v281 = vld [vmem:[%s250 + $0x74] sm:$0x1]
        %v282 = vld [vmem:[%s250] sm:$0xe]
        %v283 = vld [vmem:[%s250 + $0xc] sm:$0xe]
        %v284 = vld [vmem:[%s250 + $0x18] sm:$0xe]
        %v285 = vld [vmem:[%s250 + $0x24] sm:$0xe]
        %v286 = vld [vmem:[%s250 + $0x30] sm:$0xe]
        %v287 = vld [vmem:[%s250 + $0x3c] sm:$0xe]
        %v288 = vld [vmem:[%s250 + $0x48] sm:$0xe]
        %v289 = vld [vmem:[%s250 + $0x54] sm:$0xe]
        %v290 = vld [vmem:[%s250 + $0x60] sm:$0xe]
        %v291 = vld [vmem:[%s250 + $0x6c] sm:$0xe]
        %s292 = scalar_lea.vmem %s250, 12
        %v293 = vld [vmem:[%s292] sm:$0xf]
        %v294 = vld [vmem:[%s292 + $0x4] sm:$0xf]
        %v295 = vld [vmem:[%s292 + $0xc] sm:$0xf]
        %v296 = vld [vmem:[%s292 + $0x10] sm:$0xf]
        %v297 = vld [vmem:[%s292 + $0x18] sm:$0xf]
        %v298 = vld [vmem:[%s292 + $0x1c] sm:$0xf]
        %v299 = vld [vmem:[%s292 + $0x24] sm:$0xf]
        %v300 = vld [vmem:[%s292 + $0x28] sm:$0xf]
        %v301 = vld [vmem:[%s292 + $0x30] sm:$0xf]
        %v302 = vld [vmem:[%s292 + $0x34] sm:$0xf]
        %v303 = vld [vmem:[%s292 + $0x3c] sm:$0xf]
        %v304 = vld [vmem:[%s292 + $0x40] sm:$0xf]
        %v305 = vld [vmem:[%s292 + $0x48] sm:$0xf]
        %v306 = vld [vmem:[%s292 + $0x4c] sm:$0xf]
        %v307 = vld [vmem:[%s292 + $0x54] sm:$0xf]
        %v308 = vld [vmem:[%s292 + $0x58] sm:$0xf]
        %v309 = vld [vmem:[%s292 + $0x60] sm:$0xf]
        %v310 = vld [vmem:[%s292 + $0x64] sm:$0xf]
        %v311 = vld [vmem:[%s292 + $0x6c] sm:$0xf]
        %v312 = vld [vmem:[%s292 + $0x70] sm:$0xf]
        %v313 = vld [vmem:[%s292 + $0x8] sm:$0x1]
        %v314 = vld [vmem:[%s292 + $0x14] sm:$0x1]
        %v315 = vld [vmem:[%s292 + $0x20] sm:$0x1]
        %v316 = vld [vmem:[%s292 + $0x2c] sm:$0x1]
        %v317 = vld [vmem:[%s292 + $0x38] sm:$0x1]
        %v318 = vld [vmem:[%s292 + $0x44] sm:$0x1]
        %v319 = vld [vmem:[%s292 + $0x50] sm:$0x1]
        %v320 = vld [vmem:[%s292 + $0x5c] sm:$0x1]
        %v321 = vld [vmem:[%s292 + $0x68] sm:$0x1]
        %v322 = vld [vmem:[%s292 + $0x74] sm:$0x1]
        %v323 = vld [vmem:[%s292] sm:$0xe]
        %v324 = vld [vmem:[%s292 + $0xc] sm:$0xe]
        %v325 = vld [vmem:[%s292 + $0x18] sm:$0xe]
        %v326 = vld [vmem:[%s292 + $0x24] sm:$0xe]
        %v327 = vld [vmem:[%s292 + $0x30] sm:$0xe]
        %v328 = vld [vmem:[%s292 + $0x3c] sm:$0xe]
        %v329 = vld [vmem:[%s292 + $0x48] sm:$0xe]
        %v330 = vld [vmem:[%s292 + $0x54] sm:$0xe]
        %v331 = vld [vmem:[%s292 + $0x60] sm:$0xe]
        %v332 = vld [vmem:[%s292 + $0x6c] sm:$0xe]
        %s333 = scalar_lea.vmem %s250, 24
        %v334 = vld [vmem:[%s333] sm:$0xf]
        %v335 = vld [vmem:[%s333 + $0x4] sm:$0xf]
        %v336 = vld [vmem:[%s333 + $0xc] sm:$0xf]
        %v337 = vld [vmem:[%s333 + $0x10] sm:$0xf]
        %v338 = vld [vmem:[%s333 + $0x18] sm:$0xf]
        %v339 = vld [vmem:[%s333 + $0x1c] sm:$0xf]
        %v340 = vld [vmem:[%s333 + $0x24] sm:$0xf]
        %v341 = vld [vmem:[%s333 + $0x28] sm:$0xf]
        %v342 = vld [vmem:[%s333 + $0x30] sm:$0xf]
        %v343 = vld [vmem:[%s333 + $0x34] sm:$0xf]
        %v344 = vld [vmem:[%s333 + $0x3c] sm:$0xf]
        %v345 = vld [vmem:[%s333 + $0x40] sm:$0xf]
        %v346 = vld [vmem:[%s333 + $0x48] sm:$0xf]
        %v347 = vld [vmem:[%s333 + $0x4c] sm:$0xf]
        %v348 = vld [vmem:[%s333 + $0x54] sm:$0xf]
        %v349 = vld [vmem:[%s333 + $0x58] sm:$0xf]
        %v350 = vld [vmem:[%s333 + $0x60] sm:$0xf]
        %v351 = vld [vmem:[%s333 + $0x64] sm:$0xf]
        %v352 = vld [vmem:[%s333 + $0x6c] sm:$0xf]
        %v353 = vld [vmem:[%s333 + $0x70] sm:$0xf]
        %v354 = vld [vmem:[%s333 + $0x8] sm:$0x1]
        %v355 = vld [vmem:[%s333 + $0x14] sm:$0x1]
        %v356 = vld [vmem:[%s333 + $0x20] sm:$0x1]
        %v357 = vld [vmem:[%s333 + $0x2c] sm:$0x1]
        %v358 = vld [vmem:[%s333 + $0x38] sm:$0x1]
        %v359 = vld [vmem:[%s333 + $0x44] sm:$0x1]
        %v360 = vld [vmem:[%s333 + $0x50] sm:$0x1]
        %v361 = vld [vmem:[%s333 + $0x5c] sm:$0x1]
        %v362 = vld [vmem:[%s333 + $0x68] sm:$0x1]
        %v363 = vld [vmem:[%s333 + $0x74] sm:$0x1]
        %v364 = vld [vmem:[%s333] sm:$0xe]
        %v365 = vld [vmem:[%s333 + $0xc] sm:$0xe]
        %v366 = vld [vmem:[%s333 + $0x18] sm:$0xe]
        %v367 = vld [vmem:[%s333 + $0x24] sm:$0xe]
        %v368 = vld [vmem:[%s333 + $0x30] sm:$0xe]
        %v369 = vld [vmem:[%s333 + $0x3c] sm:$0xe]
        %v370 = vld [vmem:[%s333 + $0x48] sm:$0xe]
        %v371 = vld [vmem:[%s333 + $0x54] sm:$0xe]
        %v372 = vld [vmem:[%s333 + $0x60] sm:$0xe]
        %v373 = vld [vmem:[%s333 + $0x6c] sm:$0xe]
        %v394 = vunpack.c.l.b16 %v252
        %v395 = vunpack.c.l.b16 %v253
        %v396 = vunpack.c.l.b16 %v254
        %v397 = vunpack.c.l.b16 %v255
        %v398 = vunpack.c.l.b16 %v256
        %v399 = vunpack.c.l.b16 %v257
        %v400 = vunpack.c.l.b16 %v258
        %v401 = vunpack.c.l.b16 %v259
        %v402 = vunpack.c.l.b16 %v260
        %v403 = vunpack.c.l.b16 %v261
        %v404 = vunpack.c.l.b16 %v262
        %v405 = vunpack.c.l.b16 %v263
        %v406 = vunpack.c.l.b16 %v264
        %v407 = vunpack.c.l.b16 %v265
        %v408 = vunpack.c.l.b16 %v266
        %v409 = vunpack.c.l.b16 %v267
        %v410 = vunpack.c.l.b16 %v268
        %v411 = vunpack.c.l.b16 %v269
        %v412 = vunpack.c.l.b16 %v270
        %v413 = vunpack.c.l.b16 %v271
        %v414 = vpack.c.b16 %v395, %v394
        %v415 = vpack.c.b16 %v397, %v396
        %v416 = vpack.c.b16 %v399, %v398
        %v417 = vpack.c.b16 %v401, %v400
        %v418 = vpack.c.b16 %v403, %v402
        %v419 = vpack.c.b16 %v405, %v404
        %v420 = vpack.c.b16 %v407, %v406
        %v421 = vpack.c.b16 %v409, %v408
        %v422 = vpack.c.b16 %v411, %v410
        %v423 = vpack.c.b16 %v413, %v412
        %v434 = vunpack.c.l.b16 %v272
        %v435 = vunpack.c.l.b16 %v273
        %v436 = vunpack.c.l.b16 %v274
        %v437 = vunpack.c.l.b16 %v275
        %v438 = vunpack.c.l.b16 %v276
        %v439 = vunpack.c.l.b16 %v277
        %v440 = vunpack.c.l.b16 %v278
        %v441 = vunpack.c.l.b16 %v279
        %v442 = vunpack.c.l.b16 %v280
        %v443 = vunpack.c.l.b16 %v281
        %v444 = vpack.c.b16 %v434, %v434
        %v445 = vpack.c.b16 %v435, %v435
        %v446 = vpack.c.b16 %v436, %v436
        %v447 = vpack.c.b16 %v437, %v437
        %v448 = vpack.c.b16 %v438, %v438
        %v449 = vpack.c.b16 %v439, %v439
        %v450 = vpack.c.b16 %v440, %v440
        %v451 = vpack.c.b16 %v441, %v441
        %v452 = vpack.c.b16 %v442, %v442
        %v453 = vpack.c.b16 %v443, %v443
        %vm454 = vsmask.f32 7424
        %v456 = vshrl.u32 %v414, 16
        %v458 = vshll.u32 %v414, 16
        %v460 = vrot.slane %v458, 1
        %v461 = vor.u32 %v456, %v460
        %v463 = vshll.u32 %v444, 16
        %v465 = vrot.slane %v463, 1
        %v466 = vsel %vm454, %v461, %v465
        %v468 = vshrl.u32 %v415, 16
        %v470 = vshll.u32 %v415, 16
        %v472 = vrot.slane %v470, 1
        %v473 = vor.u32 %v468, %v472
        %v475 = vshll.u32 %v445, 16
        %v477 = vrot.slane %v475, 1
        %v478 = vsel %vm454, %v473, %v477
        %v480 = vshrl.u32 %v416, 16
        %v482 = vshll.u32 %v416, 16
        %v484 = vrot.slane %v482, 1
        %v485 = vor.u32 %v480, %v484
        %v487 = vshll.u32 %v446, 16
        %v489 = vrot.slane %v487, 1
        %v490 = vsel %vm454, %v485, %v489
        %v492 = vshrl.u32 %v417, 16
        %v494 = vshll.u32 %v417, 16
        %v496 = vrot.slane %v494, 1
        %v497 = vor.u32 %v492, %v496
        %v499 = vshll.u32 %v447, 16
        %v501 = vrot.slane %v499, 1
        %v502 = vsel %vm454, %v497, %v501
        %v504 = vshrl.u32 %v418, 16
        %v506 = vshll.u32 %v418, 16
        %v508 = vrot.slane %v506, 1
        %v509 = vor.u32 %v504, %v508
        %v511 = vshll.u32 %v448, 16
        %v513 = vrot.slane %v511, 1
        %v514 = vsel %vm454, %v509, %v513
        %v516 = vshrl.u32 %v419, 16
        %v518 = vshll.u32 %v419, 16
        %v520 = vrot.slane %v518, 1
        %v521 = vor.u32 %v516, %v520
        %v523 = vshll.u32 %v449, 16
        %v525 = vrot.slane %v523, 1
        %v526 = vsel %vm454, %v521, %v525
        %v528 = vshrl.u32 %v420, 16
        %v530 = vshll.u32 %v420, 16
        %v532 = vrot.slane %v530, 1
        %v533 = vor.u32 %v528, %v532
        %v535 = vshll.u32 %v450, 16
        %v537 = vrot.slane %v535, 1
        %v538 = vsel %vm454, %v533, %v537
        %v540 = vshrl.u32 %v421, 16
        %v542 = vshll.u32 %v421, 16
        %v544 = vrot.slane %v542, 1
        %v545 = vor.u32 %v540, %v544
        %v547 = vshll.u32 %v451, 16
        %v549 = vrot.slane %v547, 1
        %v550 = vsel %vm454, %v545, %v549
        %v552 = vshrl.u32 %v422, 16
        %v554 = vshll.u32 %v422, 16
        %v556 = vrot.slane %v554, 1
        %v557 = vor.u32 %v552, %v556
        %v559 = vshll.u32 %v452, 16
        %v561 = vrot.slane %v559, 1
        %v562 = vsel %vm454, %v557, %v561
        %v564 = vshrl.u32 %v423, 16
        %v566 = vshll.u32 %v423, 16
        %v568 = vrot.slane %v566, 1
        %v569 = vor.u32 %v564, %v568
        %v571 = vshll.u32 %v453, 16
        %v573 = vrot.slane %v571, 1
        %v574 = vsel %vm454, %v569, %v573
        %575 = vrot.lane.b32.xlu0 %v466, 4
        %v576 = vpop.permute.xlu0 %575
        %577 = vrot.lane.b32.xlu0 %v478, 4
        %v578 = vpop.permute.xlu0 %577
        %579 = vrot.lane.b32.xlu0 %v490, 4
        %v580 = vpop.permute.xlu0 %579
        %581 = vrot.lane.b32.xlu0 %v502, 4
        %v582 = vpop.permute.xlu0 %581
        %583 = vrot.lane.b32.xlu0 %v514, 4
        %v584 = vpop.permute.xlu0 %583
        %585 = vrot.lane.b32.xlu0 %v526, 4
        %v586 = vpop.permute.xlu0 %585
        %587 = vrot.lane.b32.xlu0 %v538, 4
        %v588 = vpop.permute.xlu0 %587
        %589 = vrot.lane.b32.xlu0 %v550, 4
        %v590 = vpop.permute.xlu0 %589
        %591 = vrot.lane.b32.xlu0 %v562, 4
        %v592 = vpop.permute.xlu0 %591
        %593 = vrot.lane.b32.xlu0 %v574, 4
        %v594 = vpop.permute.xlu0 %593
        %v605 = vunpack.c.l.b16 %v282
        %v606 = vunpack.c.l.b16 %v283
        %v607 = vunpack.c.l.b16 %v284
        %v608 = vunpack.c.l.b16 %v285
        %v609 = vunpack.c.l.b16 %v286
        %v610 = vunpack.c.l.b16 %v287
        %v611 = vunpack.c.l.b16 %v288
        %v612 = vunpack.c.l.b16 %v289
        %v613 = vunpack.c.l.b16 %v290
        %v614 = vunpack.c.l.b16 %v291
        %v615 = vpack.c.b16 %v395, %v605
        %v616 = vpack.c.b16 %v397, %v606
        %v617 = vpack.c.b16 %v399, %v607
        %v618 = vpack.c.b16 %v401, %v608
        %v619 = vpack.c.b16 %v403, %v609
        %v620 = vpack.c.b16 %v405, %v610
        %v621 = vpack.c.b16 %v407, %v611
        %v622 = vpack.c.b16 %v409, %v612
        %v623 = vpack.c.b16 %v411, %v613
        %v624 = vpack.c.b16 %v413, %v614
        %vm625 = vcmask 1046528
        %v626 = vrot.slane %v615, 1
        %v627 = vrot.slane %v444, 1
        %v628 = vsel %vm625, %v626, %v627
        %v629 = vrot.slane %v616, 1
        %v630 = vrot.slane %v445, 1
        %v631 = vsel %vm625, %v629, %v630
        %v632 = vrot.slane %v617, 1
        %v633 = vrot.slane %v446, 1
        %v634 = vsel %vm625, %v632, %v633
        %v635 = vrot.slane %v618, 1
        %v636 = vrot.slane %v447, 1
        %v637 = vsel %vm625, %v635, %v636
        %v638 = vrot.slane %v619, 1
        %v639 = vrot.slane %v448, 1
        %v640 = vsel %vm625, %v638, %v639
        %v641 = vrot.slane %v620, 1
        %v642 = vrot.slane %v449, 1
        %v643 = vsel %vm625, %v641, %v642
        %v644 = vrot.slane %v621, 1
        %v645 = vrot.slane %v450, 1
        %v646 = vsel %vm625, %v644, %v645
        %v647 = vrot.slane %v622, 1
        %v648 = vrot.slane %v451, 1
        %v649 = vsel %vm625, %v647, %v648
        %v650 = vrot.slane %v623, 1
        %v651 = vrot.slane %v452, 1
        %v652 = vsel %vm625, %v650, %v651
        %v653 = vrot.slane %v624, 1
        %v654 = vrot.slane %v453, 1
        %v655 = vsel %vm625, %v653, %v654
        %656 = vrot.lane.b32.xlu0 %v628, 8
        %v657 = vpop.permute.xlu0 %656
        %658 = vrot.lane.b32.xlu0 %v631, 8
        %v659 = vpop.permute.xlu0 %658
        %660 = vrot.lane.b32.xlu0 %v634, 8
        %v661 = vpop.permute.xlu0 %660
        %662 = vrot.lane.b32.xlu0 %v637, 8
        %v663 = vpop.permute.xlu0 %662
        %664 = vrot.lane.b32.xlu0 %v640, 8
        %v665 = vpop.permute.xlu0 %664
        %666 = vrot.lane.b32.xlu0 %v643, 8
        %v667 = vpop.permute.xlu0 %666
        %668 = vrot.lane.b32.xlu0 %v646, 8
        %v669 = vpop.permute.xlu0 %668
        %670 = vrot.lane.b32.xlu0 %v649, 8
        %v671 = vpop.permute.xlu0 %670
        %672 = vrot.lane.b32.xlu0 %v652, 8
        %v673 = vpop.permute.xlu0 %672
        %674 = vrot.lane.b32.xlu0 %v655, 8
        %v675 = vpop.permute.xlu0 %674
        %v696 = vunpack.c.l.b16 %v293
        %v697 = vunpack.c.l.b16 %v294
        %v698 = vunpack.c.l.b16 %v295
        %v699 = vunpack.c.l.b16 %v296
        %v700 = vunpack.c.l.b16 %v297
        %v701 = vunpack.c.l.b16 %v298
        %v702 = vunpack.c.l.b16 %v299
        %v703 = vunpack.c.l.b16 %v300
        %v704 = vunpack.c.l.b16 %v301
        %v705 = vunpack.c.l.b16 %v302
        %v706 = vunpack.c.l.b16 %v303
        %v707 = vunpack.c.l.b16 %v304
        %v708 = vunpack.c.l.b16 %v305
        %v709 = vunpack.c.l.b16 %v306
        %v710 = vunpack.c.l.b16 %v307
        %v711 = vunpack.c.l.b16 %v308
        %v712 = vunpack.c.l.b16 %v309
        %v713 = vunpack.c.l.b16 %v310
        %v714 = vunpack.c.l.b16 %v311
        %v715 = vunpack.c.l.b16 %v312
        %v716 = vpack.c.b16 %v697, %v696
        %v717 = vpack.c.b16 %v699, %v698
        %v718 = vpack.c.b16 %v701, %v700
        %v719 = vpack.c.b16 %v703, %v702
        %v720 = vpack.c.b16 %v705, %v704
        %v721 = vpack.c.b16 %v707, %v706
        %v722 = vpack.c.b16 %v709, %v708
        %v723 = vpack.c.b16 %v711, %v710
        %v724 = vpack.c.b16 %v713, %v712
        %v725 = vpack.c.b16 %v715, %v714
        %726 = vrot.lane.b32.xlu0 %v716, 12
        %v727 = vpop.permute.xlu0 %726
        %728 = vrot.lane.b32.xlu0 %v717, 12
        %v729 = vpop.permute.xlu0 %728
        %730 = vrot.lane.b32.xlu0 %v718, 12
        %v731 = vpop.permute.xlu0 %730
        %732 = vrot.lane.b32.xlu0 %v719, 12
        %v733 = vpop.permute.xlu0 %732
        %734 = vrot.lane.b32.xlu0 %v720, 12
        %v735 = vpop.permute.xlu0 %734
        %736 = vrot.lane.b32.xlu0 %v721, 12
        %v737 = vpop.permute.xlu0 %736
        %738 = vrot.lane.b32.xlu0 %v722, 12
        %v739 = vpop.permute.xlu0 %738
        %740 = vrot.lane.b32.xlu0 %v723, 12
        %v741 = vpop.permute.xlu0 %740
        %742 = vrot.lane.b32.xlu0 %v724, 12
        %v743 = vpop.permute.xlu0 %742
        %744 = vrot.lane.b32.xlu0 %v725, 12
        %v745 = vpop.permute.xlu0 %744
        %v756 = vunpack.c.l.b16 %v313
        %v757 = vunpack.c.l.b16 %v314
        %v758 = vunpack.c.l.b16 %v315
        %v759 = vunpack.c.l.b16 %v316
        %v760 = vunpack.c.l.b16 %v317
        %v761 = vunpack.c.l.b16 %v318
        %v762 = vunpack.c.l.b16 %v319
        %v763 = vunpack.c.l.b16 %v320
        %v764 = vunpack.c.l.b16 %v321
        %v765 = vunpack.c.l.b16 %v322
        %v766 = vpack.c.b16 %v756, %v756
        %v767 = vpack.c.b16 %v757, %v757
        %v768 = vpack.c.b16 %v758, %v758
        %v769 = vpack.c.b16 %v759, %v759
        %v770 = vpack.c.b16 %v760, %v760
        %v771 = vpack.c.b16 %v761, %v761
        %v772 = vpack.c.b16 %v762, %v762
        %v773 = vpack.c.b16 %v763, %v763
        %v774 = vpack.c.b16 %v764, %v764
        %v775 = vpack.c.b16 %v765, %v765
        %v777 = vshrl.u32 %v716, 16
        %v779 = vshll.u32 %v716, 16
        %v781 = vrot.slane %v779, 1
        %v782 = vor.u32 %v777, %v781
        %v784 = vshll.u32 %v766, 16
        %v786 = vrot.slane %v784, 1
        %v787 = vsel %vm454, %v782, %v786
        %v789 = vshrl.u32 %v717, 16
        %v791 = vshll.u32 %v717, 16
        %v793 = vrot.slane %v791, 1
        %v794 = vor.u32 %v789, %v793
        %v796 = vshll.u32 %v767, 16
        %v798 = vrot.slane %v796, 1
        %v799 = vsel %vm454, %v794, %v798
        %v801 = vshrl.u32 %v718, 16
        %v803 = vshll.u32 %v718, 16
        %v805 = vrot.slane %v803, 1
        %v806 = vor.u32 %v801, %v805
        %v808 = vshll.u32 %v768, 16
        %v810 = vrot.slane %v808, 1
        %v811 = vsel %vm454, %v806, %v810
        %v813 = vshrl.u32 %v719, 16
        %v815 = vshll.u32 %v719, 16
        %v817 = vrot.slane %v815, 1
        %v818 = vor.u32 %v813, %v817
        %v820 = vshll.u32 %v769, 16
        %v822 = vrot.slane %v820, 1
        %v823 = vsel %vm454, %v818, %v822
        %v825 = vshrl.u32 %v720, 16
        %v827 = vshll.u32 %v720, 16
        %v829 = vrot.slane %v827, 1
        %v830 = vor.u32 %v825, %v829
        %v832 = vshll.u32 %v770, 16
        %v834 = vrot.slane %v832, 1
        %v835 = vsel %vm454, %v830, %v834
        %v837 = vshrl.u32 %v721, 16
        %v839 = vshll.u32 %v721, 16
        %v841 = vrot.slane %v839, 1
        %v842 = vor.u32 %v837, %v841
        %v844 = vshll.u32 %v771, 16
        %v846 = vrot.slane %v844, 1
        %v847 = vsel %vm454, %v842, %v846
        %v849 = vshrl.u32 %v722, 16
        %v851 = vshll.u32 %v722, 16
        %v853 = vrot.slane %v851, 1
        %v854 = vor.u32 %v849, %v853
        %v856 = vshll.u32 %v772, 16
        %v858 = vrot.slane %v856, 1
        %v859 = vsel %vm454, %v854, %v858
        %v861 = vshrl.u32 %v723, 16
        %v863 = vshll.u32 %v723, 16
        %v865 = vrot.slane %v863, 1
        %v866 = vor.u32 %v861, %v865
        %v868 = vshll.u32 %v773, 16
        %v870 = vrot.slane %v868, 1
        %v871 = vsel %vm454, %v866, %v870
        %v873 = vshrl.u32 %v724, 16
        %v875 = vshll.u32 %v724, 16
        %v877 = vrot.slane %v875, 1
        %v878 = vor.u32 %v873, %v877
        %v880 = vshll.u32 %v774, 16
        %v882 = vrot.slane %v880, 1
        %v883 = vsel %vm454, %v878, %v882
        %v885 = vshrl.u32 %v725, 16
        %v887 = vshll.u32 %v725, 16
        %v889 = vrot.slane %v887, 1
        %v890 = vor.u32 %v885, %v889
        %v892 = vshll.u32 %v775, 16
        %v894 = vrot.slane %v892, 1
        %v895 = vsel %vm454, %v890, %v894
        %896 = vrot.lane.b32.xlu0 %v787, 16
        %v897 = vpop.permute.xlu0 %896
        %898 = vrot.lane.b32.xlu0 %v799, 16
        %v899 = vpop.permute.xlu0 %898
        %900 = vrot.lane.b32.xlu0 %v811, 16
        %v901 = vpop.permute.xlu0 %900
        %902 = vrot.lane.b32.xlu0 %v823, 16
        %v903 = vpop.permute.xlu0 %902
        %904 = vrot.lane.b32.xlu0 %v835, 16
        %v905 = vpop.permute.xlu0 %904
        %906 = vrot.lane.b32.xlu0 %v847, 16
        %v907 = vpop.permute.xlu0 %906
        %908 = vrot.lane.b32.xlu0 %v859, 16
        %v909 = vpop.permute.xlu0 %908
        %910 = vrot.lane.b32.xlu0 %v871, 16
        %v911 = vpop.permute.xlu0 %910
        %912 = vrot.lane.b32.xlu0 %v883, 16
        %v913 = vpop.permute.xlu0 %912
        %914 = vrot.lane.b32.xlu0 %v895, 16
        %v915 = vpop.permute.xlu0 %914
        %v926 = vunpack.c.l.b16 %v323
        %v927 = vunpack.c.l.b16 %v324
        %v928 = vunpack.c.l.b16 %v325
        %v929 = vunpack.c.l.b16 %v326
        %v930 = vunpack.c.l.b16 %v327
        %v931 = vunpack.c.l.b16 %v328
        %v932 = vunpack.c.l.b16 %v329
        %v933 = vunpack.c.l.b16 %v330
        %v934 = vunpack.c.l.b16 %v331
        %v935 = vunpack.c.l.b16 %v332
        %v936 = vpack.c.b16 %v697, %v926
        %v937 = vpack.c.b16 %v699, %v927
        %v938 = vpack.c.b16 %v701, %v928
        %v939 = vpack.c.b16 %v703, %v929
        %v940 = vpack.c.b16 %v705, %v930
        %v941 = vpack.c.b16 %v707, %v931
        %v942 = vpack.c.b16 %v709, %v932
        %v943 = vpack.c.b16 %v711, %v933
        %v944 = vpack.c.b16 %v713, %v934
        %v945 = vpack.c.b16 %v715, %v935
        %v946 = vrot.slane %v936, 1
        %v947 = vrot.slane %v766, 1
        %v948 = vsel %vm625, %v946, %v947
        %v949 = vrot.slane %v937, 1
        %v950 = vrot.slane %v767, 1
        %v951 = vsel %vm625, %v949, %v950
        %v952 = vrot.slane %v938, 1
        %v953 = vrot.slane %v768, 1
        %v954 = vsel %vm625, %v952, %v953
        %v955 = vrot.slane %v939, 1
        %v956 = vrot.slane %v769, 1
        %v957 = vsel %vm625, %v955, %v956
        %v958 = vrot.slane %v940, 1
        %v959 = vrot.slane %v770, 1
        %v960 = vsel %vm625, %v958, %v959
        %v961 = vrot.slane %v941, 1
        %v962 = vrot.slane %v771, 1
        %v963 = vsel %vm625, %v961, %v962
        %v964 = vrot.slane %v942, 1
        %v965 = vrot.slane %v772, 1
        %v966 = vsel %vm625, %v964, %v965
        %v967 = vrot.slane %v943, 1
        %v968 = vrot.slane %v773, 1
        %v969 = vsel %vm625, %v967, %v968
        %v970 = vrot.slane %v944, 1
        %v971 = vrot.slane %v774, 1
        %v972 = vsel %vm625, %v970, %v971
        %v973 = vrot.slane %v945, 1
        %v974 = vrot.slane %v775, 1
        %v975 = vsel %vm625, %v973, %v974
        %976 = vrot.lane.b32.xlu0 %v948, 20
        %v977 = vpop.permute.xlu0 %976
        %978 = vrot.lane.b32.xlu0 %v951, 20
        %v979 = vpop.permute.xlu0 %978
        %980 = vrot.lane.b32.xlu0 %v954, 20
        %v981 = vpop.permute.xlu0 %980
        %982 = vrot.lane.b32.xlu0 %v957, 20
        %v983 = vpop.permute.xlu0 %982
        %984 = vrot.lane.b32.xlu0 %v960, 20
        %v985 = vpop.permute.xlu0 %984
        %986 = vrot.lane.b32.xlu0 %v963, 20
        %v987 = vpop.permute.xlu0 %986
        %988 = vrot.lane.b32.xlu0 %v966, 20
        %v989 = vpop.permute.xlu0 %988
        %990 = vrot.lane.b32.xlu0 %v969, 20
        %v991 = vpop.permute.xlu0 %990
        %992 = vrot.lane.b32.xlu0 %v972, 20
        %v993 = vpop.permute.xlu0 %992
        %994 = vrot.lane.b32.xlu0 %v975, 20
        %v995 = vpop.permute.xlu0 %994
        %v1016 = vunpack.c.l.b16 %v334
        %v1017 = vunpack.c.l.b16 %v335
        %v1018 = vunpack.c.l.b16 %v336
        %v1019 = vunpack.c.l.b16 %v337
        %v1020 = vunpack.c.l.b16 %v338
        %v1021 = vunpack.c.l.b16 %v339
        %v1022 = vunpack.c.l.b16 %v340
        %v1023 = vunpack.c.l.b16 %v341
        %v1024 = vunpack.c.l.b16 %v342
        %v1025 = vunpack.c.l.b16 %v343
        %v1026 = vunpack.c.l.b16 %v344
        %v1027 = vunpack.c.l.b16 %v345
        %v1028 = vunpack.c.l.b16 %v346
        %v1029 = vunpack.c.l.b16 %v347
        %v1030 = vunpack.c.l.b16 %v348
        %v1031 = vunpack.c.l.b16 %v349
        %v1032 = vunpack.c.l.b16 %v350
        %v1033 = vunpack.c.l.b16 %v351
        %v1034 = vunpack.c.l.b16 %v352
        %v1035 = vunpack.c.l.b16 %v353
        %v1036 = vpack.c.b16 %v1017, %v1016
        %v1037 = vpack.c.b16 %v1019, %v1018
        %v1038 = vpack.c.b16 %v1021, %v1020
        %v1039 = vpack.c.b16 %v1023, %v1022
        %v1040 = vpack.c.b16 %v1025, %v1024
        %v1041 = vpack.c.b16 %v1027, %v1026
        %v1042 = vpack.c.b16 %v1029, %v1028
        %v1043 = vpack.c.b16 %v1031, %v1030
        %v1044 = vpack.c.b16 %v1033, %v1032
        %v1045 = vpack.c.b16 %v1035, %v1034
        %1046 = vrot.lane.b32.xlu0 %v1036, 24
        %v1047 = vpop.permute.xlu0 %1046
        %1048 = vrot.lane.b32.xlu0 %v1037, 24
        %v1049 = vpop.permute.xlu0 %1048
        %1050 = vrot.lane.b32.xlu0 %v1038, 24
        %v1051 = vpop.permute.xlu0 %1050
        %1052 = vrot.lane.b32.xlu0 %v1039, 24
        %v1053 = vpop.permute.xlu0 %1052
        %1054 = vrot.lane.b32.xlu0 %v1040, 24
        %v1055 = vpop.permute.xlu0 %1054
        %1056 = vrot.lane.b32.xlu0 %v1041, 24
        %v1057 = vpop.permute.xlu0 %1056
        %1058 = vrot.lane.b32.xlu0 %v1042, 24
        %v1059 = vpop.permute.xlu0 %1058
        %1060 = vrot.lane.b32.xlu0 %v1043, 24
        %v1061 = vpop.permute.xlu0 %1060
        %1062 = vrot.lane.b32.xlu0 %v1044, 24
        %v1063 = vpop.permute.xlu0 %1062
        %1064 = vrot.lane.b32.xlu0 %v1045, 24
        %v1065 = vpop.permute.xlu0 %1064
        %v1076 = vunpack.c.l.b16 %v354
        %v1077 = vunpack.c.l.b16 %v355
        %v1078 = vunpack.c.l.b16 %v356
        %v1079 = vunpack.c.l.b16 %v357
        %v1080 = vunpack.c.l.b16 %v358
        %v1081 = vunpack.c.l.b16 %v359
        %v1082 = vunpack.c.l.b16 %v360
        %v1083 = vunpack.c.l.b16 %v361
        %v1084 = vunpack.c.l.b16 %v362
        %v1085 = vunpack.c.l.b16 %v363
        %v1086 = vpack.c.b16 %v1076, %v1076
        %v1087 = vpack.c.b16 %v1077, %v1077
        %v1088 = vpack.c.b16 %v1078, %v1078
        %v1089 = vpack.c.b16 %v1079, %v1079
        %v1090 = vpack.c.b16 %v1080, %v1080
        %v1091 = vpack.c.b16 %v1081, %v1081
        %v1092 = vpack.c.b16 %v1082, %v1082
        %v1093 = vpack.c.b16 %v1083, %v1083
        %v1094 = vpack.c.b16 %v1084, %v1084
        %v1095 = vpack.c.b16 %v1085, %v1085
        %v1097 = vshrl.u32 %v1036, 16
        %v1099 = vshll.u32 %v1036, 16
        %v1101 = vrot.slane %v1099, 1
        %v1102 = vor.u32 %v1097, %v1101
        %v1104 = vshll.u32 %v1086, 16
        %v1106 = vrot.slane %v1104, 1
        %v1107 = vsel %vm454, %v1102, %v1106
        %v1109 = vshrl.u32 %v1037, 16
        %v1111 = vshll.u32 %v1037, 16
        %v1113 = vrot.slane %v1111, 1
        %v1114 = vor.u32 %v1109, %v1113
        %v1116 = vshll.u32 %v1087, 16
        %v1118 = vrot.slane %v1116, 1
        %v1119 = vsel %vm454, %v1114, %v1118
        %v1121 = vshrl.u32 %v1038, 16
        %v1123 = vshll.u32 %v1038, 16
        %v1125 = vrot.slane %v1123, 1
        %v1126 = vor.u32 %v1121, %v1125
        %v1128 = vshll.u32 %v1088, 16
        %v1130 = vrot.slane %v1128, 1
        %v1131 = vsel %vm454, %v1126, %v1130
        %v1133 = vshrl.u32 %v1039, 16
        %v1135 = vshll.u32 %v1039, 16
        %v1137 = vrot.slane %v1135, 1
        %v1138 = vor.u32 %v1133, %v1137
        %v1140 = vshll.u32 %v1089, 16
        %v1142 = vrot.slane %v1140, 1
        %v1143 = vsel %vm454, %v1138, %v1142
        %v1145 = vshrl.u32 %v1040, 16
        %v1147 = vshll.u32 %v1040, 16
        %v1149 = vrot.slane %v1147, 1
        %v1150 = vor.u32 %v1145, %v1149
        %v1152 = vshll.u32 %v1090, 16
        %v1154 = vrot.slane %v1152, 1
        %v1155 = vsel %vm454, %v1150, %v1154
        %v1157 = vshrl.u32 %v1041, 16
        %v1159 = vshll.u32 %v1041, 16
        %v1161 = vrot.slane %v1159, 1
        %v1162 = vor.u32 %v1157, %v1161
        %v1164 = vshll.u32 %v1091, 16
        %v1166 = vrot.slane %v1164, 1
        %v1167 = vsel %vm454, %v1162, %v1166
        %v1169 = vshrl.u32 %v1042, 16
        %v1171 = vshll.u32 %v1042, 16
        %v1173 = vrot.slane %v1171, 1
        %v1174 = vor.u32 %v1169, %v1173
        %v1176 = vshll.u32 %v1092, 16
        %v1178 = vrot.slane %v1176, 1
        %v1179 = vsel %vm454, %v1174, %v1178
        %v1181 = vshrl.u32 %v1043, 16
        %v1183 = vshll.u32 %v1043, 16
        %v1185 = vrot.slane %v1183, 1
        %v1186 = vor.u32 %v1181, %v1185
        %v1188 = vshll.u32 %v1093, 16
        %v1190 = vrot.slane %v1188, 1
        %v1191 = vsel %vm454, %v1186, %v1190
        %v1193 = vshrl.u32 %v1044, 16
        %v1195 = vshll.u32 %v1044, 16
        %v1197 = vrot.slane %v1195, 1
        %v1198 = vor.u32 %v1193, %v1197
        %v1200 = vshll.u32 %v1094, 16
        %v1202 = vrot.slane %v1200, 1
        %v1203 = vsel %vm454, %v1198, %v1202
        %v1205 = vshrl.u32 %v1045, 16
        %v1207 = vshll.u32 %v1045, 16
        %v1209 = vrot.slane %v1207, 1
        %v1210 = vor.u32 %v1205, %v1209
        %v1212 = vshll.u32 %v1095, 16
        %v1214 = vrot.slane %v1212, 1
        %v1215 = vsel %vm454, %v1210, %v1214
        %1216 = vrot.lane.b32.xlu0 %v1107, 28
        %v1217 = vpop.permute.xlu0 %1216
        %1218 = vrot.lane.b32.xlu0 %v1119, 28
        %v1219 = vpop.permute.xlu0 %1218
        %1220 = vrot.lane.b32.xlu0 %v1131, 28
        %v1221 = vpop.permute.xlu0 %1220
        %1222 = vrot.lane.b32.xlu0 %v1143, 28
        %v1223 = vpop.permute.xlu0 %1222
        %1224 = vrot.lane.b32.xlu0 %v1155, 28
        %v1225 = vpop.permute.xlu0 %1224
        %1226 = vrot.lane.b32.xlu0 %v1167, 28
        %v1227 = vpop.permute.xlu0 %1226
        %1228 = vrot.lane.b32.xlu0 %v1179, 28
        %v1229 = vpop.permute.xlu0 %1228
        %1230 = vrot.lane.b32.xlu0 %v1191, 28
        %v1231 = vpop.permute.xlu0 %1230
        %1232 = vrot.lane.b32.xlu0 %v1203, 28
        %v1233 = vpop.permute.xlu0 %1232
        %1234 = vrot.lane.b32.xlu0 %v1215, 28
        %v1235 = vpop.permute.xlu0 %1234
        %v1246 = vunpack.c.l.b16 %v364
        %v1247 = vunpack.c.l.b16 %v365
        %v1248 = vunpack.c.l.b16 %v366
        %v1249 = vunpack.c.l.b16 %v367
        %v1250 = vunpack.c.l.b16 %v368
        %v1251 = vunpack.c.l.b16 %v369
        %v1252 = vunpack.c.l.b16 %v370
        %v1253 = vunpack.c.l.b16 %v371
        %v1254 = vunpack.c.l.b16 %v372
        %v1255 = vunpack.c.l.b16 %v373
        %v1256 = vpack.c.b16 %v1017, %v1246
        %v1257 = vpack.c.b16 %v1019, %v1247
        %v1258 = vpack.c.b16 %v1021, %v1248
        %v1259 = vpack.c.b16 %v1023, %v1249
        %v1260 = vpack.c.b16 %v1025, %v1250
        %v1261 = vpack.c.b16 %v1027, %v1251
        %v1262 = vpack.c.b16 %v1029, %v1252
        %v1263 = vpack.c.b16 %v1031, %v1253
        %v1264 = vpack.c.b16 %v1033, %v1254
        %v1265 = vpack.c.b16 %v1035, %v1255
        %v1266 = vrot.slane %v1256, 1
        %v1267 = vrot.slane %v1086, 1
        %v1268 = vsel %vm625, %v1266, %v1267
        %v1269 = vrot.slane %v1257, 1
        %v1270 = vrot.slane %v1087, 1
        %v1271 = vsel %vm625, %v1269, %v1270
        %v1272 = vrot.slane %v1258, 1
        %v1273 = vrot.slane %v1088, 1
        %v1274 = vsel %vm625, %v1272, %v1273
        %v1275 = vrot.slane %v1259, 1
        %v1276 = vrot.slane %v1089, 1
        %v1277 = vsel %vm625, %v1275, %v1276
        %v1278 = vrot.slane %v1260, 1
        %v1279 = vrot.slane %v1090, 1
        %v1280 = vsel %vm625, %v1278, %v1279
        %v1281 = vrot.slane %v1261, 1
        %v1282 = vrot.slane %v1091, 1
        %v1283 = vsel %vm625, %v1281, %v1282
        %v1284 = vrot.slane %v1262, 1
        %v1285 = vrot.slane %v1092, 1
        %v1286 = vsel %vm625, %v1284, %v1285
        %v1287 = vrot.slane %v1263, 1
        %v1288 = vrot.slane %v1093, 1
        %v1289 = vsel %vm625, %v1287, %v1288
        %v1290 = vrot.slane %v1264, 1
        %v1291 = vrot.slane %v1094, 1
        %v1292 = vsel %vm625, %v1290, %v1291
        %v1293 = vrot.slane %v1265, 1
        %v1294 = vrot.slane %v1095, 1
        %v1295 = vsel %vm625, %v1293, %v1294
        %1296 = vrot.lane.b32.xlu0 %v1268, 32
        %v1297 = vpop.permute.xlu0 %1296
        %1298 = vrot.lane.b32.xlu0 %v1271, 32
        %v1299 = vpop.permute.xlu0 %1298
        %1300 = vrot.lane.b32.xlu0 %v1274, 32
        %v1301 = vpop.permute.xlu0 %1300
        %1302 = vrot.lane.b32.xlu0 %v1277, 32
        %v1303 = vpop.permute.xlu0 %1302
        %1304 = vrot.lane.b32.xlu0 %v1280, 32
        %v1305 = vpop.permute.xlu0 %1304
        %1306 = vrot.lane.b32.xlu0 %v1283, 32
        %v1307 = vpop.permute.xlu0 %1306
        %1308 = vrot.lane.b32.xlu0 %v1286, 32
        %v1309 = vpop.permute.xlu0 %1308
        %1310 = vrot.lane.b32.xlu0 %v1289, 32
        %v1311 = vpop.permute.xlu0 %1310
        %1312 = vrot.lane.b32.xlu0 %v1292, 32
        %v1313 = vpop.permute.xlu0 %1312
        %1314 = vrot.lane.b32.xlu0 %v1295, 32
        %v1315 = vpop.permute.xlu0 %1314
        %vm1316 = vcmask 31744
        %v1318 = vsel %vm1316, %v414, %v576
        %v1320 = vsel %vm1316, %v415, %v578
        %v1322 = vsel %vm1316, %v416, %v580
        %v1324 = vsel %vm1316, %v417, %v582
        %v1326 = vsel %vm1316, %v418, %v584
        %v1328 = vsel %vm1316, %v419, %v586
        %v1330 = vsel %vm1316, %v420, %v588
        %v1332 = vsel %vm1316, %v421, %v590
        %v1334 = vsel %vm1316, %v422, %v592
        %v1336 = vsel %vm1316, %v423, %v594
        %vm1337 = vcmask 64512
        %v1339 = vsel %vm1337, %v1318, %v657
        %v1341 = vsel %vm1337, %v1320, %v659
        %v1343 = vsel %vm1337, %v1322, %v661
        %v1345 = vsel %vm1337, %v1324, %v663
        %v1347 = vsel %vm1337, %v1326, %v665
        %v1349 = vsel %vm1337, %v1328, %v667
        %v1351 = vsel %vm1337, %v1330, %v669
        %v1353 = vsel %vm1337, %v1332, %v671
        %v1355 = vsel %vm1337, %v1334, %v673
        %v1357 = vsel %vm1337, %v1336, %v675
        %vm1358 = vcmask 97280
        %v1360 = vsel %vm1358, %v1339, %v727
        %v1362 = vsel %vm1358, %v1341, %v729
        %v1364 = vsel %vm1358, %v1343, %v731
        %v1366 = vsel %vm1358, %v1345, %v733
        %v1368 = vsel %vm1358, %v1347, %v735
        %v1370 = vsel %vm1358, %v1349, %v737
        %v1372 = vsel %vm1358, %v1351, %v739
        %v1374 = vsel %vm1358, %v1353, %v741
        %v1376 = vsel %vm1358, %v1355, %v743
        %v1378 = vsel %vm1358, %v1357, %v745
        %vm1379 = vcmask 130048
        %v1381 = vsel %vm1379, %v1360, %v897
        %v1383 = vsel %vm1379, %v1362, %v899
        %v1385 = vsel %vm1379, %v1364, %v901
        %v1387 = vsel %vm1379, %v1366, %v903
        %v1389 = vsel %vm1379, %v1368, %v905
        %v1391 = vsel %vm1379, %v1370, %v907
        %v1393 = vsel %vm1379, %v1372, %v909
        %v1395 = vsel %vm1379, %v1374, %v911
        %v1397 = vsel %vm1379, %v1376, %v913
        %v1399 = vsel %vm1379, %v1378, %v915
        %vm1400 = vcmask 162816
        %v1402 = vsel %vm1400, %v1381, %v977
        %v1404 = vsel %vm1400, %v1383, %v979
        %v1406 = vsel %vm1400, %v1385, %v981
        %v1408 = vsel %vm1400, %v1387, %v983
        %v1410 = vsel %vm1400, %v1389, %v985
        %v1412 = vsel %vm1400, %v1391, %v987
        %v1414 = vsel %vm1400, %v1393, %v989
        %v1416 = vsel %vm1400, %v1395, %v991
        %v1418 = vsel %vm1400, %v1397, %v993
        %v1420 = vsel %vm1400, %v1399, %v995
        %vm1421 = vcmask 195584
        %v1423 = vsel %vm1421, %v1402, %v1047
        %v1425 = vsel %vm1421, %v1404, %v1049
        %v1427 = vsel %vm1421, %v1406, %v1051
        %v1429 = vsel %vm1421, %v1408, %v1053
        %v1431 = vsel %vm1421, %v1410, %v1055
        %v1433 = vsel %vm1421, %v1412, %v1057
        %v1435 = vsel %vm1421, %v1414, %v1059
        %v1437 = vsel %vm1421, %v1416, %v1061
        %v1439 = vsel %vm1421, %v1418, %v1063
        %v1441 = vsel %vm1421, %v1420, %v1065
        %vm1442 = vcmask 228352
        %v1444 = vsel %vm1442, %v1423, %v1217
        %v1446 = vsel %vm1442, %v1425, %v1219
        %v1448 = vsel %vm1442, %v1427, %v1221
        %v1450 = vsel %vm1442, %v1429, %v1223
        %v1452 = vsel %vm1442, %v1431, %v1225
        %v1454 = vsel %vm1442, %v1433, %v1227
        %v1456 = vsel %vm1442, %v1435, %v1229
        %v1458 = vsel %vm1442, %v1437, %v1231
        %v1460 = vsel %vm1442, %v1439, %v1233
        %v1462 = vsel %vm1442, %v1441, %v1235
        %vm1463 = vcmask 261120
        %v1465 = vsel %vm1463, %v1444, %v1297
        %v1467 = vsel %vm1463, %v1446, %v1299
        %v1469 = vsel %vm1463, %v1448, %v1301
        %v1471 = vsel %vm1463, %v1450, %v1303
        %v1473 = vsel %vm1463, %v1452, %v1305
        %v1475 = vsel %vm1463, %v1454, %v1307
        %v1477 = vsel %vm1463, %v1456, %v1309
        %v1479 = vsel %vm1463, %v1458, %v1311
        %v1481 = vsel %vm1463, %v1460, %v1313
        %v1483 = vsel %vm1463, %v1462, %v1315
        %v1484 = vld [vmem:[%s1] sm:$0xf]
        %v1485 = vld [vmem:[%s1 + $0x4] sm:$0xf]
        %v1486 = vld [vmem:[%s1 + $0x8] sm:$0xf]
        %v1487 = vld [vmem:[%s1 + $0xc] sm:$0xf]
        %v1488 = vld [vmem:[%s1 + $0x10] sm:$0x3]
        %v1489 = vld [vmem:[%s2] sm:$0x1]
        %v1491 = vlaneseq
        %v1492 = vshrl.u32 %v1491, 7
        %v1493 = vsub.s32 0, %v1492
        %v1494 = vrot.slane %v1489, %v1493
        %v1501 = vunpack.c.l.b16 %v1484
        %v1502 = vunpack.c.l.b16 %v1485
        %v1503 = vunpack.c.l.b16 %v1486
        %v1504 = vunpack.c.l.b16 %v1487
        %v1505 = vunpack.c.l.b16 %v1488
        %v1506 = vpack.c.b16 %v1502, %v1501
        %v1507 = vpack.c.b16 %v1504, %v1503
        %v1508 = vpack.c.b16 %v1505, %v1505
        %vm1511 = vcmask 293888
        %v1512 = vsel %vm1511, %v1465, 0
        %v1514 = vsel %vm1511, %v1467, 0
        %v1516 = vsel %vm1511, %v1469, 0
        %v1518 = vsel %vm1511, %v1471, 0
        %v1520 = vsel %vm1511, %v1473, 0
        %v1522 = vsel %vm1511, %v1475, 0
        %v1524 = vsel %vm1511, %v1477, 0
        %v1526 = vsel %vm1511, %v1479, 0
        %v1528 = vsel %vm1511, %v1481, 0
        %v1530 = vsel %vm1511, %v1483, 0
        %vm1532 = vcmask 1041408
        %v1534 = vsel %vm1532, %v1508, 0
        %1536 = vmatprep.subr.bf16.mxu0 0
        %1537 = vmatpush1.bf16.msra.mxu0 %v1506
        %1538 = vmatprep.subr.bf16.mxu0 0
        %1539 = vmatpush1.bf16.msra.mxu0 %v1507
        %1540 = vmatprep.subr.bf16.mxu0 0
        %1541 = vmatpush1.bf16.msra.mxu0 %v1534
        %1542 = vmatprep.subr.bf16.mxu0 0
        %1543 = vmatpush1.bf16.msra.mxu0 0
        %1544 = vmatprep.subr.bf16.mxu0 0
        %1545 = vmatpush1.bf16.msra.mxu0 0
        %1546 = vmatprep.subr.bf16.mxu0 0
        %1547 = vmatpush1.bf16.msra.mxu0 0
        %1548 = vmatprep.subr.bf16.mxu0 0
        %1549 = vmatpush1.bf16.msra.mxu0 0
        %1550 = vmatprep.subr.bf16.mxu0 0
        %1551 = vmatpush1.bf16.msra.mxu0 0
        %1552 = vmatprep.subr.bf16.mxu0 0
        %1553 = vmatpush1.bf16.msra.mxu0 0
        %1554 = vmatprep.subr.bf16.mxu0 0
        %1555 = vmatpush1.bf16.msra.mxu0 0
        %1556 = vmatprep.subr.bf16.mxu0 0
        %1557 = vmatpush1.bf16.msra.mxu0 0
        %1558 = vmatprep.subr.bf16.mxu0 0
        %1559 = vmatpush1.bf16.msra.mxu0 0
        %1560 = vmatprep.subr.bf16.mxu0 0
        %1561 = vmatpush1.bf16.msra.mxu0 0
        %1562 = vmatprep.subr.bf16.mxu0 0
        %1563 = vmatpush1.bf16.msra.mxu0 0
        %1564 = vmatprep.subr.bf16.mxu0 0
        %1565 = vmatpush1.bf16.msra.mxu0 0
        %1566 = vmatprep.subr.bf16.mxu0 0
        %1567 = vmatpush1.bf16.msra.mxu0 0
        %1568 = vmatprep.mubr.bf16.mxu0 0
        %1569 = vmatmul.mubr.bf16.gmra.mrb[0].mxu0 %v1512
        %v1570 = vpop.f32.mrb[0].mxu0
        %v1571 = vadd.f32 %v1494, %v1570
        %v1572 = vpop.f32.mrb[0].mxu0
        %v1573 = vpop.f32.mrb[0].mxu0
        %v1574 = vadd.f32 %v1494, %v1573
        %v1575 = vpop.f32.mrb[0].mxu0
        %1576 = vmatprep.mubr.bf16.mxu0 0
        %1577 = vmatmul.mubr.bf16.gmra.mrb[0].mxu0 %v1514
        %v1578 = vpop.f32.mrb[0].mxu0
        %v1579 = vadd.f32 %v1494, %v1578
        %v1580 = vpop.f32.mrb[0].mxu0
        %v1581 = vpop.f32.mrb[0].mxu0
        %v1582 = vadd.f32 %v1494, %v1581
        %v1583 = vpop.f32.mrb[0].mxu0
        %1584 = vmatprep.mubr.bf16.mxu0 0
        %1585 = vmatmul.mubr.bf16.gmra.mrb[0].mxu0 %v1516
        %v1586 = vpop.f32.mrb[0].mxu0
        %v1587 = vadd.f32 %v1494, %v1586
        %v1588 = vpop.f32.mrb[0].mxu0
        %v1589 = vpop.f32.mrb[0].mxu0
        %v1590 = vadd.f32 %v1494, %v1589
        %v1591 = vpop.f32.mrb[0].mxu0
        %1592 = vmatprep.mubr.bf16.mxu0 0
        %1593 = vmatmul.mubr.bf16.gmra.mrb[0].mxu0 %v1518
        %v1594 = vpop.f32.mrb[0].mxu0
        %v1595 = vadd.f32 %v1494, %v1594
        %v1596 = vpop.f32.mrb[0].mxu0
        %v1597 = vpop.f32.mrb[0].mxu0
        %v1598 = vadd.f32 %v1494, %v1597
        %v1599 = vpop.f32.mrb[0].mxu0
        %1600 = vmatprep.mubr.bf16.mxu0 0
        %1601 = vmatmul.mubr.bf16.gmra.mrb[0].mxu0 %v1520
        %v1602 = vpop.f32.mrb[0].mxu0
        %v1603 = vadd.f32 %v1494, %v1602
        %v1604 = vpop.f32.mrb[0].mxu0
        %v1605 = vpop.f32.mrb[0].mxu0
        %v1606 = vadd.f32 %v1494, %v1605
        %v1607 = vpop.f32.mrb[0].mxu0
        %1608 = vmatprep.mubr.bf16.mxu0 0
        %1609 = vmatmul.mubr.bf16.gmra.mrb[0].mxu0 %v1522
        %v1610 = vpop.f32.mrb[0].mxu0
        %v1611 = vadd.f32 %v1494, %v1610
        %v1612 = vpop.f32.mrb[0].mxu0
        %v1613 = vpop.f32.mrb[0].mxu0
        %v1614 = vadd.f32 %v1494, %v1613
        %v1615 = vpop.f32.mrb[0].mxu0
        %1616 = vmatprep.mubr.bf16.mxu0 0
        %1617 = vmatmul.mubr.bf16.gmra.mrb[0].mxu0 %v1524
        %v1618 = vpop.f32.mrb[0].mxu0
        %v1619 = vadd.f32 %v1494, %v1618
        %v1620 = vpop.f32.mrb[0].mxu0
        %v1621 = vpop.f32.mrb[0].mxu0
        %v1622 = vadd.f32 %v1494, %v1621
        %v1623 = vpop.f32.mrb[0].mxu0
        %1624 = vmatprep.mubr.bf16.mxu0 0
        %1625 = vmatmul.mubr.bf16.gmra.mrb[0].mxu0 %v1526
        %v1626 = vpop.f32.mrb[0].mxu0
        %v1627 = vadd.f32 %v1494, %v1626
        %v1628 = vpop.f32.mrb[0].mxu0
        %v1629 = vpop.f32.mrb[0].mxu0
        %v1630 = vadd.f32 %v1494, %v1629
        %v1631 = vpop.f32.mrb[0].mxu0
        %1632 = vmatprep.mubr.bf16.mxu0 0
        %1633 = vmatmul.mubr.bf16.gmra.mrb[0].mxu0 %v1528
        %v1634 = vpop.f32.mrb[0].mxu0
        %v1635 = vadd.f32 %v1494, %v1634
        %v1636 = vpop.f32.mrb[0].mxu0
        %v1637 = vpop.f32.mrb[0].mxu0
        %v1638 = vadd.f32 %v1494, %v1637
        %v1639 = vpop.f32.mrb[0].mxu0
        %1640 = vmatprep.mubr.bf16.mxu0 0
        %1641 = vmatmul.mubr.bf16.gmra.mrb[0].mxu0 %v1530
        %v1642 = vpop.f32.mrb[0].mxu0
        %v1643 = vadd.f32 %v1494, %v1642
        %v1644 = vpop.f32.mrb[0].mxu0
        %v1645 = vpop.f32.mrb[0].mxu0
        %v1646 = vadd.f32 %v1494, %v1645
        %v1647 = vpop.f32.mrb[0].mxu0
        %1648 = vdwg.mxu0
        %v1649 = vmax.f32 %v1571, 0.0
        %v1650 = vmax.f32 %v1574, 0.0
        %v1651 = vmax.f32 %v1579, 0.0
        %v1652 = vmax.f32 %v1582, 0.0
        %v1653 = vmax.f32 %v1587, 0.0
        %v1654 = vmax.f32 %v1590, 0.0
        %v1655 = vmax.f32 %v1595, 0.0
        %v1656 = vmax.f32 %v1598, 0.0
        %v1657 = vmax.f32 %v1603, 0.0
        %v1658 = vmax.f32 %v1606, 0.0
        %v1659 = vmax.f32 %v1611, 0.0
        %v1660 = vmax.f32 %v1614, 0.0
        %v1661 = vmax.f32 %v1619, 0.0
        %v1662 = vmax.f32 %v1622, 0.0
        %v1663 = vmax.f32 %v1627, 0.0
        %v1664 = vmax.f32 %v1630, 0.0
        %v1665 = vmax.f32 %v1635, 0.0
        %v1666 = vmax.f32 %v1638, 0.0
        %v1667 = vmax.f32 %v1643, 0.0
        %v1668 = vmax.f32 %v1646, 0.0
        %s1669 = smul.u32 %s24, 8
        %v1670 = vstv %s1669
        %v1671 = vadd.s32 %v1670, 2
        %v1672 = vadd.s32 %v1670, 3
        %v1673 = vadd.s32 %v1670, 4
        %v1674 = vadd.s32 %v1670, 5
        %v1675 = vadd.s32 %v1670, 6
        %v1676 = vadd.s32 %v1670, 7
        %v1677 = vadd.s32 %v1670, 8
        %v1678 = vadd.s32 %v1670, 9
        %v1679 = vsub.s32 %v1670, 1
        %v1680 = vsub.s32 %v1671, 1
        %v1681 = vsub.s32 %v1672, 1
        %v1682 = vsub.s32 %v1673, 1
        %v1683 = vsub.s32 %v1674, 1
        %v1684 = vsub.s32 %v1675, 1
        %v1685 = vsub.s32 %v1676, 1
        %v1686 = vsub.s32 %v1677, 1
        %v1687 = vsub.s32 %v1678, 1
        %vm1688 = vcmp.ge.s32.totalorder %v1679, 0
        %vm1689 = vcmp.ge.s32.totalorder %v1670, 0
        %vm1690 = vcmp.ge.s32.totalorder %v1680, 0
        %vm1691 = vcmp.ge.s32.totalorder %v1681, 0
        %vm1692 = vcmp.ge.s32.totalorder %v1682, 0
        %vm1693 = vcmp.ge.s32.totalorder %v1683, 0
        %vm1694 = vcmp.ge.s32.totalorder %v1684, 0
        %vm1695 = vcmp.ge.s32.totalorder %v1685, 0
        %vm1696 = vcmp.ge.s32.totalorder %v1686, 0
        %vm1697 = vcmp.ge.s32.totalorder %v1687, 0
        %vm1698 = vcmp.lt.s32.totalorder %v1679, 16
        %vm1699 = vcmp.lt.s32.totalorder %v1670, 16
        %vm1700 = vcmp.lt.s32.totalorder %v1680, 16
        %vm1701 = vcmp.lt.s32.totalorder %v1681, 16
        %vm1702 = vcmp.lt.s32.totalorder %v1682, 16
        %vm1703 = vcmp.lt.s32.totalorder %v1683, 16
        %vm1704 = vcmp.lt.s32.totalorder %v1684, 16
        %vm1705 = vcmp.lt.s32.totalorder %v1685, 16
        %vm1706 = vcmp.lt.s32.totalorder %v1686, 16
        %vm1707 = vcmp.lt.s32.totalorder %v1687, 16
        %vm1708 = vmand %vm1688, %vm1698
        %vm1709 = vmand %vm1689, %vm1699
        %vm1710 = vmand %vm1690, %vm1700
        %vm1711 = vmand %vm1691, %vm1701
        %vm1712 = vmand %vm1692, %vm1702
        %vm1713 = vmand %vm1693, %vm1703
        %vm1714 = vmand %vm1694, %vm1704
        %vm1715 = vmand %vm1695, %vm1705
        %vm1716 = vmand %vm1696, %vm1706
        %vm1717 = vmand %vm1697, %vm1707
        %v1718 = vsel %vm1708, %v1649, 0.0
        %v1719 = vsel %vm1708, %v1650, 0.0
        %v1720 = vsel %vm1709, %v1651, 0.0
        %v1721 = vsel %vm1709, %v1652, 0.0
        %v1722 = vsel %vm1710, %v1653, 0.0
        %v1723 = vsel %vm1710, %v1654, 0.0
        %v1724 = vsel %vm1711, %v1655, 0.0
        %v1725 = vsel %vm1711, %v1656, 0.0
        %v1726 = vsel %vm1712, %v1657, 0.0
        %v1727 = vsel %vm1712, %v1658, 0.0
        %v1728 = vsel %vm1713, %v1659, 0.0
        %v1729 = vsel %vm1713, %v1660, 0.0
        %v1730 = vsel %vm1714, %v1661, 0.0
        %v1731 = vsel %vm1714, %v1662, 0.0
        %v1732 = vsel %vm1715, %v1663, 0.0
        %v1733 = vsel %vm1715, %v1664, 0.0
        %v1734 = vsel %vm1716, %v1665, 0.0
        %v1735 = vsel %vm1716, %v1666, 0.0
        %v1736 = vsel %vm1717, %v1667, 0.0
        %v1737 = vsel %vm1717, %v1668, 0.0
        %vm1738 = vcmask 1043459
        %vm1739 = vsmask.f32 7950
        %vm1740 = vmand %vm1738, %vm1739
        %v1741 = vld [vmem:[#allocation2] sm:$0x8]
        %v1742 = vsel %vm1740, 0, %v1741
        %1743 = vst [vmem:[#allocation2] sm:$0x8] %v1742
        %v1744 = vld [vmem:[#allocation2 + $0x10] sm:$0x8]
        %v1745 = vsel %vm1740, 0, %v1744
        %1746 = vst [vmem:[#allocation2 + $0x10] sm:$0x8] %v1745
        %v1747 = vld [vmem:[#allocation2 + $0x20] sm:$0x8]
        %v1748 = vsel %vm1740, 0, %v1747
        %1749 = vst [vmem:[#allocation2 + $0x20] sm:$0x8] %v1748
        %v1750 = vld [vmem:[#allocation2 + $0x30] sm:$0x8]
        %v1751 = vsel %vm1740, 0, %v1750
        %1752 = vst [vmem:[#allocation2 + $0x30] sm:$0x8] %v1751
        %v1753 = vld [vmem:[#allocation2 + $0x40] sm:$0x8]
        %v1754 = vsel %vm1740, 0, %v1753
        %1755 = vst [vmem:[#allocation2 + $0x40] sm:$0x8] %v1754
        %v1756 = vld [vmem:[#allocation2 + $0x50] sm:$0x8]
        %v1757 = vsel %vm1740, 0, %v1756
        %1758 = vst [vmem:[#allocation2 + $0x50] sm:$0x8] %v1757
        %v1759 = vld [vmem:[#allocation2 + $0x60] sm:$0x8]
        %v1760 = vsel %vm1740, 0, %v1759
        %1761 = vst [vmem:[#allocation2 + $0x60] sm:$0x8] %v1760
        %v1762 = vld [vmem:[#allocation2 + $0x70] sm:$0x8]
        %v1763 = vsel %vm1740, 0, %v1762
        %1764 = vst [vmem:[#allocation2 + $0x70] sm:$0x8] %v1763
        %v1765 = vld [vmem:[#allocation2 + $0x80] sm:$0x8]
        %v1766 = vsel %vm1740, 0, %v1765
        %1767 = vst [vmem:[#allocation2 + $0x80] sm:$0x8] %v1766
        %v1768 = vld [vmem:[#allocation2 + $0x90] sm:$0x8]
        %v1769 = vsel %vm1740, 0, %v1768
        %1770 = vst [vmem:[#allocation2 + $0x90] sm:$0x8] %v1769
        %vm1771 = vcmask 1040384
        %vm1772 = vsmask.f32 256
        %vm1773 = vmand %vm1771, %vm1772
        %v1774 = vld [vmem:[#allocation2 + $0xc] sm:$0x1]
        %v1775 = vsel %vm1773, 0, %v1774
        %1776 = vst [vmem:[#allocation2 + $0xc] sm:$0x1] %v1775
        %v1777 = vld [vmem:[#allocation2 + $0x1c] sm:$0x1]
        %v1778 = vsel %vm1773, 0, %v1777
        %1779 = vst [vmem:[#allocation2 + $0x1c] sm:$0x1] %v1778
        %v1780 = vld [vmem:[#allocation2 + $0x2c] sm:$0x1]
        %v1781 = vsel %vm1773, 0, %v1780
        %1782 = vst [vmem:[#allocation2 + $0x2c] sm:$0x1] %v1781
        %v1783 = vld [vmem:[#allocation2 + $0x3c] sm:$0x1]
        %v1784 = vsel %vm1773, 0, %v1783
        %1785 = vst [vmem:[#allocation2 + $0x3c] sm:$0x1] %v1784
        %v1786 = vld [vmem:[#allocation2 + $0x4c] sm:$0x1]
        %v1787 = vsel %vm1773, 0, %v1786
        %1788 = vst [vmem:[#allocation2 + $0x4c] sm:$0x1] %v1787
        %v1789 = vld [vmem:[#allocation2 + $0x5c] sm:$0x1]
        %v1790 = vsel %vm1773, 0, %v1789
        %1791 = vst [vmem:[#allocation2 + $0x5c] sm:$0x1] %v1790
        %v1792 = vld [vmem:[#allocation2 + $0x6c] sm:$0x1]
        %v1793 = vsel %vm1773, 0, %v1792
        %1794 = vst [vmem:[#allocation2 + $0x6c] sm:$0x1] %v1793
        %v1795 = vld [vmem:[#allocation2 + $0x7c] sm:$0x1]
        %v1796 = vsel %vm1773, 0, %v1795
        %1797 = vst [vmem:[#allocation2 + $0x7c] sm:$0x1] %v1796
        %v1798 = vld [vmem:[#allocation2 + $0x8c] sm:$0x1]
        %v1799 = vsel %vm1773, 0, %v1798
        %1800 = vst [vmem:[#allocation2 + $0x8c] sm:$0x1] %v1799
        %v1801 = vld [vmem:[#allocation2 + $0x9c] sm:$0x1]
        %v1802 = vsel %vm1773, 0, %v1801
        %1803 = vst [vmem:[#allocation2 + $0x9c] sm:$0x1] %v1802
        %v1804 = vpack.c.bf16 %v1719, %v1718
        %v1805 = vpack.c.bf16 %v1721, %v1720
        %v1806 = vpack.c.bf16 %v1723, %v1722
        %v1807 = vpack.c.bf16 %v1725, %v1724
        %v1808 = vpack.c.bf16 %v1727, %v1726
        %v1809 = vpack.c.bf16 %v1729, %v1728
        %v1810 = vpack.c.bf16 %v1731, %v1730
        %v1811 = vpack.c.bf16 %v1733, %v1732
        %v1812 = vpack.c.bf16 %v1735, %v1734
        %v1813 = vpack.c.bf16 %v1737, %v1736
        %v1824 = vunpack.c.l.b16 %v1804
        %v1825 = vunpack.c.h.b16 %v1804
        %v1826 = vunpack.c.l.b16 %v1805
        %v1827 = vunpack.c.h.b16 %v1805
        %v1828 = vunpack.c.l.b16 %v1806
        %v1829 = vunpack.c.h.b16 %v1806
        %v1830 = vunpack.c.l.b16 %v1807
        %v1831 = vunpack.c.h.b16 %v1807
        %v1832 = vunpack.c.l.b16 %v1808
        %v1833 = vunpack.c.h.b16 %v1808
        %v1834 = vunpack.c.l.b16 %v1809
        %v1835 = vunpack.c.h.b16 %v1809
        %v1836 = vunpack.c.l.b16 %v1810
        %v1837 = vunpack.c.h.b16 %v1810
        %v1838 = vunpack.c.l.b16 %v1811
        %v1839 = vunpack.c.h.b16 %v1811
        %v1840 = vunpack.c.l.b16 %v1812
        %v1841 = vunpack.c.h.b16 %v1812
        %v1842 = vunpack.c.l.b16 %v1813
        %v1843 = vunpack.c.h.b16 %v1813
        %v1844 = vpack.c.b16 %v1824, %v1824
        %v1845 = vpack.c.b16 %v1825, %v1825
        %v1846 = vpack.c.b16 %v1826, %v1826
        %v1847 = vpack.c.b16 %v1827, %v1827
        %v1848 = vpack.c.b16 %v1828, %v1828
        %v1849 = vpack.c.b16 %v1829, %v1829
        %v1850 = vpack.c.b16 %v1830, %v1830
        %v1851 = vpack.c.b16 %v1831, %v1831
        %v1852 = vpack.c.b16 %v1832, %v1832
        %v1853 = vpack.c.b16 %v1833, %v1833
        %v1854 = vpack.c.b16 %v1834, %v1834
        %v1855 = vpack.c.b16 %v1835, %v1835
        %v1856 = vpack.c.b16 %v1836, %v1836
        %v1857 = vpack.c.b16 %v1837, %v1837
        %v1858 = vpack.c.b16 %v1838, %v1838
        %v1859 = vpack.c.b16 %v1839, %v1839
        %v1860 = vpack.c.b16 %v1840, %v1840
        %v1861 = vpack.c.b16 %v1841, %v1841
        %v1862 = vpack.c.b16 %v1842, %v1842
        %v1863 = vpack.c.b16 %v1843, %v1843
        %1884 = vst [vmem:[#allocation2 + $0x4] sm:$0xf] %v1844
        %1885 = vst [vmem:[#allocation2 + $0x8] sm:$0xf] %v1845
        %1886 = vst [vmem:[#allocation2 + $0x14] sm:$0xf] %v1846
        %1887 = vst [vmem:[#allocation2 + $0x18] sm:$0xf] %v1847
        %1888 = vst [vmem:[#allocation2 + $0x24] sm:$0xf] %v1848
        %1889 = vst [vmem:[#allocation2 + $0x28] sm:$0xf] %v1849
        %1890 = vst [vmem:[#allocation2 + $0x34] sm:$0xf] %v1850
        %1891 = vst [vmem:[#allocation2 + $0x38] sm:$0xf] %v1851
        %1892 = vst [vmem:[#allocation2 + $0x44] sm:$0xf] %v1852
        %1893 = vst [vmem:[#allocation2 + $0x48] sm:$0xf] %v1853
        %1894 = vst [vmem:[#allocation2 + $0x54] sm:$0xf] %v1854
        %1895 = vst [vmem:[#allocation2 + $0x58] sm:$0xf] %v1855
        %1896 = vst [vmem:[#allocation2 + $0x64] sm:$0xf] %v1856
        %1897 = vst [vmem:[#allocation2 + $0x68] sm:$0xf] %v1857
        %1898 = vst [vmem:[#allocation2 + $0x74] sm:$0xf] %v1858
        %1899 = vst [vmem:[#allocation2 + $0x78] sm:$0xf] %v1859
        %1900 = vst [vmem:[#allocation2 + $0x84] sm:$0xf] %v1860
        %1901 = vst [vmem:[#allocation2 + $0x88] sm:$0xf] %v1861
        %1902 = vst [vmem:[#allocation2 + $0x94] sm:$0xf] %v1862
        %1903 = vst [vmem:[#allocation2 + $0x98] sm:$0xf] %v1863
        %v1904 = vld [vmem:[#allocation2] sm:$0x8]
        %v1905 = vld [vmem:[#allocation2 + $0x4] sm:$0xf]
        %v1906 = vld [vmem:[#allocation2 + $0x8] sm:$0xf]
        %v1907 = vld [vmem:[#allocation2 + $0x10] sm:$0x8]
        %v1908 = vld [vmem:[#allocation2 + $0x14] sm:$0xf]
        %v1909 = vld [vmem:[#allocation2 + $0x18] sm:$0xf]
        %v1910 = vld [vmem:[#allocation2 + $0x20] sm:$0x8]
        %v1911 = vld [vmem:[#allocation2 + $0x24] sm:$0xf]
        %v1912 = vld [vmem:[#allocation2 + $0x28] sm:$0xf]
        %v1913 = vld [vmem:[#allocation2 + $0x30] sm:$0x8]
        %v1914 = vld [vmem:[#allocation2 + $0x34] sm:$0xf]
        %v1915 = vld [vmem:[#allocation2 + $0x38] sm:$0xf]
        %v1916 = vld [vmem:[#allocation2 + $0x40] sm:$0x8]
        %v1917 = vld [vmem:[#allocation2 + $0x44] sm:$0xf]
        %v1918 = vld [vmem:[#allocation2 + $0x48] sm:$0xf]
        %v1919 = vld [vmem:[#allocation2 + $0x50] sm:$0x8]
        %v1920 = vld [vmem:[#allocation2 + $0x54] sm:$0xf]
        %v1921 = vld [vmem:[#allocation2 + $0x58] sm:$0xf]
        %v1922 = vld [vmem:[#allocation2 + $0x60] sm:$0x8]
        %v1923 = vld [vmem:[#allocation2 + $0x64] sm:$0xf]
        %v1924 = vld [vmem:[#allocation2 + $0x68] sm:$0xf]
        %v1925 = vld [vmem:[#allocation2 + $0x70] sm:$0x8]
        %v1926 = vld [vmem:[#allocation2 + $0x74] sm:$0xf]
        %v1927 = vld [vmem:[#allocation2 + $0x78] sm:$0xf]
        %v1928 = vld [vmem:[#allocation2 + $0xc] sm:$0x1]
        %v1929 = vld [vmem:[#allocation2 + $0x1c] sm:$0x1]
        %v1930 = vld [vmem:[#allocation2 + $0x2c] sm:$0x1]
        %v1931 = vld [vmem:[#allocation2 + $0x3c] sm:$0x1]
        %v1932 = vld [vmem:[#allocation2 + $0x4c] sm:$0x1]
        %v1933 = vld [vmem:[#allocation2 + $0x5c] sm:$0x1]
        %v1934 = vld [vmem:[#allocation2 + $0x6c] sm:$0x1]
        %v1935 = vld [vmem:[#allocation2 + $0x7c] sm:$0x1]
        %s1936 = scalar_lea.vmem [#allocation2], 16
        %v1937 = vld [vmem:[%s1936] sm:$0x8]
        %v1938 = vld [vmem:[%s1936 + $0x4] sm:$0xf]
        %v1939 = vld [vmem:[%s1936 + $0x8] sm:$0xf]
        %v1940 = vld [vmem:[%s1936 + $0x10] sm:$0x8]
        %v1941 = vld [vmem:[%s1936 + $0x14] sm:$0xf]
        %v1942 = vld [vmem:[%s1936 + $0x18] sm:$0xf]
        %v1943 = vld [vmem:[%s1936 + $0x20] sm:$0x8]
        %v1944 = vld [vmem:[%s1936 + $0x24] sm:$0xf]
        %v1945 = vld [vmem:[%s1936 + $0x28] sm:$0xf]
        %v1946 = vld [vmem:[%s1936 + $0x30] sm:$0x8]
        %v1947 = vld [vmem:[%s1936 + $0x34] sm:$0xf]
        %v1948 = vld [vmem:[%s1936 + $0x38] sm:$0xf]
        %v1949 = vld [vmem:[%s1936 + $0x40] sm:$0x8]
        %v1950 = vld [vmem:[%s1936 + $0x44] sm:$0xf]
        %v1951 = vld [vmem:[%s1936 + $0x48] sm:$0xf]
        %v1952 = vld [vmem:[%s1936 + $0x50] sm:$0x8]
        %v1953 = vld [vmem:[%s1936 + $0x54] sm:$0xf]
        %v1954 = vld [vmem:[%s1936 + $0x58] sm:$0xf]
        %v1955 = vld [vmem:[%s1936 + $0x60] sm:$0x8]
        %v1956 = vld [vmem:[%s1936 + $0x64] sm:$0xf]
        %v1957 = vld [vmem:[%s1936 + $0x68] sm:$0xf]
        %v1958 = vld [vmem:[%s1936 + $0x70] sm:$0x8]
        %v1959 = vld [vmem:[%s1936 + $0x74] sm:$0xf]
        %v1960 = vld [vmem:[%s1936 + $0x78] sm:$0xf]
        %v1961 = vld [vmem:[%s1936 + $0xc] sm:$0x1]
        %v1962 = vld [vmem:[%s1936 + $0x1c] sm:$0x1]
        %v1963 = vld [vmem:[%s1936 + $0x2c] sm:$0x1]
        %v1964 = vld [vmem:[%s1936 + $0x3c] sm:$0x1]
        %v1965 = vld [vmem:[%s1936 + $0x4c] sm:$0x1]
        %v1966 = vld [vmem:[%s1936 + $0x5c] sm:$0x1]
        %v1967 = vld [vmem:[%s1936 + $0x6c] sm:$0x1]
        %v1968 = vld [vmem:[%s1936 + $0x7c] sm:$0x1]
        %s1969 = scalar_lea.vmem [#allocation2], 32
        %v1970 = vld [vmem:[%s1969] sm:$0x8]
        %v1971 = vld [vmem:[%s1969 + $0x4] sm:$0xf]
        %v1972 = vld [vmem:[%s1969 + $0x8] sm:$0xf]
        %v1973 = vld [vmem:[%s1969 + $0x10] sm:$0x8]
        %v1974 = vld [vmem:[%s1969 + $0x14] sm:$0xf]
        %v1975 = vld [vmem:[%s1969 + $0x18] sm:$0xf]
        %v1976 = vld [vmem:[%s1969 + $0x20] sm:$0x8]
        %v1977 = vld [vmem:[%s1969 + $0x24] sm:$0xf]
        %v1978 = vld [vmem:[%s1969 + $0x28] sm:$0xf]
        %v1979 = vld [vmem:[%s1969 + $0x30] sm:$0x8]
        %v1980 = vld [vmem:[%s1969 + $0x34] sm:$0xf]
        %v1981 = vld [vmem:[%s1969 + $0x38] sm:$0xf]
        %v1982 = vld [vmem:[%s1969 + $0x40] sm:$0x8]
        %v1983 = vld [vmem:[%s1969 + $0x44] sm:$0xf]
        %v1984 = vld [vmem:[%s1969 + $0x48] sm:$0xf]
        %v1985 = vld [vmem:[%s1969 + $0x50] sm:$0x8]
        %v1986 = vld [vmem:[%s1969 + $0x54] sm:$0xf]
        %v1987 = vld [vmem:[%s1969 + $0x58] sm:$0xf]
        %v1988 = vld [vmem:[%s1969 + $0x60] sm:$0x8]
        %v1989 = vld [vmem:[%s1969 + $0x64] sm:$0xf]
        %v1990 = vld [vmem:[%s1969 + $0x68] sm:$0xf]
        %v1991 = vld [vmem:[%s1969 + $0x70] sm:$0x8]
        %v1992 = vld [vmem:[%s1969 + $0x74] sm:$0xf]
        %v1993 = vld [vmem:[%s1969 + $0x78] sm:$0xf]
        %v1994 = vld [vmem:[%s1969 + $0xc] sm:$0x1]
        %v1995 = vld [vmem:[%s1969 + $0x1c] sm:$0x1]
        %v1996 = vld [vmem:[%s1969 + $0x2c] sm:$0x1]
        %v1997 = vld [vmem:[%s1969 + $0x3c] sm:$0x1]
        %v1998 = vld [vmem:[%s1969 + $0x4c] sm:$0x1]
        %v1999 = vld [vmem:[%s1969 + $0x5c] sm:$0x1]
        %v2000 = vld [vmem:[%s1969 + $0x6c] sm:$0x1]
        %v2001 = vld [vmem:[%s1969 + $0x7c] sm:$0x1]
        %v2026 = vunpack.c.l.b16 %v1904
        %v2027 = vunpack.c.l.b16 %v1905
        %v2028 = vunpack.c.l.b16 %v1906
        %v2029 = vunpack.c.l.b16 %v1907
        %v2030 = vunpack.c.l.b16 %v1908
        %v2031 = vunpack.c.l.b16 %v1909
        %v2032 = vunpack.c.l.b16 %v1910
        %v2033 = vunpack.c.l.b16 %v1911
        %v2034 = vunpack.c.l.b16 %v1912
        %v2035 = vunpack.c.l.b16 %v1913
        %v2036 = vunpack.c.l.b16 %v1914
        %v2037 = vunpack.c.l.b16 %v1915
        %v2038 = vunpack.c.l.b16 %v1916
        %v2039 = vunpack.c.l.b16 %v1917
        %v2040 = vunpack.c.l.b16 %v1918
        %v2041 = vunpack.c.l.b16 %v1919
        %v2042 = vunpack.c.l.b16 %v1920
        %v2043 = vunpack.c.l.b16 %v1921
        %v2044 = vunpack.c.l.b16 %v1922
        %v2045 = vunpack.c.l.b16 %v1923
        %v2046 = vunpack.c.l.b16 %v1924
        %v2047 = vunpack.c.l.b16 %v1925
        %v2048 = vunpack.c.l.b16 %v1926
        %v2049 = vunpack.c.l.b16 %v1927
        %v2050 = vpack.c.b16 %v2027, %v2026
        %v2051 = vpack.c.b16 %v2028, %v2028
        %v2052 = vpack.c.b16 %v2030, %v2029
        %v2053 = vpack.c.b16 %v2031, %v2031
        %v2054 = vpack.c.b16 %v2033, %v2032
        %v2055 = vpack.c.b16 %v2034, %v2034
        %v2056 = vpack.c.b16 %v2036, %v2035
        %v2057 = vpack.c.b16 %v2037, %v2037
        %v2058 = vpack.c.b16 %v2039, %v2038
        %v2059 = vpack.c.b16 %v2040, %v2040
        %v2060 = vpack.c.b16 %v2042, %v2041
        %v2061 = vpack.c.b16 %v2043, %v2043
        %v2062 = vpack.c.b16 %v2045, %v2044
        %v2063 = vpack.c.b16 %v2046, %v2046
        %v2064 = vpack.c.b16 %v2048, %v2047
        %v2065 = vpack.c.b16 %v2049, %v2049
        %v2066 = vpack.c.b16 %v2028, %v2027
        %v2067 = vpack.c.b16 %v2031, %v2030
        %v2068 = vpack.c.b16 %v2034, %v2033
        %v2069 = vpack.c.b16 %v2037, %v2036
        %v2070 = vpack.c.b16 %v2040, %v2039
        %v2071 = vpack.c.b16 %v2043, %v2042
        %v2072 = vpack.c.b16 %v2046, %v2045
        %v2073 = vpack.c.b16 %v2049, %v2048
        %v2075 = vshrl.u32 %v2066, 16
        %v2077 = vrot.slane %v2075, 4
        %v2078 = vshll.u32 %v2066, 16
        %v2080 = vrot.slane %v2078, 5
        %v2081 = vor.u32 %v2077, %v2080
        %v2083 = vshrl.u32 %v2067, 16
        %v2085 = vrot.slane %v2083, 4
        %v2086 = vshll.u32 %v2067, 16
        %v2088 = vrot.slane %v2086, 5
        %v2089 = vor.u32 %v2085, %v2088
        %v2091 = vshrl.u32 %v2068, 16
        %v2093 = vrot.slane %v2091, 4
        %v2094 = vshll.u32 %v2068, 16
        %v2096 = vrot.slane %v2094, 5
        %v2097 = vor.u32 %v2093, %v2096
        %v2099 = vshrl.u32 %v2069, 16
        %v2101 = vrot.slane %v2099, 4
        %v2102 = vshll.u32 %v2069, 16
        %v2104 = vrot.slane %v2102, 5
        %v2105 = vor.u32 %v2101, %v2104
        %v2107 = vshrl.u32 %v2070, 16
        %v2109 = vrot.slane %v2107, 4
        %v2110 = vshll.u32 %v2070, 16
        %v2112 = vrot.slane %v2110, 5
        %v2113 = vor.u32 %v2109, %v2112
        %v2115 = vshrl.u32 %v2071, 16
        %v2117 = vrot.slane %v2115, 4
        %v2118 = vshll.u32 %v2071, 16
        %v2120 = vrot.slane %v2118, 5
        %v2121 = vor.u32 %v2117, %v2120
        %v2123 = vshrl.u32 %v2072, 16
        %v2125 = vrot.slane %v2123, 4
        %v2126 = vshll.u32 %v2072, 16
        %v2128 = vrot.slane %v2126, 5
        %v2129 = vor.u32 %v2125, %v2128
        %v2131 = vshrl.u32 %v2073, 16
        %v2133 = vrot.slane %v2131, 4
        %v2134 = vshll.u32 %v2073, 16
        %v2136 = vrot.slane %v2134, 5
        %v2137 = vor.u32 %v2133, %v2136
        %v2146 = vunpack.c.l.b16 %v1928
        %v2147 = vunpack.c.l.b16 %v1929
        %v2148 = vunpack.c.l.b16 %v1930
        %v2149 = vunpack.c.l.b16 %v1931
        %v2150 = vunpack.c.l.b16 %v1932
        %v2151 = vunpack.c.l.b16 %v1933
        %v2152 = vunpack.c.l.b16 %v1934
        %v2153 = vunpack.c.l.b16 %v1935
        %v2154 = vpack.c.b16 %v2146, %v2146
        %v2155 = vpack.c.b16 %v2147, %v2147
        %v2156 = vpack.c.b16 %v2148, %v2148
        %v2157 = vpack.c.b16 %v2149, %v2149
        %v2158 = vpack.c.b16 %v2150, %v2150
        %v2159 = vpack.c.b16 %v2151, %v2151
        %v2160 = vpack.c.b16 %v2152, %v2152
        %v2161 = vpack.c.b16 %v2153, %v2153
        %vm2162 = vcmask 1042432
        %v2163 = vrot.slane %v2066, 5
        %v2164 = vrot.slane %v2154, 5
        %v2165 = vsel %vm2162, %v2163, %v2164
        %v2166 = vrot.slane %v2067, 5
        %v2167 = vrot.slane %v2155, 5
        %v2168 = vsel %vm2162, %v2166, %v2167
        %v2169 = vrot.slane %v2068, 5
        %v2170 = vrot.slane %v2156, 5
        %v2171 = vsel %vm2162, %v2169, %v2170
        %v2172 = vrot.slane %v2069, 5
        %v2173 = vrot.slane %v2157, 5
        %v2174 = vsel %vm2162, %v2172, %v2173
        %v2175 = vrot.slane %v2070, 5
        %v2176 = vrot.slane %v2158, 5
        %v2177 = vsel %vm2162, %v2175, %v2176
        %v2178 = vrot.slane %v2071, 5
        %v2179 = vrot.slane %v2159, 5
        %v2180 = vsel %vm2162, %v2178, %v2179
        %v2181 = vrot.slane %v2072, 5
        %v2182 = vrot.slane %v2160, 5
        %v2183 = vsel %vm2162, %v2181, %v2182
        %v2184 = vrot.slane %v2073, 5
        %v2185 = vrot.slane %v2161, 5
        %v2186 = vsel %vm2162, %v2184, %v2185
        %v2211 = vunpack.c.l.b16 %v1937
        %v2212 = vunpack.c.l.b16 %v1938
        %v2213 = vunpack.c.l.b16 %v1939
        %v2214 = vunpack.c.l.b16 %v1940
        %v2215 = vunpack.c.l.b16 %v1941
        %v2216 = vunpack.c.l.b16 %v1942
        %v2217 = vunpack.c.l.b16 %v1943
        %v2218 = vunpack.c.l.b16 %v1944
        %v2219 = vunpack.c.l.b16 %v1945
        %v2220 = vunpack.c.l.b16 %v1946
        %v2221 = vunpack.c.l.b16 %v1947
        %v2222 = vunpack.c.l.b16 %v1948
        %v2223 = vunpack.c.l.b16 %v1949
        %v2224 = vunpack.c.l.b16 %v1950
        %v2225 = vunpack.c.l.b16 %v1951
        %v2226 = vunpack.c.l.b16 %v1952
        %v2227 = vunpack.c.l.b16 %v1953
        %v2228 = vunpack.c.l.b16 %v1954
        %v2229 = vunpack.c.l.b16 %v1955
        %v2230 = vunpack.c.l.b16 %v1956
        %v2231 = vunpack.c.l.b16 %v1957
        %v2232 = vunpack.c.l.b16 %v1958
        %v2233 = vunpack.c.l.b16 %v1959
        %v2234 = vunpack.c.l.b16 %v1960
        %v2235 = vpack.c.b16 %v2212, %v2211
        %v2236 = vpack.c.b16 %v2213, %v2213
        %v2237 = vpack.c.b16 %v2215, %v2214
        %v2238 = vpack.c.b16 %v2216, %v2216
        %v2239 = vpack.c.b16 %v2218, %v2217
        %v2240 = vpack.c.b16 %v2219, %v2219
        %v2241 = vpack.c.b16 %v2221, %v2220
        %v2242 = vpack.c.b16 %v2222, %v2222
        %v2243 = vpack.c.b16 %v2224, %v2223
        %v2244 = vpack.c.b16 %v2225, %v2225
        %v2245 = vpack.c.b16 %v2227, %v2226
        %v2246 = vpack.c.b16 %v2228, %v2228
        %v2247 = vpack.c.b16 %v2230, %v2229
        %v2248 = vpack.c.b16 %v2231, %v2231
        %v2249 = vpack.c.b16 %v2233, %v2232
        %v2250 = vpack.c.b16 %v2234, %v2234
        %v2251 = vpack.c.b16 %v2213, %v2212
        %v2252 = vpack.c.b16 %v2216, %v2215
        %v2253 = vpack.c.b16 %v2219, %v2218
        %v2254 = vpack.c.b16 %v2222, %v2221
        %v2255 = vpack.c.b16 %v2225, %v2224
        %v2256 = vpack.c.b16 %v2228, %v2227
        %v2257 = vpack.c.b16 %v2231, %v2230
        %v2258 = vpack.c.b16 %v2234, %v2233
        %v2260 = vshrl.u32 %v2251, 16
        %v2262 = vrot.slane %v2260, 4
        %v2263 = vshll.u32 %v2251, 16
        %v2265 = vrot.slane %v2263, 5
        %v2266 = vor.u32 %v2262, %v2265
        %v2268 = vshrl.u32 %v2252, 16
        %v2270 = vrot.slane %v2268, 4
        %v2271 = vshll.u32 %v2252, 16
        %v2273 = vrot.slane %v2271, 5
        %v2274 = vor.u32 %v2270, %v2273
        %v2276 = vshrl.u32 %v2253, 16
        %v2278 = vrot.slane %v2276, 4
        %v2279 = vshll.u32 %v2253, 16
        %v2281 = vrot.slane %v2279, 5
        %v2282 = vor.u32 %v2278, %v2281
        %v2284 = vshrl.u32 %v2254, 16
        %v2286 = vrot.slane %v2284, 4
        %v2287 = vshll.u32 %v2254, 16
        %v2289 = vrot.slane %v2287, 5
        %v2290 = vor.u32 %v2286, %v2289
        %v2292 = vshrl.u32 %v2255, 16
        %v2294 = vrot.slane %v2292, 4
        %v2295 = vshll.u32 %v2255, 16
        %v2297 = vrot.slane %v2295, 5
        %v2298 = vor.u32 %v2294, %v2297
        %v2300 = vshrl.u32 %v2256, 16
        %v2302 = vrot.slane %v2300, 4
        %v2303 = vshll.u32 %v2256, 16
        %v2305 = vrot.slane %v2303, 5
        %v2306 = vor.u32 %v2302, %v2305
        %v2308 = vshrl.u32 %v2257, 16
        %v2310 = vrot.slane %v2308, 4
        %v2311 = vshll.u32 %v2257, 16
        %v2313 = vrot.slane %v2311, 5
        %v2314 = vor.u32 %v2310, %v2313
        %v2316 = vshrl.u32 %v2258, 16
        %v2318 = vrot.slane %v2316, 4
        %v2319 = vshll.u32 %v2258, 16
        %v2321 = vrot.slane %v2319, 5
        %v2322 = vor.u32 %v2318, %v2321
        %v2331 = vunpack.c.l.b16 %v1961
        %v2332 = vunpack.c.l.b16 %v1962
        %v2333 = vunpack.c.l.b16 %v1963
        %v2334 = vunpack.c.l.b16 %v1964
        %v2335 = vunpack.c.l.b16 %v1965
        %v2336 = vunpack.c.l.b16 %v1966
        %v2337 = vunpack.c.l.b16 %v1967
        %v2338 = vunpack.c.l.b16 %v1968
        %v2339 = vpack.c.b16 %v2331, %v2331
        %v2340 = vpack.c.b16 %v2332, %v2332
        %v2341 = vpack.c.b16 %v2333, %v2333
        %v2342 = vpack.c.b16 %v2334, %v2334
        %v2343 = vpack.c.b16 %v2335, %v2335
        %v2344 = vpack.c.b16 %v2336, %v2336
        %v2345 = vpack.c.b16 %v2337, %v2337
        %v2346 = vpack.c.b16 %v2338, %v2338
        %v2347 = vrot.slane %v2251, 5
        %v2348 = vrot.slane %v2339, 5
        %v2349 = vsel %vm2162, %v2347, %v2348
        %v2350 = vrot.slane %v2252, 5
        %v2351 = vrot.slane %v2340, 5
        %v2352 = vsel %vm2162, %v2350, %v2351
        %v2353 = vrot.slane %v2253, 5
        %v2354 = vrot.slane %v2341, 5
        %v2355 = vsel %vm2162, %v2353, %v2354
        %v2356 = vrot.slane %v2254, 5
        %v2357 = vrot.slane %v2342, 5
        %v2358 = vsel %vm2162, %v2356, %v2357
        %v2359 = vrot.slane %v2255, 5
        %v2360 = vrot.slane %v2343, 5
        %v2361 = vsel %vm2162, %v2359, %v2360
        %v2362 = vrot.slane %v2256, 5
        %v2363 = vrot.slane %v2344, 5
        %v2364 = vsel %vm2162, %v2362, %v2363
        %v2365 = vrot.slane %v2257, 5
        %v2366 = vrot.slane %v2345, 5
        %v2367 = vsel %vm2162, %v2365, %v2366
        %v2368 = vrot.slane %v2258, 5
        %v2369 = vrot.slane %v2346, 5
        %v2370 = vsel %vm2162, %v2368, %v2369
        %v2395 = vunpack.c.l.b16 %v1970
        %v2396 = vunpack.c.l.b16 %v1971
        %v2397 = vunpack.c.l.b16 %v1972
        %v2398 = vunpack.c.l.b16 %v1973
        %v2399 = vunpack.c.l.b16 %v1974
        %v2400 = vunpack.c.l.b16 %v1975
        %v2401 = vunpack.c.l.b16 %v1976
        %v2402 = vunpack.c.l.b16 %v1977
        %v2403 = vunpack.c.l.b16 %v1978
        %v2404 = vunpack.c.l.b16 %v1979
        %v2405 = vunpack.c.l.b16 %v1980
        %v2406 = vunpack.c.l.b16 %v1981
        %v2407 = vunpack.c.l.b16 %v1982
        %v2408 = vunpack.c.l.b16 %v1983
        %v2409 = vunpack.c.l.b16 %v1984
        %v2410 = vunpack.c.l.b16 %v1985
        %v2411 = vunpack.c.l.b16 %v1986
        %v2412 = vunpack.c.l.b16 %v1987
        %v2413 = vunpack.c.l.b16 %v1988
        %v2414 = vunpack.c.l.b16 %v1989
        %v2415 = vunpack.c.l.b16 %v1990
        %v2416 = vunpack.c.l.b16 %v1991
        %v2417 = vunpack.c.l.b16 %v1992
        %v2418 = vunpack.c.l.b16 %v1993
        %v2419 = vpack.c.b16 %v2396, %v2395
        %v2420 = vpack.c.b16 %v2397, %v2397
        %v2421 = vpack.c.b16 %v2399, %v2398
        %v2422 = vpack.c.b16 %v2400, %v2400
        %v2423 = vpack.c.b16 %v2402, %v2401
        %v2424 = vpack.c.b16 %v2403, %v2403
        %v2425 = vpack.c.b16 %v2405, %v2404
        %v2426 = vpack.c.b16 %v2406, %v2406
        %v2427 = vpack.c.b16 %v2408, %v2407
        %v2428 = vpack.c.b16 %v2409, %v2409
        %v2429 = vpack.c.b16 %v2411, %v2410
        %v2430 = vpack.c.b16 %v2412, %v2412
        %v2431 = vpack.c.b16 %v2414, %v2413
        %v2432 = vpack.c.b16 %v2415, %v2415
        %v2433 = vpack.c.b16 %v2417, %v2416
        %v2434 = vpack.c.b16 %v2418, %v2418
        %v2435 = vpack.c.b16 %v2397, %v2396
        %v2436 = vpack.c.b16 %v2400, %v2399
        %v2437 = vpack.c.b16 %v2403, %v2402
        %v2438 = vpack.c.b16 %v2406, %v2405
        %v2439 = vpack.c.b16 %v2409, %v2408
        %v2440 = vpack.c.b16 %v2412, %v2411
        %v2441 = vpack.c.b16 %v2415, %v2414
        %v2442 = vpack.c.b16 %v2418, %v2417
        %v2444 = vshrl.u32 %v2435, 16
        %v2446 = vrot.slane %v2444, 4
        %v2447 = vshll.u32 %v2435, 16
        %v2449 = vrot.slane %v2447, 5
        %v2450 = vor.u32 %v2446, %v2449
        %v2452 = vshrl.u32 %v2436, 16
        %v2454 = vrot.slane %v2452, 4
        %v2455 = vshll.u32 %v2436, 16
        %v2457 = vrot.slane %v2455, 5
        %v2458 = vor.u32 %v2454, %v2457
        %v2460 = vshrl.u32 %v2437, 16
        %v2462 = vrot.slane %v2460, 4
        %v2463 = vshll.u32 %v2437, 16
        %v2465 = vrot.slane %v2463, 5
        %v2466 = vor.u32 %v2462, %v2465
        %v2468 = vshrl.u32 %v2438, 16
        %v2470 = vrot.slane %v2468, 4
        %v2471 = vshll.u32 %v2438, 16
        %v2473 = vrot.slane %v2471, 5
        %v2474 = vor.u32 %v2470, %v2473
        %v2476 = vshrl.u32 %v2439, 16
        %v2478 = vrot.slane %v2476, 4
        %v2479 = vshll.u32 %v2439, 16
        %v2481 = vrot.slane %v2479, 5
        %v2482 = vor.u32 %v2478, %v2481
        %v2484 = vshrl.u32 %v2440, 16
        %v2486 = vrot.slane %v2484, 4
        %v2487 = vshll.u32 %v2440, 16
        %v2489 = vrot.slane %v2487, 5
        %v2490 = vor.u32 %v2486, %v2489
        %v2492 = vshrl.u32 %v2441, 16
        %v2494 = vrot.slane %v2492, 4
        %v2495 = vshll.u32 %v2441, 16
        %v2497 = vrot.slane %v2495, 5
        %v2498 = vor.u32 %v2494, %v2497
        %v2500 = vshrl.u32 %v2442, 16
        %v2502 = vrot.slane %v2500, 4
        %v2503 = vshll.u32 %v2442, 16
        %v2505 = vrot.slane %v2503, 5
        %v2506 = vor.u32 %v2502, %v2505
        %v2515 = vunpack.c.l.b16 %v1994
        %v2516 = vunpack.c.l.b16 %v1995
        %v2517 = vunpack.c.l.b16 %v1996
        %v2518 = vunpack.c.l.b16 %v1997
        %v2519 = vunpack.c.l.b16 %v1998
        %v2520 = vunpack.c.l.b16 %v1999
        %v2521 = vunpack.c.l.b16 %v2000
        %v2522 = vunpack.c.l.b16 %v2001
        %v2523 = vpack.c.b16 %v2515, %v2515
        %v2524 = vpack.c.b16 %v2516, %v2516
        %v2525 = vpack.c.b16 %v2517, %v2517
        %v2526 = vpack.c.b16 %v2518, %v2518
        %v2527 = vpack.c.b16 %v2519, %v2519
        %v2528 = vpack.c.b16 %v2520, %v2520
        %v2529 = vpack.c.b16 %v2521, %v2521
        %v2530 = vpack.c.b16 %v2522, %v2522
        %v2531 = vrot.slane %v2435, 5
        %v2532 = vrot.slane %v2523, 5
        %v2533 = vsel %vm2162, %v2531, %v2532
        %v2534 = vrot.slane %v2436, 5
        %v2535 = vrot.slane %v2524, 5
        %v2536 = vsel %vm2162, %v2534, %v2535
        %v2537 = vrot.slane %v2437, 5
        %v2538 = vrot.slane %v2525, 5
        %v2539 = vsel %vm2162, %v2537, %v2538
        %v2540 = vrot.slane %v2438, 5
        %v2541 = vrot.slane %v2526, 5
        %v2542 = vsel %vm2162, %v2540, %v2541
        %v2543 = vrot.slane %v2439, 5
        %v2544 = vrot.slane %v2527, 5
        %v2545 = vsel %vm2162, %v2543, %v2544
        %v2546 = vrot.slane %v2440, 5
        %v2547 = vrot.slane %v2528, 5
        %v2548 = vsel %vm2162, %v2546, %v2547
        %v2549 = vrot.slane %v2441, 5
        %v2550 = vrot.slane %v2529, 5
        %v2551 = vsel %vm2162, %v2549, %v2550
        %v2552 = vrot.slane %v2442, 5
        %v2553 = vrot.slane %v2530, 5
        %v2554 = vsel %vm2162, %v2552, %v2553
        %vm2555 = vsmask.f32 4352
        %v2557 = vshrl.u32 %v2050, 16
        %v2559 = vrot.slane %v2557, 3
        %v2560 = vshll.u32 %v2050, 16
        %v2562 = vrot.slane %v2560, 4
        %v2563 = vor.u32 %v2559, %v2562
        %v2565 = vshrl.u32 %v2051, 16
        %v2567 = vrot.slane %v2565, 3
        %v2568 = vshll.u32 %v2051, 16
        %v2570 = vrot.slane %v2568, 4
        %v2571 = vor.u32 %v2567, %v2570
        %v2572 = vsel %vm2555, %v2563, %v2571
        %v2574 = vshrl.u32 %v2081, 16
        %v2576 = vrot.slane %v2574, 3
        %v2577 = vshll.u32 %v2081, 16
        %v2579 = vrot.slane %v2577, 4
        %v2580 = vor.u32 %v2576, %v2579
        %v2581 = vsel %vm2555, %v2580, %v2580
        %v2583 = vshrl.u32 %v2163, 16
        %v2585 = vrot.slane %v2583, 3
        %v2586 = vshll.u32 %v2163, 16
        %v2588 = vrot.slane %v2586, 4
        %v2589 = vor.u32 %v2585, %v2588
        %v2591 = vshrl.u32 %v2165, 16
        %v2593 = vrot.slane %v2591, 3
        %v2594 = vshll.u32 %v2165, 16
        %v2596 = vrot.slane %v2594, 4
        %v2597 = vor.u32 %v2593, %v2596
        %v2598 = vsel %vm2555, %v2589, %v2597
        %v2600 = vshrl.u32 %v2235, 16
        %v2602 = vrot.slane %v2600, 3
        %v2603 = vshll.u32 %v2235, 16
        %v2605 = vrot.slane %v2603, 4
        %v2606 = vor.u32 %v2602, %v2605
        %v2608 = vshrl.u32 %v2236, 16
        %v2610 = vrot.slane %v2608, 3
        %v2611 = vshll.u32 %v2236, 16
        %v2613 = vrot.slane %v2611, 4
        %v2614 = vor.u32 %v2610, %v2613
        %v2615 = vsel %vm2555, %v2606, %v2614
        %v2617 = vshrl.u32 %v2266, 16
        %v2619 = vrot.slane %v2617, 3
        %v2620 = vshll.u32 %v2266, 16
        %v2622 = vrot.slane %v2620, 4
        %v2623 = vor.u32 %v2619, %v2622
        %v2624 = vsel %vm2555, %v2623, %v2623
        %v2626 = vshrl.u32 %v2347, 16
        %v2628 = vrot.slane %v2626, 3
        %v2629 = vshll.u32 %v2347, 16
        %v2631 = vrot.slane %v2629, 4
        %v2632 = vor.u32 %v2628, %v2631
        %v2634 = vshrl.u32 %v2349, 16
        %v2636 = vrot.slane %v2634, 3
        %v2637 = vshll.u32 %v2349, 16
        %v2639 = vrot.slane %v2637, 4
        %v2640 = vor.u32 %v2636, %v2639
        %v2641 = vsel %vm2555, %v2632, %v2640
        %v2643 = vshrl.u32 %v2419, 16
        %v2645 = vrot.slane %v2643, 3
        %v2646 = vshll.u32 %v2419, 16
        %v2648 = vrot.slane %v2646, 4
        %v2649 = vor.u32 %v2645, %v2648
        %v2651 = vshrl.u32 %v2420, 16
        %v2653 = vrot.slane %v2651, 3
        %v2654 = vshll.u32 %v2420, 16
        %v2656 = vrot.slane %v2654, 4
        %v2657 = vor.u32 %v2653, %v2656
        %v2658 = vsel %vm2555, %v2649, %v2657
        %v2660 = vshrl.u32 %v2450, 16
        %v2662 = vrot.slane %v2660, 3
        %v2663 = vshll.u32 %v2450, 16
        %v2665 = vrot.slane %v2663, 4
        %v2666 = vor.u32 %v2662, %v2665
        %v2667 = vsel %vm2555, %v2666, %v2666
        %v2669 = vshrl.u32 %v2531, 16
        %v2671 = vrot.slane %v2669, 3
        %v2672 = vshll.u32 %v2531, 16
        %v2674 = vrot.slane %v2672, 4
        %v2675 = vor.u32 %v2671, %v2674
        %v2677 = vshrl.u32 %v2533, 16
        %v2679 = vrot.slane %v2677, 3
        %v2680 = vshll.u32 %v2533, 16
        %v2682 = vrot.slane %v2680, 4
        %v2683 = vor.u32 %v2679, %v2682
        %v2684 = vsel %vm2555, %v2675, %v2683
        %v2686 = vshrl.u32 %v2052, 16
        %v2688 = vrot.slane %v2686, 3
        %v2689 = vshll.u32 %v2052, 16
        %v2691 = vrot.slane %v2689, 4
        %v2692 = vor.u32 %v2688, %v2691
        %v2694 = vshrl.u32 %v2053, 16
        %v2696 = vrot.slane %v2694, 3
        %v2697 = vshll.u32 %v2053, 16
        %v2699 = vrot.slane %v2697, 4
        %v2700 = vor.u32 %v2696, %v2699
        %v2701 = vsel %vm2555, %v2692, %v2700
        %v2703 = vshrl.u32 %v2089, 16
        %v2705 = vrot.slane %v2703, 3
        %v2706 = vshll.u32 %v2089, 16
        %v2708 = vrot.slane %v2706, 4
        %v2709 = vor.u32 %v2705, %v2708
        %v2710 = vsel %vm2555, %v2709, %v2709
        %v2712 = vshrl.u32 %v2166, 16
        %v2714 = vrot.slane %v2712, 3
        %v2715 = vshll.u32 %v2166, 16
        %v2717 = vrot.slane %v2715, 4
        %v2718 = vor.u32 %v2714, %v2717
        %v2720 = vshrl.u32 %v2168, 16
        %v2722 = vrot.slane %v2720, 3
        %v2723 = vshll.u32 %v2168, 16
        %v2725 = vrot.slane %v2723, 4
        %v2726 = vor.u32 %v2722, %v2725
        %v2727 = vsel %vm2555, %v2718, %v2726
        %v2729 = vshrl.u32 %v2237, 16
        %v2731 = vrot.slane %v2729, 3
        %v2732 = vshll.u32 %v2237, 16
        %v2734 = vrot.slane %v2732, 4
        %v2735 = vor.u32 %v2731, %v2734
        %v2737 = vshrl.u32 %v2238, 16
        %v2739 = vrot.slane %v2737, 3
        %v2740 = vshll.u32 %v2238, 16
        %v2742 = vrot.slane %v2740, 4
        %v2743 = vor.u32 %v2739, %v2742
        %v2744 = vsel %vm2555, %v2735, %v2743
        %v2746 = vshrl.u32 %v2274, 16
        %v2748 = vrot.slane %v2746, 3
        %v2749 = vshll.u32 %v2274, 16
        %v2751 = vrot.slane %v2749, 4
        %v2752 = vor.u32 %v2748, %v2751
        %v2753 = vsel %vm2555, %v2752, %v2752
        %v2755 = vshrl.u32 %v2350, 16
        %v2757 = vrot.slane %v2755, 3
        %v2758 = vshll.u32 %v2350, 16
        %v2760 = vrot.slane %v2758, 4
        %v2761 = vor.u32 %v2757, %v2760
        %v2763 = vshrl.u32 %v2352, 16
        %v2765 = vrot.slane %v2763, 3
        %v2766 = vshll.u32 %v2352, 16
        %v2768 = vrot.slane %v2766, 4
        %v2769 = vor.u32 %v2765, %v2768
        %v2770 = vsel %vm2555, %v2761, %v2769
        %v2772 = vshrl.u32 %v2421, 16
        %v2774 = vrot.slane %v2772, 3
        %v2775 = vshll.u32 %v2421, 16
        %v2777 = vrot.slane %v2775, 4
        %v2778 = vor.u32 %v2774, %v2777
        %v2780 = vshrl.u32 %v2422, 16
        %v2782 = vrot.slane %v2780, 3
        %v2783 = vshll.u32 %v2422, 16
        %v2785 = vrot.slane %v2783, 4
        %v2786 = vor.u32 %v2782, %v2785
        %v2787 = vsel %vm2555, %v2778, %v2786
        %v2789 = vshrl.u32 %v2458, 16
        %v2791 = vrot.slane %v2789, 3
        %v2792 = vshll.u32 %v2458, 16
        %v2794 = vrot.slane %v2792, 4
        %v2795 = vor.u32 %v2791, %v2794
        %v2796 = vsel %vm2555, %v2795, %v2795
        %v2798 = vshrl.u32 %v2534, 16
        %v2800 = vrot.slane %v2798, 3
        %v2801 = vshll.u32 %v2534, 16
        %v2803 = vrot.slane %v2801, 4
        %v2804 = vor.u32 %v2800, %v2803
        %v2806 = vshrl.u32 %v2536, 16
        %v2808 = vrot.slane %v2806, 3
        %v2809 = vshll.u32 %v2536, 16
        %v2811 = vrot.slane %v2809, 4
        %v2812 = vor.u32 %v2808, %v2811
        %v2813 = vsel %vm2555, %v2804, %v2812
        %v2815 = vshrl.u32 %v2054, 16
        %v2817 = vrot.slane %v2815, 3
        %v2818 = vshll.u32 %v2054, 16
        %v2820 = vrot.slane %v2818, 4
        %v2821 = vor.u32 %v2817, %v2820
        %v2823 = vshrl.u32 %v2055, 16
        %v2825 = vrot.slane %v2823, 3
        %v2826 = vshll.u32 %v2055, 16
        %v2828 = vrot.slane %v2826, 4
        %v2829 = vor.u32 %v2825, %v2828
        %v2830 = vsel %vm2555, %v2821, %v2829
        %v2832 = vshrl.u32 %v2097, 16
        %v2834 = vrot.slane %v2832, 3
        %v2835 = vshll.u32 %v2097, 16
        %v2837 = vrot.slane %v2835, 4
        %v2838 = vor.u32 %v2834, %v2837
        %v2839 = vsel %vm2555, %v2838, %v2838
        %v2841 = vshrl.u32 %v2169, 16
        %v2843 = vrot.slane %v2841, 3
        %v2844 = vshll.u32 %v2169, 16
        %v2846 = vrot.slane %v2844, 4
        %v2847 = vor.u32 %v2843, %v2846
        %v2849 = vshrl.u32 %v2171, 16
        %v2851 = vrot.slane %v2849, 3
        %v2852 = vshll.u32 %v2171, 16
        %v2854 = vrot.slane %v2852, 4
        %v2855 = vor.u32 %v2851, %v2854
        %v2856 = vsel %vm2555, %v2847, %v2855
        %v2858 = vshrl.u32 %v2239, 16
        %v2860 = vrot.slane %v2858, 3
        %v2861 = vshll.u32 %v2239, 16
        %v2863 = vrot.slane %v2861, 4
        %v2864 = vor.u32 %v2860, %v2863
        %v2866 = vshrl.u32 %v2240, 16
        %v2868 = vrot.slane %v2866, 3
        %v2869 = vshll.u32 %v2240, 16
        %v2871 = vrot.slane %v2869, 4
        %v2872 = vor.u32 %v2868, %v2871
        %v2873 = vsel %vm2555, %v2864, %v2872
        %v2875 = vshrl.u32 %v2282, 16
        %v2877 = vrot.slane %v2875, 3
        %v2878 = vshll.u32 %v2282, 16
        %v2880 = vrot.slane %v2878, 4
        %v2881 = vor.u32 %v2877, %v2880
        %v2882 = vsel %vm2555, %v2881, %v2881
        %v2884 = vshrl.u32 %v2353, 16
        %v2886 = vrot.slane %v2884, 3
        %v2887 = vshll.u32 %v2353, 16
        %v2889 = vrot.slane %v2887, 4
        %v2890 = vor.u32 %v2886, %v2889
        %v2892 = vshrl.u32 %v2355, 16
        %v2894 = vrot.slane %v2892, 3
        %v2895 = vshll.u32 %v2355, 16
        %v2897 = vrot.slane %v2895, 4
        %v2898 = vor.u32 %v2894, %v2897
        %v2899 = vsel %vm2555, %v2890, %v2898
        %v2901 = vshrl.u32 %v2423, 16
        %v2903 = vrot.slane %v2901, 3
        %v2904 = vshll.u32 %v2423, 16
        %v2906 = vrot.slane %v2904, 4
        %v2907 = vor.u32 %v2903, %v2906
        %v2909 = vshrl.u32 %v2424, 16
        %v2911 = vrot.slane %v2909, 3
        %v2912 = vshll.u32 %v2424, 16
        %v2914 = vrot.slane %v2912, 4
        %v2915 = vor.u32 %v2911, %v2914
        %v2916 = vsel %vm2555, %v2907, %v2915
        %v2918 = vshrl.u32 %v2466, 16
        %v2920 = vrot.slane %v2918, 3
        %v2921 = vshll.u32 %v2466, 16
        %v2923 = vrot.slane %v2921, 4
        %v2924 = vor.u32 %v2920, %v2923
        %v2925 = vsel %vm2555, %v2924, %v2924
        %v2927 = vshrl.u32 %v2537, 16
        %v2929 = vrot.slane %v2927, 3
        %v2930 = vshll.u32 %v2537, 16
        %v2932 = vrot.slane %v2930, 4
        %v2933 = vor.u32 %v2929, %v2932
        %v2935 = vshrl.u32 %v2539, 16
        %v2937 = vrot.slane %v2935, 3
        %v2938 = vshll.u32 %v2539, 16
        %v2940 = vrot.slane %v2938, 4
        %v2941 = vor.u32 %v2937, %v2940
        %v2942 = vsel %vm2555, %v2933, %v2941
        %v2944 = vshrl.u32 %v2056, 16
        %v2946 = vrot.slane %v2944, 3
        %v2947 = vshll.u32 %v2056, 16
        %v2949 = vrot.slane %v2947, 4
        %v2950 = vor.u32 %v2946, %v2949
        %v2952 = vshrl.u32 %v2057, 16
        %v2954 = vrot.slane %v2952, 3
        %v2955 = vshll.u32 %v2057, 16
        %v2957 = vrot.slane %v2955, 4
        %v2958 = vor.u32 %v2954, %v2957
        %v2959 = vsel %vm2555, %v2950, %v2958
        %v2961 = vshrl.u32 %v2105, 16
        %v2963 = vrot.slane %v2961, 3
        %v2964 = vshll.u32 %v2105, 16
        %v2966 = vrot.slane %v2964, 4
        %v2967 = vor.u32 %v2963, %v2966
        %v2968 = vsel %vm2555, %v2967, %v2967
        %v2970 = vshrl.u32 %v2172, 16
        %v2972 = vrot.slane %v2970, 3
        %v2973 = vshll.u32 %v2172, 16
        %v2975 = vrot.slane %v2973, 4
        %v2976 = vor.u32 %v2972, %v2975
        %v2978 = vshrl.u32 %v2174, 16
        %v2980 = vrot.slane %v2978, 3
        %v2981 = vshll.u32 %v2174, 16
        %v2983 = vrot.slane %v2981, 4
        %v2984 = vor.u32 %v2980, %v2983
        %v2985 = vsel %vm2555, %v2976, %v2984
        %v2987 = vshrl.u32 %v2241, 16
        %v2989 = vrot.slane %v2987, 3
        %v2990 = vshll.u32 %v2241, 16
        %v2992 = vrot.slane %v2990, 4
        %v2993 = vor.u32 %v2989, %v2992
        %v2995 = vshrl.u32 %v2242, 16
        %v2997 = vrot.slane %v2995, 3
        %v2998 = vshll.u32 %v2242, 16
        %v3000 = vrot.slane %v2998, 4
        %v3001 = vor.u32 %v2997, %v3000
        %v3002 = vsel %vm2555, %v2993, %v3001
        %v3004 = vshrl.u32 %v2290, 16
        %v3006 = vrot.slane %v3004, 3
        %v3007 = vshll.u32 %v2290, 16
        %v3009 = vrot.slane %v3007, 4
        %v3010 = vor.u32 %v3006, %v3009
        %v3011 = vsel %vm2555, %v3010, %v3010
        %v3013 = vshrl.u32 %v2356, 16
        %v3015 = vrot.slane %v3013, 3
        %v3016 = vshll.u32 %v2356, 16
        %v3018 = vrot.slane %v3016, 4
        %v3019 = vor.u32 %v3015, %v3018
        %v3021 = vshrl.u32 %v2358, 16
        %v3023 = vrot.slane %v3021, 3
        %v3024 = vshll.u32 %v2358, 16
        %v3026 = vrot.slane %v3024, 4
        %v3027 = vor.u32 %v3023, %v3026
        %v3028 = vsel %vm2555, %v3019, %v3027
        %v3030 = vshrl.u32 %v2425, 16
        %v3032 = vrot.slane %v3030, 3
        %v3033 = vshll.u32 %v2425, 16
        %v3035 = vrot.slane %v3033, 4
        %v3036 = vor.u32 %v3032, %v3035
        %v3038 = vshrl.u32 %v2426, 16
        %v3040 = vrot.slane %v3038, 3
        %v3041 = vshll.u32 %v2426, 16
        %v3043 = vrot.slane %v3041, 4
        %v3044 = vor.u32 %v3040, %v3043
        %v3045 = vsel %vm2555, %v3036, %v3044
        %v3047 = vshrl.u32 %v2474, 16
        %v3049 = vrot.slane %v3047, 3
        %v3050 = vshll.u32 %v2474, 16
        %v3052 = vrot.slane %v3050, 4
        %v3053 = vor.u32 %v3049, %v3052
        %v3054 = vsel %vm2555, %v3053, %v3053
        %v3056 = vshrl.u32 %v2540, 16
        %v3058 = vrot.slane %v3056, 3
        %v3059 = vshll.u32 %v2540, 16
        %v3061 = vrot.slane %v3059, 4
        %v3062 = vor.u32 %v3058, %v3061
        %v3064 = vshrl.u32 %v2542, 16
        %v3066 = vrot.slane %v3064, 3
        %v3067 = vshll.u32 %v2542, 16
        %v3069 = vrot.slane %v3067, 4
        %v3070 = vor.u32 %v3066, %v3069
        %v3071 = vsel %vm2555, %v3062, %v3070
        %v3073 = vshrl.u32 %v2058, 16
        %v3075 = vrot.slane %v3073, 3
        %v3076 = vshll.u32 %v2058, 16
        %v3078 = vrot.slane %v3076, 4
        %v3079 = vor.u32 %v3075, %v3078
        %v3081 = vshrl.u32 %v2059, 16
        %v3083 = vrot.slane %v3081, 3
        %v3084 = vshll.u32 %v2059, 16
        %v3086 = vrot.slane %v3084, 4
        %v3087 = vor.u32 %v3083, %v3086
        %v3088 = vsel %vm2555, %v3079, %v3087
        %v3090 = vshrl.u32 %v2113, 16
        %v3092 = vrot.slane %v3090, 3
        %v3093 = vshll.u32 %v2113, 16
        %v3095 = vrot.slane %v3093, 4
        %v3096 = vor.u32 %v3092, %v3095
        %v3097 = vsel %vm2555, %v3096, %v3096
        %v3099 = vshrl.u32 %v2175, 16
        %v3101 = vrot.slane %v3099, 3
        %v3102 = vshll.u32 %v2175, 16
        %v3104 = vrot.slane %v3102, 4
        %v3105 = vor.u32 %v3101, %v3104
        %v3107 = vshrl.u32 %v2177, 16
        %v3109 = vrot.slane %v3107, 3
        %v3110 = vshll.u32 %v2177, 16
        %v3112 = vrot.slane %v3110, 4
        %v3113 = vor.u32 %v3109, %v3112
        %v3114 = vsel %vm2555, %v3105, %v3113
        %v3116 = vshrl.u32 %v2243, 16
        %v3118 = vrot.slane %v3116, 3
        %v3119 = vshll.u32 %v2243, 16
        %v3121 = vrot.slane %v3119, 4
        %v3122 = vor.u32 %v3118, %v3121
        %v3124 = vshrl.u32 %v2244, 16
        %v3126 = vrot.slane %v3124, 3
        %v3127 = vshll.u32 %v2244, 16
        %v3129 = vrot.slane %v3127, 4
        %v3130 = vor.u32 %v3126, %v3129
        %v3131 = vsel %vm2555, %v3122, %v3130
        %v3133 = vshrl.u32 %v2298, 16
        %v3135 = vrot.slane %v3133, 3
        %v3136 = vshll.u32 %v2298, 16
        %v3138 = vrot.slane %v3136, 4
        %v3139 = vor.u32 %v3135, %v3138
        %v3140 = vsel %vm2555, %v3139, %v3139
        %v3142 = vshrl.u32 %v2359, 16
        %v3144 = vrot.slane %v3142, 3
        %v3145 = vshll.u32 %v2359, 16
        %v3147 = vrot.slane %v3145, 4
        %v3148 = vor.u32 %v3144, %v3147
        %v3150 = vshrl.u32 %v2361, 16
        %v3152 = vrot.slane %v3150, 3
        %v3153 = vshll.u32 %v2361, 16
        %v3155 = vrot.slane %v3153, 4
        %v3156 = vor.u32 %v3152, %v3155
        %v3157 = vsel %vm2555, %v3148, %v3156
        %v3159 = vshrl.u32 %v2427, 16
        %v3161 = vrot.slane %v3159, 3
        %v3162 = vshll.u32 %v2427, 16
        %v3164 = vrot.slane %v3162, 4
        %v3165 = vor.u32 %v3161, %v3164
        %v3167 = vshrl.u32 %v2428, 16
        %v3169 = vrot.slane %v3167, 3
        %v3170 = vshll.u32 %v2428, 16
        %v3172 = vrot.slane %v3170, 4
        %v3173 = vor.u32 %v3169, %v3172
        %v3174 = vsel %vm2555, %v3165, %v3173
        %v3176 = vshrl.u32 %v2482, 16
        %v3178 = vrot.slane %v3176, 3
        %v3179 = vshll.u32 %v2482, 16
        %v3181 = vrot.slane %v3179, 4
        %v3182 = vor.u32 %v3178, %v3181
        %v3183 = vsel %vm2555, %v3182, %v3182
        %v3185 = vshrl.u32 %v2543, 16
        %v3187 = vrot.slane %v3185, 3
        %v3188 = vshll.u32 %v2543, 16
        %v3190 = vrot.slane %v3188, 4
        %v3191 = vor.u32 %v3187, %v3190
        %v3193 = vshrl.u32 %v2545, 16
        %v3195 = vrot.slane %v3193, 3
        %v3196 = vshll.u32 %v2545, 16
        %v3198 = vrot.slane %v3196, 4
        %v3199 = vor.u32 %v3195, %v3198
        %v3200 = vsel %vm2555, %v3191, %v3199
        %v3202 = vshrl.u32 %v2060, 16
        %v3204 = vrot.slane %v3202, 3
        %v3205 = vshll.u32 %v2060, 16
        %v3207 = vrot.slane %v3205, 4
        %v3208 = vor.u32 %v3204, %v3207
        %v3210 = vshrl.u32 %v2061, 16
        %v3212 = vrot.slane %v3210, 3
        %v3213 = vshll.u32 %v2061, 16
        %v3215 = vrot.slane %v3213, 4
        %v3216 = vor.u32 %v3212, %v3215
        %v3217 = vsel %vm2555, %v3208, %v3216
        %v3219 = vshrl.u32 %v2121, 16
        %v3221 = vrot.slane %v3219, 3
        %v3222 = vshll.u32 %v2121, 16
        %v3224 = vrot.slane %v3222, 4
        %v3225 = vor.u32 %v3221, %v3224
        %v3226 = vsel %vm2555, %v3225, %v3225
        %v3228 = vshrl.u32 %v2178, 16
        %v3230 = vrot.slane %v3228, 3
        %v3231 = vshll.u32 %v2178, 16
        %v3233 = vrot.slane %v3231, 4
        %v3234 = vor.u32 %v3230, %v3233
        %v3236 = vshrl.u32 %v2180, 16
        %v3238 = vrot.slane %v3236, 3
        %v3239 = vshll.u32 %v2180, 16
        %v3241 = vrot.slane %v3239, 4
        %v3242 = vor.u32 %v3238, %v3241
        %v3243 = vsel %vm2555, %v3234, %v3242
        %v3245 = vshrl.u32 %v2245, 16
        %v3247 = vrot.slane %v3245, 3
        %v3248 = vshll.u32 %v2245, 16
        %v3250 = vrot.slane %v3248, 4
        %v3251 = vor.u32 %v3247, %v3250
        %v3253 = vshrl.u32 %v2246, 16
        %v3255 = vrot.slane %v3253, 3
        %v3256 = vshll.u32 %v2246, 16
        %v3258 = vrot.slane %v3256, 4
        %v3259 = vor.u32 %v3255, %v3258
        %v3260 = vsel %vm2555, %v3251, %v3259
        %v3262 = vshrl.u32 %v2306, 16
        %v3264 = vrot.slane %v3262, 3
        %v3265 = vshll.u32 %v2306, 16
        %v3267 = vrot.slane %v3265, 4
        %v3268 = vor.u32 %v3264, %v3267
        %v3269 = vsel %vm2555, %v3268, %v3268
        %v3271 = vshrl.u32 %v2362, 16
        %v3273 = vrot.slane %v3271, 3
        %v3274 = vshll.u32 %v2362, 16
        %v3276 = vrot.slane %v3274, 4
        %v3277 = vor.u32 %v3273, %v3276
        %v3279 = vshrl.u32 %v2364, 16
        %v3281 = vrot.slane %v3279, 3
        %v3282 = vshll.u32 %v2364, 16
        %v3284 = vrot.slane %v3282, 4
        %v3285 = vor.u32 %v3281, %v3284
        %v3286 = vsel %vm2555, %v3277, %v3285
        %v3288 = vshrl.u32 %v2429, 16
        %v3290 = vrot.slane %v3288, 3
        %v3291 = vshll.u32 %v2429, 16
        %v3293 = vrot.slane %v3291, 4
        %v3294 = vor.u32 %v3290, %v3293
        %v3296 = vshrl.u32 %v2430, 16
        %v3298 = vrot.slane %v3296, 3
        %v3299 = vshll.u32 %v2430, 16
        %v3301 = vrot.slane %v3299, 4
        %v3302 = vor.u32 %v3298, %v3301
        %v3303 = vsel %vm2555, %v3294, %v3302
        %v3305 = vshrl.u32 %v2490, 16
        %v3307 = vrot.slane %v3305, 3
        %v3308 = vshll.u32 %v2490, 16
        %v3310 = vrot.slane %v3308, 4
        %v3311 = vor.u32 %v3307, %v3310
        %v3312 = vsel %vm2555, %v3311, %v3311
        %v3314 = vshrl.u32 %v2546, 16
        %v3316 = vrot.slane %v3314, 3
        %v3317 = vshll.u32 %v2546, 16
        %v3319 = vrot.slane %v3317, 4
        %v3320 = vor.u32 %v3316, %v3319
        %v3322 = vshrl.u32 %v2548, 16
        %v3324 = vrot.slane %v3322, 3
        %v3325 = vshll.u32 %v2548, 16
        %v3327 = vrot.slane %v3325, 4
        %v3328 = vor.u32 %v3324, %v3327
        %v3329 = vsel %vm2555, %v3320, %v3328
        %v3331 = vshrl.u32 %v2062, 16
        %v3333 = vrot.slane %v3331, 3
        %v3334 = vshll.u32 %v2062, 16
        %v3336 = vrot.slane %v3334, 4
        %v3337 = vor.u32 %v3333, %v3336
        %v3339 = vshrl.u32 %v2063, 16
        %v3341 = vrot.slane %v3339, 3
        %v3342 = vshll.u32 %v2063, 16
        %v3344 = vrot.slane %v3342, 4
        %v3345 = vor.u32 %v3341, %v3344
        %v3346 = vsel %vm2555, %v3337, %v3345
        %v3348 = vshrl.u32 %v2129, 16
        %v3350 = vrot.slane %v3348, 3
        %v3351 = vshll.u32 %v2129, 16
        %v3353 = vrot.slane %v3351, 4
        %v3354 = vor.u32 %v3350, %v3353
        %v3355 = vsel %vm2555, %v3354, %v3354
        %v3357 = vshrl.u32 %v2181, 16
        %v3359 = vrot.slane %v3357, 3
        %v3360 = vshll.u32 %v2181, 16
        %v3362 = vrot.slane %v3360, 4
        %v3363 = vor.u32 %v3359, %v3362
        %v3365 = vshrl.u32 %v2183, 16
        %v3367 = vrot.slane %v3365, 3
        %v3368 = vshll.u32 %v2183, 16
        %v3370 = vrot.slane %v3368, 4
        %v3371 = vor.u32 %v3367, %v3370
        %v3372 = vsel %vm2555, %v3363, %v3371
        %v3374 = vshrl.u32 %v2247, 16
        %v3376 = vrot.slane %v3374, 3
        %v3377 = vshll.u32 %v2247, 16
        %v3379 = vrot.slane %v3377, 4
        %v3380 = vor.u32 %v3376, %v3379
        %v3382 = vshrl.u32 %v2248, 16
        %v3384 = vrot.slane %v3382, 3
        %v3385 = vshll.u32 %v2248, 16
        %v3387 = vrot.slane %v3385, 4
        %v3388 = vor.u32 %v3384, %v3387
        %v3389 = vsel %vm2555, %v3380, %v3388
        %v3391 = vshrl.u32 %v2314, 16
        %v3393 = vrot.slane %v3391, 3
        %v3394 = vshll.u32 %v2314, 16
        %v3396 = vrot.slane %v3394, 4
        %v3397 = vor.u32 %v3393, %v3396
        %v3398 = vsel %vm2555, %v3397, %v3397
        %v3400 = vshrl.u32 %v2365, 16
        %v3402 = vrot.slane %v3400, 3
        %v3403 = vshll.u32 %v2365, 16
        %v3405 = vrot.slane %v3403, 4
        %v3406 = vor.u32 %v3402, %v3405
        %v3408 = vshrl.u32 %v2367, 16
        %v3410 = vrot.slane %v3408, 3
        %v3411 = vshll.u32 %v2367, 16
        %v3413 = vrot.slane %v3411, 4
        %v3414 = vor.u32 %v3410, %v3413
        %v3415 = vsel %vm2555, %v3406, %v3414
        %v3417 = vshrl.u32 %v2431, 16
        %v3419 = vrot.slane %v3417, 3
        %v3420 = vshll.u32 %v2431, 16
        %v3422 = vrot.slane %v3420, 4
        %v3423 = vor.u32 %v3419, %v3422
        %v3425 = vshrl.u32 %v2432, 16
        %v3427 = vrot.slane %v3425, 3
        %v3428 = vshll.u32 %v2432, 16
        %v3430 = vrot.slane %v3428, 4
        %v3431 = vor.u32 %v3427, %v3430
        %v3432 = vsel %vm2555, %v3423, %v3431
        %v3434 = vshrl.u32 %v2498, 16
        %v3436 = vrot.slane %v3434, 3
        %v3437 = vshll.u32 %v2498, 16
        %v3439 = vrot.slane %v3437, 4
        %v3440 = vor.u32 %v3436, %v3439
        %v3441 = vsel %vm2555, %v3440, %v3440
        %v3443 = vshrl.u32 %v2549, 16
        %v3445 = vrot.slane %v3443, 3
        %v3446 = vshll.u32 %v2549, 16
        %v3448 = vrot.slane %v3446, 4
        %v3449 = vor.u32 %v3445, %v3448
        %v3451 = vshrl.u32 %v2551, 16
        %v3453 = vrot.slane %v3451, 3
        %v3454 = vshll.u32 %v2551, 16
        %v3456 = vrot.slane %v3454, 4
        %v3457 = vor.u32 %v3453, %v3456
        %v3458 = vsel %vm2555, %v3449, %v3457
        %v3460 = vshrl.u32 %v2064, 16
        %v3462 = vrot.slane %v3460, 3
        %v3463 = vshll.u32 %v2064, 16
        %v3465 = vrot.slane %v3463, 4
        %v3466 = vor.u32 %v3462, %v3465
        %v3468 = vshrl.u32 %v2065, 16
        %v3470 = vrot.slane %v3468, 3
        %v3471 = vshll.u32 %v2065, 16
        %v3473 = vrot.slane %v3471, 4
        %v3474 = vor.u32 %v3470, %v3473
        %v3475 = vsel %vm2555, %v3466, %v3474
        %v3477 = vshrl.u32 %v2137, 16
        %v3479 = vrot.slane %v3477, 3
        %v3480 = vshll.u32 %v2137, 16
        %v3482 = vrot.slane %v3480, 4
        %v3483 = vor.u32 %v3479, %v3482
        %v3484 = vsel %vm2555, %v3483, %v3483
        %v3486 = vshrl.u32 %v2184, 16
        %v3488 = vrot.slane %v3486, 3
        %v3489 = vshll.u32 %v2184, 16
        %v3491 = vrot.slane %v3489, 4
        %v3492 = vor.u32 %v3488, %v3491
        %v3494 = vshrl.u32 %v2186, 16
        %v3496 = vrot.slane %v3494, 3
        %v3497 = vshll.u32 %v2186, 16
        %v3499 = vrot.slane %v3497, 4
        %v3500 = vor.u32 %v3496, %v3499
        %v3501 = vsel %vm2555, %v3492, %v3500
        %v3503 = vshrl.u32 %v2249, 16
        %v3505 = vrot.slane %v3503, 3
        %v3506 = vshll.u32 %v2249, 16
        %v3508 = vrot.slane %v3506, 4
        %v3509 = vor.u32 %v3505, %v3508
        %v3511 = vshrl.u32 %v2250, 16
        %v3513 = vrot.slane %v3511, 3
        %v3514 = vshll.u32 %v2250, 16
        %v3516 = vrot.slane %v3514, 4
        %v3517 = vor.u32 %v3513, %v3516
        %v3518 = vsel %vm2555, %v3509, %v3517
        %v3520 = vshrl.u32 %v2322, 16
        %v3522 = vrot.slane %v3520, 3
        %v3523 = vshll.u32 %v2322, 16
        %v3525 = vrot.slane %v3523, 4
        %v3526 = vor.u32 %v3522, %v3525
        %v3527 = vsel %vm2555, %v3526, %v3526
        %v3529 = vshrl.u32 %v2368, 16
        %v3531 = vrot.slane %v3529, 3
        %v3532 = vshll.u32 %v2368, 16
        %v3534 = vrot.slane %v3532, 4
        %v3535 = vor.u32 %v3531, %v3534
        %v3537 = vshrl.u32 %v2370, 16
        %v3539 = vrot.slane %v3537, 3
        %v3540 = vshll.u32 %v2370, 16
        %v3542 = vrot.slane %v3540, 4
        %v3543 = vor.u32 %v3539, %v3542
        %v3544 = vsel %vm2555, %v3535, %v3543
        %v3546 = vshrl.u32 %v2433, 16
        %v3548 = vrot.slane %v3546, 3
        %v3549 = vshll.u32 %v2433, 16
        %v3551 = vrot.slane %v3549, 4
        %v3552 = vor.u32 %v3548, %v3551
        %v3554 = vshrl.u32 %v2434, 16
        %v3556 = vrot.slane %v3554, 3
        %v3557 = vshll.u32 %v2434, 16
        %v3559 = vrot.slane %v3557, 4
        %v3560 = vor.u32 %v3556, %v3559
        %v3561 = vsel %vm2555, %v3552, %v3560
        %v3563 = vshrl.u32 %v2506, 16
        %v3565 = vrot.slane %v3563, 3
        %v3566 = vshll.u32 %v2506, 16
        %v3568 = vrot.slane %v3566, 4
        %v3569 = vor.u32 %v3565, %v3568
        %v3570 = vsel %vm2555, %v3569, %v3569
        %v3572 = vshrl.u32 %v2552, 16
        %v3574 = vrot.slane %v3572, 3
        %v3575 = vshll.u32 %v2552, 16
        %v3577 = vrot.slane %v3575, 4
        %v3578 = vor.u32 %v3574, %v3577
        %v3580 = vshrl.u32 %v2554, 16
        %v3582 = vrot.slane %v3580, 3
        %v3583 = vshll.u32 %v2554, 16
        %v3585 = vrot.slane %v3583, 4
        %v3586 = vor.u32 %v3582, %v3585
        %v3587 = vsel %vm2555, %v3578, %v3586
        %v3660 = vld [vmem:[%s3] sm:$0xf]
        %v3661 = vld [vmem:[%s3 + $0x4] sm:$0xf]
        %v3662 = vld [vmem:[%s3 + $0x8] sm:$0xf]
        %v3663 = vld [vmem:[%s3 + $0xc] sm:$0xf]
        %v3664 = vld [vmem:[%s3 + $0x10] sm:$0xf]
        %v3665 = vld [vmem:[%s3 + $0x14] sm:$0xf]
        %v3666 = vld [vmem:[%s3 + $0x18] sm:$0xf]
        %v3667 = vld [vmem:[%s3 + $0x1c] sm:$0xf]
        %v3668 = vld [vmem:[%s3 + $0x20] sm:$0xf]
        %v3669 = vld [vmem:[%s3 + $0x24] sm:$0xf]
        %v3670 = vld [vmem:[%s3 + $0x28] sm:$0xf]
        %v3671 = vld [vmem:[%s3 + $0x2c] sm:$0xf]
        %v3672 = vld [vmem:[%s3 + $0x30] sm:$0xf]
        %v3673 = vld [vmem:[%s3 + $0x34] sm:$0xf]
        %v3674 = vld [vmem:[%s3 + $0x38] sm:$0xf]
        %v3675 = vld [vmem:[%s3 + $0x3c] sm:$0xf]
        %v3676 = vld [vmem:[%s3 + $0x40] sm:$0xf]
        %v3677 = vld [vmem:[%s3 + $0x44] sm:$0xf]
        %v3678 = vld [vmem:[%s3 + $0x48] sm:$0xf]
        %v3679 = vld [vmem:[%s3 + $0x4c] sm:$0xf]
        %v3680 = vld [vmem:[%s3 + $0x50] sm:$0xf]
        %v3681 = vld [vmem:[%s3 + $0x54] sm:$0xf]
        %v3682 = vld [vmem:[%s3 + $0x58] sm:$0xf]
        %v3683 = vld [vmem:[%s3 + $0x5c] sm:$0xf]
        %v3684 = vld [vmem:[%s3 + $0x60] sm:$0xf]
        %v3685 = vld [vmem:[%s3 + $0x64] sm:$0xf]
        %v3686 = vld [vmem:[%s3 + $0x68] sm:$0xf]
        %v3687 = vld [vmem:[%s3 + $0x6c] sm:$0xf]
        %v3688 = vld [vmem:[%s3 + $0x70] sm:$0xf]
        %v3689 = vld [vmem:[%s3 + $0x74] sm:$0xf]
        %v3690 = vld [vmem:[%s3 + $0x78] sm:$0xf]
        %v3691 = vld [vmem:[%s3 + $0x7c] sm:$0xf]
        %v3692 = vld [vmem:[%s3 + $0x80] sm:$0xf]
        %v3693 = vld [vmem:[%s3 + $0x84] sm:$0xf]
        %v3694 = vld [vmem:[%s3 + $0x88] sm:$0xf]
        %v3695 = vld [vmem:[%s3 + $0x8c] sm:$0xf]
        %v3696 = vld [vmem:[%s3 + $0x90] sm:$0xf]
        %v3697 = vld [vmem:[%s3 + $0x94] sm:$0xf]
        %v3698 = vld [vmem:[%s3 + $0x98] sm:$0xf]
        %v3699 = vld [vmem:[%s3 + $0x9c] sm:$0xf]
        %v3700 = vld [vmem:[%s3 + $0xa0] sm:$0xf]
        %v3701 = vld [vmem:[%s3 + $0xa4] sm:$0xf]
        %v3702 = vld [vmem:[%s3 + $0xa8] sm:$0xf]
        %v3703 = vld [vmem:[%s3 + $0xac] sm:$0xf]
        %v3704 = vld [vmem:[%s3 + $0xb0] sm:$0xf]
        %v3705 = vld [vmem:[%s3 + $0xb4] sm:$0xf]
        %v3706 = vld [vmem:[%s3 + $0xb8] sm:$0xf]
        %v3707 = vld [vmem:[%s3 + $0xbc] sm:$0xf]
        %v3708 = vld [vmem:[%s3 + $0xc0] sm:$0xf]
        %v3709 = vld [vmem:[%s3 + $0xc4] sm:$0xf]
        %v3710 = vld [vmem:[%s3 + $0xc8] sm:$0xf]
        %v3711 = vld [vmem:[%s3 + $0xcc] sm:$0xf]
        %v3712 = vld [vmem:[%s3 + $0xd0] sm:$0xf]
        %v3713 = vld [vmem:[%s3 + $0xd4] sm:$0xf]
        %v3714 = vld [vmem:[%s3 + $0xd8] sm:$0xf]
        %v3715 = vld [vmem:[%s3 + $0xdc] sm:$0xf]
        %v3716 = vld [vmem:[%s3 + $0xe0] sm:$0xf]
        %v3717 = vld [vmem:[%s3 + $0xe4] sm:$0xf]
        %v3718 = vld [vmem:[%s3 + $0xe8] sm:$0xf]
        %v3719 = vld [vmem:[%s3 + $0xec] sm:$0xf]
        %v3720 = vld [vmem:[%s3 + $0xf0] sm:$0xf]
        %v3721 = vld [vmem:[%s3 + $0xf4] sm:$0xf]
        %v3722 = vld [vmem:[%s3 + $0xf8] sm:$0xf]
        %v3723 = vld [vmem:[%s3 + $0xfc] sm:$0xf]
        %v3724 = vld [vmem:[%s3 + $0x100] sm:$0xf]
        %v3725 = vld [vmem:[%s3 + $0x104] sm:$0xf]
        %v3726 = vld [vmem:[%s3 + $0x108] sm:$0xf]
        %v3727 = vld [vmem:[%s3 + $0x10c] sm:$0xf]
        %v3728 = vld [vmem:[%s3 + $0x110] sm:$0xf]
        %v3729 = vld [vmem:[%s3 + $0x114] sm:$0xf]
        %v3730 = vld [vmem:[%s3 + $0x118] sm:$0xf]
        %v3731 = vld [vmem:[%s3 + $0x11c] sm:$0xf]
        %v3732 = vld [vmem:[%s3 + $0x120] sm:$0xf]
        %v3733 = vld [vmem:[%s3 + $0x124] sm:$0xf]
        %v3734 = vld [vmem:[%s3 + $0x128] sm:$0xf]
        %v3735 = vld [vmem:[%s3 + $0x12c] sm:$0xf]
        %v3736 = vld [vmem:[%s3 + $0x130] sm:$0xf]
        %v3737 = vld [vmem:[%s3 + $0x134] sm:$0xf]
        %v3738 = vld [vmem:[%s3 + $0x138] sm:$0xf]
        %v3739 = vld [vmem:[%s3 + $0x13c] sm:$0xf]
        %v3740 = vld [vmem:[%s3 + $0x140] sm:$0xf]
        %v3741 = vld [vmem:[%s3 + $0x144] sm:$0xf]
        %v3742 = vld [vmem:[%s3 + $0x148] sm:$0xf]
        %v3743 = vld [vmem:[%s3 + $0x14c] sm:$0xf]
        %v3744 = vld [vmem:[%s3 + $0x150] sm:$0xf]
        %v3745 = vld [vmem:[%s3 + $0x154] sm:$0xf]
        %v3746 = vld [vmem:[%s3 + $0x158] sm:$0xf]
        %v3747 = vld [vmem:[%s3 + $0x15c] sm:$0xf]
        %v3748 = vld [vmem:[%s3 + $0x160] sm:$0xf]
        %v3749 = vld [vmem:[%s3 + $0x164] sm:$0xf]
        %v3750 = vld [vmem:[%s3 + $0x168] sm:$0xf]
        %v3751 = vld [vmem:[%s3 + $0x16c] sm:$0xf]
        %v3752 = vld [vmem:[%s3 + $0x170] sm:$0xf]
        %v3753 = vld [vmem:[%s3 + $0x174] sm:$0xf]
        %v3754 = vld [vmem:[%s3 + $0x178] sm:$0xf]
        %v3755 = vld [vmem:[%s3 + $0x17c] sm:$0xf]
        %v3756 = vld [vmem:[%s3 + $0x180] sm:$0xf]
        %v3757 = vld [vmem:[%s3 + $0x184] sm:$0xf]
        %v3758 = vld [vmem:[%s3 + $0x188] sm:$0xf]
        %v3759 = vld [vmem:[%s3 + $0x18c] sm:$0xf]
        %v3760 = vld [vmem:[%s3 + $0x190] sm:$0xf]
        %v3761 = vld [vmem:[%s3 + $0x194] sm:$0xf]
        %v3762 = vld [vmem:[%s3 + $0x198] sm:$0xf]
        %v3763 = vld [vmem:[%s3 + $0x19c] sm:$0xf]
        %v3764 = vld [vmem:[%s3 + $0x1a0] sm:$0xf]
        %v3765 = vld [vmem:[%s3 + $0x1a4] sm:$0xf]
        %v3766 = vld [vmem:[%s3 + $0x1a8] sm:$0xf]
        %v3767 = vld [vmem:[%s3 + $0x1ac] sm:$0xf]
        %v3768 = vld [vmem:[%s3 + $0x1b0] sm:$0xf]
        %v3769 = vld [vmem:[%s3 + $0x1b4] sm:$0xf]
        %v3770 = vld [vmem:[%s3 + $0x1b8] sm:$0xf]
        %v3771 = vld [vmem:[%s3 + $0x1bc] sm:$0xf]
        %v3772 = vld [vmem:[%s3 + $0x1c0] sm:$0xf]
        %v3773 = vld [vmem:[%s3 + $0x1c4] sm:$0xf]
        %v3774 = vld [vmem:[%s3 + $0x1c8] sm:$0xf]
        %v3775 = vld [vmem:[%s3 + $0x1cc] sm:$0xf]
        %v3776 = vld [vmem:[%s3 + $0x1d0] sm:$0xf]
        %v3777 = vld [vmem:[%s3 + $0x1d4] sm:$0xf]
        %v3778 = vld [vmem:[%s3 + $0x1d8] sm:$0xf]
        %v3779 = vld [vmem:[%s3 + $0x1dc] sm:$0xf]
        %v3780 = vld [vmem:[%s3 + $0x1e0] sm:$0xf]
        %v3781 = vld [vmem:[%s3 + $0x1e4] sm:$0xf]
        %v3782 = vld [vmem:[%s3 + $0x1e8] sm:$0xf]
        %v3783 = vld [vmem:[%s3 + $0x1ec] sm:$0xf]
        %v3784 = vld [vmem:[%s3 + $0x1f0] sm:$0xf]
        %v3785 = vld [vmem:[%s3 + $0x1f4] sm:$0xf]
        %v3786 = vld [vmem:[%s3 + $0x1f8] sm:$0xf]
        %v3787 = vld [vmem:[%s3 + $0x1fc] sm:$0xf]
        %v3788 = vld [vmem:[%s3 + $0x200] sm:$0xf]
        %v3789 = vld [vmem:[%s3 + $0x204] sm:$0xf]
        %v3790 = vld [vmem:[%s3 + $0x208] sm:$0xf]
        %v3791 = vld [vmem:[%s3 + $0x20c] sm:$0xf]
        %v3792 = vld [vmem:[%s3 + $0x210] sm:$0xf]
        %v3793 = vld [vmem:[%s3 + $0x214] sm:$0xf]
        %v3794 = vld [vmem:[%s3 + $0x218] sm:$0xf]
        %v3795 = vld [vmem:[%s3 + $0x21c] sm:$0xf]
        %v3796 = vld [vmem:[%s3 + $0x220] sm:$0xf]
        %v3797 = vld [vmem:[%s3 + $0x224] sm:$0xf]
        %v3798 = vld [vmem:[%s3 + $0x228] sm:$0xf]
        %v3799 = vld [vmem:[%s3 + $0x22c] sm:$0xf]
        %v3800 = vld [vmem:[%s3 + $0x230] sm:$0xf]
        %v3801 = vld [vmem:[%s3 + $0x234] sm:$0xf]
        %v3802 = vld [vmem:[%s3 + $0x238] sm:$0xf]
        %v3803 = vld [vmem:[%s3 + $0x23c] sm:$0xf]
        %v3804 = vld [vmem:[%s4] sm:$0x1]
        %v3806 = vlaneseq
        %v3807 = vshrl.u32 %v3806, 7
        %v3808 = vsub.s32 0, %v3807
        %v3809 = vrot.slane %v3804, %v3808
        %v3955 = vunpack.c.l.b16 %v3660
        %v3956 = vunpack.c.l.b16 %v3661
        %v3957 = vunpack.c.l.b16 %v3662
        %v3958 = vunpack.c.l.b16 %v3663
        %v3959 = vunpack.c.l.b16 %v3664
        %v3960 = vunpack.c.l.b16 %v3665
        %v3961 = vunpack.c.l.b16 %v3666
        %v3962 = vunpack.c.l.b16 %v3667
        %v3963 = vunpack.c.l.b16 %v3668
        %v3964 = vunpack.c.l.b16 %v3669
        %v3965 = vunpack.c.l.b16 %v3670
        %v3966 = vunpack.c.l.b16 %v3671
        %v3967 = vunpack.c.l.b16 %v3672
        %v3968 = vunpack.c.l.b16 %v3673
        %v3969 = vunpack.c.l.b16 %v3674
        %v3970 = vunpack.c.l.b16 %v3675
        %v3971 = vunpack.c.l.b16 %v3676
        %v3972 = vunpack.c.l.b16 %v3677
        %v3973 = vunpack.c.l.b16 %v3678
        %v3974 = vunpack.c.l.b16 %v3679
        %v3975 = vunpack.c.l.b16 %v3680
        %v3976 = vunpack.c.l.b16 %v3681
        %v3977 = vunpack.c.l.b16 %v3682
        %v3978 = vunpack.c.l.b16 %v3683
        %v3979 = vunpack.c.l.b16 %v3684
        %v3980 = vunpack.c.l.b16 %v3685
        %v3981 = vunpack.c.l.b16 %v3686
        %v3982 = vunpack.c.l.b16 %v3687
        %v3983 = vunpack.c.l.b16 %v3688
        %v3984 = vunpack.c.l.b16 %v3689
        %v3985 = vunpack.c.l.b16 %v3690
        %v3986 = vunpack.c.l.b16 %v3691
        %v3987 = vunpack.c.l.b16 %v3692
        %v3988 = vunpack.c.l.b16 %v3693
        %v3989 = vunpack.c.l.b16 %v3694
        %v3990 = vunpack.c.l.b16 %v3695
        %v3991 = vunpack.c.l.b16 %v3696
        %v3992 = vunpack.c.l.b16 %v3697
        %v3993 = vunpack.c.l.b16 %v3698
        %v3994 = vunpack.c.l.b16 %v3699
        %v3995 = vunpack.c.l.b16 %v3700
        %v3996 = vunpack.c.l.b16 %v3701
        %v3997 = vunpack.c.l.b16 %v3702
        %v3998 = vunpack.c.l.b16 %v3703
        %v3999 = vunpack.c.l.b16 %v3704
        %v4000 = vunpack.c.l.b16 %v3705
        %v4001 = vunpack.c.l.b16 %v3706
        %v4002 = vunpack.c.l.b16 %v3707
        %v4003 = vunpack.c.l.b16 %v3708
        %v4004 = vunpack.c.l.b16 %v3709
        %v4005 = vunpack.c.l.b16 %v3710
        %v4006 = vunpack.c.l.b16 %v3711
        %v4007 = vunpack.c.l.b16 %v3712
        %v4008 = vunpack.c.l.b16 %v3713
        %v4009 = vunpack.c.l.b16 %v3714
        %v4010 = vunpack.c.l.b16 %v3715
        %v4011 = vunpack.c.l.b16 %v3716
        %v4012 = vunpack.c.l.b16 %v3717
        %v4013 = vunpack.c.l.b16 %v3718
        %v4014 = vunpack.c.l.b16 %v3719
        %v4015 = vunpack.c.l.b16 %v3720
        %v4016 = vunpack.c.l.b16 %v3721
        %v4017 = vunpack.c.l.b16 %v3722
        %v4018 = vunpack.c.l.b16 %v3723
        %v4019 = vunpack.c.l.b16 %v3724
        %v4020 = vunpack.c.l.b16 %v3725
        %v4021 = vunpack.c.l.b16 %v3726
        %v4022 = vunpack.c.l.b16 %v3727
        %v4023 = vunpack.c.l.b16 %v3728
        %v4024 = vunpack.c.l.b16 %v3729
        %v4025 = vunpack.c.l.b16 %v3730
        %v4026 = vunpack.c.l.b16 %v3731
        %v4027 = vunpack.c.l.b16 %v3732
        %v4028 = vunpack.c.l.b16 %v3733
        %v4029 = vunpack.c.l.b16 %v3734
        %v4030 = vunpack.c.l.b16 %v3735
        %v4031 = vunpack.c.l.b16 %v3736
        %v4032 = vunpack.c.l.b16 %v3737
        %v4033 = vunpack.c.l.b16 %v3738
        %v4034 = vunpack.c.l.b16 %v3739
        %v4035 = vunpack.c.l.b16 %v3740
        %v4036 = vunpack.c.l.b16 %v3741
        %v4037 = vunpack.c.l.b16 %v3742
        %v4038 = vunpack.c.l.b16 %v3743
        %v4039 = vunpack.c.l.b16 %v3744
        %v4040 = vunpack.c.l.b16 %v3745
        %v4041 = vunpack.c.l.b16 %v3746
        %v4042 = vunpack.c.l.b16 %v3747
        %v4043 = vunpack.c.l.b16 %v3748
        %v4044 = vunpack.c.l.b16 %v3749
        %v4045 = vunpack.c.l.b16 %v3750
        %v4046 = vunpack.c.l.b16 %v3751
        %v4047 = vunpack.c.l.b16 %v3752
        %v4048 = vunpack.c.l.b16 %v3753
        %v4049 = vunpack.c.l.b16 %v3754
        %v4050 = vunpack.c.l.b16 %v3755
        %v4051 = vunpack.c.l.b16 %v3756
        %v4052 = vunpack.c.l.b16 %v3757
        %v4053 = vunpack.c.l.b16 %v3758
        %v4054 = vunpack.c.l.b16 %v3759
        %v4055 = vunpack.c.l.b16 %v3760
        %v4056 = vunpack.c.l.b16 %v3761
        %v4057 = vunpack.c.l.b16 %v3762
        %v4058 = vunpack.c.l.b16 %v3763
        %v4059 = vunpack.c.l.b16 %v3764
        %v4060 = vunpack.c.l.b16 %v3765
        %v4061 = vunpack.c.l.b16 %v3766
        %v4062 = vunpack.c.l.b16 %v3767
        %v4063 = vunpack.c.l.b16 %v3768
        %v4064 = vunpack.c.l.b16 %v3769
        %v4065 = vunpack.c.l.b16 %v3770
        %v4066 = vunpack.c.l.b16 %v3771
        %v4067 = vunpack.c.l.b16 %v3772
        %v4068 = vunpack.c.l.b16 %v3773
        %v4069 = vunpack.c.l.b16 %v3774
        %v4070 = vunpack.c.l.b16 %v3775
        %v4071 = vunpack.c.l.b16 %v3776
        %v4072 = vunpack.c.l.b16 %v3777
        %v4073 = vunpack.c.l.b16 %v3778
        %v4074 = vunpack.c.l.b16 %v3779
        %v4075 = vunpack.c.l.b16 %v3780
        %v4076 = vunpack.c.l.b16 %v3781
        %v4077 = vunpack.c.l.b16 %v3782
        %v4078 = vunpack.c.l.b16 %v3783
        %v4079 = vunpack.c.l.b16 %v3784
        %v4080 = vunpack.c.l.b16 %v3785
        %v4081 = vunpack.c.l.b16 %v3786
        %v4082 = vunpack.c.l.b16 %v3787
        %v4083 = vunpack.c.l.b16 %v3788
        %v4084 = vunpack.c.l.b16 %v3789
        %v4085 = vunpack.c.l.b16 %v3790
        %v4086 = vunpack.c.l.b16 %v3791
        %v4087 = vunpack.c.l.b16 %v3792
        %v4088 = vunpack.c.l.b16 %v3793
        %v4089 = vunpack.c.l.b16 %v3794
        %v4090 = vunpack.c.l.b16 %v3795
        %v4091 = vunpack.c.l.b16 %v3796
        %v4092 = vunpack.c.l.b16 %v3797
        %v4093 = vunpack.c.l.b16 %v3798
        %v4094 = vunpack.c.l.b16 %v3799
        %v4095 = vunpack.c.l.b16 %v3800
        %v4096 = vunpack.c.l.b16 %v3801
        %v4097 = vunpack.c.l.b16 %v3802
        %v4098 = vunpack.c.l.b16 %v3803
        %v4099 = vpack.c.b16 %v3956, %v3955
        %v4100 = vpack.c.b16 %v3958, %v3957
        %v4101 = vpack.c.b16 %v3960, %v3959
        %v4102 = vpack.c.b16 %v3962, %v3961
        %v4103 = vpack.c.b16 %v3964, %v3963
        %v4104 = vpack.c.b16 %v3966, %v3965
        %v4105 = vpack.c.b16 %v3968, %v3967
        %v4106 = vpack.c.b16 %v3970, %v3969
        %v4107 = vpack.c.b16 %v3972, %v3971
        %v4108 = vpack.c.b16 %v3974, %v3973
        %v4109 = vpack.c.b16 %v3976, %v3975
        %v4110 = vpack.c.b16 %v3978, %v3977
        %v4111 = vpack.c.b16 %v3980, %v3979
        %v4112 = vpack.c.b16 %v3982, %v3981
        %v4113 = vpack.c.b16 %v3984, %v3983
        %v4114 = vpack.c.b16 %v3986, %v3985
        %v4115 = vpack.c.b16 %v3988, %v3987
        %v4116 = vpack.c.b16 %v3990, %v3989
        %v4117 = vpack.c.b16 %v3992, %v3991
        %v4118 = vpack.c.b16 %v3994, %v3993
        %v4119 = vpack.c.b16 %v3996, %v3995
        %v4120 = vpack.c.b16 %v3998, %v3997
        %v4121 = vpack.c.b16 %v4000, %v3999
        %v4122 = vpack.c.b16 %v4002, %v4001
        %v4123 = vpack.c.b16 %v4004, %v4003
        %v4124 = vpack.c.b16 %v4006, %v4005
        %v4125 = vpack.c.b16 %v4008, %v4007
        %v4126 = vpack.c.b16 %v4010, %v4009
        %v4127 = vpack.c.b16 %v4012, %v4011
        %v4128 = vpack.c.b16 %v4014, %v4013
        %v4129 = vpack.c.b16 %v4016, %v4015
        %v4130 = vpack.c.b16 %v4018, %v4017
        %v4131 = vpack.c.b16 %v4020, %v4019
        %v4132 = vpack.c.b16 %v4022, %v4021
        %v4133 = vpack.c.b16 %v4024, %v4023
        %v4134 = vpack.c.b16 %v4026, %v4025
        %v4135 = vpack.c.b16 %v4028, %v4027
        %v4136 = vpack.c.b16 %v4030, %v4029
        %v4137 = vpack.c.b16 %v4032, %v4031
        %v4138 = vpack.c.b16 %v4034, %v4033
        %v4139 = vpack.c.b16 %v4036, %v4035
        %v4140 = vpack.c.b16 %v4038, %v4037
        %v4141 = vpack.c.b16 %v4040, %v4039
        %v4142 = vpack.c.b16 %v4042, %v4041
        %v4143 = vpack.c.b16 %v4044, %v4043
        %v4144 = vpack.c.b16 %v4046, %v4045
        %v4145 = vpack.c.b16 %v4048, %v4047
        %v4146 = vpack.c.b16 %v4050, %v4049
        %v4147 = vpack.c.b16 %v4052, %v4051
        %v4148 = vpack.c.b16 %v4054, %v4053
        %v4149 = vpack.c.b16 %v4056, %v4055
        %v4150 = vpack.c.b16 %v4058, %v4057
        %v4151 = vpack.c.b16 %v4060, %v4059
        %v4152 = vpack.c.b16 %v4062, %v4061
        %v4153 = vpack.c.b16 %v4064, %v4063
        %v4154 = vpack.c.b16 %v4066, %v4065
        %v4155 = vpack.c.b16 %v4068, %v4067
        %v4156 = vpack.c.b16 %v4070, %v4069
        %v4157 = vpack.c.b16 %v4072, %v4071
        %v4158 = vpack.c.b16 %v4074, %v4073
        %v4159 = vpack.c.b16 %v4076, %v4075
        %v4160 = vpack.c.b16 %v4078, %v4077
        %v4161 = vpack.c.b16 %v4080, %v4079
        %v4162 = vpack.c.b16 %v4082, %v4081
        %v4163 = vpack.c.b16 %v4084, %v4083
        %v4164 = vpack.c.b16 %v4086, %v4085
        %v4165 = vpack.c.b16 %v4088, %v4087
        %v4166 = vpack.c.b16 %v4090, %v4089
        %v4167 = vpack.c.b16 %v4092, %v4091
        %v4168 = vpack.c.b16 %v4094, %v4093
        %v4169 = vpack.c.b16 %v4096, %v4095
        %v4170 = vpack.c.b16 %v4098, %v4097
        %4243 = vmatprep.subr.bf16.mxu0 0
        %4244 = vmatpush1.bf16.msra.mxu0 %v4099
        %4245 = vmatprep.subr.bf16.mxu0 0
        %4246 = vmatpush1.bf16.msra.mxu0 %v4100
        %4247 = vmatprep.subr.bf16.mxu0 0
        %4248 = vmatpush1.bf16.msra.mxu0 %v4101
        %4249 = vmatprep.subr.bf16.mxu0 0
        %4250 = vmatpush1.bf16.msra.mxu0 %v4102
        %4251 = vmatprep.subr.bf16.mxu0 0
        %4252 = vmatpush1.bf16.msra.mxu0 %v4103
        %4253 = vmatprep.subr.bf16.mxu0 0
        %4254 = vmatpush1.bf16.msra.mxu0 %v4104
        %4255 = vmatprep.subr.bf16.mxu0 0
        %4256 = vmatpush1.bf16.msra.mxu0 %v4105
        %4257 = vmatprep.subr.bf16.mxu0 0
        %4258 = vmatpush1.bf16.msra.mxu0 %v4106
        %4259 = vmatprep.subr.bf16.mxu0 0
        %4260 = vmatpush1.bf16.msra.mxu0 %v4107
        %4261 = vmatprep.subr.bf16.mxu0 0
        %4262 = vmatpush1.bf16.msra.mxu0 %v4108
        %4263 = vmatprep.subr.bf16.mxu0 0
        %4264 = vmatpush1.bf16.msra.mxu0 %v4109
        %4265 = vmatprep.subr.bf16.mxu0 0
        %4266 = vmatpush1.bf16.msra.mxu0 %v4110
        %4267 = vmatprep.subr.bf16.mxu0 0
        %4268 = vmatpush1.bf16.msra.mxu0 %v4111
        %4269 = vmatprep.subr.bf16.mxu0 0
        %4270 = vmatpush1.bf16.msra.mxu0 %v4112
        %4271 = vmatprep.subr.bf16.mxu0 0
        %4272 = vmatpush1.bf16.msra.mxu0 %v4113
        %4273 = vmatprep.subr.bf16.mxu0 0
        %4274 = vmatpush1.bf16.msra.mxu0 %v4114
        %4275 = vmatprep.mubr.bf16.mxu0 %v2581
        %4276 = vmatmul.mubr.bf16.gmra.mrb[0].mxu0 %v2572
        %v4277 = vpop.f32.mrb[0].mxu0
        %v4278 = vadd.f32 %v3809, %v4277
        %v4279 = vpop.f32.mrb[0].mxu0
        %v4280 = vpop.f32.mrb[0].mxu0
        %v4281 = vadd.f32 %v3809, %v4280
        %v4282 = vpop.f32.mrb[0].mxu0
        %4283 = vmatprep.mubr.bf16.mxu0 %v2710
        %4284 = vmatmul.mubr.bf16.gmra.mrb[0].mxu0 %v2701
        %v4285 = vpop.f32.mrb[0].mxu0
        %v4286 = vadd.f32 %v3809, %v4285
        %v4287 = vpop.f32.mrb[0].mxu0
        %v4288 = vpop.f32.mrb[0].mxu0
        %v4289 = vadd.f32 %v3809, %v4288
        %v4290 = vpop.f32.mrb[0].mxu0
        %4291 = vmatprep.mubr.bf16.mxu0 %v2839
        %4292 = vmatmul.mubr.bf16.gmra.mrb[0].mxu0 %v2830
        %v4293 = vpop.f32.mrb[0].mxu0
        %v4294 = vadd.f32 %v3809, %v4293
        %v4295 = vpop.f32.mrb[0].mxu0
        %v4296 = vpop.f32.mrb[0].mxu0
        %v4297 = vadd.f32 %v3809, %v4296
        %v4298 = vpop.f32.mrb[0].mxu0
        %4299 = vmatprep.mubr.bf16.mxu0 %v2968
        %4300 = vmatmul.mubr.bf16.gmra.mrb[0].mxu0 %v2959
        %v4301 = vpop.f32.mrb[0].mxu0
        %v4302 = vadd.f32 %v3809, %v4301
        %v4303 = vpop.f32.mrb[0].mxu0
        %v4304 = vpop.f32.mrb[0].mxu0
        %v4305 = vadd.f32 %v3809, %v4304
        %v4306 = vpop.f32.mrb[0].mxu0
        %4307 = vmatprep.mubr.bf16.mxu0 %v3097
        %4308 = vmatmul.mubr.bf16.gmra.mrb[0].mxu0 %v3088
        %v4309 = vpop.f32.mrb[0].mxu0
        %v4310 = vadd.f32 %v3809, %v4309
        %v4311 = vpop.f32.mrb[0].mxu0
        %v4312 = vpop.f32.mrb[0].mxu0
        %v4313 = vadd.f32 %v3809, %v4312
        %v4314 = vpop.f32.mrb[0].mxu0
        %4315 = vmatprep.mubr.bf16.mxu0 %v3226
        %4316 = vmatmul.mubr.bf16.gmra.mrb[0].mxu0 %v3217
        %v4317 = vpop.f32.mrb[0].mxu0
        %v4318 = vadd.f32 %v3809, %v4317
        %v4319 = vpop.f32.mrb[0].mxu0
        %v4320 = vpop.f32.mrb[0].mxu0
        %v4321 = vadd.f32 %v3809, %v4320
        %v4322 = vpop.f32.mrb[0].mxu0
        %4323 = vmatprep.mubr.bf16.mxu0 %v3355
        %4324 = vmatmul.mubr.bf16.gmra.mrb[0].mxu0 %v3346
        %v4325 = vpop.f32.mrb[0].mxu0
        %v4326 = vadd.f32 %v3809, %v4325
        %v4327 = vpop.f32.mrb[0].mxu0
        %v4328 = vpop.f32.mrb[0].mxu0
        %v4329 = vadd.f32 %v3809, %v4328
        %v4330 = vpop.f32.mrb[0].mxu0
        %4331 = vmatprep.mubr.bf16.mxu0 %v3484
        %4332 = vmatmul.mubr.bf16.gmra.mrb[0].mxu0 %v3475
        %v4333 = vpop.f32.mrb[0].mxu0
        %v4334 = vadd.f32 %v3809, %v4333
        %v4335 = vpop.f32.mrb[0].mxu0
        %v4336 = vpop.f32.mrb[0].mxu0
        %v4337 = vadd.f32 %v3809, %v4336
        %v4338 = vpop.f32.mrb[0].mxu0
        %4339 = vdwg.mxu0
        %4340 = vmatprep.subr.bf16.mxu0 0
        %4341 = vmatpush1.bf16.msra.mxu0 %v4115
        %4342 = vmatprep.subr.bf16.mxu0 0
        %4343 = vmatpush1.bf16.msra.mxu0 %v4116
        %4344 = vmatprep.subr.bf16.mxu0 0
        %4345 = vmatpush1.bf16.msra.mxu0 %v4117
        %4346 = vmatprep.subr.bf16.mxu0 0
        %4347 = vmatpush1.bf16.msra.mxu0 %v4118
        %4348 = vmatprep.subr.bf16.mxu0 0
        %4349 = vmatpush1.bf16.msra.mxu0 %v4119
        %4350 = vmatprep.subr.bf16.mxu0 0
        %4351 = vmatpush1.bf16.msra.mxu0 %v4120
        %4352 = vmatprep.subr.bf16.mxu0 0
        %4353 = vmatpush1.bf16.msra.mxu0 %v4121
        %4354 = vmatprep.subr.bf16.mxu0 0
        %4355 = vmatpush1.bf16.msra.mxu0 %v4122
        %4356 = vmatprep.subr.bf16.mxu0 0
        %4357 = vmatpush1.bf16.msra.mxu0 %v4123
        %4358 = vmatprep.subr.bf16.mxu0 0
        %4359 = vmatpush1.bf16.msra.mxu0 %v4124
        %4360 = vmatprep.subr.bf16.mxu0 0
        %4361 = vmatpush1.bf16.msra.mxu0 %v4125
        %4362 = vmatprep.subr.bf16.mxu0 0
        %4363 = vmatpush1.bf16.msra.mxu0 %v4126
        %4364 = vmatprep.subr.bf16.mxu0 0
        %4365 = vmatpush1.bf16.msra.mxu0 %v4127
        %4366 = vmatprep.subr.bf16.mxu0 0
        %4367 = vmatpush1.bf16.msra.mxu0 %v4128
        %4368 = vmatprep.subr.bf16.mxu0 0
        %4369 = vmatpush1.bf16.msra.mxu0 %v4129
        %4370 = vmatprep.subr.bf16.mxu0 0
        %4371 = vmatpush1.bf16.msra.mxu0 %v4130
        %4372 = vmatprep.mubr.bf16.mxu0 %v2615
        %4373 = vmatmul.mubr.bf16.gmra.mrb[0].mxu0 %v2598
        %v4374 = vpop.f32.mrb[0].mxu0
        %v4375 = vadd.f32 %v4278, %v4374
        %v4376 = vpop.f32.mrb[0].mxu0
        %v4377 = vpop.f32.mrb[0].mxu0
        %v4378 = vadd.f32 %v4281, %v4377
        %v4379 = vpop.f32.mrb[0].mxu0
        %4380 = vmatprep.mubr.bf16.mxu0 %v2744
        %4381 = vmatmul.mubr.bf16.gmra.mrb[0].mxu0 %v2727
        %v4382 = vpop.f32.mrb[0].mxu0
        %v4383 = vadd.f32 %v4286, %v4382
        %v4384 = vpop.f32.mrb[0].mxu0
        %v4385 = vpop.f32.mrb[0].mxu0
        %v4386 = vadd.f32 %v4289, %v4385
        %v4387 = vpop.f32.mrb[0].mxu0
        %4388 = vmatprep.mubr.bf16.mxu0 %v2873
        %4389 = vmatmul.mubr.bf16.gmra.mrb[0].mxu0 %v2856
        %v4390 = vpop.f32.mrb[0].mxu0
        %v4391 = vadd.f32 %v4294, %v4390
        %v4392 = vpop.f32.mrb[0].mxu0
        %v4393 = vpop.f32.mrb[0].mxu0
        %v4394 = vadd.f32 %v4297, %v4393
        %v4395 = vpop.f32.mrb[0].mxu0
        %4396 = vmatprep.mubr.bf16.mxu0 %v3002
        %4397 = vmatmul.mubr.bf16.gmra.mrb[0].mxu0 %v2985
        %v4398 = vpop.f32.mrb[0].mxu0
        %v4399 = vadd.f32 %v4302, %v4398
        %v4400 = vpop.f32.mrb[0].mxu0
        %v4401 = vpop.f32.mrb[0].mxu0
        %v4402 = vadd.f32 %v4305, %v4401
        %v4403 = vpop.f32.mrb[0].mxu0
        %4404 = vmatprep.mubr.bf16.mxu0 %v3131
        %4405 = vmatmul.mubr.bf16.gmra.mrb[0].mxu0 %v3114
        %v4406 = vpop.f32.mrb[0].mxu0
        %v4407 = vadd.f32 %v4310, %v4406
        %v4408 = vpop.f32.mrb[0].mxu0
        %v4409 = vpop.f32.mrb[0].mxu0
        %v4410 = vadd.f32 %v4313, %v4409
        %v4411 = vpop.f32.mrb[0].mxu0
        %4412 = vmatprep.mubr.bf16.mxu0 %v3260
        %4413 = vmatmul.mubr.bf16.gmra.mrb[0].mxu0 %v3243
        %v4414 = vpop.f32.mrb[0].mxu0
        %v4415 = vadd.f32 %v4318, %v4414
        %v4416 = vpop.f32.mrb[0].mxu0
        %v4417 = vpop.f32.mrb[0].mxu0
        %v4418 = vadd.f32 %v4321, %v4417
        %v4419 = vpop.f32.mrb[0].mxu0
        %4420 = vmatprep.mubr.bf16.mxu0 %v3389
        %4421 = vmatmul.mubr.bf16.gmra.mrb[0].mxu0 %v3372
        %v4422 = vpop.f32.mrb[0].mxu0
        %v4423 = vadd.f32 %v4326, %v4422
        %v4424 = vpop.f32.mrb[0].mxu0
        %v4425 = vpop.f32.mrb[0].mxu0
        %v4426 = vadd.f32 %v4329, %v4425
        %v4427 = vpop.f32.mrb[0].mxu0
        %4428 = vmatprep.mubr.bf16.mxu0 %v3518
        %4429 = vmatmul.mubr.bf16.gmra.mrb[0].mxu0 %v3501
        %v4430 = vpop.f32.mrb[0].mxu0
        %v4431 = vadd.f32 %v4334, %v4430
        %v4432 = vpop.f32.mrb[0].mxu0
        %v4433 = vpop.f32.mrb[0].mxu0
        %v4434 = vadd.f32 %v4337, %v4433
        %v4435 = vpop.f32.mrb[0].mxu0
        %4436 = vdwg.mxu0
        %4437 = vmatprep.subr.bf16.mxu0 0
        %4438 = vmatpush1.bf16.msra.mxu0 %v4131
        %4439 = vmatprep.subr.bf16.mxu0 0
        %4440 = vmatpush1.bf16.msra.mxu0 %v4132
        %4441 = vmatprep.subr.bf16.mxu0 0
        %4442 = vmatpush1.bf16.msra.mxu0 %v4133
        %4443 = vmatprep.subr.bf16.mxu0 0
        %4444 = vmatpush1.bf16.msra.mxu0 %v4134
        %4445 = vmatprep.subr.bf16.mxu0 0
        %4446 = vmatpush1.bf16.msra.mxu0 %v4135
        %4447 = vmatprep.subr.bf16.mxu0 0
        %4448 = vmatpush1.bf16.msra.mxu0 %v4136
        %4449 = vmatprep.subr.bf16.mxu0 0
        %4450 = vmatpush1.bf16.msra.mxu0 %v4137
        %4451 = vmatprep.subr.bf16.mxu0 0
        %4452 = vmatpush1.bf16.msra.mxu0 %v4138
        %4453 = vmatprep.subr.bf16.mxu0 0
        %4454 = vmatpush1.bf16.msra.mxu0 %v4139
        %4455 = vmatprep.subr.bf16.mxu0 0
        %4456 = vmatpush1.bf16.msra.mxu0 %v4140
        %4457 = vmatprep.subr.bf16.mxu0 0
        %4458 = vmatpush1.bf16.msra.mxu0 %v4141
        %4459 = vmatprep.subr.bf16.mxu0 0
        %4460 = vmatpush1.bf16.msra.mxu0 %v4142
        %4461 = vmatprep.subr.bf16.mxu0 0
        %4462 = vmatpush1.bf16.msra.mxu0 %v4143
        %4463 = vmatprep.subr.bf16.mxu0 0
        %4464 = vmatpush1.bf16.msra.mxu0 %v4144
        %4465 = vmatprep.subr.bf16.mxu0 0
        %4466 = vmatpush1.bf16.msra.mxu0 %v4145
        %4467 = vmatprep.subr.bf16.mxu0 0
        %4468 = vmatpush1.bf16.msra.mxu0 %v4146
        %4469 = vmatprep.mubr.bf16.mxu0 %v2641
        %4470 = vmatmul.mubr.bf16.gmra.mrb[0].mxu0 %v2624
        %v4471 = vpop.f32.mrb[0].mxu0
        %v4472 = vadd.f32 %v4375, %v4471
        %v4473 = vpop.f32.mrb[0].mxu0
        %v4474 = vpop.f32.mrb[0].mxu0
        %v4475 = vadd.f32 %v4378, %v4474
        %v4476 = vpop.f32.mrb[0].mxu0
        %4477 = vmatprep.mubr.bf16.mxu0 %v2770
        %4478 = vmatmul.mubr.bf16.gmra.mrb[0].mxu0 %v2753
        %v4479 = vpop.f32.mrb[0].mxu0
        %v4480 = vadd.f32 %v4383, %v4479
        %v4481 = vpop.f32.mrb[0].mxu0
        %v4482 = vpop.f32.mrb[0].mxu0
        %v4483 = vadd.f32 %v4386, %v4482
        %v4484 = vpop.f32.mrb[0].mxu0
        %4485 = vmatprep.mubr.bf16.mxu0 %v2899
        %4486 = vmatmul.mubr.bf16.gmra.mrb[0].mxu0 %v2882
        %v4487 = vpop.f32.mrb[0].mxu0
        %v4488 = vadd.f32 %v4391, %v4487
        %v4489 = vpop.f32.mrb[0].mxu0
        %v4490 = vpop.f32.mrb[0].mxu0
        %v4491 = vadd.f32 %v4394, %v4490
        %v4492 = vpop.f32.mrb[0].mxu0
        %4493 = vmatprep.mubr.bf16.mxu0 %v3028
        %4494 = vmatmul.mubr.bf16.gmra.mrb[0].mxu0 %v3011
        %v4495 = vpop.f32.mrb[0].mxu0
        %v4496 = vadd.f32 %v4399, %v4495
        %v4497 = vpop.f32.mrb[0].mxu0
        %v4498 = vpop.f32.mrb[0].mxu0
        %v4499 = vadd.f32 %v4402, %v4498
        %v4500 = vpop.f32.mrb[0].mxu0
        %4501 = vmatprep.mubr.bf16.mxu0 %v3157
        %4502 = vmatmul.mubr.bf16.gmra.mrb[0].mxu0 %v3140
        %v4503 = vpop.f32.mrb[0].mxu0
        %v4504 = vadd.f32 %v4407, %v4503
        %v4505 = vpop.f32.mrb[0].mxu0
        %v4506 = vpop.f32.mrb[0].mxu0
        %v4507 = vadd.f32 %v4410, %v4506
        %v4508 = vpop.f32.mrb[0].mxu0
        %4509 = vmatprep.mubr.bf16.mxu0 %v3286
        %4510 = vmatmul.mubr.bf16.gmra.mrb[0].mxu0 %v3269
        %v4511 = vpop.f32.mrb[0].mxu0
        %v4512 = vadd.f32 %v4415, %v4511
        %v4513 = vpop.f32.mrb[0].mxu0
        %v4514 = vpop.f32.mrb[0].mxu0
        %v4515 = vadd.f32 %v4418, %v4514
        %v4516 = vpop.f32.mrb[0].mxu0
        %4517 = vmatprep.mubr.bf16.mxu0 %v3415
        %4518 = vmatmul.mubr.bf16.gmra.mrb[0].mxu0 %v3398
        %v4519 = vpop.f32.mrb[0].mxu0
        %v4520 = vadd.f32 %v4423, %v4519
        %v4521 = vpop.f32.mrb[0].mxu0
        %v4522 = vpop.f32.mrb[0].mxu0
        %v4523 = vadd.f32 %v4426, %v4522
        %v4524 = vpop.f32.mrb[0].mxu0
        %4525 = vmatprep.mubr.bf16.mxu0 %v3544
        %4526 = vmatmul.mubr.bf16.gmra.mrb[0].mxu0 %v3527
        %v4527 = vpop.f32.mrb[0].mxu0
        %v4528 = vadd.f32 %v4431, %v4527
        %v4529 = vpop.f32.mrb[0].mxu0
        %v4530 = vpop.f32.mrb[0].mxu0
        %v4531 = vadd.f32 %v4434, %v4530
        %v4532 = vpop.f32.mrb[0].mxu0
        %4533 = vdwg.mxu0
        %4534 = vmatprep.subr.bf16.mxu0 0
        %4535 = vmatpush1.bf16.msra.mxu0 %v4147
        %4536 = vmatprep.subr.bf16.mxu0 0
        %4537 = vmatpush1.bf16.msra.mxu0 %v4148
        %4538 = vmatprep.subr.bf16.mxu0 0
        %4539 = vmatpush1.bf16.msra.mxu0 %v4149
        %4540 = vmatprep.subr.bf16.mxu0 0
        %4541 = vmatpush1.bf16.msra.mxu0 %v4150
        %4542 = vmatprep.subr.bf16.mxu0 0
        %4543 = vmatpush1.bf16.msra.mxu0 %v4151
        %4544 = vmatprep.subr.bf16.mxu0 0
        %4545 = vmatpush1.bf16.msra.mxu0 %v4152
        %4546 = vmatprep.subr.bf16.mxu0 0
        %4547 = vmatpush1.bf16.msra.mxu0 %v4153
        %4548 = vmatprep.subr.bf16.mxu0 0
        %4549 = vmatpush1.bf16.msra.mxu0 %v4154
        %4550 = vmatprep.subr.bf16.mxu0 0
        %4551 = vmatpush1.bf16.msra.mxu0 %v4155
        %4552 = vmatprep.subr.bf16.mxu0 0
        %4553 = vmatpush1.bf16.msra.mxu0 %v4156
        %4554 = vmatprep.subr.bf16.mxu0 0
        %4555 = vmatpush1.bf16.msra.mxu0 %v4157
        %4556 = vmatprep.subr.bf16.mxu0 0
        %4557 = vmatpush1.bf16.msra.mxu0 %v4158
        %4558 = vmatprep.subr.bf16.mxu0 0
        %4559 = vmatpush1.bf16.msra.mxu0 %v4159
        %4560 = vmatprep.subr.bf16.mxu0 0
        %4561 = vmatpush1.bf16.msra.mxu0 %v4160
        %4562 = vmatprep.subr.bf16.mxu0 0
        %4563 = vmatpush1.bf16.msra.mxu0 %v4161
        %4564 = vmatprep.subr.bf16.mxu0 0
        %4565 = vmatpush1.bf16.msra.mxu0 %v4162
        %4566 = vmatprep.mubr.bf16.mxu0 %v2667
        %4567 = vmatmul.mubr.bf16.gmra.mrb[0].mxu0 %v2658
        %v4568 = vpop.f32.mrb[0].mxu0
        %v4569 = vadd.f32 %v4472, %v4568
        %v4570 = vpop.f32.mrb[0].mxu0
        %v4571 = vpop.f32.mrb[0].mxu0
        %v4572 = vadd.f32 %v4475, %v4571
        %v4573 = vpop.f32.mrb[0].mxu0
        %4574 = vmatprep.mubr.bf16.mxu0 %v2796
        %4575 = vmatmul.mubr.bf16.gmra.mrb[0].mxu0 %v2787
        %v4576 = vpop.f32.mrb[0].mxu0
        %v4577 = vadd.f32 %v4480, %v4576
        %v4578 = vpop.f32.mrb[0].mxu0
        %v4579 = vpop.f32.mrb[0].mxu0
        %v4580 = vadd.f32 %v4483, %v4579
        %v4581 = vpop.f32.mrb[0].mxu0
        %4582 = vmatprep.mubr.bf16.mxu0 %v2925
        %4583 = vmatmul.mubr.bf16.gmra.mrb[0].mxu0 %v2916
        %v4584 = vpop.f32.mrb[0].mxu0
        %v4585 = vadd.f32 %v4488, %v4584
        %v4586 = vpop.f32.mrb[0].mxu0
        %v4587 = vpop.f32.mrb[0].mxu0
        %v4588 = vadd.f32 %v4491, %v4587
        %v4589 = vpop.f32.mrb[0].mxu0
        %4590 = vmatprep.mubr.bf16.mxu0 %v3054
        %4591 = vmatmul.mubr.bf16.gmra.mrb[0].mxu0 %v3045
        %v4592 = vpop.f32.mrb[0].mxu0
        %v4593 = vadd.f32 %v4496, %v4592
        %v4594 = vpop.f32.mrb[0].mxu0
        %v4595 = vpop.f32.mrb[0].mxu0
        %v4596 = vadd.f32 %v4499, %v4595
        %v4597 = vpop.f32.mrb[0].mxu0
        %4598 = vmatprep.mubr.bf16.mxu0 %v3183
        %4599 = vmatmul.mubr.bf16.gmra.mrb[0].mxu0 %v3174
        %v4600 = vpop.f32.mrb[0].mxu0
        %v4601 = vadd.f32 %v4504, %v4600
        %v4602 = vpop.f32.mrb[0].mxu0
        %v4603 = vpop.f32.mrb[0].mxu0
        %v4604 = vadd.f32 %v4507, %v4603
        %v4605 = vpop.f32.mrb[0].mxu0
        %4606 = vmatprep.mubr.bf16.mxu0 %v3312
        %4607 = vmatmul.mubr.bf16.gmra.mrb[0].mxu0 %v3303
        %v4608 = vpop.f32.mrb[0].mxu0
        %v4609 = vadd.f32 %v4512, %v4608
        %v4610 = vpop.f32.mrb[0].mxu0
        %v4611 = vpop.f32.mrb[0].mxu0
        %v4612 = vadd.f32 %v4515, %v4611
        %v4613 = vpop.f32.mrb[0].mxu0
        %4614 = vmatprep.mubr.bf16.mxu0 %v3441
        %4615 = vmatmul.mubr.bf16.gmra.mrb[0].mxu0 %v3432
        %v4616 = vpop.f32.mrb[0].mxu0
        %v4617 = vadd.f32 %v4520, %v4616
        %v4618 = vpop.f32.mrb[0].mxu0
        %v4619 = vpop.f32.mrb[0].mxu0
        %v4620 = vadd.f32 %v4523, %v4619
        %v4621 = vpop.f32.mrb[0].mxu0
        %4622 = vmatprep.mubr.bf16.mxu0 %v3570
        %4623 = vmatmul.mubr.bf16.gmra.mrb[0].mxu0 %v3561
        %v4624 = vpop.f32.mrb[0].mxu0
        %v4625 = vadd.f32 %v4528, %v4624
        %v4626 = vpop.f32.mrb[0].mxu0
        %v4627 = vpop.f32.mrb[0].mxu0
        %v4628 = vadd.f32 %v4531, %v4627
        %v4629 = vpop.f32.mrb[0].mxu0
        %4630 = vdwg.mxu0
        %4631 = vmatprep.subr.bf16.mxu0 0
        %4632 = vmatpush1.bf16.msra.mxu0 %v4163
        %4633 = vmatprep.subr.bf16.mxu0 0
        %4634 = vmatpush1.bf16.msra.mxu0 %v4164
        %4635 = vmatprep.subr.bf16.mxu0 0
        %4636 = vmatpush1.bf16.msra.mxu0 %v4165
        %4637 = vmatprep.subr.bf16.mxu0 0
        %4638 = vmatpush1.bf16.msra.mxu0 %v4166
        %4639 = vmatprep.subr.bf16.mxu0 0
        %4640 = vmatpush1.bf16.msra.mxu0 %v4167
        %4641 = vmatprep.subr.bf16.mxu0 0
        %4642 = vmatpush1.bf16.msra.mxu0 %v4168
        %4643 = vmatprep.subr.bf16.mxu0 0
        %4644 = vmatpush1.bf16.msra.mxu0 %v4169
        %4645 = vmatprep.subr.bf16.mxu0 0
        %4646 = vmatpush1.bf16.msra.mxu0 %v4170
        %4647 = vmatprep.subr.bf16.mxu0 0
        %4648 = vmatpush1.bf16.msra.mxu0 0
        %4649 = vmatprep.subr.bf16.mxu0 0
        %4650 = vmatpush1.bf16.msra.mxu0 0
        %4651 = vmatprep.subr.bf16.mxu0 0
        %4652 = vmatpush1.bf16.msra.mxu0 0
        %4653 = vmatprep.subr.bf16.mxu0 0
        %4654 = vmatpush1.bf16.msra.mxu0 0
        %4655 = vmatprep.subr.bf16.mxu0 0
        %4656 = vmatpush1.bf16.msra.mxu0 0
        %4657 = vmatprep.subr.bf16.mxu0 0
        %4658 = vmatpush1.bf16.msra.mxu0 0
        %4659 = vmatprep.subr.bf16.mxu0 0
        %4660 = vmatpush1.bf16.msra.mxu0 0
        %4661 = vmatprep.subr.bf16.mxu0 0
        %4662 = vmatpush1.bf16.msra.mxu0 0
        %4663 = vmatprep.mubr.bf16.mxu0 0
        %4664 = vmatmul.mubr.bf16.gmra.mrb[0].mxu0 %v2684
        %v4665 = vpop.f32.mrb[0].mxu0
        %v4666 = vadd.f32 %v4569, %v4665
        %v4667 = vpop.f32.mrb[0].mxu0
        %v4668 = vpop.f32.mrb[0].mxu0
        %v4669 = vadd.f32 %v4572, %v4668
        %v4670 = vpop.f32.mrb[0].mxu0
        %4671 = vmatprep.mubr.bf16.mxu0 0
        %4672 = vmatmul.mubr.bf16.gmra.mrb[0].mxu0 %v2813
        %v4673 = vpop.f32.mrb[0].mxu0
        %v4674 = vadd.f32 %v4577, %v4673
        %v4675 = vpop.f32.mrb[0].mxu0
        %v4676 = vpop.f32.mrb[0].mxu0
        %v4677 = vadd.f32 %v4580, %v4676
        %v4678 = vpop.f32.mrb[0].mxu0
        %4679 = vmatprep.mubr.bf16.mxu0 0
        %4680 = vmatmul.mubr.bf16.gmra.mrb[0].mxu0 %v2942
        %v4681 = vpop.f32.mrb[0].mxu0
        %v4682 = vadd.f32 %v4585, %v4681
        %v4683 = vpop.f32.mrb[0].mxu0
        %v4684 = vpop.f32.mrb[0].mxu0
        %v4685 = vadd.f32 %v4588, %v4684
        %v4686 = vpop.f32.mrb[0].mxu0
        %4687 = vmatprep.mubr.bf16.mxu0 0
        %4688 = vmatmul.mubr.bf16.gmra.mrb[0].mxu0 %v3071
        %v4689 = vpop.f32.mrb[0].mxu0
        %v4690 = vadd.f32 %v4593, %v4689
        %v4691 = vpop.f32.mrb[0].mxu0
        %v4692 = vpop.f32.mrb[0].mxu0
        %v4693 = vadd.f32 %v4596, %v4692
        %v4694 = vpop.f32.mrb[0].mxu0
        %4695 = vmatprep.mubr.bf16.mxu0 0
        %4696 = vmatmul.mubr.bf16.gmra.mrb[0].mxu0 %v3200
        %v4697 = vpop.f32.mrb[0].mxu0
        %v4698 = vadd.f32 %v4601, %v4697
        %v4699 = vpop.f32.mrb[0].mxu0
        %v4700 = vpop.f32.mrb[0].mxu0
        %v4701 = vadd.f32 %v4604, %v4700
        %v4702 = vpop.f32.mrb[0].mxu0
        %4703 = vmatprep.mubr.bf16.mxu0 0
        %4704 = vmatmul.mubr.bf16.gmra.mrb[0].mxu0 %v3329
        %v4705 = vpop.f32.mrb[0].mxu0
        %v4706 = vadd.f32 %v4609, %v4705
        %v4707 = vpop.f32.mrb[0].mxu0
        %v4708 = vpop.f32.mrb[0].mxu0
        %v4709 = vadd.f32 %v4612, %v4708
        %v4710 = vpop.f32.mrb[0].mxu0
        %4711 = vmatprep.mubr.bf16.mxu0 0
        %4712 = vmatmul.mubr.bf16.gmra.mrb[0].mxu0 %v3458
        %v4713 = vpop.f32.mrb[0].mxu0
        %v4714 = vadd.f32 %v4617, %v4713
        %v4715 = vpop.f32.mrb[0].mxu0
        %v4716 = vpop.f32.mrb[0].mxu0
        %v4717 = vadd.f32 %v4620, %v4716
        %v4718 = vpop.f32.mrb[0].mxu0
        %4719 = vmatprep.mubr.bf16.mxu0 0
        %4720 = vmatmul.mubr.bf16.gmra.mrb[0].mxu0 %v3587
        %v4721 = vpop.f32.mrb[0].mxu0
        %v4722 = vadd.f32 %v4625, %v4721
        %v4723 = vpop.f32.mrb[0].mxu0
        %v4724 = vpop.f32.mrb[0].mxu0
        %v4725 = vadd.f32 %v4628, %v4724
        %v4726 = vpop.f32.mrb[0].mxu0
        %4727 = vdwg.mxu0
        %v4728 = vmax.f32 %v4666, 0.0
        %v4729 = vmax.f32 %v4669, 0.0
        %v4730 = vmax.f32 %v4674, 0.0
        %v4731 = vmax.f32 %v4677, 0.0
        %v4732 = vmax.f32 %v4682, 0.0
        %v4733 = vmax.f32 %v4685, 0.0
        %v4734 = vmax.f32 %v4690, 0.0
        %v4735 = vmax.f32 %v4693, 0.0
        %v4736 = vmax.f32 %v4698, 0.0
        %v4737 = vmax.f32 %v4701, 0.0
        %v4738 = vmax.f32 %v4706, 0.0
        %v4739 = vmax.f32 %v4709, 0.0
        %v4740 = vmax.f32 %v4714, 0.0
        %v4741 = vmax.f32 %v4717, 0.0
        %v4742 = vmax.f32 %v4722, 0.0
        %v4743 = vmax.f32 %v4725, 0.0
        %4744 = vst [vmem:[%s241] sm:$0xff] %v4728
        %4745 = vst [vmem:[%s241 + $0x8] sm:$0xff] %v4729
        %4746 = vst [vmem:[%s241 + $0x10] sm:$0xff] %v4730
        %4747 = vst [vmem:[%s241 + $0x18] sm:$0xff] %v4731
        %4748 = vst [vmem:[%s241 + $0x20] sm:$0xff] %v4732
        %4749 = vst [vmem:[%s241 + $0x28] sm:$0xff] %v4733
        %4750 = vst [vmem:[%s241 + $0x30] sm:$0xff] %v4734
        %4751 = vst [vmem:[%s241 + $0x38] sm:$0xff] %v4735
        %4752 = vst [vmem:[%s241 + $0x40] sm:$0xff] %v4736
        %4753 = vst [vmem:[%s241 + $0x48] sm:$0xff] %v4737
        %4754 = vst [vmem:[%s241 + $0x50] sm:$0xff] %v4738
        %4755 = vst [vmem:[%s241 + $0x58] sm:$0xff] %v4739
        %4756 = vst [vmem:[%s241 + $0x60] sm:$0xff] %v4740
        %4757 = vst [vmem:[%s241 + $0x68] sm:$0xff] %v4741
        %4758 = vst [vmem:[%s241 + $0x70] sm:$0xff] %v4742
        %4759 = vst [vmem:[%s241 + $0x78] sm:$0xff] %v4743
        %s4760 = sand.u32 %s153, 1
        %s4761 = scalar_lea.sflag [#allocation4], %s4760
        %s4762 = sand.u32 %s153, 1
        %s4763 = smul.addr %s4762, 128
        %s4764 = scalar_lea.vmem [#allocation3], %s4763
        // Predicated region
        $region41: #{tpu_custom_call.1} parent=39 // pred_check
          %p4765 = pneg %p163
        $region42: #{tpu_custom_call.1} parent=39 // pred_check_branch
          %4767 = sbr.rel (%p4765) target = $region44
        $region43: #{tpu_custom_call.1} parent=39 // pred_region
          %s4769 = ssub.s32 2048, 2048
          %4770 = vsyncadd %s4761, %s4769
          %s4771 = smul.addr %s24, 16
          %s4772 = smul.addr %s23, 32
          %s4773 = sadd.s32 %s4771, %s4772
          %s4774 = smul.addr %s4773, 128
          %s4775 = scalar_lea.hbm %s5, %s4774
          %s4776 = sshll.u32 %s4764, 4
          %s4777 = int_to_ptr.vmem [resolvable:$true] %s4776
          %4782 = dma.vmem_to_hbm [thread:$0]  %s4777, 2048, %s4775, %s4761, 128, 128, 8
        $region44: #{tpu_custom_call.1} parent=39 // pred_fallthru
          _
      $region40: #{tpu_custom_call.1} parent=5 // pred_fallthru
        _
      %p4783 = scmp.le.s32.totalorder 2, %s14
      // Predicated region
      $region45: #{tpu_custom_call.1} parent=5 // pred_check
        %p4784 = pneg %p4783
      $region46: #{tpu_custom_call.1} parent=5 // pred_check_branch
        %4786 = sbr.rel (%p4784) target = $region48
      $region47: #{tpu_custom_call.1} parent=5 // pred_region
        %s4787 = ssub.s32 %s14, 2
        // Predicated region
        $region49: #{tpu_custom_call.1} parent=47 // pred_check
          %p4788 = pneg %p169
        $region50: #{tpu_custom_call.1} parent=47 // pred_check_branch
          %4790 = sbr.rel (%p4788) target = $region52
        $region51: #{tpu_custom_call.1} parent=47 // pred_region
          %s4791 = sand.u32 %s154, 1
          %s4792 = scalar_lea.sflag [#allocation4], %s4791
          %s4793 = sand.u32 %s154, 1
          %s4794 = smul.addr %s4793, 128
          %s4795 = scalar_lea.vmem [#allocation3], %s4794
          %4796 = dma.done %s4792, 2048
        $region52: #{tpu_custom_call.1} parent=47 // pred_fallthru
          _
      $region48: #{tpu_custom_call.1} parent=5 // pred_fallthru
        _
    $region6: #{tpu_custom_call.1} parent=1 // loop_footer
      %s18 = sadd.s32 1, %s14
    $region7: #{tpu_custom_call.1} parent=1 // loop_footer_branch
      %13 = sbr.rel target = $region3
    $region8: #{tpu_custom_call.1} parent=1 // loop_exit
      _
    %4797 = vsyncpa [#allocation4], 1
    %s4798 = scalar_lea.sflag [#allocation4], 1
    %4799 = vsyncpa %s4798, 1

</llo_original>
